<compile_context>
chip_gen: v6e
topology: v6e:2x2x1
jax: 0.10.0
libtpu: 0.0.40
codegen_flags: <defaults>
</compile_context>

<pallas_src>
import math
import functools

import jax
import jax.numpy as jnp
from jax.experimental import pallas as pl
from jax.experimental.pallas import tpu as pltpu


# -----------------------------------------------------------------------------
# Kernel helpers
# -----------------------------------------------------------------------------
def _layernorm(v, gamma, beta, eps=1e-5):
    # Two-pass form (mean, then variance of centered values): matches PyTorch
    # nn.LayerNorm (biased variance) and avoids E[x^2] - E[x]^2 cancellation.
    mu = jnp.mean(v, axis=-1, keepdims=True)
    c = v - mu
    var = jnp.mean(c * c, axis=-1, keepdims=True)
    return c * jax.lax.rsqrt(var + eps) * gamma + beta


# -----------------------------------------------------------------------------
# Kernel body (shared by the single-tile and sequence-tiled variants)
# -----------------------------------------------------------------------------
def _encoder_body(
    x_tile_ref,            # (1, TQ, H) f32   query-tile rows (also residual)
    x_full_ref,            # (1, S, H) f32 or None (single-tile variant)
    wqkv_ref, bqkv_ref,    # (H, 3H) bf16, (1, 3H) f32   (scale folded into Q)
    wo_ref, bo_ref,        # (H, H)  bf16, (1, H)  f32
    g1_ref, be1_ref,       # (1, H) f32
    wf1_ref, bf1_ref,      # (H, 4H) bf16, (1, 4H) f32
    wf2_ref, bf2_ref,      # (4H, H) bf16, (1, H)  f32
    g2_ref, be2_ref,       # (1, H) f32
    out_ref,               # (1, TQ, H) f32
    q_scr,                 # (TQ, H) bf16   lane-dense Q slab
    kv_scr,                # (S, 2H) bf16   persistent K|V slab (per batch elem)
    *,
    num_heads: int,
    ff_chunk: int,
):
    f32, bf16 = jnp.float32, jnp.bfloat16
    TQ, H = x_tile_ref.shape[1], x_tile_ref.shape[2]
    nh = num_heads
    hd = H // nh

    x_tile = x_tile_ref[0]                          # (TQ, H) f32
    xt_bf = x_tile.astype(bf16)

    # ---- Q / K / V projections ------------------------------------------------
    if x_full_ref is None:
        # Single query tile == full sequence: one fused (TQ,H)x(H,3H) matmul.
        qkv = (jnp.dot(xt_bf, wqkv_ref[...], preferred_element_type=f32)
               + bqkv_ref[...])
        q_scr[...] = qkv[:, :H].astype(bf16)        # lane-dense store
        kv_scr[...] = qkv[:, H:].astype(bf16)       # lane-dense store
    else:
        # K/V projected once per batch element into the persistent scratch.
        @pl.when(pl.program_id(1) == 0)
        def _():
            xf_bf = x_full_ref[0].astype(bf16)
            kv = (jnp.dot(xf_bf, wqkv_ref[:, H:], preferred_element_type=f32)
                  + bqkv_ref[:, H:])
            kv_scr[...] = kv.astype(bf16)
        q = (jnp.dot(xt_bf, wqkv_ref[:, :H], preferred_element_type=f32)
             + bqkv_ref[:, :H])
        q_scr[...] = q.astype(bf16)
    # NOTE: 1/sqrt(head_dim) is already folded into the Q weight/bias on host.

    # ---- attention, one head at a time ----------------------------------------
    # Per-head processing keeps the live f32 score block at TQ*S (not nh*TQ*S)
    # and folds each head's output straight into the W_O projection, so there
    # is no head concat and no narrow-lane scatter store.
    # TODO(synk): for long sequences add a KV-tile inner loop with an online
    # (flash-style) softmax so the (TQ, S) score block stays a few MiB (needed
    # earlier on v7x's 64 MiB VMEM).
    attn = None
    for h in range(nh):                             # static, fully unrolled
        qh = q_scr[:, h * hd:(h + 1) * hd]                  # (TQ, hd) bf16
        kh = kv_scr[:, h * hd:(h + 1) * hd]                 # (S, hd)  bf16
        vh = kv_scr[:, H + h * hd:H + (h + 1) * hd]         # (S, hd)  bf16
        s = jax.lax.dot_general(qh, kh, (((1,), (1,)), ((), ())),
                                preferred_element_type=f32)  # (TQ, S)
        m = jnp.max(s, axis=-1, keepdims=True)
        e = jnp.exp(s - m)
        denom = jnp.sum(e, axis=-1, keepdims=True)
        # approx reciprocal on the EUP (deliberate ~1e-3-level trade-off)
        p = (e * pl.reciprocal(denom, approx=True)).astype(bf16)
        # dropout(attn) -> identity (eval mode)
        oh = jnp.dot(p, vh, preferred_element_type=f32)       # (TQ, hd)
        part = jnp.dot(oh.astype(bf16), wo_ref[h * hd:(h + 1) * hd, :],
                       preferred_element_type=f32)            # (TQ, H)
        attn = part if attn is None else attn + part
    attn_out = attn + bo_ref[...]

    # ---- residual + LayerNorm 1 ------------------------------------------------
    x1 = _layernorm(x_tile + attn_out, g1_ref[...], be1_ref[...])

    # ---- feed-forward: Linear(H,4H) -> ReLU -> Linear(4H,H), 4H chunked --------
    x1_bf = x1.astype(bf16)
    H4 = wf1_ref.shape[1]
    ff = None
    for c0 in range(0, H4, ff_chunk):               # static, fully unrolled
        c1 = c0 + ff_chunk
        h1 = (jnp.dot(x1_bf, wf1_ref[:, c0:c1], preferred_element_type=f32)
              + bf1_ref[:, c0:c1])
        h1 = jnp.maximum(h1, 0.0).astype(bf16)      # ReLU; dropout -> identity
        part = jnp.dot(h1, wf2_ref[c0:c1, :], preferred_element_type=f32)
        ff = part if ff is None else ff + part
    ff = ff + bf2_ref[...]

    # ---- residual + LayerNorm 2 -------------------------------------------------
    x2 = _layernorm(x1 + ff, g2_ref[...], be2_ref[...])
    out_ref[0] = x2.astype(out_ref.dtype)


def _kernel_single(x_tile_ref, *rest, num_heads, ff_chunk):
    # No x_full input: avoids DMAing the sequence twice when q_tile == S.
    _encoder_body(x_tile_ref, None, *rest, num_heads=num_heads, ff_chunk=ff_chunk)


def _kernel_tiled(x_tile_ref, x_full_ref, *rest, num_heads, ff_chunk):
    _encoder_body(x_tile_ref, x_full_ref, *rest,
                  num_heads=num_heads, ff_chunk=ff_chunk)


# -----------------------------------------------------------------------------
# Host-side one-time weight preparation (hoisted out of the per-call path)
# -----------------------------------------------------------------------------
_WEIGHT_ORDER = ("wqkv", "bqkv", "wo", "bo", "g1", "be1",
                 "wf1", "bf1", "wf2", "bf2", "g2", "be2")


def prepare_params(params, num_heads):
    """Fuse QKV, fold 1/sqrt(head_dim) into Q, cast weights to bf16 — ONCE."""
    f32, bf16 = jnp.float32, jnp.bfloat16
    H = params["wq"].shape[0]
    hd = H // num_heads
    scale = 1.0 / math.sqrt(hd)
    wqkv = jnp.concatenate([params["wq"] * scale, params["wk"], params["wv"]],
                           axis=1).astype(bf16)
    bqkv = jnp.concatenate([params["bq"] * scale, params["bk"], params["bv"]],
                           axis=1).astype(f32)
    return dict(
        wqkv=wqkv, bqkv=bqkv,
        wo=params["wo"].astype(bf16), bo=params["bo"].astype(f32),
        g1=params["g1"].astype(f32), be1=params["be1"].astype(f32),
        wf1=params["wf1"].astype(bf16), bf1=params["bf1"].astype(f32),
        wf2=params["wf2"].astype(bf16), bf2=params["bf2"].astype(f32),
        g2=params["g2"].astype(f32), be2=params["be2"].astype(f32),
    )


def _vmem_limit_bytes(S, H, q_tile, single_tile):
    """Footprint-derived VMEM budget, capped at 75% of the chip's VMEM."""
    bf16_b, f32_b = 2, 4
    weights = 12 * H * H * bf16_b + (3 * H + H + 4 * H + H + 4 * H) * f32_b
    io = 2 * 2 * q_tile * H * f32_b                 # in/out tiles, double-buffered
    if not single_tile:
        io += 2 * S * H * f32_b                     # x_full block, double-buffered
    scratch = q_tile * H * bf16_b + S * 2 * H * bf16_b
    ff_chunk = min(4 * H, 512)
    transient = (3 * q_tile * S * f32_b             # per-head scores / exp
                 + 2 * q_tile * ff_chunk * f32_b    # FFN chunk
                 + 6 * q_tile * H * f32_b)          # live (TQ,H) f32 slabs
    footprint = weights + io + scratch + transient
    try:
        cap = getattr(pltpu.get_tpu_info(), "vmem_capacity_bytes",
                      64 * 1024 * 1024)
    except Exception:                               # conservative (v7x-sized)
        cap = 64 * 1024 * 1024
    return int(min(max(2 * footprint, 32 * 1024 * 1024), int(0.75 * cap)))


# -----------------------------------------------------------------------------
# Wrapper
# -----------------------------------------------------------------------------
def transformer_encoder(x, prepped, num_heads, q_tile=None):
    """x: (B, S, H) float32. prepped: output of prepare_params()."""
    B, S, H = x.shape
    assert H % 128 == 0, "hidden_dim must be a multiple of 128 (lane-dense)"
    assert H % num_heads == 0
    if q_tile is None:
        q_tile = S if S <= 256 else 256
    assert S % q_tile == 0 and q_tile % 8 == 0
    nqt = S // q_tile
    single_tile = (nqt == 1)
    ff_chunk = min(4 * H, 512)
    assert (4 * H) % ff_chunk == 0

    weights = [prepped[k] for k in _WEIGHT_ORDER]
    # Weights: whole-array, VMEM-resident, grid-invariant -> no double-buffering.
    vmem_resident = pl.BlockSpec(memory_space=pltpu.MemorySpace.VMEM)

    in_specs = [pl.BlockSpec((1, q_tile, H), lambda b, qt: (b, qt, 0))]
    inputs = [x]
    if single_tile:
        kernel = functools.partial(_kernel_single,
                                   num_heads=num_heads, ff_chunk=ff_chunk)
    else:
        kernel = functools.partial(_kernel_tiled,
                                   num_heads=num_heads, ff_chunk=ff_chunk)
        # Full sequence for K/V; block index constant across qt -> fetched once
        # per batch element and only read under @pl.when(qt == 0).
        in_specs.append(pl.BlockSpec((1, S, H), lambda b, qt: (b, 0, 0)))
        inputs.append(x)
    in_specs += [vmem_resident] * len(weights)

    return pl.pallas_call(
        kernel,
        out_shape=jax.ShapeDtypeStruct((B, S, H), jnp.float32),
        grid=(B, nqt),
        in_specs=in_specs,
        out_specs=pl.BlockSpec((1, q_tile, H), lambda b, qt: (b, qt, 0)),
        scratch_shapes=[
            pltpu.VMEM((q_tile, H), jnp.bfloat16),      # Q slab (lane-dense)
            pltpu.VMEM((S, 2 * H), jnp.bfloat16),       # persistent K|V slab
        ],
        compiler_params=pltpu.CompilerParams(
            # Batch axis feeds both TensorCores on v7x; qt carries the
            # K/V-reuse dependence across query tiles, hence "arbitrary".
            dimension_semantics=("parallel", "arbitrary"),
            vmem_limit_bytes=_vmem_limit_bytes(S, H, q_tile, single_tile),
        ),
    )(*inputs, *weights)


# -----------------------------------------------------------------------------
# Deterministic parameter construction (shapes from the module __init__)
# -----------------------------------------------------------------------------
def init_params(key, hidden_dim):
    H = hidden_dim
    ks = jax.random.split(key, 12)
    s = 0.05

    def lin(kw, kb, d_in, d_out):
        # stored pre-transposed: (d_in, d_out) so the kernel does x @ W + b
        w = jax.random.normal(kw, (d_in, d_out), jnp.float32) * s
        b = jax.random.normal(kb, (1, d_out), jnp.float32) * s
        return w, b

    wq, bq = lin(ks[0], ks[1], H, H)
    wk, bk = lin(ks[2], ks[3], H, H)
    wv, bv = lin(ks[4], ks[5], H, H)
    wo, bo = lin(ks[6], ks[7], H, H)
    wf1, bf1 = lin(ks[8], ks[9], H, 4 * H)
    wf2, bf2 = lin(ks[10], ks[11], 4 * H, H)

    # LayerNorm params: PyTorch default init (gamma=1, beta=0), kept 2-D.
    g1 = jnp.ones((1, H), jnp.float32)
    be1 = jnp.zeros((1, H), jnp.float32)
    g2 = jnp.ones((1, H), jnp.float32)
    be2 = jnp.zeros((1, H), jnp.float32)

    return dict(wq=wq, bq=bq, wk=wk, bk=bk, wv=wv, bv=bv, wo=wo, bo=bo,
                g1=g1, be1=be1, wf1=wf1, bf1=bf1, wf2=wf2, bf2=bf2,
                g2=g2, be2=be2)


# -----------------------------------------------------------------------------
# Pure-JAX reference (f32) for self-check
# -----------------------------------------------------------------------------
def reference(x, p, num_heads):
    B, S, H = x.shape
    hd = H // num_heads

    def ln(v, g, b, eps=1e-5):
        mu = jnp.mean(v, axis=-1, keepdims=True)
        var = jnp.mean((v - mu) ** 2, axis=-1, keepdims=True)
        return (v - mu) / jnp.sqrt(var + eps) * g + b

    q = x @ p["wq"] + p["bq"]
    k = x @ p["wk"] + p["bk"]
    v = x @ p["wv"] + p["bv"]
    q = q.reshape(B, S, num_heads, hd).transpose(0, 2, 1, 3)
    k = k.reshape(B, S, num_heads, hd).transpose(0, 2, 1, 3)
    v = v.reshape(B, S, num_heads, hd).transpose(0, 2, 1, 3)
    scores = jnp.einsum("bhqd,bhkd->bhqk", q, k) / math.sqrt(hd)
    attn = jax.nn.softmax(scores, axis=-1)
    o = jnp.einsum("bhqk,bhkd->bhqd", attn, v)
    o = o.transpose(0, 2, 1, 3).reshape(B, S, H)
    attn_out = o @ p["wo"] + p["bo"]
    x1 = ln(x + attn_out, p["g1"], p["be1"])
    ff = jnp.maximum(x1 @ p["wf1"] + p["bf1"], 0.0) @ p["wf2"] + p["bf2"]
    return ln(x1 + ff, p["g2"], p["be2"])


# -----------------------------------------------------------------------------
if __name__ == "__main__":
    # H = 256 keeps everything lane-dense (multiple of 128) and gives
    # head_dim = 64 — better MXU contraction depth on v6e/v7x than hd = 32.
    B, S, H, NUM_HEADS = 2, 128, 256, 4

    key = jax.random.PRNGKey(0)
    kx, kp = jax.random.split(key)
    x = jax.random.normal(kx, (B, S, H), jnp.float32)
    raw_params = init_params(kp, H)
    params = prepare_params(raw_params, NUM_HEADS)   # one-time weight prep

    ref = reference(x, raw_params, NUM_HEADS)

    # Path 1: single query tile per batch element (no duplicated x_full DMA).
    out1 = jax.block_until_ready(
        transformer_encoder(x, params, NUM_HEADS, q_tile=S))
    # Path 2: 2 query tiles -> exercises the K/V-once-per-batch arbitrary axis.
    out2 = jax.block_until_ready(
        transformer_encoder(x, params, NUM_HEADS, q_tile=S // 2))

    assert out1.shape == (B, S, H) and out2.shape == (B, S, H)
    # bf16 MXU operands + approx-reciprocal softmax vs a pure-f32 reference:
    # expect a few 1e-3 of absolute error; 5e-2 gives comfortable margin.
    err1 = float(jnp.max(jnp.abs(out1 - ref)))
    err2 = float(jnp.max(jnp.abs(out2 - ref)))
    assert err1 < 5e-2, f"single-tile mismatch vs reference: {err1}"
    assert err2 < 5e-2, f"seq-tiled mismatch vs reference: {err2}"

    print("KERNEL_OK")
</pallas_src>

<mosaic_0001>
module attributes {stable_mosaic.version = 11 : i64} {
  func.func @_kernel_single(%arg0: i32, %arg1: i32, %arg2: memref<1x128x256xf32, #tpu.memory_space<vmem>>, %arg3: memref<256x768xbf16, #tpu.memory_space<vmem>>, %arg4: memref<1x768xf32, #tpu.memory_space<vmem>>, %arg5: memref<256x256xbf16, #tpu.memory_space<vmem>>, %arg6: memref<1x256xf32, #tpu.memory_space<vmem>>, %arg7: memref<1x256xf32, #tpu.memory_space<vmem>>, %arg8: memref<1x256xf32, #tpu.memory_space<vmem>>, %arg9: memref<256x1024xbf16, #tpu.memory_space<vmem>>, %arg10: memref<1x1024xf32, #tpu.memory_space<vmem>>, %arg11: memref<1024x256xbf16, #tpu.memory_space<vmem>>, %arg12: memref<1x256xf32, #tpu.memory_space<vmem>>, %arg13: memref<1x256xf32, #tpu.memory_space<vmem>>, %arg14: memref<1x256xf32, #tpu.memory_space<vmem>>, %arg15: memref<1x128x256xf32, #tpu.memory_space<vmem>>, %arg16: memref<128x256xbf16, #tpu.memory_space<vmem>>, %arg17: memref<128x512xbf16, #tpu.memory_space<vmem>>) attributes {dimension_semantics = [#tpu.dimension_semantics<parallel>, #tpu.dimension_semantics<arbitrary>], iteration_bounds = array<i64: 2, 1>, scalar_prefetch = 0 : i64, scratch_operands = 2 : i64, tpu.core_type = #tpu.core_type<tc>, window_params = [{transform_indices = @transform_0, window_bounds = array<i64: 1, 128, 256>}, {pipeline_mode = #tpu.pipeline_mode<synchronous>, transform_indices = @transform_1, window_bounds = array<i64: 256, 768>}, {pipeline_mode = #tpu.pipeline_mode<synchronous>, transform_indices = @transform_2, window_bounds = array<i64: 1, 768>}, {pipeline_mode = #tpu.pipeline_mode<synchronous>, transform_indices = @transform_3, window_bounds = array<i64: 256, 256>}, {pipeline_mode = #tpu.pipeline_mode<synchronous>, transform_indices = @transform_4, window_bounds = array<i64: 1, 256>}, {pipeline_mode = #tpu.pipeline_mode<synchronous>, transform_indices = @transform_5, window_bounds = array<i64: 1, 256>}, {pipeline_mode = #tpu.pipeline_mode<synchronous>, transform_indices = @transform_6, window_bounds = array<i64: 1, 256>}, {pipeline_mode = #tpu.pipeline_mode<synchronous>, transform_indices = @transform_7, window_bounds = array<i64: 256, 1024>}, {pipeline_mode = #tpu.pipeline_mode<synchronous>, transform_indices = @transform_8, window_bounds = array<i64: 1, 1024>}, {pipeline_mode = #tpu.pipeline_mode<synchronous>, transform_indices = @transform_9, window_bounds = array<i64: 1024, 256>}, {pipeline_mode = #tpu.pipeline_mode<synchronous>, transform_indices = @transform_10, window_bounds = array<i64: 1, 256>}, {pipeline_mode = #tpu.pipeline_mode<synchronous>, transform_indices = @transform_11, window_bounds = array<i64: 1, 256>}, {pipeline_mode = #tpu.pipeline_mode<synchronous>, transform_indices = @transform_12, window_bounds = array<i64: 1, 256>}, {transform_indices = @transform_13, window_bounds = array<i64: 1, 128, 256>}]} {
    %c0 = arith.constant 0 : index
    %c0_0 = arith.constant 0 : index
    %c0_1 = arith.constant 0 : index
    %0 = vector.load %arg2[%c0, %c0_0, %c0_1] : memref<1x128x256xf32, #tpu.memory_space<vmem>>, vector<1x128x256xf32>
    %1 = vector.shape_cast %0 : vector<1x128x256xf32> to vector<128x256xf32>
    %2 = arith.truncf %1 : vector<128x256xf32> to vector<128x256xbf16>
    %c0_2 = arith.constant 0 : index
    %c0_3 = arith.constant 0 : index
    %3 = vector.load %arg3[%c0_2, %c0_3] : memref<256x768xbf16, #tpu.memory_space<vmem>>, vector<256x768xbf16>
    %cst = arith.constant dense<0.000000e+00> : vector<128x768xf32>
    %4 = tpu.matmul %2, %3, %cst {dimension_numbers = #tpu.dot_dimension_numbers<[1], [0], [0], [1], [0, 0, 1, 1], [], []>} : vector<128x256xbf16>, vector<256x768xbf16>, vector<128x768xf32> -> vector<128x768xf32>
    %c0_4 = arith.constant 0 : index
    %c0_5 = arith.constant 0 : index
    %5 = vector.load %arg4[%c0_4, %c0_5] : memref<1x768xf32, #tpu.memory_space<vmem>>, vector<1x768xf32>
    %6 = vector.broadcast %5 : vector<1x768xf32> to vector<128x768xf32>
    %7 = arith.addf %4, %6 : vector<128x768xf32>
    %8 = vector.extract_strided_slice %7 {offsets = [0, 0], sizes = [128, 256], strides = [1, 1]} : vector<128x768xf32> to vector<128x256xf32>
    %9 = arith.truncf %8 : vector<128x256xf32> to vector<128x256xbf16>
    %c0_6 = arith.constant 0 : index
    %c0_7 = arith.constant 0 : index
    %10 = vector.load %arg16[%c0_6, %c0_7] : memref<128x256xbf16, #tpu.memory_space<vmem>>, vector<128x256xbf16>
    tpu.vector_store %arg16[%c0_6, %c0_7], %9 {strides = array<i32>} : memref<128x256xbf16, #tpu.memory_space<vmem>>, vector<128x256xbf16>,
    %11 = vector.extract_strided_slice %7 {offsets = [0, 256], sizes = [128, 512], strides = [1, 1]} : vector<128x768xf32> to vector<128x512xf32>
    %12 = arith.truncf %11 : vector<128x512xf32> to vector<128x512xbf16>
    %c0_8 = arith.constant 0 : index
    %c0_9 = arith.constant 0 : index
    %13 = vector.load %arg17[%c0_8, %c0_9] : memref<128x512xbf16, #tpu.memory_space<vmem>>, vector<128x512xbf16>
    tpu.vector_store %arg17[%c0_8, %c0_9], %12 {strides = array<i32>} : memref<128x512xbf16, #tpu.memory_space<vmem>>, vector<128x512xbf16>,
    %c0_10 = arith.constant 0 : index
    %c0_11 = arith.constant 0 : index
    %14 = vector.load %arg16[%c0_10, %c0_11] : memref<128x256xbf16, #tpu.memory_space<vmem>>, vector<128x64xbf16>
    %c0_12 = arith.constant 0 : index
    %c0_13 = arith.constant 0 : index
    %15 = vector.load %arg17[%c0_12, %c0_13] : memref<128x512xbf16, #tpu.memory_space<vmem>>, vector<128x64xbf16>
    %c0_14 = arith.constant 0 : index
    %c256 = arith.constant 256 : index
    %16 = vector.load %arg17[%c0_14, %c256] : memref<128x512xbf16, #tpu.memory_space<vmem>>, vector<128x64xbf16>
    %cst_15 = arith.constant dense<0.000000e+00> : vector<128x128xf32>
    %17 = tpu.matmul %14, %15, %cst_15 {dimension_numbers = #tpu.dot_dimension_numbers<[1], [1], [0], [0], [0, 0, 1, 0], [], []>} : vector<128x64xbf16>, vector<128x64xbf16>, vector<128x128xf32> -> vector<128x128xf32>
    %cst_16 = arith.constant dense<0xFF800000> : vector<128xf32>
    %18 = vector.multi_reduction <maximumf>, %17, %cst_16 [1] : vector<128x128xf32> to vector<128xf32>
    %19 = vector.shape_cast %18 : vector<128xf32> to vector<128x1xf32>
    %20 = vector.broadcast %19 : vector<128x1xf32> to vector<128x128xf32>
    %21 = arith.subf %17, %20 : vector<128x128xf32>
    %22 = math.exp %21 : vector<128x128xf32>
    %cst_17 = arith.constant dense<0.000000e+00> : vector<128xf32>
    %23 = vector.multi_reduction <add>, %22, %cst_17 [1] : vector<128x128xf32> to vector<128xf32>
    %24 = vector.shape_cast %23 : vector<128xf32> to vector<128x1xf32>
    %25 = tpu.reciprocal %24 {approx = true} : vector<128x1xf32> -> vector<128x1xf32>
    %26 = vector.broadcast %25 : vector<128x1xf32> to vector<128x128xf32>
    %27 = arith.mulf %22, %26 : vector<128x128xf32>
    %28 = arith.truncf %27 : vector<128x128xf32> to vector<128x128xbf16>
    %cst_18 = arith.constant dense<0.000000e+00> : vector<128x64xf32>
    %29 = tpu.matmul %28, %16, %cst_18 {dimension_numbers = #tpu.dot_dimension_numbers<[1], [0], [0], [1], [0, 0, 1, 1], [], []>} : vector<128x128xbf16>, vector<128x64xbf16>, vector<128x64xf32> -> vector<128x64xf32>
    %30 = arith.truncf %29 : vector<128x64xf32> to vector<128x64xbf16>
    %c0_19 = arith.constant 0 : index
    %c0_20 = arith.constant 0 : index
    %31 = vector.load %arg5[%c0_19, %c0_20] : memref<256x256xbf16, #tpu.memory_space<vmem>>, vector<64x256xbf16>
    %cst_21 = arith.constant dense<0.000000e+00> : vector<128x256xf32>
    %32 = tpu.matmul %30, %31, %cst_21 {dimension_numbers = #tpu.dot_dimension_numbers<[1], [0], [0], [1], [0, 0, 1, 1], [], []>} : vector<128x64xbf16>, vector<64x256xbf16>, vector<128x256xf32> -> vector<128x256xf32>
    %c0_22 = arith.constant 0 : index
    %c64 = arith.constant 64 : index
    %33 = vector.load %arg16[%c0_22, %c64] : memref<128x256xbf16, #tpu.memory_space<vmem>>, vector<128x64xbf16>
    %c0_23 = arith.constant 0 : index
    %c64_24 = arith.constant 64 : index
    %34 = vector.load %arg17[%c0_23, %c64_24] : memref<128x512xbf16, #tpu.memory_space<vmem>>, vector<128x64xbf16>
    %c0_25 = arith.constant 0 : index
    %c320 = arith.constant 320 : index
    %35 = vector.load %arg17[%c0_25, %c320] : memref<128x512xbf16, #tpu.memory_space<vmem>>, vector<128x64xbf16>
    %cst_26 = arith.constant dense<0.000000e+00> : vector<128x128xf32>
    %36 = tpu.matmul %33, %34, %cst_26 {dimension_numbers = #tpu.dot_dimension_numbers<[1], [1], [0], [0], [0, 0, 1, 0], [], []>} : vector<128x64xbf16>, vector<128x64xbf16>, vector<128x128xf32> -> vector<128x128xf32>
    %cst_27 = arith.constant dense<0xFF800000> : vector<128xf32>
    %37 = vector.multi_reduction <maximumf>, %36, %cst_27 [1] : vector<128x128xf32> to vector<128xf32>
    %38 = vector.shape_cast %37 : vector<128xf32> to vector<128x1xf32>
    %39 = vector.broadcast %38 : vector<128x1xf32> to vector<128x128xf32>
    %40 = arith.subf %36, %39 : vector<128x128xf32>
    %41 = math.exp %40 : vector<128x128xf32>
    %cst_28 = arith.constant dense<0.000000e+00> : vector<128xf32>
    %42 = vector.multi_reduction <add>, %41, %cst_28 [1] : vector<128x128xf32> to vector<128xf32>
    %43 = vector.shape_cast %42 : vector<128xf32> to vector<128x1xf32>
    %44 = tpu.reciprocal %43 {approx = true} : vector<128x1xf32> -> vector<128x1xf32>
    %45 = vector.broadcast %44 : vector<128x1xf32> to vector<128x128xf32>
    %46 = arith.mulf %41, %45 : vector<128x128xf32>
    %47 = arith.truncf %46 : vector<128x128xf32> to vector<128x128xbf16>
    %cst_29 = arith.constant dense<0.000000e+00> : vector<128x64xf32>
    %48 = tpu.matmul %47, %35, %cst_29 {dimension_numbers = #tpu.dot_dimension_numbers<[1], [0], [0], [1], [0, 0, 1, 1], [], []>} : vector<128x128xbf16>, vector<128x64xbf16>, vector<128x64xf32> -> vector<128x64xf32>
    %49 = arith.truncf %48 : vector<128x64xf32> to vector<128x64xbf16>
    %c64_30 = arith.constant 64 : index
    %c0_31 = arith.constant 0 : index
    %50 = vector.load %arg5[%c64_30, %c0_31] : memref<256x256xbf16, #tpu.memory_space<vmem>>, vector<64x256xbf16>
    %cst_32 = arith.constant dense<0.000000e+00> : vector<128x256xf32>
    %51 = tpu.matmul %49, %50, %cst_32 {dimension_numbers = #tpu.dot_dimension_numbers<[1], [0], [0], [1], [0, 0, 1, 1], [], []>} : vector<128x64xbf16>, vector<64x256xbf16>, vector<128x256xf32> -> vector<128x256xf32>
    %52 = arith.addf %32, %51 : vector<128x256xf32>
    %c0_33 = arith.constant 0 : index
    %c128 = arith.constant 128 : index
    %53 = vector.load %arg16[%c0_33, %c128] : memref<128x256xbf16, #tpu.memory_space<vmem>>, vector<128x64xbf16>
    %c0_34 = arith.constant 0 : index
    %c128_35 = arith.constant 128 : index
    %54 = vector.load %arg17[%c0_34, %c128_35] : memref<128x512xbf16, #tpu.memory_space<vmem>>, vector<128x64xbf16>
    %c0_36 = arith.constant 0 : index
    %c384 = arith.constant 384 : index
    %55 = vector.load %arg17[%c0_36, %c384] : memref<128x512xbf16, #tpu.memory_space<vmem>>, vector<128x64xbf16>
    %cst_37 = arith.constant dense<0.000000e+00> : vector<128x128xf32>
    %56 = tpu.matmul %53, %54, %cst_37 {dimension_numbers = #tpu.dot_dimension_numbers<[1], [1], [0], [0], [0, 0, 1, 0], [], []>} : vector<128x64xbf16>, vector<128x64xbf16>, vector<128x128xf32> -> vector<128x128xf32>
    %cst_38 = arith.constant dense<0xFF800000> : vector<128xf32>
    %57 = vector.multi_reduction <maximumf>, %56, %cst_38 [1] : vector<128x128xf32> to vector<128xf32>
    %58 = vector.shape_cast %57 : vector<128xf32> to vector<128x1xf32>
    %59 = vector.broadcast %58 : vector<128x1xf32> to vector<128x128xf32>
    %60 = arith.subf %56, %59 : vector<128x128xf32>
    %61 = math.exp %60 : vector<128x128xf32>
    %cst_39 = arith.constant dense<0.000000e+00> : vector<128xf32>
    %62 = vector.multi_reduction <add>, %61, %cst_39 [1] : vector<128x128xf32> to vector<128xf32>
    %63 = vector.shape_cast %62 : vector<128xf32> to vector<128x1xf32>
    %64 = tpu.reciprocal %63 {approx = true} : vector<128x1xf32> -> vector<128x1xf32>
    %65 = vector.broadcast %64 : vector<128x1xf32> to vector<128x128xf32>
    %66 = arith.mulf %61, %65 : vector<128x128xf32>
    %67 = arith.truncf %66 : vector<128x128xf32> to vector<128x128xbf16>
    %cst_40 = arith.constant dense<0.000000e+00> : vector<128x64xf32>
    %68 = tpu.matmul %67, %55, %cst_40 {dimension_numbers = #tpu.dot_dimension_numbers<[1], [0], [0], [1], [0, 0, 1, 1], [], []>} : vector<128x128xbf16>, vector<128x64xbf16>, vector<128x64xf32> -> vector<128x64xf32>
    %69 = arith.truncf %68 : vector<128x64xf32> to vector<128x64xbf16>
    %c128_41 = arith.constant 128 : index
    %c0_42 = arith.constant 0 : index
    %70 = vector.load %arg5[%c128_41, %c0_42] : memref<256x256xbf16, #tpu.memory_space<vmem>>, vector<64x256xbf16>
    %cst_43 = arith.constant dense<0.000000e+00> : vector<128x256xf32>
    %71 = tpu.matmul %69, %70, %cst_43 {dimension_numbers = #tpu.dot_dimension_numbers<[1], [0], [0], [1], [0, 0, 1, 1], [], []>} : vector<128x64xbf16>, vector<64x256xbf16>, vector<128x256xf32> -> vector<128x256xf32>
    %72 = arith.addf %52, %71 : vector<128x256xf32>
    %c0_44 = arith.constant 0 : index
    %c192 = arith.constant 192 : index
    %73 = vector.load %arg16[%c0_44, %c192] : memref<128x256xbf16, #tpu.memory_space<vmem>>, vector<128x64xbf16>
    %c0_45 = arith.constant 0 : index
    %c192_46 = arith.constant 192 : index
    %74 = vector.load %arg17[%c0_45, %c192_46] : memref<128x512xbf16, #tpu.memory_space<vmem>>, vector<128x64xbf16>
    %c0_47 = arith.constant 0 : index
    %c448 = arith.constant 448 : index
    %75 = vector.load %arg17[%c0_47, %c448] : memref<128x512xbf16, #tpu.memory_space<vmem>>, vector<128x64xbf16>
    %cst_48 = arith.constant dense<0.000000e+00> : vector<128x128xf32>
    %76 = tpu.matmul %73, %74, %cst_48 {dimension_numbers = #tpu.dot_dimension_numbers<[1], [1], [0], [0], [0, 0, 1, 0], [], []>} : vector<128x64xbf16>, vector<128x64xbf16>, vector<128x128xf32> -> vector<128x128xf32>
    %cst_49 = arith.constant dense<0xFF800000> : vector<128xf32>
    %77 = vector.multi_reduction <maximumf>, %76, %cst_49 [1] : vector<128x128xf32> to vector<128xf32>
    %78 = vector.shape_cast %77 : vector<128xf32> to vector<128x1xf32>
    %79 = vector.broadcast %78 : vector<128x1xf32> to vector<128x128xf32>
    %80 = arith.subf %76, %79 : vector<128x128xf32>
    %81 = math.exp %80 : vector<128x128xf32>
    %cst_50 = arith.constant dense<0.000000e+00> : vector<128xf32>
    %82 = vector.multi_reduction <add>, %81, %cst_50 [1] : vector<128x128xf32> to vector<128xf32>
    %83 = vector.shape_cast %82 : vector<128xf32> to vector<128x1xf32>
    %84 = tpu.reciprocal %83 {approx = true} : vector<128x1xf32> -> vector<128x1xf32>
    %85 = vector.broadcast %84 : vector<128x1xf32> to vector<128x128xf32>
    %86 = arith.mulf %81, %85 : vector<128x128xf32>
    %87 = arith.truncf %86 : vector<128x128xf32> to vector<128x128xbf16>
    %cst_51 = arith.constant dense<0.000000e+00> : vector<128x64xf32>
    %88 = tpu.matmul %87, %75, %cst_51 {dimension_numbers = #tpu.dot_dimension_numbers<[1], [0], [0], [1], [0, 0, 1, 1], [], []>} : vector<128x128xbf16>, vector<128x64xbf16>, vector<128x64xf32> -> vector<128x64xf32>
    %89 = arith.truncf %88 : vector<128x64xf32> to vector<128x64xbf16>
    %c192_52 = arith.constant 192 : index
    %c0_53 = arith.constant 0 : index
    %90 = vector.load %arg5[%c192_52, %c0_53] : memref<256x256xbf16, #tpu.memory_space<vmem>>, vector<64x256xbf16>
    %cst_54 = arith.constant dense<0.000000e+00> : vector<128x256xf32>
    %91 = tpu.matmul %89, %90, %cst_54 {dimension_numbers = #tpu.dot_dimension_numbers<[1], [0], [0], [1], [0, 0, 1, 1], [], []>} : vector<128x64xbf16>, vector<64x256xbf16>, vector<128x256xf32> -> vector<128x256xf32>
    %92 = arith.addf %72, %91 : vector<128x256xf32>
    %c0_55 = arith.constant 0 : index
    %c0_56 = arith.constant 0 : index
    %93 = vector.load %arg6[%c0_55, %c0_56] : memref<1x256xf32, #tpu.memory_space<vmem>>, vector<1x256xf32>
    %94 = vector.broadcast %93 : vector<1x256xf32> to vector<128x256xf32>
    %95 = arith.addf %92, %94 : vector<128x256xf32>
    %96 = arith.addf %1, %95 : vector<128x256xf32>
    %c0_57 = arith.constant 0 : index
    %c0_58 = arith.constant 0 : index
    %97 = vector.load %arg7[%c0_57, %c0_58] : memref<1x256xf32, #tpu.memory_space<vmem>>, vector<1x256xf32>
    %c0_59 = arith.constant 0 : index
    %c0_60 = arith.constant 0 : index
    %98 = vector.load %arg8[%c0_59, %c0_60] : memref<1x256xf32, #tpu.memory_space<vmem>>, vector<1x256xf32>
    %cst_61 = arith.constant dense<0.000000e+00> : vector<128xf32>
    %99 = vector.multi_reduction <add>, %96, %cst_61 [1] : vector<128x256xf32> to vector<128xf32>
    %100 = vector.shape_cast %99 : vector<128xf32> to vector<128x1xf32>
    %cst_62 = arith.constant 2.560000e+02 : f32
    %101 = vector.broadcast %cst_62 : f32 to vector<128x1xf32>
    %102 = arith.divf %100, %101 : vector<128x1xf32>
    %103 = vector.broadcast %102 : vector<128x1xf32> to vector<128x256xf32>
    %104 = arith.subf %96, %103 : vector<128x256xf32>
    %105 = arith.mulf %104, %104 : vector<128x256xf32>
    %cst_63 = arith.constant dense<0.000000e+00> : vector<128xf32>
    %106 = vector.multi_reduction <add>, %105, %cst_63 [1] : vector<128x256xf32> to vector<128xf32>
    %107 = vector.shape_cast %106 : vector<128xf32> to vector<128x1xf32>
    %cst_64 = arith.constant 2.560000e+02 : f32
    %108 = vector.broadcast %cst_64 : f32 to vector<128x1xf32>
    %109 = arith.divf %107, %108 : vector<128x1xf32>
    %cst_65 = arith.constant 9.99999974E-6 : f32
    %110 = vector.broadcast %cst_65 : f32 to vector<128x1xf32>
    %111 = arith.addf %109, %110 : vector<128x1xf32>
    %112 = math.rsqrt %111 : vector<128x1xf32>
    %113 = vector.broadcast %112 : vector<128x1xf32> to vector<128x256xf32>
    %114 = arith.mulf %104, %113 : vector<128x256xf32>
    %115 = vector.broadcast %97 : vector<1x256xf32> to vector<128x256xf32>
    %116 = arith.mulf %114, %115 : vector<128x256xf32>
    %117 = vector.broadcast %98 : vector<1x256xf32> to vector<128x256xf32>
    %118 = arith.addf %116, %117 : vector<128x256xf32>
    %119 = arith.truncf %118 : vector<128x256xf32> to vector<128x256xbf16>
    %c0_66 = arith.constant 0 : index
    %c0_67 = arith.constant 0 : index
    %120 = vector.load %arg9[%c0_66, %c0_67] : memref<256x1024xbf16, #tpu.memory_space<vmem>>, vector<256x512xbf16>
    %cst_68 = arith.constant dense<0.000000e+00> : vector<128x512xf32>
    %121 = tpu.matmul %119, %120, %cst_68 {dimension_numbers = #tpu.dot_dimension_numbers<[1], [0], [0], [1], [0, 0, 1, 1], [], []>} : vector<128x256xbf16>, vector<256x512xbf16>, vector<128x512xf32> -> vector<128x512xf32>
    %c0_69 = arith.constant 0 : index
    %c0_70 = arith.constant 0 : index
    %122 = vector.load %arg10[%c0_69, %c0_70] : memref<1x1024xf32, #tpu.memory_space<vmem>>, vector<1x512xf32>
    %123 = vector.broadcast %122 : vector<1x512xf32> to vector<128x512xf32>
    %124 = arith.addf %121, %123 : vector<128x512xf32>
    %cst_71 = arith.constant 0.000000e+00 : f32
    %125 = vector.broadcast %cst_71 : f32 to vector<128x512xf32>
    %126 = arith.maximumf %124, %125 : vector<128x512xf32>
    %127 = arith.truncf %126 : vector<128x512xf32> to vector<128x512xbf16>
    %c0_72 = arith.constant 0 : index
    %c0_73 = arith.constant 0 : index
    %128 = vector.load %arg11[%c0_72, %c0_73] : memref<1024x256xbf16, #tpu.memory_space<vmem>>, vector<512x256xbf16>
    %cst_74 = arith.constant dense<0.000000e+00> : vector<128x256xf32>
    %129 = tpu.matmul %127, %128, %cst_74 {dimension_numbers = #tpu.dot_dimension_numbers<[1], [0], [0], [1], [0, 0, 1, 1], [], []>} : vector<128x512xbf16>, vector<512x256xbf16>, vector<128x256xf32> -> vector<128x256xf32>
    %c0_75 = arith.constant 0 : index
    %c512 = arith.constant 512 : index
    %130 = vector.load %arg9[%c0_75, %c512] : memref<256x1024xbf16, #tpu.memory_space<vmem>>, vector<256x512xbf16>
    %cst_76 = arith.constant dense<0.000000e+00> : vector<128x512xf32>
    %131 = tpu.matmul %119, %130, %cst_76 {dimension_numbers = #tpu.dot_dimension_numbers<[1], [0], [0], [1], [0, 0, 1, 1], [], []>} : vector<128x256xbf16>, vector<256x512xbf16>, vector<128x512xf32> -> vector<128x512xf32>
    %c0_77 = arith.constant 0 : index
    %c512_78 = arith.constant 512 : index
    %132 = vector.load %arg10[%c0_77, %c512_78] : memref<1x1024xf32, #tpu.memory_space<vmem>>, vector<1x512xf32>
    %133 = vector.broadcast %132 : vector<1x512xf32> to vector<128x512xf32>
    %134 = arith.addf %131, %133 : vector<128x512xf32>
    %cst_79 = arith.constant 0.000000e+00 : f32
    %135 = vector.broadcast %cst_79 : f32 to vector<128x512xf32>
    %136 = arith.maximumf %134, %135 : vector<128x512xf32>
    %137 = arith.truncf %136 : vector<128x512xf32> to vector<128x512xbf16>
    %c512_80 = arith.constant 512 : index
    %c0_81 = arith.constant 0 : index
    %138 = vector.load %arg11[%c512_80, %c0_81] : memref<1024x256xbf16, #tpu.memory_space<vmem>>, vector<512x256xbf16>
    %cst_82 = arith.constant dense<0.000000e+00> : vector<128x256xf32>
    %139 = tpu.matmul %137, %138, %cst_82 {dimension_numbers = #tpu.dot_dimension_numbers<[1], [0], [0], [1], [0, 0, 1, 1], [], []>} : vector<128x512xbf16>, vector<512x256xbf16>, vector<128x256xf32> -> vector<128x256xf32>
    %140 = arith.addf %129, %139 : vector<128x256xf32>
    %c0_83 = arith.constant 0 : index
    %c0_84 = arith.constant 0 : index
    %141 = vector.load %arg12[%c0_83, %c0_84] : memref<1x256xf32, #tpu.memory_space<vmem>>, vector<1x256xf32>
    %142 = vector.broadcast %141 : vector<1x256xf32> to vector<128x256xf32>
    %143 = arith.addf %140, %142 : vector<128x256xf32>
    %144 = arith.addf %118, %143 : vector<128x256xf32>
    %c0_85 = arith.constant 0 : index
    %c0_86 = arith.constant 0 : index
    %145 = vector.load %arg13[%c0_85, %c0_86] : memref<1x256xf32, #tpu.memory_space<vmem>>, vector<1x256xf32>
    %c0_87 = arith.constant 0 : index
    %c0_88 = arith.constant 0 : index
    %146 = vector.load %arg14[%c0_87, %c0_88] : memref<1x256xf32, #tpu.memory_space<vmem>>, vector<1x256xf32>
    %cst_89 = arith.constant dense<0.000000e+00> : vector<128xf32>
    %147 = vector.multi_reduction <add>, %144, %cst_89 [1] : vector<128x256xf32> to vector<128xf32>
    %148 = vector.shape_cast %147 : vector<128xf32> to vector<128x1xf32>
    %cst_90 = arith.constant 2.560000e+02 : f32
    %149 = vector.broadcast %cst_90 : f32 to vector<128x1xf32>
    %150 = arith.divf %148, %149 : vector<128x1xf32>
    %151 = vector.broadcast %150 : vector<128x1xf32> to vector<128x256xf32>
    %152 = arith.subf %144, %151 : vector<128x256xf32>
    %153 = arith.mulf %152, %152 : vector<128x256xf32>
    %cst_91 = arith.constant dense<0.000000e+00> : vector<128xf32>
    %154 = vector.multi_reduction <add>, %153, %cst_91 [1] : vector<128x256xf32> to vector<128xf32>
    %155 = vector.shape_cast %154 : vector<128xf32> to vector<128x1xf32>
    %cst_92 = arith.constant 2.560000e+02 : f32
    %156 = vector.broadcast %cst_92 : f32 to vector<128x1xf32>
    %157 = arith.divf %155, %156 : vector<128x1xf32>
    %cst_93 = arith.constant 9.99999974E-6 : f32
    %158 = vector.broadcast %cst_93 : f32 to vector<128x1xf32>
    %159 = arith.addf %157, %158 : vector<128x1xf32>
    %160 = math.rsqrt %159 : vector<128x1xf32>
    %161 = vector.broadcast %160 : vector<128x1xf32> to vector<128x256xf32>
    %162 = arith.mulf %152, %161 : vector<128x256xf32>
    %163 = vector.broadcast %145 : vector<1x256xf32> to vector<128x256xf32>
    %164 = arith.mulf %162, %163 : vector<128x256xf32>
    %165 = vector.broadcast %146 : vector<1x256xf32> to vector<128x256xf32>
    %166 = arith.addf %164, %165 : vector<128x256xf32>
    %c0_94 = arith.constant 0 : index
    %c0_95 = arith.constant 0 : index
    %c0_96 = arith.constant 0 : index
    %167 = vector.load %arg15[%c0_94, %c0_95, %c0_96] : memref<1x128x256xf32, #tpu.memory_space<vmem>>, vector<1x128x256xf32>
    %168 = vector.shape_cast %167 : vector<1x128x256xf32> to vector<128x256xf32>
    %169 = vector.shape_cast %166 : vector<128x256xf32> to vector<1x128x256xf32>
    tpu.vector_store %arg15[%c0_94, %c0_95, %c0_96], %169 {strides = array<i32>} : memref<1x128x256xf32, #tpu.memory_space<vmem>>, vector<1x128x256xf32>,
    return
  }
  func.func @transform_0(%arg0: i32, %arg1: i32) -> (i32, i32, i32) {
    %c0_i32 = arith.constant 0 : i32
    %c0_i32_0 = arith.constant 0 : i32
    return %arg0, %arg1, %c0_i32 : i32, i32, i32
  }
  func.func @transform_1(%arg0: i32, %arg1: i32) -> (i32, i32) {
    %c0_i32 = arith.constant 0 : i32
    %c0_i32_0 = arith.constant 0 : i32
    %c0_i32_1 = arith.constant 0 : i32
    return %c0_i32, %c0_i32_0 : i32, i32
  }
  func.func @transform_2(%arg0: i32, %arg1: i32) -> (i32, i32) {
    %c0_i32 = arith.constant 0 : i32
    %c0_i32_0 = arith.constant 0 : i32
    %c0_i32_1 = arith.constant 0 : i32
    return %c0_i32, %c0_i32_0 : i32, i32
  }
  func.func @transform_3(%arg0: i32, %arg1: i32) -> (i32, i32) {
    %c0_i32 = arith.constant 0 : i32
    %c0_i32_0 = arith.constant 0 : i32
    %c0_i32_1 = arith.constant 0 : i32
    return %c0_i32, %c0_i32_0 : i32, i32
  }
  func.func @transform_4(%arg0: i32, %arg1: i32) -> (i32, i32) {
    %c0_i32 = arith.constant 0 : i32
    %c0_i32_0 = arith.constant 0 : i32
    %c0_i32_1 = arith.constant 0 : i32
    return %c0_i32, %c0_i32_0 : i32, i32
  }
  func.func @transform_5(%arg0: i32, %arg1: i32) -> (i32, i32) {
    %c0_i32 = arith.constant 0 : i32
    %c0_i32_0 = arith.constant 0 : i32
    %c0_i32_1 = arith.constant 0 : i32
    return %c0_i32, %c0_i32_0 : i32, i32
  }
  func.func @transform_6(%arg0: i32, %arg1: i32) -> (i32, i32) {
    %c0_i32 = arith.constant 0 : i32
    %c0_i32_0 = arith.constant 0 : i32
    %c0_i32_1 = arith.constant 0 : i32
    return %c0_i32, %c0_i32_0 : i32, i32
  }
  func.func @transform_7(%arg0: i32, %arg1: i32) -> (i32, i32) {
    %c0_i32 = arith.constant 0 : i32
    %c0_i32_0 = arith.constant 0 : i32
    %c0_i32_1 = arith.constant 0 : i32
    return %c0_i32, %c0_i32_0 : i32, i32
  }
  func.func @transform_8(%arg0: i32, %arg1: i32) -> (i32, i32) {
    %c0_i32 = arith.constant 0 : i32
    %c0_i32_0 = arith.constant 0 : i32
    %c0_i32_1 = arith.constant 0 : i32
    return %c0_i32, %c0_i32_0 : i32, i32
  }
  func.func @transform_9(%arg0: i32, %arg1: i32) -> (i32, i32) {
    %c0_i32 = arith.constant 0 : i32
    %c0_i32_0 = arith.constant 0 : i32
    %c0_i32_1 = arith.constant 0 : i32
    return %c0_i32, %c0_i32_0 : i32, i32
  }
  func.func @transform_10(%arg0: i32, %arg1: i32) -> (i32, i32) {
    %c0_i32 = arith.constant 0 : i32
    %c0_i32_0 = arith.constant 0 : i32
    %c0_i32_1 = arith.constant 0 : i32
    return %c0_i32, %c0_i32_0 : i32, i32
  }
  func.func @transform_11(%arg0: i32, %arg1: i32) -> (i32, i32) {
    %c0_i32 = arith.constant 0 : i32
    %c0_i32_0 = arith.constant 0 : i32
    %c0_i32_1 = arith.constant 0 : i32
    return %c0_i32, %c0_i32_0 : i32, i32
  }
  func.func @transform_12(%arg0: i32, %arg1: i32) -> (i32, i32) {
    %c0_i32 = arith.constant 0 : i32
    %c0_i32_0 = arith.constant 0 : i32
    %c0_i32_1 = arith.constant 0 : i32
    return %c0_i32, %c0_i32_0 : i32, i32
  }
  func.func @transform_13(%arg0: i32, %arg1: i32) -> (i32, i32, i32) {
    %c0_i32 = arith.constant 0 : i32
    %c0_i32_0 = arith.constant 0 : i32
    return %arg0, %arg1, %c0_i32 : i32, i32, i32
  }
}

</mosaic_0001>

<llo_original>
// kernel: tpu_custom_call.1
$region0: #{tpu_custom_call.1}
  #allocation0 [shape = 'u32[]', space=smem, size = 0x4, offset = 0x4, fixed_abs, tag = 'smem constant byte address 0x4 - core index']
  #allocation1 [shape = 'u32[144,128]{1,0:T(1,128)}', space=vmem, size = 0x12000, scoped, tag = 'internal scratch']
  #allocation2 [shape = 'bf16[128,256]{1,0:T(8,128)(2,1)}', space=vmem, size = 0x10000, scoped, tag = 'scratch operand']
  #allocation3 [shape = 'bf16[128,512]{1,0:T(8,128)(2,1)}', space=vmem, size = 0x20000, scoped, tag = 'scratch operand']
  %s0 = inlined_call_operand.hbm [shape: f32[2,128,256], index: 0, kind: input, shape index: {}]
  %s1 = inlined_call_operand.hbm [shape: bf16[256,768], index: 1, kind: input, shape index: {}]
  %s2 = inlined_call_operand.hbm [shape: f32[1,768], index: 2, kind: input, shape index: {}]
  %s3 = inlined_call_operand.hbm [shape: bf16[256,256], index: 3, kind: input, shape index: {}]
  %s4 = inlined_call_operand.vmem [shape: f32[1,256], index: 4, kind: input, shape index: {}]
  %s5 = inlined_call_operand.vmem [shape: f32[1,256], index: 5, kind: input, shape index: {}]
  %s6 = inlined_call_operand.vmem [shape: f32[1,256], index: 6, kind: input, shape index: {}]
  %s7 = inlined_call_operand.hbm [shape: bf16[256,1024], index: 7, kind: input, shape index: {}]
  %s8 = inlined_call_operand.vmem [shape: f32[1,1024], index: 8, kind: input, shape index: {}]
  %s9 = inlined_call_operand.hbm [shape: bf16[1024,256], index: 9, kind: input, shape index: {}]
  %s10 = inlined_call_operand.vmem [shape: f32[1,256], index: 10, kind: input, shape index: {}]
  %s11 = inlined_call_operand.vmem [shape: f32[1,256], index: 11, kind: input, shape index: {}]
  %s12 = inlined_call_operand.vmem [shape: f32[1,256], index: 12, kind: input, shape index: {}]
  %s13 = inlined_call_operand.hbm [shape: f32[2,128,256], index: 13, kind: output, shape index: {}]
  %s14 = sld [smem:[#allocation0]]
  $region109: #{tpu_custom_call.1} parent=0
    _
  %s16 = ssub.s32 1, %s14
  %s17 = scalar_select 0, %s16, %s14
  $region1: #{tpu_custom_call.1} parent=0
    #allocation4 [shape = 'u8[262144]{0}', space=vmem, size = 0x40000, scoped, tag = 'input window, operand 0']
    #allocation5 [shape = 's32[2]{0}', space=sflag, size = 0x8, scoped, tag = 'scoped memory for tpu_custom_call.1']
    #allocation6 [shape = 's32[2]{0}', space=sflag, size = 0x8, scoped, tag = 'scoped memory for tpu_custom_call.1']
    #allocation7 [shape = 'u8[393216]{0}', space=vmem, size = 0x60000, scoped, tag = 'input window, operand 1, single buffered']
    #allocation8 [shape = 's32[1]{0}', space=sflag, size = 0x4, scoped, tag = 'scoped memory for tpu_custom_call.1']
    #allocation9 [shape = 'u8[3072]{0}', space=vmem, size = 0xc00, scoped, tag = 'input window, operand 2, single buffered']
    #allocation10 [shape = 'u8[131072]{0}', space=vmem, size = 0x20000, scoped, tag = 'input window, operand 3, single buffered']
    #allocation11 [shape = 's32[1]{0}', space=sflag, size = 0x4, scoped, tag = 'scoped memory for tpu_custom_call.1']
    #allocation12 [shape = 'u8[524288]{0}', space=vmem, size = 0x80000, scoped, tag = 'input window, operand 7, single buffered']
    #allocation13 [shape = 'u8[524288]{0}', space=vmem, size = 0x80000, scoped, tag = 'input window, operand 9, single buffered']
    #allocation14 [shape = 's32[1]{0}', space=sflag, size = 0x4, scoped, tag = 'scoped memory for tpu_custom_call.1']
    #allocation15 [shape = 'u8[262144]{0}', space=vmem, size = 0x40000, scoped, tag = 'output window, operand 0']
    %18 = vsyncpa [#allocation5], 0
    %s19 = scalar_lea.sflag [#allocation5], 1
    %20 = vsyncpa %s19, 0
    %21 = vsyncpa [#allocation8], 0
    %22 = vsyncpa [#allocation11], 0
    %23 = vsyncpa [#allocation14], 0
    %24 = vsyncpa [#allocation6], 0
    %s25 = scalar_lea.sflag [#allocation6], 1
    %26 = vsyncpa %s25, 0
    loop: start=0, step=1, limit=4
    $region2: #{tpu_custom_call.1} parent=1 // loop_pre_header
      _
    $region3: #{tpu_custom_call.1} parent=1 // loop_header
      %s28 = sphi 0, %s32
      %p29 = scmp.ge.s32.totalorder %s28, 4
      %s35 = sphi 0, %s47
      %s36 = sphi 0, %s43
      %s37 = sphi 0, %s35
      %s38 = sphi 0, %s36
      %s39 = sphi 0, %s37
      %s40 = sphi 0, %s38
      %s52 = sphi 0, %s54
      %s55 = sphi 0, %s52
      %s56 = sphi 0, %s55
      %s72 = sphi 0, %s56
      %s76 = sphi 0, %s76
      %s78 = sphi 0, %s76
      %s79 = sphi 0, %s78
      %s93 = sphi 0, %s79
      %s97 = sphi 0, %s97
      %s99 = sphi 0, %s97
      %s100 = sphi 0, %s99
      %s114 = sphi 0, %s100
      %s118 = sphi 0, %s118
      %s120 = sphi 0, %s118
      %s121 = sphi 0, %s120
      %s135 = sphi 0, %s121
      %s139 = sphi 0, %s139
      %s141 = sphi 0, %s139
      %s142 = sphi 0, %s141
      %s156 = sphi 0, %s142
      %s160 = sphi 0, %s160
      %s162 = sphi 0, %s160
      %s163 = sphi 0, %s162
      %s177 = sphi 0, %s163
      %s181 = sphi 0, %s181
      %s183 = sphi 0, %s181
      %s184 = sphi 0, %s183
      %s198 = sphi 0, %s184
      %s202 = sphi 0, %s202
      %s204 = sphi 0, %s202
      %s205 = sphi 0, %s204
      %s219 = sphi 0, %s205
      %s223 = sphi 0, %s223
      %s225 = sphi 0, %s223
      %s226 = sphi 0, %s225
      %s240 = sphi 0, %s226
      %s244 = sphi 0, %s244
      %s246 = sphi 0, %s244
      %s247 = sphi 0, %s246
      %s261 = sphi 0, %s247
      %s265 = sphi 0, %s265
      %s267 = sphi 0, %s265
      %s268 = sphi 0, %s267
      %s282 = sphi 0, %s268
      %s286 = sphi 0, %s286
      %s288 = sphi 0, %s286
      %s289 = sphi 0, %s288
      %s303 = sphi 0, %s289
      %s307 = sphi 0, %s307
      %s309 = sphi 0, %s307
      %s310 = sphi 0, %s309
      %s324 = sphi 0, %s310
      %s332 = sphi 0, %s334
      %s335 = sphi 0, %s332
      %s336 = sphi 0, %s335
      %s352 = sphi 0, %s336
    $region4: #{tpu_custom_call.1} parent=1 // loop_header_branch
      %31 = sbr.rel (%p29) target = $region8
    $region5: #{tpu_custom_call.1} parent=1 // loop_body
      %s33 = ssub.s32 %s28, 1
      %s34 = ssub.s32 %s28, 2
      %s41 = sadd.s32 1, %s36
      %p42 = scmp.ge.s32.totalorder %s41, 1
      %s43 = scalar_select %p42, 0, %s41
      %s44 = sadd.s32 1, %s35
      %s45 = scalar_select %p42, %s44, %s35
      %p46 = scmp.ge.s32.totalorder %s45, 2
      %s47 = scalar_select %p46, 0, %s45
      %s48 = ssub.s32 %s35, %s47
      %s49 = ssub.s32 %s36, %s43
      %s50 = sor.u32 %s48, %s49
      %p51 = scmp.eq.s32.totalorder %s50, 0
      %s53 = sadd.s32 %s52, 1
      %s54 = scalar_select %p51, %s52, %s53
      %p57 = pneg %p51
      %p58 = scmp.eq.s32.totalorder %s28, 1
      %p59 = por %p57, %p58
      %p60 = scmp.ne.s32.totalorder %s52, %s55
      %p61 = scmp.eq.s32.totalorder %s28, 0
      %p62 = por %p60, %p61
      %p63 = scmp.ne.s32.totalorder %s52, %s55
      %p64 = scmp.eq.s32.totalorder %s33, 1
      %p65 = por %p63, %p64
      %p66 = scmp.ne.s32.totalorder %s55, %s56
      %p67 = scmp.eq.s32.totalorder %s33, 0
      %p68 = por %p66, %p67
      %p69 = scmp.ne.s32.totalorder %s55, %s56
      %p70 = scmp.eq.s32.totalorder %s34, 1
      %p71 = por %p69, %p70
      %p73 = scmp.ne.s32.totalorder %s56, %s72
      %p74 = scmp.eq.s32.totalorder %s34, 0
      %p75 = por %p73, %p74
      %s77 = sadd.s32 %s76, 1
      %p80 = scmp.eq.s32.totalorder %s28, 1
      %p81 = scmp.ne.s32.totalorder %s76, %s78
      %p82 = scmp.eq.s32.totalorder %s28, 0
      %p83 = por %p81, %p82
      %p84 = scmp.ne.s32.totalorder %s76, %s78
      %p85 = scmp.eq.s32.totalorder %s33, 1
      %p86 = por %p84, %p85
      %p87 = scmp.ne.s32.totalorder %s78, %s79
      %p88 = scmp.eq.s32.totalorder %s33, 0
      %p89 = por %p87, %p88
      %p90 = scmp.ne.s32.totalorder %s78, %s79
      %p91 = scmp.eq.s32.totalorder %s34, 1
      %p92 = por %p90, %p91
      %p94 = scmp.ne.s32.totalorder %s79, %s93
      %p95 = scmp.eq.s32.totalorder %s34, 0
      %p96 = por %p94, %p95
      %s98 = sadd.s32 %s97, 1
      %p101 = scmp.eq.s32.totalorder %s28, 1
      %p102 = scmp.ne.s32.totalorder %s97, %s99
      %p103 = scmp.eq.s32.totalorder %s28, 0
      %p104 = por %p102, %p103
      %p105 = scmp.ne.s32.totalorder %s97, %s99
      %p106 = scmp.eq.s32.totalorder %s33, 1
      %p107 = por %p105, %p106
      %p108 = scmp.ne.s32.totalorder %s99, %s100
      %p109 = scmp.eq.s32.totalorder %s33, 0
      %p110 = por %p108, %p109
      %p111 = scmp.ne.s32.totalorder %s99, %s100
      %p112 = scmp.eq.s32.totalorder %s34, 1
      %p113 = por %p111, %p112
      %p115 = scmp.ne.s32.totalorder %s100, %s114
      %p116 = scmp.eq.s32.totalorder %s34, 0
      %p117 = por %p115, %p116
      %s119 = sadd.s32 %s118, 1
      %p122 = scmp.eq.s32.totalorder %s28, 1
      %p123 = scmp.ne.s32.totalorder %s118, %s120
      %p124 = scmp.eq.s32.totalorder %s28, 0
      %p125 = por %p123, %p124
      %p126 = scmp.ne.s32.totalorder %s118, %s120
      %p127 = scmp.eq.s32.totalorder %s33, 1
      %p128 = por %p126, %p127
      %p129 = scmp.ne.s32.totalorder %s120, %s121
      %p130 = scmp.eq.s32.totalorder %s33, 0
      %p131 = por %p129, %p130
      %p132 = scmp.ne.s32.totalorder %s120, %s121
      %p133 = scmp.eq.s32.totalorder %s34, 1
      %p134 = por %p132, %p133
      %p136 = scmp.ne.s32.totalorder %s121, %s135
      %p137 = scmp.eq.s32.totalorder %s34, 0
      %p138 = por %p136, %p137
      %s140 = sadd.s32 %s139, 1
      %p143 = scmp.eq.s32.totalorder %s28, 1
      %p144 = scmp.ne.s32.totalorder %s139, %s141
      %p145 = scmp.eq.s32.totalorder %s28, 0
      %p146 = por %p144, %p145
      %p147 = scmp.ne.s32.totalorder %s139, %s141
      %p148 = scmp.eq.s32.totalorder %s33, 1
      %p149 = por %p147, %p148
      %p150 = scmp.ne.s32.totalorder %s141, %s142
      %p151 = scmp.eq.s32.totalorder %s33, 0
      %p152 = por %p150, %p151
      %p153 = scmp.ne.s32.totalorder %s141, %s142
      %p154 = scmp.eq.s32.totalorder %s34, 1
      %p155 = por %p153, %p154
      %p157 = scmp.ne.s32.totalorder %s142, %s156
      %p158 = scmp.eq.s32.totalorder %s34, 0
      %p159 = por %p157, %p158
      %s161 = sadd.s32 %s160, 1
      %p164 = scmp.eq.s32.totalorder %s28, 1
      %p165 = scmp.ne.s32.totalorder %s160, %s162
      %p166 = scmp.eq.s32.totalorder %s28, 0
      %p167 = por %p165, %p166
      %p168 = scmp.ne.s32.totalorder %s160, %s162
      %p169 = scmp.eq.s32.totalorder %s33, 1
      %p170 = por %p168, %p169
      %p171 = scmp.ne.s32.totalorder %s162, %s163
      %p172 = scmp.eq.s32.totalorder %s33, 0
      %p173 = por %p171, %p172
      %p174 = scmp.ne.s32.totalorder %s162, %s163
      %p175 = scmp.eq.s32.totalorder %s34, 1
      %p176 = por %p174, %p175
      %p178 = scmp.ne.s32.totalorder %s163, %s177
      %p179 = scmp.eq.s32.totalorder %s34, 0
      %p180 = por %p178, %p179
      %s182 = sadd.s32 %s181, 1
      %p185 = scmp.eq.s32.totalorder %s28, 1
      %p186 = scmp.ne.s32.totalorder %s181, %s183
      %p187 = scmp.eq.s32.totalorder %s28, 0
      %p188 = por %p186, %p187
      %p189 = scmp.ne.s32.totalorder %s181, %s183
      %p190 = scmp.eq.s32.totalorder %s33, 1
      %p191 = por %p189, %p190
      %p192 = scmp.ne.s32.totalorder %s183, %s184
      %p193 = scmp.eq.s32.totalorder %s33, 0
      %p194 = por %p192, %p193
      %p195 = scmp.ne.s32.totalorder %s183, %s184
      %p196 = scmp.eq.s32.totalorder %s34, 1
      %p197 = por %p195, %p196
      %p199 = scmp.ne.s32.totalorder %s184, %s198
      %p200 = scmp.eq.s32.totalorder %s34, 0
      %p201 = por %p199, %p200
      %s203 = sadd.s32 %s202, 1
      %p206 = scmp.eq.s32.totalorder %s28, 1
      %p207 = scmp.ne.s32.totalorder %s202, %s204
      %p208 = scmp.eq.s32.totalorder %s28, 0
      %p209 = por %p207, %p208
      %p210 = scmp.ne.s32.totalorder %s202, %s204
      %p211 = scmp.eq.s32.totalorder %s33, 1
      %p212 = por %p210, %p211
      %p213 = scmp.ne.s32.totalorder %s204, %s205
      %p214 = scmp.eq.s32.totalorder %s33, 0
      %p215 = por %p213, %p214
      %p216 = scmp.ne.s32.totalorder %s204, %s205
      %p217 = scmp.eq.s32.totalorder %s34, 1
      %p218 = por %p216, %p217
      %p220 = scmp.ne.s32.totalorder %s205, %s219
      %p221 = scmp.eq.s32.totalorder %s34, 0
      %p222 = por %p220, %p221
      %s224 = sadd.s32 %s223, 1
      %p227 = scmp.eq.s32.totalorder %s28, 1
      %p228 = scmp.ne.s32.totalorder %s223, %s225
      %p229 = scmp.eq.s32.totalorder %s28, 0
      %p230 = por %p228, %p229
      %p231 = scmp.ne.s32.totalorder %s223, %s225
      %p232 = scmp.eq.s32.totalorder %s33, 1
      %p233 = por %p231, %p232
      %p234 = scmp.ne.s32.totalorder %s225, %s226
      %p235 = scmp.eq.s32.totalorder %s33, 0
      %p236 = por %p234, %p235
      %p237 = scmp.ne.s32.totalorder %s225, %s226
      %p238 = scmp.eq.s32.totalorder %s34, 1
      %p239 = por %p237, %p238
      %p241 = scmp.ne.s32.totalorder %s226, %s240
      %p242 = scmp.eq.s32.totalorder %s34, 0
      %p243 = por %p241, %p242
      %s245 = sadd.s32 %s244, 1
      %p248 = scmp.eq.s32.totalorder %s28, 1
      %p249 = scmp.ne.s32.totalorder %s244, %s246
      %p250 = scmp.eq.s32.totalorder %s28, 0
      %p251 = por %p249, %p250
      %p252 = scmp.ne.s32.totalorder %s244, %s246
      %p253 = scmp.eq.s32.totalorder %s33, 1
      %p254 = por %p252, %p253
      %p255 = scmp.ne.s32.totalorder %s246, %s247
      %p256 = scmp.eq.s32.totalorder %s33, 0
      %p257 = por %p255, %p256
      %p258 = scmp.ne.s32.totalorder %s246, %s247
      %p259 = scmp.eq.s32.totalorder %s34, 1
      %p260 = por %p258, %p259
      %p262 = scmp.ne.s32.totalorder %s247, %s261
      %p263 = scmp.eq.s32.totalorder %s34, 0
      %p264 = por %p262, %p263
      %s266 = sadd.s32 %s265, 1
      %p269 = scmp.eq.s32.totalorder %s28, 1
      %p270 = scmp.ne.s32.totalorder %s265, %s267
      %p271 = scmp.eq.s32.totalorder %s28, 0
      %p272 = por %p270, %p271
      %p273 = scmp.ne.s32.totalorder %s265, %s267
      %p274 = scmp.eq.s32.totalorder %s33, 1
      %p275 = por %p273, %p274
      %p276 = scmp.ne.s32.totalorder %s267, %s268
      %p277 = scmp.eq.s32.totalorder %s33, 0
      %p278 = por %p276, %p277
      %p279 = scmp.ne.s32.totalorder %s267, %s268
      %p280 = scmp.eq.s32.totalorder %s34, 1
      %p281 = por %p279, %p280
      %p283 = scmp.ne.s32.totalorder %s268, %s282
      %p284 = scmp.eq.s32.totalorder %s34, 0
      %p285 = por %p283, %p284
      %s287 = sadd.s32 %s286, 1
      %p290 = scmp.eq.s32.totalorder %s28, 1
      %p291 = scmp.ne.s32.totalorder %s286, %s288
      %p292 = scmp.eq.s32.totalorder %s28, 0
      %p293 = por %p291, %p292
      %p294 = scmp.ne.s32.totalorder %s286, %s288
      %p295 = scmp.eq.s32.totalorder %s33, 1
      %p296 = por %p294, %p295
      %p297 = scmp.ne.s32.totalorder %s288, %s289
      %p298 = scmp.eq.s32.totalorder %s33, 0
      %p299 = por %p297, %p298
      %p300 = scmp.ne.s32.totalorder %s288, %s289
      %p301 = scmp.eq.s32.totalorder %s34, 1
      %p302 = por %p300, %p301
      %p304 = scmp.ne.s32.totalorder %s289, %s303
      %p305 = scmp.eq.s32.totalorder %s34, 0
      %p306 = por %p304, %p305
      %s308 = sadd.s32 %s307, 1
      %p311 = scmp.eq.s32.totalorder %s28, 1
      %p312 = scmp.ne.s32.totalorder %s307, %s309
      %p313 = scmp.eq.s32.totalorder %s28, 0
      %p314 = por %p312, %p313
      %p315 = scmp.ne.s32.totalorder %s307, %s309
      %p316 = scmp.eq.s32.totalorder %s33, 1
      %p317 = por %p315, %p316
      %p318 = scmp.ne.s32.totalorder %s309, %s310
      %p319 = scmp.eq.s32.totalorder %s33, 0
      %p320 = por %p318, %p319
      %p321 = scmp.ne.s32.totalorder %s309, %s310
      %p322 = scmp.eq.s32.totalorder %s34, 1
      %p323 = por %p321, %p322
      %p325 = scmp.ne.s32.totalorder %s310, %s324
      %p326 = scmp.eq.s32.totalorder %s34, 0
      %p327 = por %p325, %p326
      %s328 = ssub.s32 %s35, %s47
      %s329 = ssub.s32 %s36, %s43
      %s330 = sor.u32 %s328, %s329
      %p331 = scmp.eq.s32.totalorder %s330, 0
      %s333 = sadd.s32 %s332, 1
      %s334 = scalar_select %p331, %s332, %s333
      %p337 = pneg %p331
      %p338 = scmp.eq.s32.totalorder %s28, 1
      %p339 = por %p337, %p338
      %p340 = scmp.ne.s32.totalorder %s332, %s335
      %p341 = scmp.eq.s32.totalorder %s28, 0
      %p342 = por %p340, %p341
      %p343 = scmp.ne.s32.totalorder %s332, %s335
      %p344 = scmp.eq.s32.totalorder %s33, 1
      %p345 = por %p343, %p344
      %p346 = scmp.ne.s32.totalorder %s335, %s336
      %p347 = scmp.eq.s32.totalorder %s33, 0
      %p348 = por %p346, %p347
      %p349 = scmp.ne.s32.totalorder %s335, %s336
      %p350 = scmp.eq.s32.totalorder %s34, 1
      %p351 = por %p349, %p350
      %p353 = scmp.ne.s32.totalorder %s336, %s352
      %p354 = scmp.eq.s32.totalorder %s34, 0
      %p355 = por %p353, %p354
      %p356 = scmp.le.s32.totalorder 1, %s28
      %p357 = scmp.lt.s32.totalorder %s28, 3
      %p358 = pnand %p356, %p357
      %p359 = pneg %p358
      // Predicated region
      $region9: #{tpu_custom_call.1} parent=5 // pred_check
        _
      $region10: #{tpu_custom_call.1} parent=5 // pred_check_branch
        %361 = sbr.rel (%p358) target = $region12
      $region11: #{tpu_custom_call.1} parent=5 // pred_region
        %s362 = ssub.s32 %s28, 1
        // Predicated region
        $region13: #{tpu_custom_call.1} parent=11 // pred_check
          %p363 = pneg %p89
        $region14: #{tpu_custom_call.1} parent=11 // pred_check_branch
          %365 = sbr.rel (%p363) target = $region16
        $region15: #{tpu_custom_call.1} parent=11 // pred_region
          %s367 = ssub.s32 12288, 12288
          %368 = vsyncadd [#allocation8], %s367
          %s369 = sshll.u32 [#allocation7], 4
          %s370 = int_to_ptr.vmem [resolvable:$true] %s369
          %375 = dma.hbm_to_vmem [thread:$0]  %s1, 12288, %s370, [#allocation8], 384, 384, 24
        $region16: #{tpu_custom_call.1} parent=11 // pred_fallthru
          _
        // Predicated region
        $region17: #{tpu_custom_call.1} parent=11 // pred_check
          %p376 = pneg %p110
        $region18: #{tpu_custom_call.1} parent=11 // pred_check_branch
          %378 = sbr.rel (%p376) target = $region20
        $region19: #{tpu_custom_call.1} parent=11 // pred_region
          %s380 = ssub.s32 96, 96
          %381 = vsyncadd [#allocation8], %s380
          %s383 = sshll.u32 [#allocation9], 4
          %s384 = int_to_ptr.vmem [resolvable:$true] %s383
          %386 = dma.hbm_to_vmem [thread:$0]  %s2, 96, %s384, [#allocation8]
        $region20: #{tpu_custom_call.1} parent=11 // pred_fallthru
          _
        // Predicated region
        $region21: #{tpu_custom_call.1} parent=11 // pred_check
          %p387 = pneg %p131
        $region22: #{tpu_custom_call.1} parent=11 // pred_check_branch
          %389 = sbr.rel (%p387) target = $region24
        $region23: #{tpu_custom_call.1} parent=11 // pred_region
          %s391 = ssub.s32 4096, 4096
          %392 = vsyncadd [#allocation11], %s391
          %s393 = sshll.u32 [#allocation10], 4
          %s394 = int_to_ptr.vmem [resolvable:$true] %s393
          %399 = dma.hbm_to_vmem [thread:$0]  %s3, 4096, %s394, [#allocation11], 128, 128, 8
        $region24: #{tpu_custom_call.1} parent=11 // pred_fallthru
          _
        // Predicated region
        $region25: #{tpu_custom_call.1} parent=11 // pred_check
          %p400 = pneg %p152
        $region26: #{tpu_custom_call.1} parent=11 // pred_check_branch
          %402 = sbr.rel (%p400) target = $region28
        $region27: #{tpu_custom_call.1} parent=11 // pred_region
          _
        $region28: #{tpu_custom_call.1} parent=11 // pred_fallthru
          _
        // Predicated region
        $region29: #{tpu_custom_call.1} parent=11 // pred_check
          %p403 = pneg %p173
        $region30: #{tpu_custom_call.1} parent=11 // pred_check_branch
          %405 = sbr.rel (%p403) target = $region32
        $region31: #{tpu_custom_call.1} parent=11 // pred_region
          _
        $region32: #{tpu_custom_call.1} parent=11 // pred_fallthru
          _
        // Predicated region
        $region33: #{tpu_custom_call.1} parent=11 // pred_check
          %p406 = pneg %p194
        $region34: #{tpu_custom_call.1} parent=11 // pred_check_branch
          %408 = sbr.rel (%p406) target = $region36
        $region35: #{tpu_custom_call.1} parent=11 // pred_region
          _
        $region36: #{tpu_custom_call.1} parent=11 // pred_fallthru
          _
        // Predicated region
        $region37: #{tpu_custom_call.1} parent=11 // pred_check
          %p409 = pneg %p215
        $region38: #{tpu_custom_call.1} parent=11 // pred_check_branch
          %411 = sbr.rel (%p409) target = $region40
        $region39: #{tpu_custom_call.1} parent=11 // pred_region
          %s413 = ssub.s32 16384, 16384
          %414 = vsyncadd [#allocation11], %s413
          %s415 = sshll.u32 [#allocation12], 4
          %s416 = int_to_ptr.vmem [resolvable:$true] %s415
          %421 = dma.hbm_to_vmem [thread:$0]  %s7, 16384, %s416, [#allocation11], 512, 512, 32
        $region40: #{tpu_custom_call.1} parent=11 // pred_fallthru
          _
        // Predicated region
        $region41: #{tpu_custom_call.1} parent=11 // pred_check
          %p422 = pneg %p236
        $region42: #{tpu_custom_call.1} parent=11 // pred_check_branch
          %424 = sbr.rel (%p422) target = $region44
        $region43: #{tpu_custom_call.1} parent=11 // pred_region
          _
        $region44: #{tpu_custom_call.1} parent=11 // pred_fallthru
          _
        // Predicated region
        $region45: #{tpu_custom_call.1} parent=11 // pred_check
          %p425 = pneg %p257
        $region46: #{tpu_custom_call.1} parent=11 // pred_check_branch
          %427 = sbr.rel (%p425) target = $region48
        $region47: #{tpu_custom_call.1} parent=11 // pred_region
          %s429 = ssub.s32 16384, 16384
          %430 = vsyncadd [#allocation14], %s429
          %s431 = sshll.u32 [#allocation13], 4
          %s432 = int_to_ptr.vmem [resolvable:$true] %s431
          %437 = dma.hbm_to_vmem [thread:$0]  %s9, 16384, %s432, [#allocation14], 128, 128, 8
        $region48: #{tpu_custom_call.1} parent=11 // pred_fallthru
          _
        // Predicated region
        $region49: #{tpu_custom_call.1} parent=11 // pred_check
          %p438 = pneg %p278
        $region50: #{tpu_custom_call.1} parent=11 // pred_check_branch
          %440 = sbr.rel (%p438) target = $region52
        $region51: #{tpu_custom_call.1} parent=11 // pred_region
          _
        $region52: #{tpu_custom_call.1} parent=11 // pred_fallthru
          _
        // Predicated region
        $region53: #{tpu_custom_call.1} parent=11 // pred_check
          %p441 = pneg %p299
        $region54: #{tpu_custom_call.1} parent=11 // pred_check_branch
          %443 = sbr.rel (%p441) target = $region56
        $region55: #{tpu_custom_call.1} parent=11 // pred_region
          _
        $region56: #{tpu_custom_call.1} parent=11 // pred_fallthru
          _
        // Predicated region
        $region57: #{tpu_custom_call.1} parent=11 // pred_check
          %p444 = pneg %p320
        $region58: #{tpu_custom_call.1} parent=11 // pred_check_branch
          %446 = sbr.rel (%p444) target = $region60
        $region59: #{tpu_custom_call.1} parent=11 // pred_region
          _
        $region60: #{tpu_custom_call.1} parent=11 // pred_fallthru
          _
      $region12: #{tpu_custom_call.1} parent=5 // pred_fallthru
        _
      %p447 = scmp.lt.s32.totalorder %s28, 2
      // Predicated region
      $region61: #{tpu_custom_call.1} parent=5 // pred_check
        %p448 = pneg %p447
      $region62: #{tpu_custom_call.1} parent=5 // pred_check_branch
        %450 = sbr.rel (%p448) target = $region64
      $region63: #{tpu_custom_call.1} parent=5 // pred_region
        // Predicated region
        $region65: #{tpu_custom_call.1} parent=63 // pred_check
          %p451 = pneg %p62
        $region66: #{tpu_custom_call.1} parent=63 // pred_check_branch
          %453 = sbr.rel (%p451) target = $region68
        $region67: #{tpu_custom_call.1} parent=63 // pred_region
          %s454 = sand.u32 %s52, 1
          %s455 = scalar_lea.sflag [#allocation5], %s454
          %s456 = sand.u32 %s52, 1
          %s457 = smul.addr %s456, 256
          %s458 = scalar_lea.vmem [#allocation4], %s457
          %s459 = smul.u32 16, %s36
          %s461 = ssub.s32 4096, 4096
          %462 = vsyncadd %s455, %s461
          %s463 = smul.addr %s459, 2
          %s464 = smul.addr %s35, 32
          %s465 = sadd.s32 %s463, %s464
          %s466 = smul.addr %s465, 128
          %s467 = scalar_lea.hbm %s0, %s466
          %s468 = sshll.u32 %s458, 4
          %s469 = int_to_ptr.vmem [resolvable:$true] %s468
          %474 = dma.hbm_to_vmem [thread:$0]  %s467, 4096, %s469, %s455, 256, 256, 16
        $region68: #{tpu_custom_call.1} parent=63 // pred_fallthru
          _
      $region64: #{tpu_custom_call.1} parent=5 // pred_fallthru
        _
      %p475 = scmp.le.s32.totalorder 1, %s28
      %p476 = scmp.lt.s32.totalorder %s28, 3
      %p477 = pnand %p475, %p476
      %p478 = pneg %p477
      // Predicated region
      $region69: #{tpu_custom_call.1} parent=5 // pred_check
        _
      $region70: #{tpu_custom_call.1} parent=5 // pred_check_branch
        %480 = sbr.rel (%p477) target = $region72
      $region71: #{tpu_custom_call.1} parent=5 // pred_region
        %s481 = ssub.s32 %s28, 1
        %s482 = sand.u32 %s55, 1
        %s483 = scalar_lea.sflag [#allocation5], %s482
        %s484 = sand.u32 %s55, 1
        %s485 = smul.addr %s484, 256
        %s486 = scalar_lea.vmem [#allocation4], %s485
        // Predicated region
        $region73: #{tpu_custom_call.1} parent=71 // pred_check
          %p487 = pneg %p68
        $region74: #{tpu_custom_call.1} parent=71 // pred_check_branch
          %489 = sbr.rel (%p487) target = $region76
        $region75: #{tpu_custom_call.1} parent=71 // pred_region
          %490 = dma.done %s483, 4096
        $region76: #{tpu_custom_call.1} parent=71 // pred_fallthru
          _
        // Predicated region
        $region77: #{tpu_custom_call.1} parent=71 // pred_check
          %p491 = pneg %p89
        $region78: #{tpu_custom_call.1} parent=71 // pred_check_branch
          %493 = sbr.rel (%p491) target = $region80
        $region79: #{tpu_custom_call.1} parent=71 // pred_region
          %494 = dma.done [#allocation8], 12288
        $region80: #{tpu_custom_call.1} parent=71 // pred_fallthru
          _
        // Predicated region
        $region81: #{tpu_custom_call.1} parent=71 // pred_check
          %p495 = pneg %p110
        $region82: #{tpu_custom_call.1} parent=71 // pred_check_branch
          %497 = sbr.rel (%p495) target = $region84
        $region83: #{tpu_custom_call.1} parent=71 // pred_region
          %498 = dma.done [#allocation8], 96
        $region84: #{tpu_custom_call.1} parent=71 // pred_fallthru
          _
        // Predicated region
        $region85: #{tpu_custom_call.1} parent=71 // pred_check
          %p499 = pneg %p131
        $region86: #{tpu_custom_call.1} parent=71 // pred_check_branch
          %501 = sbr.rel (%p499) target = $region88
        $region87: #{tpu_custom_call.1} parent=71 // pred_region
          %502 = dma.done [#allocation11], 4096
        $region88: #{tpu_custom_call.1} parent=71 // pred_fallthru
          _
        // Predicated region
        $region89: #{tpu_custom_call.1} parent=71 // pred_check
          %p503 = pneg %p215
        $region90: #{tpu_custom_call.1} parent=71 // pred_check_branch
          %505 = sbr.rel (%p503) target = $region92
        $region91: #{tpu_custom_call.1} parent=71 // pred_region
          %506 = dma.done [#allocation11], 16384
        $region92: #{tpu_custom_call.1} parent=71 // pred_fallthru
          _
        // Predicated region
        $region93: #{tpu_custom_call.1} parent=71 // pred_check
          %p507 = pneg %p257
        $region94: #{tpu_custom_call.1} parent=71 // pred_check_branch
          %509 = sbr.rel (%p507) target = $region96
        $region95: #{tpu_custom_call.1} parent=71 // pred_region
          %510 = dma.done [#allocation14], 16384
        $region96: #{tpu_custom_call.1} parent=71 // pred_fallthru
          _
        %s511 = sand.u32 %s55, 1
        %s512 = scalar_lea.sflag [#allocation5], %s511
        %s513 = sand.u32 %s55, 1
        %s514 = smul.addr %s513, 256
        %s515 = scalar_lea.vmem [#allocation4], %s514
        %p516 = pneg %p68
        %p517 = pneg %p65
        %p518 = pneg %p89
        %p519 = pneg %p86
        %p520 = pneg %p110
        %p521 = pneg %p107
        %p522 = pneg %p131
        %p523 = pneg %p128
        %p524 = pneg %p152
        %p525 = pneg %p149
        %p526 = pneg %p173
        %p527 = pneg %p170
        %p528 = pneg %p194
        %p529 = pneg %p191
        %p530 = pneg %p215
        %p531 = pneg %p212
        %p532 = pneg %p236
        %p533 = pneg %p233
        %p534 = pneg %p257
        %p535 = pneg %p254
        %p536 = pneg %p278
        %p537 = pneg %p275
        %p538 = pneg %p299
        %p539 = pneg %p296
        %p540 = pneg %p320
        %p541 = pneg %p317
        %p542 = pneg %p348
        %p543 = pneg %p345
        %s544 = sand.u32 %s335, 1
        %s545 = scalar_lea.sflag [#allocation6], %s544
        %s546 = sand.u32 %s335, 1
        %s547 = smul.addr %s546, 256
        %s548 = scalar_lea.vmem [#allocation15], %s547
        %s549 = smul.u32 16, %s38
        %s550 = smul.u32 16, %s38
        %v552 = vld [vmem:[%s486] sm:$0xff]
        %v553 = vld [vmem:[%s486 + $0x8] sm:$0xff]
        %v554 = vld [vmem:[%s486 + $0x10] sm:$0xff]
        %v555 = vld [vmem:[%s486 + $0x18] sm:$0xff]
        %v556 = vld [vmem:[%s486 + $0x20] sm:$0xff]
        %v557 = vld [vmem:[%s486 + $0x28] sm:$0xff]
        %v558 = vld [vmem:[%s486 + $0x30] sm:$0xff]
        %v559 = vld [vmem:[%s486 + $0x38] sm:$0xff]
        %v560 = vld [vmem:[%s486 + $0x40] sm:$0xff]
        %v561 = vld [vmem:[%s486 + $0x48] sm:$0xff]
        %v562 = vld [vmem:[%s486 + $0x50] sm:$0xff]
        %v563 = vld [vmem:[%s486 + $0x58] sm:$0xff]
        %v564 = vld [vmem:[%s486 + $0x60] sm:$0xff]
        %v565 = vld [vmem:[%s486 + $0x68] sm:$0xff]
        %v566 = vld [vmem:[%s486 + $0x70] sm:$0xff]
        %v567 = vld [vmem:[%s486 + $0x78] sm:$0xff]
        %v568 = vld [vmem:[%s486 + $0x80] sm:$0xff]
        %v569 = vld [vmem:[%s486 + $0x88] sm:$0xff]
        %v570 = vld [vmem:[%s486 + $0x90] sm:$0xff]
        %v571 = vld [vmem:[%s486 + $0x98] sm:$0xff]
        %v572 = vld [vmem:[%s486 + $0xa0] sm:$0xff]
        %v573 = vld [vmem:[%s486 + $0xa8] sm:$0xff]
        %v574 = vld [vmem:[%s486 + $0xb0] sm:$0xff]
        %v575 = vld [vmem:[%s486 + $0xb8] sm:$0xff]
        %v576 = vld [vmem:[%s486 + $0xc0] sm:$0xff]
        %v577 = vld [vmem:[%s486 + $0xc8] sm:$0xff]
        %v578 = vld [vmem:[%s486 + $0xd0] sm:$0xff]
        %v579 = vld [vmem:[%s486 + $0xd8] sm:$0xff]
        %v580 = vld [vmem:[%s486 + $0xe0] sm:$0xff]
        %v581 = vld [vmem:[%s486 + $0xe8] sm:$0xff]
        %v582 = vld [vmem:[%s486 + $0xf0] sm:$0xff]
        %v583 = vld [vmem:[%s486 + $0xf8] sm:$0xff]
        %v584 = vpack.c.bf16 %v554, %v552
        %v585 = vpack.c.bf16 %v555, %v553
        %v586 = vpack.c.bf16 %v558, %v556
        %v587 = vpack.c.bf16 %v559, %v557
        %v588 = vpack.c.bf16 %v562, %v560
        %v589 = vpack.c.bf16 %v563, %v561
        %v590 = vpack.c.bf16 %v566, %v564
        %v591 = vpack.c.bf16 %v567, %v565
        %v592 = vpack.c.bf16 %v570, %v568
        %v593 = vpack.c.bf16 %v571, %v569
        %v594 = vpack.c.bf16 %v574, %v572
        %v595 = vpack.c.bf16 %v575, %v573
        %v596 = vpack.c.bf16 %v578, %v576
        %v597 = vpack.c.bf16 %v579, %v577
        %v598 = vpack.c.bf16 %v582, %v580
        %v599 = vpack.c.bf16 %v583, %v581
        %v600 = vld [vmem:[#allocation7] sm:$0xff]
        %v601 = vld [vmem:[#allocation7 + $0x8] sm:$0xff]
        %v602 = vld [vmem:[#allocation7 + $0x10] sm:$0xff]
        %v603 = vld [vmem:[#allocation7 + $0x18] sm:$0xff]
        %v604 = vld [vmem:[#allocation7 + $0x20] sm:$0xff]
        %v605 = vld [vmem:[#allocation7 + $0x28] sm:$0xff]
        %v606 = vld [vmem:[#allocation7 + $0x30] sm:$0xff]
        %v607 = vld [vmem:[#allocation7 + $0x38] sm:$0xff]
        %v608 = vld [vmem:[#allocation7 + $0x40] sm:$0xff]
        %v609 = vld [vmem:[#allocation7 + $0x48] sm:$0xff]
        %v610 = vld [vmem:[#allocation7 + $0x50] sm:$0xff]
        %v611 = vld [vmem:[#allocation7 + $0x58] sm:$0xff]
        %v612 = vld [vmem:[#allocation7 + $0x60] sm:$0xff]
        %v613 = vld [vmem:[#allocation7 + $0x68] sm:$0xff]
        %v614 = vld [vmem:[#allocation7 + $0x70] sm:$0xff]
        %v615 = vld [vmem:[#allocation7 + $0x78] sm:$0xff]
        %v616 = vld [vmem:[#allocation7 + $0x80] sm:$0xff]
        %v617 = vld [vmem:[#allocation7 + $0x88] sm:$0xff]
        %v618 = vld [vmem:[#allocation7 + $0x90] sm:$0xff]
        %v619 = vld [vmem:[#allocation7 + $0x98] sm:$0xff]
        %v620 = vld [vmem:[#allocation7 + $0xa0] sm:$0xff]
        %v621 = vld [vmem:[#allocation7 + $0xa8] sm:$0xff]
        %v622 = vld [vmem:[#allocation7 + $0xb0] sm:$0xff]
        %v623 = vld [vmem:[#allocation7 + $0xb8] sm:$0xff]
        %v624 = vld [vmem:[#allocation7 + $0xc0] sm:$0xff]
        %v625 = vld [vmem:[#allocation7 + $0xc8] sm:$0xff]
        %v626 = vld [vmem:[#allocation7 + $0xd0] sm:$0xff]
        %v627 = vld [vmem:[#allocation7 + $0xd8] sm:$0xff]
        %v628 = vld [vmem:[#allocation7 + $0xe0] sm:$0xff]
        %v629 = vld [vmem:[#allocation7 + $0xe8] sm:$0xff]
        %v630 = vld [vmem:[#allocation7 + $0xf0] sm:$0xff]
        %v631 = vld [vmem:[#allocation7 + $0xf8] sm:$0xff]
        %v632 = vld [vmem:[#allocation7 + $0x100] sm:$0xff]
        %v633 = vld [vmem:[#allocation7 + $0x108] sm:$0xff]
        %v634 = vld [vmem:[#allocation7 + $0x110] sm:$0xff]
        %v635 = vld [vmem:[#allocation7 + $0x118] sm:$0xff]
        %v636 = vld [vmem:[#allocation7 + $0x120] sm:$0xff]
        %v637 = vld [vmem:[#allocation7 + $0x128] sm:$0xff]
        %v638 = vld [vmem:[#allocation7 + $0x130] sm:$0xff]
        %v639 = vld [vmem:[#allocation7 + $0x138] sm:$0xff]
        %v640 = vld [vmem:[#allocation7 + $0x140] sm:$0xff]
        %v641 = vld [vmem:[#allocation7 + $0x148] sm:$0xff]
        %v642 = vld [vmem:[#allocation7 + $0x150] sm:$0xff]
        %v643 = vld [vmem:[#allocation7 + $0x158] sm:$0xff]
        %v644 = vld [vmem:[#allocation7 + $0x160] sm:$0xff]
        %v645 = vld [vmem:[#allocation7 + $0x168] sm:$0xff]
        %v646 = vld [vmem:[#allocation7 + $0x170] sm:$0xff]
        %v647 = vld [vmem:[#allocation7 + $0x178] sm:$0xff]
        %v648 = vld [vmem:[#allocation7 + $0x180] sm:$0xff]
        %v649 = vld [vmem:[#allocation7 + $0x188] sm:$0xff]
        %v650 = vld [vmem:[#allocation7 + $0x190] sm:$0xff]
        %v651 = vld [vmem:[#allocation7 + $0x198] sm:$0xff]
        %v652 = vld [vmem:[#allocation7 + $0x1a0] sm:$0xff]
        %v653 = vld [vmem:[#allocation7 + $0x1a8] sm:$0xff]
        %v654 = vld [vmem:[#allocation7 + $0x1b0] sm:$0xff]
        %v655 = vld [vmem:[#allocation7 + $0x1b8] sm:$0xff]
        %v656 = vld [vmem:[#allocation7 + $0x1c0] sm:$0xff]
        %v657 = vld [vmem:[#allocation7 + $0x1c8] sm:$0xff]
        %v658 = vld [vmem:[#allocation7 + $0x1d0] sm:$0xff]
        %v659 = vld [vmem:[#allocation7 + $0x1d8] sm:$0xff]
        %v660 = vld [vmem:[#allocation7 + $0x1e0] sm:$0xff]
        %v661 = vld [vmem:[#allocation7 + $0x1e8] sm:$0xff]
        %v662 = vld [vmem:[#allocation7 + $0x1f0] sm:$0xff]
        %v663 = vld [vmem:[#allocation7 + $0x1f8] sm:$0xff]
        %v664 = vld [vmem:[#allocation7 + $0x200] sm:$0xff]
        %v665 = vld [vmem:[#allocation7 + $0x208] sm:$0xff]
        %v666 = vld [vmem:[#allocation7 + $0x210] sm:$0xff]
        %v667 = vld [vmem:[#allocation7 + $0x218] sm:$0xff]
        %v668 = vld [vmem:[#allocation7 + $0x220] sm:$0xff]
        %v669 = vld [vmem:[#allocation7 + $0x228] sm:$0xff]
        %v670 = vld [vmem:[#allocation7 + $0x230] sm:$0xff]
        %v671 = vld [vmem:[#allocation7 + $0x238] sm:$0xff]
        %v672 = vld [vmem:[#allocation7 + $0x240] sm:$0xff]
        %v673 = vld [vmem:[#allocation7 + $0x248] sm:$0xff]
        %v674 = vld [vmem:[#allocation7 + $0x250] sm:$0xff]
        %v675 = vld [vmem:[#allocation7 + $0x258] sm:$0xff]
        %v676 = vld [vmem:[#allocation7 + $0x260] sm:$0xff]
        %v677 = vld [vmem:[#allocation7 + $0x268] sm:$0xff]
        %v678 = vld [vmem:[#allocation7 + $0x270] sm:$0xff]
        %v679 = vld [vmem:[#allocation7 + $0x278] sm:$0xff]
        %v680 = vld [vmem:[#allocation7 + $0x280] sm:$0xff]
        %v681 = vld [vmem:[#allocation7 + $0x288] sm:$0xff]
        %v682 = vld [vmem:[#allocation7 + $0x290] sm:$0xff]
        %v683 = vld [vmem:[#allocation7 + $0x298] sm:$0xff]
        %v684 = vld [vmem:[#allocation7 + $0x2a0] sm:$0xff]
        %v685 = vld [vmem:[#allocation7 + $0x2a8] sm:$0xff]
        %v686 = vld [vmem:[#allocation7 + $0x2b0] sm:$0xff]
        %v687 = vld [vmem:[#allocation7 + $0x2b8] sm:$0xff]
        %v688 = vld [vmem:[#allocation7 + $0x2c0] sm:$0xff]
        %v689 = vld [vmem:[#allocation7 + $0x2c8] sm:$0xff]
        %v690 = vld [vmem:[#allocation7 + $0x2d0] sm:$0xff]
        %v691 = vld [vmem:[#allocation7 + $0x2d8] sm:$0xff]
        %v692 = vld [vmem:[#allocation7 + $0x2e0] sm:$0xff]
        %v693 = vld [vmem:[#allocation7 + $0x2e8] sm:$0xff]
        %v694 = vld [vmem:[#allocation7 + $0x2f0] sm:$0xff]
        %v695 = vld [vmem:[#allocation7 + $0x2f8] sm:$0xff]
        %v696 = vld [vmem:[#allocation9] sm:$0x3f]
        %v698 = vlaneseq
        %v699 = vshrl.u32 %v698, 7
        %v700 = vsub.s32 0, %v699
        %v701 = vrot.slane %v696, %v700
        %v702 = vlaneseq
        %v703 = vshrl.u32 %v702, 7
        %v704 = vsub.s32 1, %v703
        %v705 = vrot.slane %v696, %v704
        %v706 = vlaneseq
        %v707 = vshrl.u32 %v706, 7
        %v708 = vsub.s32 2, %v707
        %v709 = vrot.slane %v696, %v708
        %v710 = vlaneseq
        %v711 = vshrl.u32 %v710, 7
        %v712 = vsub.s32 3, %v711
        %v713 = vrot.slane %v696, %v712
        %v714 = vlaneseq
        %v715 = vshrl.u32 %v714, 7
        %v716 = vsub.s32 4, %v715
        %v717 = vrot.slane %v696, %v716
        %v718 = vlaneseq
        %v719 = vshrl.u32 %v718, 7
        %v720 = vsub.s32 5, %v719
        %v721 = vrot.slane %v696, %v720
        %v824 = vunpack.c.l.b16 %v600
        %v825 = vunpack.c.h.b16 %v600
        %v826 = vunpack.c.l.b16 %v601
        %v827 = vunpack.c.h.b16 %v601
        %v828 = vunpack.c.l.b16 %v602
        %v829 = vunpack.c.h.b16 %v602
        %v830 = vunpack.c.l.b16 %v603
        %v831 = vunpack.c.h.b16 %v603
        %v832 = vunpack.c.l.b16 %v604
        %v833 = vunpack.c.h.b16 %v604
        %v834 = vunpack.c.l.b16 %v605
        %v835 = vunpack.c.h.b16 %v605
        %v836 = vunpack.c.l.b16 %v606
        %v837 = vunpack.c.h.b16 %v606
        %v838 = vunpack.c.l.b16 %v607
        %v839 = vunpack.c.h.b16 %v607
        %v840 = vunpack.c.l.b16 %v608
        %v841 = vunpack.c.h.b16 %v608
        %v842 = vunpack.c.l.b16 %v609
        %v843 = vunpack.c.h.b16 %v609
        %v844 = vunpack.c.l.b16 %v610
        %v845 = vunpack.c.h.b16 %v610
        %v846 = vunpack.c.l.b16 %v611
        %v847 = vunpack.c.h.b16 %v611
        %v848 = vunpack.c.l.b16 %v612
        %v849 = vunpack.c.h.b16 %v612
        %v850 = vunpack.c.l.b16 %v613
        %v851 = vunpack.c.h.b16 %v613
        %v852 = vunpack.c.l.b16 %v614
        %v853 = vunpack.c.h.b16 %v614
        %v854 = vunpack.c.l.b16 %v615
        %v855 = vunpack.c.h.b16 %v615
        %v856 = vunpack.c.l.b16 %v616
        %v857 = vunpack.c.h.b16 %v616
        %v858 = vunpack.c.l.b16 %v617
        %v859 = vunpack.c.h.b16 %v617
        %v860 = vunpack.c.l.b16 %v618
        %v861 = vunpack.c.h.b16 %v618
        %v862 = vunpack.c.l.b16 %v619
        %v863 = vunpack.c.h.b16 %v619
        %v864 = vunpack.c.l.b16 %v620
        %v865 = vunpack.c.h.b16 %v620
        %v866 = vunpack.c.l.b16 %v621
        %v867 = vunpack.c.h.b16 %v621
        %v868 = vunpack.c.l.b16 %v622
        %v869 = vunpack.c.h.b16 %v622
        %v870 = vunpack.c.l.b16 %v623
        %v871 = vunpack.c.h.b16 %v623
        %v872 = vunpack.c.l.b16 %v624
        %v873 = vunpack.c.h.b16 %v624
        %v874 = vunpack.c.l.b16 %v625
        %v875 = vunpack.c.h.b16 %v625
        %v876 = vunpack.c.l.b16 %v626
        %v877 = vunpack.c.h.b16 %v626
        %v878 = vunpack.c.l.b16 %v627
        %v879 = vunpack.c.h.b16 %v627
        %v880 = vunpack.c.l.b16 %v628
        %v881 = vunpack.c.h.b16 %v628
        %v882 = vunpack.c.l.b16 %v629
        %v883 = vunpack.c.h.b16 %v629
        %v884 = vunpack.c.l.b16 %v630
        %v885 = vunpack.c.h.b16 %v630
        %v886 = vunpack.c.l.b16 %v631
        %v887 = vunpack.c.h.b16 %v631
        %v888 = vunpack.c.l.b16 %v632
        %v889 = vunpack.c.h.b16 %v632
        %v890 = vunpack.c.l.b16 %v633
        %v891 = vunpack.c.h.b16 %v633
        %v892 = vunpack.c.l.b16 %v634
        %v893 = vunpack.c.h.b16 %v634
        %v894 = vunpack.c.l.b16 %v635
        %v895 = vunpack.c.h.b16 %v635
        %v896 = vunpack.c.l.b16 %v636
        %v897 = vunpack.c.h.b16 %v636
        %v898 = vunpack.c.l.b16 %v637
        %v899 = vunpack.c.h.b16 %v637
        %v900 = vunpack.c.l.b16 %v638
        %v901 = vunpack.c.h.b16 %v638
        %v902 = vunpack.c.l.b16 %v639
        %v903 = vunpack.c.h.b16 %v639
        %v904 = vunpack.c.l.b16 %v640
        %v905 = vunpack.c.h.b16 %v640
        %v906 = vunpack.c.l.b16 %v641
        %v907 = vunpack.c.h.b16 %v641
        %v908 = vunpack.c.l.b16 %v642
        %v909 = vunpack.c.h.b16 %v642
        %v910 = vunpack.c.l.b16 %v643
        %v911 = vunpack.c.h.b16 %v643
        %v912 = vunpack.c.l.b16 %v644
        %v913 = vunpack.c.h.b16 %v644
        %v914 = vunpack.c.l.b16 %v645
        %v915 = vunpack.c.h.b16 %v645
        %v916 = vunpack.c.l.b16 %v646
        %v917 = vunpack.c.h.b16 %v646
        %v918 = vunpack.c.l.b16 %v647
        %v919 = vunpack.c.h.b16 %v647
        %v920 = vunpack.c.l.b16 %v648
        %v921 = vunpack.c.h.b16 %v648
        %v922 = vunpack.c.l.b16 %v649
        %v923 = vunpack.c.h.b16 %v649
        %v924 = vunpack.c.l.b16 %v650
        %v925 = vunpack.c.h.b16 %v650
        %v926 = vunpack.c.l.b16 %v651
        %v927 = vunpack.c.h.b16 %v651
        %v928 = vunpack.c.l.b16 %v652
        %v929 = vunpack.c.h.b16 %v652
        %v930 = vunpack.c.l.b16 %v653
        %v931 = vunpack.c.h.b16 %v653
        %v932 = vunpack.c.l.b16 %v654
        %v933 = vunpack.c.h.b16 %v654
        %v934 = vunpack.c.l.b16 %v655
        %v935 = vunpack.c.h.b16 %v655
        %v936 = vunpack.c.l.b16 %v656
        %v937 = vunpack.c.h.b16 %v656
        %v938 = vunpack.c.l.b16 %v657
        %v939 = vunpack.c.h.b16 %v657
        %v940 = vunpack.c.l.b16 %v658
        %v941 = vunpack.c.h.b16 %v658
        %v942 = vunpack.c.l.b16 %v659
        %v943 = vunpack.c.h.b16 %v659
        %v944 = vunpack.c.l.b16 %v660
        %v945 = vunpack.c.h.b16 %v660
        %v946 = vunpack.c.l.b16 %v661
        %v947 = vunpack.c.h.b16 %v661
        %v948 = vunpack.c.l.b16 %v662
        %v949 = vunpack.c.h.b16 %v662
        %v950 = vunpack.c.l.b16 %v663
        %v951 = vunpack.c.h.b16 %v663
        %v952 = vunpack.c.l.b16 %v664
        %v953 = vunpack.c.h.b16 %v664
        %v954 = vunpack.c.l.b16 %v665
        %v955 = vunpack.c.h.b16 %v665
        %v956 = vunpack.c.l.b16 %v666
        %v957 = vunpack.c.h.b16 %v666
        %v958 = vunpack.c.l.b16 %v667
        %v959 = vunpack.c.h.b16 %v667
        %v960 = vunpack.c.l.b16 %v668
        %v961 = vunpack.c.h.b16 %v668
        %v962 = vunpack.c.l.b16 %v669
        %v963 = vunpack.c.h.b16 %v669
        %v964 = vunpack.c.l.b16 %v670
        %v965 = vunpack.c.h.b16 %v670
        %v966 = vunpack.c.l.b16 %v671
        %v967 = vunpack.c.h.b16 %v671
        %v968 = vunpack.c.l.b16 %v672
        %v969 = vunpack.c.h.b16 %v672
        %v970 = vunpack.c.l.b16 %v673
        %v971 = vunpack.c.h.b16 %v673
        %v972 = vunpack.c.l.b16 %v674
        %v973 = vunpack.c.h.b16 %v674
        %v974 = vunpack.c.l.b16 %v675
        %v975 = vunpack.c.h.b16 %v675
        %v976 = vunpack.c.l.b16 %v676
        %v977 = vunpack.c.h.b16 %v676
        %v978 = vunpack.c.l.b16 %v677
        %v979 = vunpack.c.h.b16 %v677
        %v980 = vunpack.c.l.b16 %v678
        %v981 = vunpack.c.h.b16 %v678
        %v982 = vunpack.c.l.b16 %v679
        %v983 = vunpack.c.h.b16 %v679
        %v984 = vunpack.c.l.b16 %v680
        %v985 = vunpack.c.h.b16 %v680
        %v986 = vunpack.c.l.b16 %v681
        %v987 = vunpack.c.h.b16 %v681
        %v988 = vunpack.c.l.b16 %v682
        %v989 = vunpack.c.h.b16 %v682
        %v990 = vunpack.c.l.b16 %v683
        %v991 = vunpack.c.h.b16 %v683
        %v992 = vunpack.c.l.b16 %v684
        %v993 = vunpack.c.h.b16 %v684
        %v994 = vunpack.c.l.b16 %v685
        %v995 = vunpack.c.h.b16 %v685
        %v996 = vunpack.c.l.b16 %v686
        %v997 = vunpack.c.h.b16 %v686
        %v998 = vunpack.c.l.b16 %v687
        %v999 = vunpack.c.h.b16 %v687
        %v1000 = vunpack.c.l.b16 %v688
        %v1001 = vunpack.c.h.b16 %v688
        %v1002 = vunpack.c.l.b16 %v689
        %v1003 = vunpack.c.h.b16 %v689
        %v1004 = vunpack.c.l.b16 %v690
        %v1005 = vunpack.c.h.b16 %v690
        %v1006 = vunpack.c.l.b16 %v691
        %v1007 = vunpack.c.h.b16 %v691
        %v1008 = vunpack.c.l.b16 %v692
        %v1009 = vunpack.c.h.b16 %v692
        %v1010 = vunpack.c.l.b16 %v693
        %v1011 = vunpack.c.h.b16 %v693
        %v1012 = vunpack.c.l.b16 %v694
        %v1013 = vunpack.c.h.b16 %v694
        %v1014 = vunpack.c.l.b16 %v695
        %v1015 = vunpack.c.h.b16 %v695
        %v1016 = vpack.c.b16 %v830, %v824
        %v1017 = vpack.c.b16 %v831, %v825
        %v1018 = vpack.c.b16 %v832, %v826
        %v1019 = vpack.c.b16 %v833, %v827
        %v1020 = vpack.c.b16 %v834, %v828
        %v1021 = vpack.c.b16 %v835, %v829
        %v1022 = vpack.c.b16 %v842, %v836
        %v1023 = vpack.c.b16 %v843, %v837
        %v1024 = vpack.c.b16 %v844, %v838
        %v1025 = vpack.c.b16 %v845, %v839
        %v1026 = vpack.c.b16 %v846, %v840
        %v1027 = vpack.c.b16 %v847, %v841
        %v1028 = vpack.c.b16 %v854, %v848
        %v1029 = vpack.c.b16 %v855, %v849
        %v1030 = vpack.c.b16 %v856, %v850
        %v1031 = vpack.c.b16 %v857, %v851
        %v1032 = vpack.c.b16 %v858, %v852
        %v1033 = vpack.c.b16 %v859, %v853
        %v1034 = vpack.c.b16 %v866, %v860
        %v1035 = vpack.c.b16 %v867, %v861
        %v1036 = vpack.c.b16 %v868, %v862
        %v1037 = vpack.c.b16 %v869, %v863
        %v1038 = vpack.c.b16 %v870, %v864
        %v1039 = vpack.c.b16 %v871, %v865
        %v1040 = vpack.c.b16 %v878, %v872
        %v1041 = vpack.c.b16 %v879, %v873
        %v1042 = vpack.c.b16 %v880, %v874
        %v1043 = vpack.c.b16 %v881, %v875
        %v1044 = vpack.c.b16 %v882, %v876
        %v1045 = vpack.c.b16 %v883, %v877
        %v1046 = vpack.c.b16 %v890, %v884
        %v1047 = vpack.c.b16 %v891, %v885
        %v1048 = vpack.c.b16 %v892, %v886
        %v1049 = vpack.c.b16 %v893, %v887
        %v1050 = vpack.c.b16 %v894, %v888
        %v1051 = vpack.c.b16 %v895, %v889
        %v1052 = vpack.c.b16 %v902, %v896
        %v1053 = vpack.c.b16 %v903, %v897
        %v1054 = vpack.c.b16 %v904, %v898
        %v1055 = vpack.c.b16 %v905, %v899
        %v1056 = vpack.c.b16 %v906, %v900
        %v1057 = vpack.c.b16 %v907, %v901
        %v1058 = vpack.c.b16 %v914, %v908
        %v1059 = vpack.c.b16 %v915, %v909
        %v1060 = vpack.c.b16 %v916, %v910
        %v1061 = vpack.c.b16 %v917, %v911
        %v1062 = vpack.c.b16 %v918, %v912
        %v1063 = vpack.c.b16 %v919, %v913
        %v1064 = vpack.c.b16 %v926, %v920
        %v1065 = vpack.c.b16 %v927, %v921
        %v1066 = vpack.c.b16 %v928, %v922
        %v1067 = vpack.c.b16 %v929, %v923
        %v1068 = vpack.c.b16 %v930, %v924
        %v1069 = vpack.c.b16 %v931, %v925
        %v1070 = vpack.c.b16 %v938, %v932
        %v1071 = vpack.c.b16 %v939, %v933
        %v1072 = vpack.c.b16 %v940, %v934
        %v1073 = vpack.c.b16 %v941, %v935
        %v1074 = vpack.c.b16 %v942, %v936
        %v1075 = vpack.c.b16 %v943, %v937
        %v1076 = vpack.c.b16 %v950, %v944
        %v1077 = vpack.c.b16 %v951, %v945
        %v1078 = vpack.c.b16 %v952, %v946
        %v1079 = vpack.c.b16 %v953, %v947
        %v1080 = vpack.c.b16 %v954, %v948
        %v1081 = vpack.c.b16 %v955, %v949
        %v1082 = vpack.c.b16 %v962, %v956
        %v1083 = vpack.c.b16 %v963, %v957
        %v1084 = vpack.c.b16 %v964, %v958
        %v1085 = vpack.c.b16 %v965, %v959
        %v1086 = vpack.c.b16 %v966, %v960
        %v1087 = vpack.c.b16 %v967, %v961
        %v1088 = vpack.c.b16 %v974, %v968
        %v1089 = vpack.c.b16 %v975, %v969
        %v1090 = vpack.c.b16 %v976, %v970
        %v1091 = vpack.c.b16 %v977, %v971
        %v1092 = vpack.c.b16 %v978, %v972
        %v1093 = vpack.c.b16 %v979, %v973
        %v1094 = vpack.c.b16 %v986, %v980
        %v1095 = vpack.c.b16 %v987, %v981
        %v1096 = vpack.c.b16 %v988, %v982
        %v1097 = vpack.c.b16 %v989, %v983
        %v1098 = vpack.c.b16 %v990, %v984
        %v1099 = vpack.c.b16 %v991, %v985
        %v1100 = vpack.c.b16 %v998, %v992
        %v1101 = vpack.c.b16 %v999, %v993
        %v1102 = vpack.c.b16 %v1000, %v994
        %v1103 = vpack.c.b16 %v1001, %v995
        %v1104 = vpack.c.b16 %v1002, %v996
        %v1105 = vpack.c.b16 %v1003, %v997
        %v1106 = vpack.c.b16 %v1010, %v1004
        %v1107 = vpack.c.b16 %v1011, %v1005
        %v1108 = vpack.c.b16 %v1012, %v1006
        %v1109 = vpack.c.b16 %v1013, %v1007
        %v1110 = vpack.c.b16 %v1014, %v1008
        %v1111 = vpack.c.b16 %v1015, %v1009
        %1208 = vmatprep.subr.bf16.mxu0 %v1059
        %1209 = vmatpush1.bf16.msra.mxu0 %v1058
        %1210 = vmatprep.subr.bf16.mxu0 %v1053
        %1211 = vmatpush1.bf16.msra.mxu0 %v1052
        %1212 = vmatprep.subr.bf16.mxu0 %v1047
        %1213 = vmatpush1.bf16.msra.mxu0 %v1046
        %1214 = vmatprep.subr.bf16.mxu0 %v1041
        %1215 = vmatpush1.bf16.msra.mxu0 %v1040
        %1216 = vmatprep.subr.bf16.mxu0 %v1035
        %1217 = vmatpush1.bf16.msra.mxu0 %v1034
        %1218 = vmatprep.subr.bf16.mxu0 %v1029
        %1219 = vmatpush1.bf16.msra.mxu0 %v1028
        %1220 = vmatprep.subr.bf16.mxu0 %v1023
        %1221 = vmatpush1.bf16.msra.mxu0 %v1022
        %1222 = vmatprep.subr.bf16.mxu0 %v1017
        %1223 = vmatpush1.bf16.msra.mxu0 %v1016
        %1224 = vmatprep.subr.bf16.mxu0 %v1107
        %1225 = vmatpush2.bf16.msra.mxu0 %v1106
        %1226 = vmatprep.subr.bf16.mxu0 %v1101
        %1227 = vmatpush2.bf16.msra.mxu0 %v1100
        %1228 = vmatprep.subr.bf16.mxu0 %v1095
        %1229 = vmatpush2.bf16.msra.mxu0 %v1094
        %1230 = vmatprep.subr.bf16.mxu0 %v1089
        %1231 = vmatpush2.bf16.msra.mxu0 %v1088
        %1232 = vmatprep.subr.bf16.mxu0 %v1083
        %1233 = vmatpush2.bf16.msra.mxu0 %v1082
        %1234 = vmatprep.subr.bf16.mxu0 %v1077
        %1235 = vmatpush2.bf16.msra.mxu0 %v1076
        %1236 = vmatprep.subr.bf16.mxu0 %v1071
        %1237 = vmatpush2.bf16.msra.mxu0 %v1070
        %1238 = vmatprep.subr.bf16.mxu0 %v1065
        %1239 = vmatpush2.bf16.msra.mxu0 %v1064
        %1240 = vmatprep.mubr.bf16.mxu0 %v585
        %1241 = vmatmul.mubr.bf16.gmra.mxu0 %v584
        %v1242 = vpop.f32.mrf.mxu0
        %v1243 = vadd.f32 %v701, %v1242
        %v1244 = vpop.f32.mrf.mxu0
        %v1245 = vadd.f32 %v705, %v1244
        %v1246 = vpop.f32.mrf.mxu0
        %v1247 = vadd.f32 %v701, %v1246
        %v1248 = vpop.f32.mrf.mxu0
        %v1249 = vadd.f32 %v705, %v1248
        %1250 = vmatprep.mubr.bf16.mxu0 %v587
        %1251 = vmatmul.mubr.bf16.gmra.mxu0 %v586
        %v1252 = vpop.f32.mrf.mxu0
        %v1253 = vadd.f32 %v701, %v1252
        %v1254 = vpop.f32.mrf.mxu0
        %v1255 = vadd.f32 %v705, %v1254
        %v1256 = vpop.f32.mrf.mxu0
        %v1257 = vadd.f32 %v701, %v1256
        %v1258 = vpop.f32.mrf.mxu0
        %v1259 = vadd.f32 %v705, %v1258
        %1260 = vmatprep.mubr.bf16.mxu0 %v589
        %1261 = vmatmul.mubr.bf16.gmra.mxu0 %v588
        %v1262 = vpop.f32.mrf.mxu0
        %v1263 = vadd.f32 %v701, %v1262
        %v1264 = vpop.f32.mrf.mxu0
        %v1265 = vadd.f32 %v705, %v1264
        %v1266 = vpop.f32.mrf.mxu0
        %v1267 = vadd.f32 %v701, %v1266
        %v1268 = vpop.f32.mrf.mxu0
        %v1269 = vadd.f32 %v705, %v1268
        %1270 = vmatprep.mubr.bf16.mxu0 %v591
        %1271 = vmatmul.mubr.bf16.gmra.mxu0 %v590
        %v1272 = vpop.f32.mrf.mxu0
        %v1273 = vadd.f32 %v701, %v1272
        %v1274 = vpop.f32.mrf.mxu0
        %v1275 = vadd.f32 %v705, %v1274
        %v1276 = vpop.f32.mrf.mxu0
        %v1277 = vadd.f32 %v701, %v1276
        %v1278 = vpop.f32.mrf.mxu0
        %v1279 = vadd.f32 %v705, %v1278
        %1280 = vmatprep.mubr.bf16.mxu0 %v593
        %1281 = vmatmul.mubr.bf16.gmra.mxu0 %v592
        %v1282 = vpop.f32.mrf.mxu0
        %v1283 = vadd.f32 %v701, %v1282
        %v1284 = vpop.f32.mrf.mxu0
        %v1285 = vadd.f32 %v705, %v1284
        %v1286 = vpop.f32.mrf.mxu0
        %v1287 = vadd.f32 %v701, %v1286
        %v1288 = vpop.f32.mrf.mxu0
        %v1289 = vadd.f32 %v705, %v1288
        %1290 = vmatprep.mubr.bf16.mxu0 %v595
        %1291 = vmatmul.mubr.bf16.gmra.mxu0 %v594
        %v1292 = vpop.f32.mrf.mxu0
        %v1293 = vadd.f32 %v701, %v1292
        %v1294 = vpop.f32.mrf.mxu0
        %v1295 = vadd.f32 %v705, %v1294
        %v1296 = vpop.f32.mrf.mxu0
        %v1297 = vadd.f32 %v701, %v1296
        %v1298 = vpop.f32.mrf.mxu0
        %v1299 = vadd.f32 %v705, %v1298
        %1300 = vmatprep.mubr.bf16.mxu0 %v597
        %1301 = vmatmul.mubr.bf16.gmra.mxu0 %v596
        %v1302 = vpop.f32.mrf.mxu0
        %v1303 = vadd.f32 %v701, %v1302
        %v1304 = vpop.f32.mrf.mxu0
        %v1305 = vadd.f32 %v705, %v1304
        %v1306 = vpop.f32.mrf.mxu0
        %v1307 = vadd.f32 %v701, %v1306
        %v1308 = vpop.f32.mrf.mxu0
        %v1309 = vadd.f32 %v705, %v1308
        %1310 = vmatprep.mubr.bf16.mxu0 %v599
        %1311 = vmatmul.mubr.bf16.gmra.mxu0 %v598
        %v1312 = vpop.f32.mrf.mxu0
        %v1313 = vadd.f32 %v701, %v1312
        %v1314 = vpop.f32.mrf.mxu0
        %v1315 = vadd.f32 %v705, %v1314
        %v1316 = vpop.f32.mrf.mxu0
        %v1317 = vadd.f32 %v701, %v1316
        %v1318 = vpop.f32.mrf.mxu0
        %v1319 = vadd.f32 %v705, %v1318
        %1320 = vdwg.mxu0
        %1321 = vmatprep.subr.bf16.mxu0 %v1061
        %1322 = vmatpush1.bf16.msra.mxu0 %v1060
        %1323 = vmatprep.subr.bf16.mxu0 %v1055
        %1324 = vmatpush1.bf16.msra.mxu0 %v1054
        %1325 = vmatprep.subr.bf16.mxu0 %v1049
        %1326 = vmatpush1.bf16.msra.mxu0 %v1048
        %1327 = vmatprep.subr.bf16.mxu0 %v1043
        %1328 = vmatpush1.bf16.msra.mxu0 %v1042
        %1329 = vmatprep.subr.bf16.mxu0 %v1037
        %1330 = vmatpush1.bf16.msra.mxu0 %v1036
        %1331 = vmatprep.subr.bf16.mxu0 %v1031
        %1332 = vmatpush1.bf16.msra.mxu0 %v1030
        %1333 = vmatprep.subr.bf16.mxu0 %v1025
        %1334 = vmatpush1.bf16.msra.mxu0 %v1024
        %1335 = vmatprep.subr.bf16.mxu0 %v1019
        %1336 = vmatpush1.bf16.msra.mxu0 %v1018
        %1337 = vmatprep.subr.bf16.mxu0 %v1109
        %1338 = vmatpush2.bf16.msra.mxu0 %v1108
        %1339 = vmatprep.subr.bf16.mxu0 %v1103
        %1340 = vmatpush2.bf16.msra.mxu0 %v1102
        %1341 = vmatprep.subr.bf16.mxu0 %v1097
        %1342 = vmatpush2.bf16.msra.mxu0 %v1096
        %1343 = vmatprep.subr.bf16.mxu0 %v1091
        %1344 = vmatpush2.bf16.msra.mxu0 %v1090
        %1345 = vmatprep.subr.bf16.mxu0 %v1085
        %1346 = vmatpush2.bf16.msra.mxu0 %v1084
        %1347 = vmatprep.subr.bf16.mxu0 %v1079
        %1348 = vmatpush2.bf16.msra.mxu0 %v1078
        %1349 = vmatprep.subr.bf16.mxu0 %v1073
        %1350 = vmatpush2.bf16.msra.mxu0 %v1072
        %1351 = vmatprep.subr.bf16.mxu0 %v1067
        %1352 = vmatpush2.bf16.msra.mxu0 %v1066
        %1353 = vmatprep.mubr.bf16.mxu0 %v585
        %1354 = vmatmul.mubr.bf16.gmra.mxu0 %v584
        %v1355 = vpop.f32.mrf.mxu0
        %v1356 = vadd.f32 %v709, %v1355
        %v1357 = vpop.f32.mrf.mxu0
        %v1358 = vadd.f32 %v713, %v1357
        %v1359 = vpop.f32.mrf.mxu0
        %v1360 = vadd.f32 %v709, %v1359
        %v1361 = vpop.f32.mrf.mxu0
        %v1362 = vadd.f32 %v713, %v1361
        %1363 = vmatprep.mubr.bf16.mxu0 %v587
        %1364 = vmatmul.mubr.bf16.gmra.mxu0 %v586
        %v1365 = vpop.f32.mrf.mxu0
        %v1366 = vadd.f32 %v709, %v1365
        %v1367 = vpop.f32.mrf.mxu0
        %v1368 = vadd.f32 %v713, %v1367
        %v1369 = vpop.f32.mrf.mxu0
        %v1370 = vadd.f32 %v709, %v1369
        %v1371 = vpop.f32.mrf.mxu0
        %v1372 = vadd.f32 %v713, %v1371
        %1373 = vmatprep.mubr.bf16.mxu0 %v589
        %1374 = vmatmul.mubr.bf16.gmra.mxu0 %v588
        %v1375 = vpop.f32.mrf.mxu0
        %v1376 = vadd.f32 %v709, %v1375
        %v1377 = vpop.f32.mrf.mxu0
        %v1378 = vadd.f32 %v713, %v1377
        %v1379 = vpop.f32.mrf.mxu0
        %v1380 = vadd.f32 %v709, %v1379
        %v1381 = vpop.f32.mrf.mxu0
        %v1382 = vadd.f32 %v713, %v1381
        %1383 = vmatprep.mubr.bf16.mxu0 %v591
        %1384 = vmatmul.mubr.bf16.gmra.mxu0 %v590
        %v1385 = vpop.f32.mrf.mxu0
        %v1386 = vadd.f32 %v709, %v1385
        %v1387 = vpop.f32.mrf.mxu0
        %v1388 = vadd.f32 %v713, %v1387
        %v1389 = vpop.f32.mrf.mxu0
        %v1390 = vadd.f32 %v709, %v1389
        %v1391 = vpop.f32.mrf.mxu0
        %v1392 = vadd.f32 %v713, %v1391
        %1393 = vmatprep.mubr.bf16.mxu0 %v593
        %1394 = vmatmul.mubr.bf16.gmra.mxu0 %v592
        %v1395 = vpop.f32.mrf.mxu0
        %v1396 = vadd.f32 %v709, %v1395
        %v1397 = vpop.f32.mrf.mxu0
        %v1398 = vadd.f32 %v713, %v1397
        %v1399 = vpop.f32.mrf.mxu0
        %v1400 = vadd.f32 %v709, %v1399
        %v1401 = vpop.f32.mrf.mxu0
        %v1402 = vadd.f32 %v713, %v1401
        %1403 = vmatprep.mubr.bf16.mxu0 %v595
        %1404 = vmatmul.mubr.bf16.gmra.mxu0 %v594
        %v1405 = vpop.f32.mrf.mxu0
        %v1406 = vadd.f32 %v709, %v1405
        %v1407 = vpop.f32.mrf.mxu0
        %v1408 = vadd.f32 %v713, %v1407
        %v1409 = vpop.f32.mrf.mxu0
        %v1410 = vadd.f32 %v709, %v1409
        %v1411 = vpop.f32.mrf.mxu0
        %v1412 = vadd.f32 %v713, %v1411
        %1413 = vmatprep.mubr.bf16.mxu0 %v597
        %1414 = vmatmul.mubr.bf16.gmra.mxu0 %v596
        %v1415 = vpop.f32.mrf.mxu0
        %v1416 = vadd.f32 %v709, %v1415
        %v1417 = vpop.f32.mrf.mxu0
        %v1418 = vadd.f32 %v713, %v1417
        %v1419 = vpop.f32.mrf.mxu0
        %v1420 = vadd.f32 %v709, %v1419
        %v1421 = vpop.f32.mrf.mxu0
        %v1422 = vadd.f32 %v713, %v1421
        %1423 = vmatprep.mubr.bf16.mxu0 %v599
        %1424 = vmatmul.mubr.bf16.gmra.mxu0 %v598
        %v1425 = vpop.f32.mrf.mxu0
        %v1426 = vadd.f32 %v709, %v1425
        %v1427 = vpop.f32.mrf.mxu0
        %v1428 = vadd.f32 %v713, %v1427
        %v1429 = vpop.f32.mrf.mxu0
        %v1430 = vadd.f32 %v709, %v1429
        %v1431 = vpop.f32.mrf.mxu0
        %v1432 = vadd.f32 %v713, %v1431
        %1433 = vdwg.mxu0
        %1434 = vmatprep.subr.bf16.mxu0 %v1063
        %1435 = vmatpush1.bf16.msra.mxu0 %v1062
        %1436 = vmatprep.subr.bf16.mxu0 %v1057
        %1437 = vmatpush1.bf16.msra.mxu0 %v1056
        %1438 = vmatprep.subr.bf16.mxu0 %v1051
        %1439 = vmatpush1.bf16.msra.mxu0 %v1050
        %1440 = vmatprep.subr.bf16.mxu0 %v1045
        %1441 = vmatpush1.bf16.msra.mxu0 %v1044
        %1442 = vmatprep.subr.bf16.mxu0 %v1039
        %1443 = vmatpush1.bf16.msra.mxu0 %v1038
        %1444 = vmatprep.subr.bf16.mxu0 %v1033
        %1445 = vmatpush1.bf16.msra.mxu0 %v1032
        %1446 = vmatprep.subr.bf16.mxu0 %v1027
        %1447 = vmatpush1.bf16.msra.mxu0 %v1026
        %1448 = vmatprep.subr.bf16.mxu0 %v1021
        %1449 = vmatpush1.bf16.msra.mxu0 %v1020
        %1450 = vmatprep.subr.bf16.mxu0 %v1111
        %1451 = vmatpush2.bf16.msra.mxu0 %v1110
        %1452 = vmatprep.subr.bf16.mxu0 %v1105
        %1453 = vmatpush2.bf16.msra.mxu0 %v1104
        %1454 = vmatprep.subr.bf16.mxu0 %v1099
        %1455 = vmatpush2.bf16.msra.mxu0 %v1098
        %1456 = vmatprep.subr.bf16.mxu0 %v1093
        %1457 = vmatpush2.bf16.msra.mxu0 %v1092
        %1458 = vmatprep.subr.bf16.mxu0 %v1087
        %1459 = vmatpush2.bf16.msra.mxu0 %v1086
        %1460 = vmatprep.subr.bf16.mxu0 %v1081
        %1461 = vmatpush2.bf16.msra.mxu0 %v1080
        %1462 = vmatprep.subr.bf16.mxu0 %v1075
        %1463 = vmatpush2.bf16.msra.mxu0 %v1074
        %1464 = vmatprep.subr.bf16.mxu0 %v1069
        %1465 = vmatpush2.bf16.msra.mxu0 %v1068
        %1466 = vmatprep.mubr.bf16.mxu0 %v585
        %1467 = vmatmul.mubr.bf16.gmra.mxu0 %v584
        %v1468 = vpop.f32.mrf.mxu0
        %v1469 = vadd.f32 %v717, %v1468
        %v1470 = vpop.f32.mrf.mxu0
        %v1471 = vadd.f32 %v721, %v1470
        %v1472 = vpop.f32.mrf.mxu0
        %v1473 = vadd.f32 %v717, %v1472
        %v1474 = vpop.f32.mrf.mxu0
        %v1475 = vadd.f32 %v721, %v1474
        %1476 = vmatprep.mubr.bf16.mxu0 %v587
        %1477 = vmatmul.mubr.bf16.gmra.mxu0 %v586
        %v1478 = vpop.f32.mrf.mxu0
        %v1479 = vadd.f32 %v717, %v1478
        %v1480 = vpop.f32.mrf.mxu0
        %v1481 = vadd.f32 %v721, %v1480
        %v1482 = vpop.f32.mrf.mxu0
        %v1483 = vadd.f32 %v717, %v1482
        %v1484 = vpop.f32.mrf.mxu0
        %v1485 = vadd.f32 %v721, %v1484
        %1486 = vmatprep.mubr.bf16.mxu0 %v589
        %1487 = vmatmul.mubr.bf16.gmra.mxu0 %v588
        %v1488 = vpop.f32.mrf.mxu0
        %v1489 = vadd.f32 %v717, %v1488
        %v1490 = vpop.f32.mrf.mxu0
        %v1491 = vadd.f32 %v721, %v1490
        %v1492 = vpop.f32.mrf.mxu0
        %v1493 = vadd.f32 %v717, %v1492
        %v1494 = vpop.f32.mrf.mxu0
        %v1495 = vadd.f32 %v721, %v1494
        %1496 = vmatprep.mubr.bf16.mxu0 %v591
        %1497 = vmatmul.mubr.bf16.gmra.mxu0 %v590
        %v1498 = vpop.f32.mrf.mxu0
        %v1499 = vadd.f32 %v717, %v1498
        %v1500 = vpop.f32.mrf.mxu0
        %v1501 = vadd.f32 %v721, %v1500
        %v1502 = vpop.f32.mrf.mxu0
        %v1503 = vadd.f32 %v717, %v1502
        %v1504 = vpop.f32.mrf.mxu0
        %v1505 = vadd.f32 %v721, %v1504
        %1506 = vmatprep.mubr.bf16.mxu0 %v593
        %1507 = vmatmul.mubr.bf16.gmra.mxu0 %v592
        %v1508 = vpop.f32.mrf.mxu0
        %v1509 = vadd.f32 %v717, %v1508
        %v1510 = vpop.f32.mrf.mxu0
        %v1511 = vadd.f32 %v721, %v1510
        %v1512 = vpop.f32.mrf.mxu0
        %v1513 = vadd.f32 %v717, %v1512
        %v1514 = vpop.f32.mrf.mxu0
        %v1515 = vadd.f32 %v721, %v1514
        %1516 = vmatprep.mubr.bf16.mxu0 %v595
        %1517 = vmatmul.mubr.bf16.gmra.mxu0 %v594
        %v1518 = vpop.f32.mrf.mxu0
        %v1519 = vadd.f32 %v717, %v1518
        %v1520 = vpop.f32.mrf.mxu0
        %v1521 = vadd.f32 %v721, %v1520
        %v1522 = vpop.f32.mrf.mxu0
        %v1523 = vadd.f32 %v717, %v1522
        %v1524 = vpop.f32.mrf.mxu0
        %v1525 = vadd.f32 %v721, %v1524
        %1526 = vmatprep.mubr.bf16.mxu0 %v597
        %1527 = vmatmul.mubr.bf16.gmra.mxu0 %v596
        %v1528 = vpop.f32.mrf.mxu0
        %v1529 = vadd.f32 %v717, %v1528
        %v1530 = vpop.f32.mrf.mxu0
        %v1531 = vadd.f32 %v721, %v1530
        %v1532 = vpop.f32.mrf.mxu0
        %v1533 = vadd.f32 %v717, %v1532
        %v1534 = vpop.f32.mrf.mxu0
        %v1535 = vadd.f32 %v721, %v1534
        %1536 = vmatprep.mubr.bf16.mxu0 %v599
        %1537 = vmatmul.mubr.bf16.gmra.mxu0 %v598
        %v1538 = vpop.f32.mrf.mxu0
        %v1539 = vadd.f32 %v717, %v1538
        %v1540 = vpop.f32.mrf.mxu0
        %v1541 = vadd.f32 %v721, %v1540
        %v1542 = vpop.f32.mrf.mxu0
        %v1543 = vadd.f32 %v717, %v1542
        %v1544 = vpop.f32.mrf.mxu0
        %v1545 = vadd.f32 %v721, %v1544
        %1546 = vdwg.mxu0
        %v1547 = vpack.c.bf16 %v1247, %v1243
        %v1548 = vpack.c.bf16 %v1249, %v1245
        %v1549 = vpack.c.bf16 %v1257, %v1253
        %v1550 = vpack.c.bf16 %v1259, %v1255
        %v1551 = vpack.c.bf16 %v1267, %v1263
        %v1552 = vpack.c.bf16 %v1269, %v1265
        %v1553 = vpack.c.bf16 %v1277, %v1273
        %v1554 = vpack.c.bf16 %v1279, %v1275
        %v1555 = vpack.c.bf16 %v1287, %v1283
        %v1556 = vpack.c.bf16 %v1289, %v1285
        %v1557 = vpack.c.bf16 %v1297, %v1293
        %v1558 = vpack.c.bf16 %v1299, %v1295
        %v1559 = vpack.c.bf16 %v1307, %v1303
        %v1560 = vpack.c.bf16 %v1309, %v1305
        %v1561 = vpack.c.bf16 %v1317, %v1313
        %v1562 = vpack.c.bf16 %v1319, %v1315
        %v1579 = vunpack.c.l.b16 %v1547
        %v1580 = vunpack.c.l.b16 %v1548
        %v1581 = vunpack.c.h.b16 %v1547
        %v1582 = vunpack.c.h.b16 %v1548
        %v1583 = vunpack.c.l.b16 %v1549
        %v1584 = vunpack.c.l.b16 %v1550
        %v1585 = vunpack.c.h.b16 %v1549
        %v1586 = vunpack.c.h.b16 %v1550
        %v1587 = vunpack.c.l.b16 %v1551
        %v1588 = vunpack.c.l.b16 %v1552
        %v1589 = vunpack.c.h.b16 %v1551
        %v1590 = vunpack.c.h.b16 %v1552
        %v1591 = vunpack.c.l.b16 %v1553
        %v1592 = vunpack.c.l.b16 %v1554
        %v1593 = vunpack.c.h.b16 %v1553
        %v1594 = vunpack.c.h.b16 %v1554
        %v1595 = vunpack.c.l.b16 %v1555
        %v1596 = vunpack.c.l.b16 %v1556
        %v1597 = vunpack.c.h.b16 %v1555
        %v1598 = vunpack.c.h.b16 %v1556
        %v1599 = vunpack.c.l.b16 %v1557
        %v1600 = vunpack.c.l.b16 %v1558
        %v1601 = vunpack.c.h.b16 %v1557
        %v1602 = vunpack.c.h.b16 %v1558
        %v1603 = vunpack.c.l.b16 %v1559
        %v1604 = vunpack.c.l.b16 %v1560
        %v1605 = vunpack.c.h.b16 %v1559
        %v1606 = vunpack.c.h.b16 %v1560
        %v1607 = vunpack.c.l.b16 %v1561
        %v1608 = vunpack.c.l.b16 %v1562
        %v1609 = vunpack.c.h.b16 %v1561
        %v1610 = vunpack.c.h.b16 %v1562
        %v1611 = vpack.c.b16 %v1580, %v1579
        %v1612 = vpack.c.b16 %v1582, %v1581
        %v1613 = vpack.c.b16 %v1584, %v1583
        %v1614 = vpack.c.b16 %v1586, %v1585
        %v1615 = vpack.c.b16 %v1588, %v1587
        %v1616 = vpack.c.b16 %v1590, %v1589
        %v1617 = vpack.c.b16 %v1592, %v1591
        %v1618 = vpack.c.b16 %v1594, %v1593
        %v1619 = vpack.c.b16 %v1596, %v1595
        %v1620 = vpack.c.b16 %v1598, %v1597
        %v1621 = vpack.c.b16 %v1600, %v1599
        %v1622 = vpack.c.b16 %v1602, %v1601
        %v1623 = vpack.c.b16 %v1604, %v1603
        %v1624 = vpack.c.b16 %v1606, %v1605
        %v1625 = vpack.c.b16 %v1608, %v1607
        %v1626 = vpack.c.b16 %v1610, %v1609
        %1643 = vst [vmem:[#allocation2] sm:$0xff] %v1611
        %1644 = vst [vmem:[#allocation2 + $0x8] sm:$0xff] %v1612
        %1645 = vst [vmem:[#allocation2 + $0x10] sm:$0xff] %v1613
        %1646 = vst [vmem:[#allocation2 + $0x18] sm:$0xff] %v1614
        %1647 = vst [vmem:[#allocation2 + $0x20] sm:$0xff] %v1615
        %1648 = vst [vmem:[#allocation2 + $0x28] sm:$0xff] %v1616
        %1649 = vst [vmem:[#allocation2 + $0x30] sm:$0xff] %v1617
        %1650 = vst [vmem:[#allocation2 + $0x38] sm:$0xff] %v1618
        %1651 = vst [vmem:[#allocation2 + $0x40] sm:$0xff] %v1619
        %1652 = vst [vmem:[#allocation2 + $0x48] sm:$0xff] %v1620
        %1653 = vst [vmem:[#allocation2 + $0x50] sm:$0xff] %v1621
        %1654 = vst [vmem:[#allocation2 + $0x58] sm:$0xff] %v1622
        %1655 = vst [vmem:[#allocation2 + $0x60] sm:$0xff] %v1623
        %1656 = vst [vmem:[#allocation2 + $0x68] sm:$0xff] %v1624
        %1657 = vst [vmem:[#allocation2 + $0x70] sm:$0xff] %v1625
        %1658 = vst [vmem:[#allocation2 + $0x78] sm:$0xff] %v1626
        %v1659 = vpack.c.bf16 %v1360, %v1356
        %v1660 = vpack.c.bf16 %v1362, %v1358
        %v1661 = vpack.c.bf16 %v1473, %v1469
        %v1662 = vpack.c.bf16 %v1475, %v1471
        %v1663 = vpack.c.bf16 %v1370, %v1366
        %v1664 = vpack.c.bf16 %v1372, %v1368
        %v1665 = vpack.c.bf16 %v1483, %v1479
        %v1666 = vpack.c.bf16 %v1485, %v1481
        %v1667 = vpack.c.bf16 %v1380, %v1376
        %v1668 = vpack.c.bf16 %v1382, %v1378
        %v1669 = vpack.c.bf16 %v1493, %v1489
        %v1670 = vpack.c.bf16 %v1495, %v1491
        %v1671 = vpack.c.bf16 %v1390, %v1386
        %v1672 = vpack.c.bf16 %v1392, %v1388
        %v1673 = vpack.c.bf16 %v1503, %v1499
        %v1674 = vpack.c.bf16 %v1505, %v1501
        %v1675 = vpack.c.bf16 %v1400, %v1396
        %v1676 = vpack.c.bf16 %v1402, %v1398
        %v1677 = vpack.c.bf16 %v1513, %v1509
        %v1678 = vpack.c.bf16 %v1515, %v1511
        %v1679 = vpack.c.bf16 %v1410, %v1406
        %v1680 = vpack.c.bf16 %v1412, %v1408
        %v1681 = vpack.c.bf16 %v1523, %v1519
        %v1682 = vpack.c.bf16 %v1525, %v1521
        %v1683 = vpack.c.bf16 %v1420, %v1416
        %v1684 = vpack.c.bf16 %v1422, %v1418
        %v1685 = vpack.c.bf16 %v1533, %v1529
        %v1686 = vpack.c.bf16 %v1535, %v1531
        %v1687 = vpack.c.bf16 %v1430, %v1426
        %v1688 = vpack.c.bf16 %v1432, %v1428
        %v1689 = vpack.c.bf16 %v1543, %v1539
        %v1690 = vpack.c.bf16 %v1545, %v1541
        %v1723 = vunpack.c.l.b16 %v1659
        %v1724 = vunpack.c.l.b16 %v1660
        %v1725 = vunpack.c.l.b16 %v1661
        %v1726 = vunpack.c.l.b16 %v1662
        %v1727 = vunpack.c.h.b16 %v1659
        %v1728 = vunpack.c.h.b16 %v1660
        %v1729 = vunpack.c.h.b16 %v1661
        %v1730 = vunpack.c.h.b16 %v1662
        %v1731 = vunpack.c.l.b16 %v1663
        %v1732 = vunpack.c.l.b16 %v1664
        %v1733 = vunpack.c.l.b16 %v1665
        %v1734 = vunpack.c.l.b16 %v1666
        %v1735 = vunpack.c.h.b16 %v1663
        %v1736 = vunpack.c.h.b16 %v1664
        %v1737 = vunpack.c.h.b16 %v1665
        %v1738 = vunpack.c.h.b16 %v1666
        %v1739 = vunpack.c.l.b16 %v1667
        %v1740 = vunpack.c.l.b16 %v1668
        %v1741 = vunpack.c.l.b16 %v1669
        %v1742 = vunpack.c.l.b16 %v1670
        %v1743 = vunpack.c.h.b16 %v1667
        %v1744 = vunpack.c.h.b16 %v1668
        %v1745 = vunpack.c.h.b16 %v1669
        %v1746 = vunpack.c.h.b16 %v1670
        %v1747 = vunpack.c.l.b16 %v1671
        %v1748 = vunpack.c.l.b16 %v1672
        %v1749 = vunpack.c.l.b16 %v1673
        %v1750 = vunpack.c.l.b16 %v1674
        %v1751 = vunpack.c.h.b16 %v1671
        %v1752 = vunpack.c.h.b16 %v1672
        %v1753 = vunpack.c.h.b16 %v1673
        %v1754 = vunpack.c.h.b16 %v1674
        %v1755 = vunpack.c.l.b16 %v1675
        %v1756 = vunpack.c.l.b16 %v1676
        %v1757 = vunpack.c.l.b16 %v1677
        %v1758 = vunpack.c.l.b16 %v1678
        %v1759 = vunpack.c.h.b16 %v1675
        %v1760 = vunpack.c.h.b16 %v1676
        %v1761 = vunpack.c.h.b16 %v1677
        %v1762 = vunpack.c.h.b16 %v1678
        %v1763 = vunpack.c.l.b16 %v1679
        %v1764 = vunpack.c.l.b16 %v1680
        %v1765 = vunpack.c.l.b16 %v1681
        %v1766 = vunpack.c.l.b16 %v1682
        %v1767 = vunpack.c.h.b16 %v1679
        %v1768 = vunpack.c.h.b16 %v1680
        %v1769 = vunpack.c.h.b16 %v1681
        %v1770 = vunpack.c.h.b16 %v1682
        %v1771 = vunpack.c.l.b16 %v1683
        %v1772 = vunpack.c.l.b16 %v1684
        %v1773 = vunpack.c.l.b16 %v1685
        %v1774 = vunpack.c.l.b16 %v1686
        %v1775 = vunpack.c.h.b16 %v1683
        %v1776 = vunpack.c.h.b16 %v1684
        %v1777 = vunpack.c.h.b16 %v1685
        %v1778 = vunpack.c.h.b16 %v1686
        %v1779 = vunpack.c.l.b16 %v1687
        %v1780 = vunpack.c.l.b16 %v1688
        %v1781 = vunpack.c.l.b16 %v1689
        %v1782 = vunpack.c.l.b16 %v1690
        %v1783 = vunpack.c.h.b16 %v1687
        %v1784 = vunpack.c.h.b16 %v1688
        %v1785 = vunpack.c.h.b16 %v1689
        %v1786 = vunpack.c.h.b16 %v1690
        %v1787 = vpack.c.b16 %v1724, %v1723
        %v1788 = vpack.c.b16 %v1726, %v1725
        %v1789 = vpack.c.b16 %v1728, %v1727
        %v1790 = vpack.c.b16 %v1730, %v1729
        %v1791 = vpack.c.b16 %v1732, %v1731
        %v1792 = vpack.c.b16 %v1734, %v1733
        %v1793 = vpack.c.b16 %v1736, %v1735
        %v1794 = vpack.c.b16 %v1738, %v1737
        %v1795 = vpack.c.b16 %v1740, %v1739
        %v1796 = vpack.c.b16 %v1742, %v1741
        %v1797 = vpack.c.b16 %v1744, %v1743
        %v1798 = vpack.c.b16 %v1746, %v1745
        %v1799 = vpack.c.b16 %v1748, %v1747
        %v1800 = vpack.c.b16 %v1750, %v1749
        %v1801 = vpack.c.b16 %v1752, %v1751
        %v1802 = vpack.c.b16 %v1754, %v1753
        %v1803 = vpack.c.b16 %v1756, %v1755
        %v1804 = vpack.c.b16 %v1758, %v1757
        %v1805 = vpack.c.b16 %v1760, %v1759
        %v1806 = vpack.c.b16 %v1762, %v1761
        %v1807 = vpack.c.b16 %v1764, %v1763
        %v1808 = vpack.c.b16 %v1766, %v1765
        %v1809 = vpack.c.b16 %v1768, %v1767
        %v1810 = vpack.c.b16 %v1770, %v1769
        %v1811 = vpack.c.b16 %v1772, %v1771
        %v1812 = vpack.c.b16 %v1774, %v1773
        %v1813 = vpack.c.b16 %v1776, %v1775
        %v1814 = vpack.c.b16 %v1778, %v1777
        %v1815 = vpack.c.b16 %v1780, %v1779
        %v1816 = vpack.c.b16 %v1782, %v1781
        %v1817 = vpack.c.b16 %v1784, %v1783
        %v1818 = vpack.c.b16 %v1786, %v1785
        %1851 = vst [vmem:[#allocation3] sm:$0xff] %v1787
        %1852 = vst [vmem:[#allocation3 + $0x8] sm:$0xff] %v1788
        %1853 = vst [vmem:[#allocation3 + $0x10] sm:$0xff] %v1789
        %1854 = vst [vmem:[#allocation3 + $0x18] sm:$0xff] %v1790
        %1855 = vst [vmem:[#allocation3 + $0x20] sm:$0xff] %v1791
        %1856 = vst [vmem:[#allocation3 + $0x28] sm:$0xff] %v1792
        %1857 = vst [vmem:[#allocation3 + $0x30] sm:$0xff] %v1793
        %1858 = vst [vmem:[#allocation3 + $0x38] sm:$0xff] %v1794
        %1859 = vst [vmem:[#allocation3 + $0x40] sm:$0xff] %v1795
        %1860 = vst [vmem:[#allocation3 + $0x48] sm:$0xff] %v1796
        %1861 = vst [vmem:[#allocation3 + $0x50] sm:$0xff] %v1797
        %1862 = vst [vmem:[#allocation3 + $0x58] sm:$0xff] %v1798
        %1863 = vst [vmem:[#allocation3 + $0x60] sm:$0xff] %v1799
        %1864 = vst [vmem:[#allocation3 + $0x68] sm:$0xff] %v1800
        %1865 = vst [vmem:[#allocation3 + $0x70] sm:$0xff] %v1801
        %1866 = vst [vmem:[#allocation3 + $0x78] sm:$0xff] %v1802
        %1867 = vst [vmem:[#allocation3 + $0x80] sm:$0xff] %v1803
        %1868 = vst [vmem:[#allocation3 + $0x88] sm:$0xff] %v1804
        %1869 = vst [vmem:[#allocation3 + $0x90] sm:$0xff] %v1805
        %1870 = vst [vmem:[#allocation3 + $0x98] sm:$0xff] %v1806
        %1871 = vst [vmem:[#allocation3 + $0xa0] sm:$0xff] %v1807
        %1872 = vst [vmem:[#allocation3 + $0xa8] sm:$0xff] %v1808
        %1873 = vst [vmem:[#allocation3 + $0xb0] sm:$0xff] %v1809
        %1874 = vst [vmem:[#allocation3 + $0xb8] sm:$0xff] %v1810
        %1875 = vst [vmem:[#allocation3 + $0xc0] sm:$0xff] %v1811
        %1876 = vst [vmem:[#allocation3 + $0xc8] sm:$0xff] %v1812
        %1877 = vst [vmem:[#allocation3 + $0xd0] sm:$0xff] %v1813
        %1878 = vst [vmem:[#allocation3 + $0xd8] sm:$0xff] %v1814
        %1879 = vst [vmem:[#allocation3 + $0xe0] sm:$0xff] %v1815
        %1880 = vst [vmem:[#allocation3 + $0xe8] sm:$0xff] %v1816
        %1881 = vst [vmem:[#allocation3 + $0xf0] sm:$0xff] %v1817
        %1882 = vst [vmem:[#allocation3 + $0xf8] sm:$0xff] %v1818
        %v1883 = vld [vmem:[#allocation2] sm:$0xf]
        %v1884 = vld [vmem:[#allocation2 + $0x8] sm:$0xf]
        %v1885 = vld [vmem:[#allocation2 + $0x10] sm:$0xf]
        %v1886 = vld [vmem:[#allocation2 + $0x18] sm:$0xf]
        %v1887 = vld [vmem:[#allocation2 + $0x20] sm:$0xf]
        %v1888 = vld [vmem:[#allocation2 + $0x28] sm:$0xf]
        %v1889 = vld [vmem:[#allocation2 + $0x30] sm:$0xf]
        %v1890 = vld [vmem:[#allocation2 + $0x38] sm:$0xf]
        %v1891 = vld [vmem:[#allocation2 + $0x40] sm:$0xf]
        %v1892 = vld [vmem:[#allocation2 + $0x48] sm:$0xf]
        %v1893 = vld [vmem:[#allocation2 + $0x50] sm:$0xf]
        %v1894 = vld [vmem:[#allocation2 + $0x58] sm:$0xf]
        %v1895 = vld [vmem:[#allocation2 + $0x60] sm:$0xf]
        %v1896 = vld [vmem:[#allocation2 + $0x68] sm:$0xf]
        %v1897 = vld [vmem:[#allocation2 + $0x70] sm:$0xf]
        %v1898 = vld [vmem:[#allocation2 + $0x78] sm:$0xf]
        %v1899 = vld [vmem:[#allocation3] sm:$0xf]
        %v1900 = vld [vmem:[#allocation3 + $0x10] sm:$0xf]
        %v1901 = vld [vmem:[#allocation3 + $0x20] sm:$0xf]
        %v1902 = vld [vmem:[#allocation3 + $0x30] sm:$0xf]
        %v1903 = vld [vmem:[#allocation3 + $0x40] sm:$0xf]
        %v1904 = vld [vmem:[#allocation3 + $0x50] sm:$0xf]
        %v1905 = vld [vmem:[#allocation3 + $0x60] sm:$0xf]
        %v1906 = vld [vmem:[#allocation3 + $0x70] sm:$0xf]
        %v1907 = vld [vmem:[#allocation3 + $0x80] sm:$0xf]
        %v1908 = vld [vmem:[#allocation3 + $0x90] sm:$0xf]
        %v1909 = vld [vmem:[#allocation3 + $0xa0] sm:$0xf]
        %v1910 = vld [vmem:[#allocation3 + $0xb0] sm:$0xf]
        %v1911 = vld [vmem:[#allocation3 + $0xc0] sm:$0xf]
        %v1912 = vld [vmem:[#allocation3 + $0xd0] sm:$0xf]
        %v1913 = vld [vmem:[#allocation3 + $0xe0] sm:$0xf]
        %v1914 = vld [vmem:[#allocation3 + $0xf0] sm:$0xf]
        %v1915 = vld [vmem:[#allocation3 + $0x8] sm:$0xf]
        %v1916 = vld [vmem:[#allocation3 + $0x18] sm:$0xf]
        %v1917 = vld [vmem:[#allocation3 + $0x28] sm:$0xf]
        %v1918 = vld [vmem:[#allocation3 + $0x38] sm:$0xf]
        %v1919 = vld [vmem:[#allocation3 + $0x48] sm:$0xf]
        %v1920 = vld [vmem:[#allocation3 + $0x58] sm:$0xf]
        %v1921 = vld [vmem:[#allocation3 + $0x68] sm:$0xf]
        %v1922 = vld [vmem:[#allocation3 + $0x78] sm:$0xf]
        %v1923 = vld [vmem:[#allocation3 + $0x88] sm:$0xf]
        %v1924 = vld [vmem:[#allocation3 + $0x98] sm:$0xf]
        %v1925 = vld [vmem:[#allocation3 + $0xa8] sm:$0xf]
        %v1926 = vld [vmem:[#allocation3 + $0xb8] sm:$0xf]
        %v1927 = vld [vmem:[#allocation3 + $0xc8] sm:$0xf]
        %v1928 = vld [vmem:[#allocation3 + $0xd8] sm:$0xf]
        %v1929 = vld [vmem:[#allocation3 + $0xe8] sm:$0xf]
        %v1930 = vld [vmem:[#allocation3 + $0xf8] sm:$0xf]
        %v1947 = vunpack.c.l.b16 %v1883
        %v1948 = vunpack.c.l.b16 %v1884
        %v1949 = vunpack.c.l.b16 %v1885
        %v1950 = vunpack.c.l.b16 %v1886
        %v1951 = vunpack.c.l.b16 %v1887
        %v1952 = vunpack.c.l.b16 %v1888
        %v1953 = vunpack.c.l.b16 %v1889
        %v1954 = vunpack.c.l.b16 %v1890
        %v1955 = vunpack.c.l.b16 %v1891
        %v1956 = vunpack.c.l.b16 %v1892
        %v1957 = vunpack.c.l.b16 %v1893
        %v1958 = vunpack.c.l.b16 %v1894
        %v1959 = vunpack.c.l.b16 %v1895
        %v1960 = vunpack.c.l.b16 %v1896
        %v1961 = vunpack.c.l.b16 %v1897
        %v1962 = vunpack.c.l.b16 %v1898
        %v1963 = vpack.c.b16 %v1948, %v1947
        %v1964 = vpack.c.b16 %v1950, %v1949
        %v1965 = vpack.c.b16 %v1952, %v1951
        %v1966 = vpack.c.b16 %v1954, %v1953
        %v1967 = vpack.c.b16 %v1956, %v1955
        %v1968 = vpack.c.b16 %v1958, %v1957
        %v1969 = vpack.c.b16 %v1960, %v1959
        %v1970 = vpack.c.b16 %v1962, %v1961
        %v1987 = vunpack.c.l.b16 %v1899
        %v1988 = vunpack.c.l.b16 %v1900
        %v1989 = vunpack.c.l.b16 %v1901
        %v1990 = vunpack.c.l.b16 %v1902
        %v1991 = vunpack.c.l.b16 %v1903
        %v1992 = vunpack.c.l.b16 %v1904
        %v1993 = vunpack.c.l.b16 %v1905
        %v1994 = vunpack.c.l.b16 %v1906
        %v1995 = vunpack.c.l.b16 %v1907
        %v1996 = vunpack.c.l.b16 %v1908
        %v1997 = vunpack.c.l.b16 %v1909
        %v1998 = vunpack.c.l.b16 %v1910
        %v1999 = vunpack.c.l.b16 %v1911
        %v2000 = vunpack.c.l.b16 %v1912
        %v2001 = vunpack.c.l.b16 %v1913
        %v2002 = vunpack.c.l.b16 %v1914
        %v2003 = vpack.c.b16 %v1988, %v1987
        %v2004 = vpack.c.b16 %v1990, %v1989
        %v2005 = vpack.c.b16 %v1992, %v1991
        %v2006 = vpack.c.b16 %v1994, %v1993
        %v2007 = vpack.c.b16 %v1996, %v1995
        %v2008 = vpack.c.b16 %v1998, %v1997
        %v2009 = vpack.c.b16 %v2000, %v1999
        %v2010 = vpack.c.b16 %v2002, %v2001
        %vm2011 = vcmask 523264
        %v2013 = vsel %vm2011, %v1963, 0
        %v2016 = vsel %vm2011, %v1964, 0
        %v2019 = vsel %vm2011, %v1965, 0
        %v2022 = vsel %vm2011, %v1966, 0
        %v2025 = vsel %vm2011, %v1967, 0
        %v2028 = vsel %vm2011, %v1968, 0
        %v2031 = vsel %vm2011, %v1969, 0
        %v2034 = vsel %vm2011, %v1970, 0
        %v2037 = vsel %vm2011, %v2003, 0
        %v2040 = vsel %vm2011, %v2004, 0
        %v2043 = vsel %vm2011, %v2005, 0
        %v2046 = vsel %vm2011, %v2006, 0
        %v2049 = vsel %vm2011, %v2007, 0
        %v2052 = vsel %vm2011, %v2008, 0
        %v2055 = vsel %vm2011, %v2009, 0
        %v2058 = vsel %vm2011, %v2010, 0
        %2060 = vmatprep.subr.bf16.mxu0 0
        %2061 = vmatpush1.bf16.xpose.msra.mxu0 %v2058
        %2062 = vmatprep.subr.bf16.mxu0 0
        %2063 = vmatpush1.bf16.xpose.msra.mxu0 %v2055
        %2064 = vmatprep.subr.bf16.mxu0 0
        %2065 = vmatpush1.bf16.xpose.msra.mxu0 %v2052
        %2066 = vmatprep.subr.bf16.mxu0 0
        %2067 = vmatpush1.bf16.xpose.msra.mxu0 %v2049
        %2068 = vmatprep.subr.bf16.mxu0 0
        %2069 = vmatpush1.bf16.xpose.msra.mxu0 %v2046
        %2070 = vmatprep.subr.bf16.mxu0 0
        %2071 = vmatpush1.bf16.xpose.msra.mxu0 %v2043
        %2072 = vmatprep.subr.bf16.mxu0 0
        %2073 = vmatpush1.bf16.xpose.msra.mxu0 %v2040
        %2074 = vmatprep.subr.bf16.mxu0 0
        %2075 = vmatpush1.bf16.xpose.msra.mxu0 %v2037
        %2076 = vmatprep.subr.bf16.mxu0 0
        %2077 = vmatpush2.bf16.xpose.msra.mxu0 0
        %2078 = vmatprep.subr.bf16.mxu0 0
        %2079 = vmatpush2.bf16.xpose.msra.mxu0 0
        %2080 = vmatprep.subr.bf16.mxu0 0
        %2081 = vmatpush2.bf16.xpose.msra.mxu0 0
        %2082 = vmatprep.subr.bf16.mxu0 0
        %2083 = vmatpush2.bf16.xpose.msra.mxu0 0
        %2084 = vmatprep.subr.bf16.mxu0 0
        %2085 = vmatpush2.bf16.xpose.msra.mxu0 0
        %2086 = vmatprep.subr.bf16.mxu0 0
        %2087 = vmatpush2.bf16.xpose.msra.mxu0 0
        %2088 = vmatprep.subr.bf16.mxu0 0
        %2089 = vmatpush2.bf16.xpose.msra.mxu0 0
        %2090 = vmatprep.subr.bf16.mxu0 0
        %2091 = vmatpush2.bf16.xpose.msra.mxu0 0
        %2092 = vmatprep.mubr.bf16.mxu0 0
        %2093 = vmatmul.mubr.bf16.gmra.mxu0 %v2013
        %v2094 = vpop.f32.mrf.mxu0
        %v2095 = vadd.f32 0.0, %v2094
        %v2096 = vpop.f32.mrf.mxu0
        %v2097 = vpop.f32.mrf.mxu0
        %v2098 = vadd.f32 0.0, %v2097
        %v2099 = vpop.f32.mrf.mxu0
        %2100 = vmatprep.mubr.bf16.mxu0 0
        %2101 = vmatmul.mubr.bf16.gmra.mxu0 %v2016
        %v2102 = vpop.f32.mrf.mxu0
        %v2103 = vadd.f32 0.0, %v2102
        %v2104 = vpop.f32.mrf.mxu0
        %v2105 = vpop.f32.mrf.mxu0
        %v2106 = vadd.f32 0.0, %v2105
        %v2107 = vpop.f32.mrf.mxu0
        %2108 = vmatprep.mubr.bf16.mxu0 0
        %2109 = vmatmul.mubr.bf16.gmra.mxu0 %v2019
        %v2110 = vpop.f32.mrf.mxu0
        %v2111 = vadd.f32 0.0, %v2110
        %v2112 = vpop.f32.mrf.mxu0
        %v2113 = vpop.f32.mrf.mxu0
        %v2114 = vadd.f32 0.0, %v2113
        %v2115 = vpop.f32.mrf.mxu0
        %2116 = vmatprep.mubr.bf16.mxu0 0
        %2117 = vmatmul.mubr.bf16.gmra.mxu0 %v2022
        %v2118 = vpop.f32.mrf.mxu0
        %v2119 = vadd.f32 0.0, %v2118
        %v2120 = vpop.f32.mrf.mxu0
        %v2121 = vpop.f32.mrf.mxu0
        %v2122 = vadd.f32 0.0, %v2121
        %v2123 = vpop.f32.mrf.mxu0
        %2124 = vmatprep.mubr.bf16.mxu0 0
        %2125 = vmatmul.mubr.bf16.gmra.mxu0 %v2025
        %v2126 = vpop.f32.mrf.mxu0
        %v2127 = vadd.f32 0.0, %v2126
        %v2128 = vpop.f32.mrf.mxu0
        %v2129 = vpop.f32.mrf.mxu0
        %v2130 = vadd.f32 0.0, %v2129
        %v2131 = vpop.f32.mrf.mxu0
        %2132 = vmatprep.mubr.bf16.mxu0 0
        %2133 = vmatmul.mubr.bf16.gmra.mxu0 %v2028
        %v2134 = vpop.f32.mrf.mxu0
        %v2135 = vadd.f32 0.0, %v2134
        %v2136 = vpop.f32.mrf.mxu0
        %v2137 = vpop.f32.mrf.mxu0
        %v2138 = vadd.f32 0.0, %v2137
        %v2139 = vpop.f32.mrf.mxu0
        %2140 = vmatprep.mubr.bf16.mxu0 0
        %2141 = vmatmul.mubr.bf16.gmra.mxu0 %v2031
        %v2142 = vpop.f32.mrf.mxu0
        %v2143 = vadd.f32 0.0, %v2142
        %v2144 = vpop.f32.mrf.mxu0
        %v2145 = vpop.f32.mrf.mxu0
        %v2146 = vadd.f32 0.0, %v2145
        %v2147 = vpop.f32.mrf.mxu0
        %2148 = vmatprep.mubr.bf16.mxu0 0
        %2149 = vmatmul.mubr.bf16.gmra.mxu0 %v2034
        %v2150 = vpop.f32.mrf.mxu0
        %v2151 = vadd.f32 0.0, %v2150
        %v2152 = vpop.f32.mrf.mxu0
        %v2153 = vpop.f32.mrf.mxu0
        %v2154 = vadd.f32 0.0, %v2153
        %v2155 = vpop.f32.mrf.mxu0
        %2156 = vdwg.mxu0
        %2157 = vmax.xlane.f32.xlu0 %v2095
        %v2158 = vpop.xlane.xlu0 %2157
        %2159 = vmax.xlane.f32.xlu0 %v2098
        %v2160 = vpop.xlane.xlu0 %2159
        %2161 = vmax.xlane.f32.xlu0 %v2103
        %v2162 = vpop.xlane.xlu0 %2161
        %2163 = vmax.xlane.f32.xlu0 %v2106
        %v2164 = vpop.xlane.xlu0 %2163
        %2165 = vmax.xlane.f32.xlu0 %v2111
        %v2166 = vpop.xlane.xlu0 %2165
        %2167 = vmax.xlane.f32.xlu0 %v2114
        %v2168 = vpop.xlane.xlu0 %2167
        %2169 = vmax.xlane.f32.xlu0 %v2119
        %v2170 = vpop.xlane.xlu0 %2169
        %2171 = vmax.xlane.f32.xlu0 %v2122
        %v2172 = vpop.xlane.xlu0 %2171
        %2173 = vmax.xlane.f32.xlu0 %v2127
        %v2174 = vpop.xlane.xlu0 %2173
        %2175 = vmax.xlane.f32.xlu0 %v2130
        %v2176 = vpop.xlane.xlu0 %2175
        %2177 = vmax.xlane.f32.xlu0 %v2135
        %v2178 = vpop.xlane.xlu0 %2177
        %2179 = vmax.xlane.f32.xlu0 %v2138
        %v2180 = vpop.xlane.xlu0 %2179
        %2181 = vmax.xlane.f32.xlu0 %v2143
        %v2182 = vpop.xlane.xlu0 %2181
        %2183 = vmax.xlane.f32.xlu0 %v2146
        %v2184 = vpop.xlane.xlu0 %2183
        %2185 = vmax.xlane.f32.xlu0 %v2151
        %v2186 = vpop.xlane.xlu0 %2185
        %2187 = vmax.xlane.f32.xlu0 %v2154
        %v2188 = vpop.xlane.xlu0 %2187
        %v2189 = vsub.f32 %v2095, %v2158
        %v2190 = vsub.f32 %v2098, %v2160
        %v2191 = vsub.f32 %v2103, %v2162
        %v2192 = vsub.f32 %v2106, %v2164
        %v2193 = vsub.f32 %v2111, %v2166
        %v2194 = vsub.f32 %v2114, %v2168
        %v2195 = vsub.f32 %v2119, %v2170
        %v2196 = vsub.f32 %v2122, %v2172
        %v2197 = vsub.f32 %v2127, %v2174
        %v2198 = vsub.f32 %v2130, %v2176
        %v2199 = vsub.f32 %v2135, %v2178
        %v2200 = vsub.f32 %v2138, %v2180
        %v2201 = vsub.f32 %v2143, %v2182
        %v2202 = vsub.f32 %v2146, %v2184
        %v2203 = vsub.f32 %v2151, %v2186
        %v2204 = vsub.f32 %v2154, %v2188
        %v2205 = vmul.f32 %v2189, 1.442695
        %v2206 = vpow.pop %v2205
        %v2207 = vmul.f32 %v2190, 1.442695
        %v2208 = vpow.pop %v2207
        %v2209 = vmul.f32 %v2191, 1.442695
        %v2210 = vpow.pop %v2209
        %v2211 = vmul.f32 %v2192, 1.442695
        %v2212 = vpow.pop %v2211
        %v2213 = vmul.f32 %v2193, 1.442695
        %v2214 = vpow.pop %v2213
        %v2215 = vmul.f32 %v2194, 1.442695
        %v2216 = vpow.pop %v2215
        %v2217 = vmul.f32 %v2195, 1.442695
        %v2218 = vpow.pop %v2217
        %v2219 = vmul.f32 %v2196, 1.442695
        %v2220 = vpow.pop %v2219
        %v2221 = vmul.f32 %v2197, 1.442695
        %v2222 = vpow.pop %v2221
        %v2223 = vmul.f32 %v2198, 1.442695
        %v2224 = vpow.pop %v2223
        %v2225 = vmul.f32 %v2199, 1.442695
        %v2226 = vpow.pop %v2225
        %v2227 = vmul.f32 %v2200, 1.442695
        %v2228 = vpow.pop %v2227
        %v2229 = vmul.f32 %v2201, 1.442695
        %v2230 = vpow.pop %v2229
        %v2231 = vmul.f32 %v2202, 1.442695
        %v2232 = vpow.pop %v2231
        %v2233 = vmul.f32 %v2203, 1.442695
        %v2234 = vpow.pop %v2233
        %v2235 = vmul.f32 %v2204, 1.442695
        %v2236 = vpow.pop %v2235
        %2237 = vadd.xlane.f32.xlu0 %v2206
        %v2238 = vpop.xlane.xlu0 %2237
        %2239 = vadd.xlane.f32.xlu0 %v2208
        %v2240 = vpop.xlane.xlu0 %2239
        %2241 = vadd.xlane.f32.xlu0 %v2210
        %v2242 = vpop.xlane.xlu0 %2241
        %2243 = vadd.xlane.f32.xlu0 %v2212
        %v2244 = vpop.xlane.xlu0 %2243
        %2245 = vadd.xlane.f32.xlu0 %v2214
        %v2246 = vpop.xlane.xlu0 %2245
        %2247 = vadd.xlane.f32.xlu0 %v2216
        %v2248 = vpop.xlane.xlu0 %2247
        %2249 = vadd.xlane.f32.xlu0 %v2218
        %v2250 = vpop.xlane.xlu0 %2249
        %2251 = vadd.xlane.f32.xlu0 %v2220
        %v2252 = vpop.xlane.xlu0 %2251
        %2253 = vadd.xlane.f32.xlu0 %v2222
        %v2254 = vpop.xlane.xlu0 %2253
        %2255 = vadd.xlane.f32.xlu0 %v2224
        %v2256 = vpop.xlane.xlu0 %2255
        %2257 = vadd.xlane.f32.xlu0 %v2226
        %v2258 = vpop.xlane.xlu0 %2257
        %2259 = vadd.xlane.f32.xlu0 %v2228
        %v2260 = vpop.xlane.xlu0 %2259
        %2261 = vadd.xlane.f32.xlu0 %v2230
        %v2262 = vpop.xlane.xlu0 %2261
        %2263 = vadd.xlane.f32.xlu0 %v2232
        %v2264 = vpop.xlane.xlu0 %2263
        %2265 = vadd.xlane.f32.xlu0 %v2234
        %v2266 = vpop.xlane.xlu0 %2265
        %2267 = vadd.xlane.f32.xlu0 %v2236
        %v2268 = vpop.xlane.xlu0 %2267
        %v2269 = vrcp.pop %v2238
        %v2270 = vrcp.pop %v2240
        %v2271 = vrcp.pop %v2242
        %v2272 = vrcp.pop %v2244
        %v2273 = vrcp.pop %v2246
        %v2274 = vrcp.pop %v2248
        %v2275 = vrcp.pop %v2250
        %v2276 = vrcp.pop %v2252
        %v2277 = vrcp.pop %v2254
        %v2278 = vrcp.pop %v2256
        %v2279 = vrcp.pop %v2258
        %v2280 = vrcp.pop %v2260
        %v2281 = vrcp.pop %v2262
        %v2282 = vrcp.pop %v2264
        %v2283 = vrcp.pop %v2266
        %v2284 = vrcp.pop %v2268
        %v2285 = vmul.f32 %v2206, %v2269
        %v2286 = vmul.f32 %v2208, %v2270
        %v2287 = vmul.f32 %v2210, %v2271
        %v2288 = vmul.f32 %v2212, %v2272
        %v2289 = vmul.f32 %v2214, %v2273
        %v2290 = vmul.f32 %v2216, %v2274
        %v2291 = vmul.f32 %v2218, %v2275
        %v2292 = vmul.f32 %v2220, %v2276
        %v2293 = vmul.f32 %v2222, %v2277
        %v2294 = vmul.f32 %v2224, %v2278
        %v2295 = vmul.f32 %v2226, %v2279
        %v2296 = vmul.f32 %v2228, %v2280
        %v2297 = vmul.f32 %v2230, %v2281
        %v2298 = vmul.f32 %v2232, %v2282
        %v2299 = vmul.f32 %v2234, %v2283
        %v2300 = vmul.f32 %v2236, %v2284
        %v2301 = vpack.c.bf16 %v2286, %v2285
        %v2302 = vpack.c.bf16 %v2288, %v2287
        %v2303 = vpack.c.bf16 %v2290, %v2289
        %v2304 = vpack.c.bf16 %v2292, %v2291
        %v2305 = vpack.c.bf16 %v2294, %v2293
        %v2306 = vpack.c.bf16 %v2296, %v2295
        %v2307 = vpack.c.bf16 %v2298, %v2297
        %v2308 = vpack.c.bf16 %v2300, %v2299
        %v2325 = vunpack.c.l.b16 %v1915
        %v2326 = vunpack.c.l.b16 %v1916
        %v2327 = vunpack.c.l.b16 %v1917
        %v2328 = vunpack.c.l.b16 %v1918
        %v2329 = vunpack.c.l.b16 %v1919
        %v2330 = vunpack.c.l.b16 %v1920
        %v2331 = vunpack.c.l.b16 %v1921
        %v2332 = vunpack.c.l.b16 %v1922
        %v2333 = vunpack.c.l.b16 %v1923
        %v2334 = vunpack.c.l.b16 %v1924
        %v2335 = vunpack.c.l.b16 %v1925
        %v2336 = vunpack.c.l.b16 %v1926
        %v2337 = vunpack.c.l.b16 %v1927
        %v2338 = vunpack.c.l.b16 %v1928
        %v2339 = vunpack.c.l.b16 %v1929
        %v2340 = vunpack.c.l.b16 %v1930
        %v2341 = vpack.c.b16 %v2326, %v2325
        %v2342 = vpack.c.b16 %v2328, %v2327
        %v2343 = vpack.c.b16 %v2330, %v2329
        %v2344 = vpack.c.b16 %v2332, %v2331
        %v2345 = vpack.c.b16 %v2334, %v2333
        %v2346 = vpack.c.b16 %v2336, %v2335
        %v2347 = vpack.c.b16 %v2338, %v2337
        %v2348 = vpack.c.b16 %v2340, %v2339
        %2357 = vmatprep.subr.bf16.mxu0 0
        %2358 = vmatpush1.bf16.msra.mxu0 %v2348
        %2359 = vmatprep.subr.bf16.mxu0 0
        %2360 = vmatpush1.bf16.msra.mxu0 %v2347
        %2361 = vmatprep.subr.bf16.mxu0 0
        %2362 = vmatpush1.bf16.msra.mxu0 %v2346
        %2363 = vmatprep.subr.bf16.mxu0 0
        %2364 = vmatpush1.bf16.msra.mxu0 %v2345
        %2365 = vmatprep.subr.bf16.mxu0 0
        %2366 = vmatpush1.bf16.msra.mxu0 %v2344
        %2367 = vmatprep.subr.bf16.mxu0 0
        %2368 = vmatpush1.bf16.msra.mxu0 %v2343
        %2369 = vmatprep.subr.bf16.mxu0 0
        %2370 = vmatpush1.bf16.msra.mxu0 %v2342
        %2371 = vmatprep.subr.bf16.mxu0 0
        %2372 = vmatpush1.bf16.msra.mxu0 %v2341
        %2373 = vmatprep.subr.bf16.mxu0 0
        %2374 = vmatpush2.bf16.msra.mxu0 0
        %2375 = vmatprep.subr.bf16.mxu0 0
        %2376 = vmatpush2.bf16.msra.mxu0 0
        %2377 = vmatprep.subr.bf16.mxu0 0
        %2378 = vmatpush2.bf16.msra.mxu0 0
        %2379 = vmatprep.subr.bf16.mxu0 0
        %2380 = vmatpush2.bf16.msra.mxu0 0
        %2381 = vmatprep.subr.bf16.mxu0 0
        %2382 = vmatpush2.bf16.msra.mxu0 0
        %2383 = vmatprep.subr.bf16.mxu0 0
        %2384 = vmatpush2.bf16.msra.mxu0 0
        %2385 = vmatprep.subr.bf16.mxu0 0
        %2386 = vmatpush2.bf16.msra.mxu0 0
        %2387 = vmatprep.subr.bf16.mxu0 0
        %2388 = vmatpush2.bf16.msra.mxu0 0
        %2389 = vmatprep.mubr.bf16.mxu0 0
        %2390 = vmatmul.mubr.bf16.gmra.mxu0 %v2301
        %v2391 = vpop.f32.mrf.mxu0
        %v2392 = vadd.f32 0.0, %v2391
        %v2393 = vpop.f32.mrf.mxu0
        %v2394 = vpop.f32.mrf.mxu0
        %v2395 = vadd.f32 0.0, %v2394
        %v2396 = vpop.f32.mrf.mxu0
        %2397 = vmatprep.mubr.bf16.mxu0 0
        %2398 = vmatmul.mubr.bf16.gmra.mxu0 %v2302
        %v2399 = vpop.f32.mrf.mxu0
        %v2400 = vadd.f32 0.0, %v2399
        %v2401 = vpop.f32.mrf.mxu0
        %v2402 = vpop.f32.mrf.mxu0
        %v2403 = vadd.f32 0.0, %v2402
        %v2404 = vpop.f32.mrf.mxu0
        %2405 = vmatprep.mubr.bf16.mxu0 0
        %2406 = vmatmul.mubr.bf16.gmra.mxu0 %v2303
        %v2407 = vpop.f32.mrf.mxu0
        %v2408 = vadd.f32 0.0, %v2407
        %v2409 = vpop.f32.mrf.mxu0
        %v2410 = vpop.f32.mrf.mxu0
        %v2411 = vadd.f32 0.0, %v2410
        %v2412 = vpop.f32.mrf.mxu0
        %2413 = vmatprep.mubr.bf16.mxu0 0
        %2414 = vmatmul.mubr.bf16.gmra.mxu0 %v2304
        %v2415 = vpop.f32.mrf.mxu0
        %v2416 = vadd.f32 0.0, %v2415
        %v2417 = vpop.f32.mrf.mxu0
        %v2418 = vpop.f32.mrf.mxu0
        %v2419 = vadd.f32 0.0, %v2418
        %v2420 = vpop.f32.mrf.mxu0
        %2421 = vmatprep.mubr.bf16.mxu0 0
        %2422 = vmatmul.mubr.bf16.gmra.mxu0 %v2305
        %v2423 = vpop.f32.mrf.mxu0
        %v2424 = vadd.f32 0.0, %v2423
        %v2425 = vpop.f32.mrf.mxu0
        %v2426 = vpop.f32.mrf.mxu0
        %v2427 = vadd.f32 0.0, %v2426
        %v2428 = vpop.f32.mrf.mxu0
        %2429 = vmatprep.mubr.bf16.mxu0 0
        %2430 = vmatmul.mubr.bf16.gmra.mxu0 %v2306
        %v2431 = vpop.f32.mrf.mxu0
        %v2432 = vadd.f32 0.0, %v2431
        %v2433 = vpop.f32.mrf.mxu0
        %v2434 = vpop.f32.mrf.mxu0
        %v2435 = vadd.f32 0.0, %v2434
        %v2436 = vpop.f32.mrf.mxu0
        %2437 = vmatprep.mubr.bf16.mxu0 0
        %2438 = vmatmul.mubr.bf16.gmra.mxu0 %v2307
        %v2439 = vpop.f32.mrf.mxu0
        %v2440 = vadd.f32 0.0, %v2439
        %v2441 = vpop.f32.mrf.mxu0
        %v2442 = vpop.f32.mrf.mxu0
        %v2443 = vadd.f32 0.0, %v2442
        %v2444 = vpop.f32.mrf.mxu0
        %2445 = vmatprep.mubr.bf16.mxu0 0
        %2446 = vmatmul.mubr.bf16.gmra.mxu0 %v2308
        %v2447 = vpop.f32.mrf.mxu0
        %v2448 = vadd.f32 0.0, %v2447
        %v2449 = vpop.f32.mrf.mxu0
        %v2450 = vpop.f32.mrf.mxu0
        %v2451 = vadd.f32 0.0, %v2450
        %v2452 = vpop.f32.mrf.mxu0
        %2453 = vdwg.mxu0
        %v2454 = vpack.c.bf16 %v2395, %v2392
        %v2455 = vpack.c.bf16 %v2403, %v2400
        %v2456 = vpack.c.bf16 %v2411, %v2408
        %v2457 = vpack.c.bf16 %v2419, %v2416
        %v2458 = vpack.c.bf16 %v2427, %v2424
        %v2459 = vpack.c.bf16 %v2435, %v2432
        %v2460 = vpack.c.bf16 %v2443, %v2440
        %v2461 = vpack.c.bf16 %v2451, %v2448
        %v2462 = vld [vmem:[#allocation10] sm:$0xff]
        %v2463 = vld [vmem:[#allocation10 + $0x8] sm:$0xff]
        %v2464 = vld [vmem:[#allocation10 + $0x10] sm:$0xff]
        %v2465 = vld [vmem:[#allocation10 + $0x18] sm:$0xff]
        %v2466 = vld [vmem:[#allocation10 + $0x20] sm:$0xff]
        %v2467 = vld [vmem:[#allocation10 + $0x28] sm:$0xff]
        %v2468 = vld [vmem:[#allocation10 + $0x30] sm:$0xff]
        %v2469 = vld [vmem:[#allocation10 + $0x38] sm:$0xff]
        %2470 = vrot.lane.b32.xlu0 %v1963, 64
        %v2471 = vpop.permute.xlu0 %2470
        %2472 = vrot.lane.b32.xlu0 %v1964, 64
        %v2473 = vpop.permute.xlu0 %2472
        %2474 = vrot.lane.b32.xlu0 %v1965, 64
        %v2475 = vpop.permute.xlu0 %2474
        %2476 = vrot.lane.b32.xlu0 %v1966, 64
        %v2477 = vpop.permute.xlu0 %2476
        %2478 = vrot.lane.b32.xlu0 %v1967, 64
        %v2479 = vpop.permute.xlu0 %2478
        %2480 = vrot.lane.b32.xlu0 %v1968, 64
        %v2481 = vpop.permute.xlu0 %2480
        %2482 = vrot.lane.b32.xlu0 %v1969, 64
        %v2483 = vpop.permute.xlu0 %2482
        %2484 = vrot.lane.b32.xlu0 %v1970, 64
        %v2485 = vpop.permute.xlu0 %2484
        %2486 = vrot.lane.b32.xlu0 %v2003, 64
        %v2487 = vpop.permute.xlu0 %2486
        %2488 = vrot.lane.b32.xlu0 %v2004, 64
        %v2489 = vpop.permute.xlu0 %2488
        %2490 = vrot.lane.b32.xlu0 %v2005, 64
        %v2491 = vpop.permute.xlu0 %2490
        %2492 = vrot.lane.b32.xlu0 %v2006, 64
        %v2493 = vpop.permute.xlu0 %2492
        %2494 = vrot.lane.b32.xlu0 %v2007, 64
        %v2495 = vpop.permute.xlu0 %2494
        %2496 = vrot.lane.b32.xlu0 %v2008, 64
        %v2497 = vpop.permute.xlu0 %2496
        %2498 = vrot.lane.b32.xlu0 %v2009, 64
        %v2499 = vpop.permute.xlu0 %2498
        %2500 = vrot.lane.b32.xlu0 %v2010, 64
        %v2501 = vpop.permute.xlu0 %2500
        %v2503 = vsel %vm2011, %v2471, 0
        %v2506 = vsel %vm2011, %v2473, 0
        %v2509 = vsel %vm2011, %v2475, 0
        %v2512 = vsel %vm2011, %v2477, 0
        %v2515 = vsel %vm2011, %v2479, 0
        %v2518 = vsel %vm2011, %v2481, 0
        %v2521 = vsel %vm2011, %v2483, 0
        %v2524 = vsel %vm2011, %v2485, 0
        %v2527 = vsel %vm2011, %v2487, 0
        %v2530 = vsel %vm2011, %v2489, 0
        %v2533 = vsel %vm2011, %v2491, 0
        %v2536 = vsel %vm2011, %v2493, 0
        %v2539 = vsel %vm2011, %v2495, 0
        %v2542 = vsel %vm2011, %v2497, 0
        %v2545 = vsel %vm2011, %v2499, 0
        %v2548 = vsel %vm2011, %v2501, 0
        %2550 = vmatprep.subr.bf16.mxu0 0
        %2551 = vmatpush1.bf16.xpose.msra.mxu0 %v2548
        %2552 = vmatprep.subr.bf16.mxu0 0
        %2553 = vmatpush1.bf16.xpose.msra.mxu0 %v2545
        %2554 = vmatprep.subr.bf16.mxu0 0
        %2555 = vmatpush1.bf16.xpose.msra.mxu0 %v2542
        %2556 = vmatprep.subr.bf16.mxu0 0
        %2557 = vmatpush1.bf16.xpose.msra.mxu0 %v2539
        %2558 = vmatprep.subr.bf16.mxu0 0
        %2559 = vmatpush1.bf16.xpose.msra.mxu0 %v2536
        %2560 = vmatprep.subr.bf16.mxu0 0
        %2561 = vmatpush1.bf16.xpose.msra.mxu0 %v2533
        %2562 = vmatprep.subr.bf16.mxu0 0
        %2563 = vmatpush1.bf16.xpose.msra.mxu0 %v2530
        %2564 = vmatprep.subr.bf16.mxu0 0
        %2565 = vmatpush1.bf16.xpose.msra.mxu0 %v2527
        %2566 = vmatprep.subr.bf16.mxu0 0
        %2567 = vmatpush2.bf16.xpose.msra.mxu0 0
        %2568 = vmatprep.subr.bf16.mxu0 0
        %2569 = vmatpush2.bf16.xpose.msra.mxu0 0
        %2570 = vmatprep.subr.bf16.mxu0 0
        %2571 = vmatpush2.bf16.xpose.msra.mxu0 0
        %2572 = vmatprep.subr.bf16.mxu0 0
        %2573 = vmatpush2.bf16.xpose.msra.mxu0 0
        %2574 = vmatprep.subr.bf16.mxu0 0
        %2575 = vmatpush2.bf16.xpose.msra.mxu0 0
        %2576 = vmatprep.subr.bf16.mxu0 0
        %2577 = vmatpush2.bf16.xpose.msra.mxu0 0
        %2578 = vmatprep.subr.bf16.mxu0 0
        %2579 = vmatpush2.bf16.xpose.msra.mxu0 0
        %2580 = vmatprep.subr.bf16.mxu0 0
        %2581 = vmatpush2.bf16.xpose.msra.mxu0 0
        %2582 = vmatprep.mubr.bf16.mxu0 0
        %2583 = vmatmul.mubr.bf16.gmra.mxu0 %v2503
        %v2584 = vpop.f32.mrf.mxu0
        %v2585 = vadd.f32 0.0, %v2584
        %v2586 = vpop.f32.mrf.mxu0
        %v2587 = vpop.f32.mrf.mxu0
        %v2588 = vadd.f32 0.0, %v2587
        %v2589 = vpop.f32.mrf.mxu0
        %2590 = vmatprep.mubr.bf16.mxu0 0
        %2591 = vmatmul.mubr.bf16.gmra.mxu0 %v2506
        %v2592 = vpop.f32.mrf.mxu0
        %v2593 = vadd.f32 0.0, %v2592
        %v2594 = vpop.f32.mrf.mxu0
        %v2595 = vpop.f32.mrf.mxu0
        %v2596 = vadd.f32 0.0, %v2595
        %v2597 = vpop.f32.mrf.mxu0
        %2598 = vmatprep.mubr.bf16.mxu0 0
        %2599 = vmatmul.mubr.bf16.gmra.mxu0 %v2509
        %v2600 = vpop.f32.mrf.mxu0
        %v2601 = vadd.f32 0.0, %v2600
        %v2602 = vpop.f32.mrf.mxu0
        %v2603 = vpop.f32.mrf.mxu0
        %v2604 = vadd.f32 0.0, %v2603
        %v2605 = vpop.f32.mrf.mxu0
        %2606 = vmatprep.mubr.bf16.mxu0 0
        %2607 = vmatmul.mubr.bf16.gmra.mxu0 %v2512
        %v2608 = vpop.f32.mrf.mxu0
        %v2609 = vadd.f32 0.0, %v2608
        %v2610 = vpop.f32.mrf.mxu0
        %v2611 = vpop.f32.mrf.mxu0
        %v2612 = vadd.f32 0.0, %v2611
        %v2613 = vpop.f32.mrf.mxu0
        %2614 = vmatprep.mubr.bf16.mxu0 0
        %2615 = vmatmul.mubr.bf16.gmra.mxu0 %v2515
        %v2616 = vpop.f32.mrf.mxu0
        %v2617 = vadd.f32 0.0, %v2616
        %v2618 = vpop.f32.mrf.mxu0
        %v2619 = vpop.f32.mrf.mxu0
        %v2620 = vadd.f32 0.0, %v2619
        %v2621 = vpop.f32.mrf.mxu0
        %2622 = vmatprep.mubr.bf16.mxu0 0
        %2623 = vmatmul.mubr.bf16.gmra.mxu0 %v2518
        %v2624 = vpop.f32.mrf.mxu0
        %v2625 = vadd.f32 0.0, %v2624
        %v2626 = vpop.f32.mrf.mxu0
        %v2627 = vpop.f32.mrf.mxu0
        %v2628 = vadd.f32 0.0, %v2627
        %v2629 = vpop.f32.mrf.mxu0
        %2630 = vmatprep.mubr.bf16.mxu0 0
        %2631 = vmatmul.mubr.bf16.gmra.mxu0 %v2521
        %v2632 = vpop.f32.mrf.mxu0
        %v2633 = vadd.f32 0.0, %v2632
        %v2634 = vpop.f32.mrf.mxu0
        %v2635 = vpop.f32.mrf.mxu0
        %v2636 = vadd.f32 0.0, %v2635
        %v2637 = vpop.f32.mrf.mxu0
        %2638 = vmatprep.mubr.bf16.mxu0 0
        %2639 = vmatmul.mubr.bf16.gmra.mxu0 %v2524
        %v2640 = vpop.f32.mrf.mxu0
        %v2641 = vadd.f32 0.0, %v2640
        %v2642 = vpop.f32.mrf.mxu0
        %v2643 = vpop.f32.mrf.mxu0
        %v2644 = vadd.f32 0.0, %v2643
        %v2645 = vpop.f32.mrf.mxu0
        %2646 = vdwg.mxu0
        %2647 = vmax.xlane.f32.xlu0 %v2585
        %v2648 = vpop.xlane.xlu0 %2647
        %2649 = vmax.xlane.f32.xlu0 %v2588
        %v2650 = vpop.xlane.xlu0 %2649
        %2651 = vmax.xlane.f32.xlu0 %v2593
        %v2652 = vpop.xlane.xlu0 %2651
        %2653 = vmax.xlane.f32.xlu0 %v2596
        %v2654 = vpop.xlane.xlu0 %2653
        %2655 = vmax.xlane.f32.xlu0 %v2601
        %v2656 = vpop.xlane.xlu0 %2655
        %2657 = vmax.xlane.f32.xlu0 %v2604
        %v2658 = vpop.xlane.xlu0 %2657
        %2659 = vmax.xlane.f32.xlu0 %v2609
        %v2660 = vpop.xlane.xlu0 %2659
        %2661 = vmax.xlane.f32.xlu0 %v2612
        %v2662 = vpop.xlane.xlu0 %2661
        %2663 = vmax.xlane.f32.xlu0 %v2617
        %v2664 = vpop.xlane.xlu0 %2663
        %2665 = vmax.xlane.f32.xlu0 %v2620
        %v2666 = vpop.xlane.xlu0 %2665
        %2667 = vmax.xlane.f32.xlu0 %v2625
        %v2668 = vpop.xlane.xlu0 %2667
        %2669 = vmax.xlane.f32.xlu0 %v2628
        %v2670 = vpop.xlane.xlu0 %2669
        %2671 = vmax.xlane.f32.xlu0 %v2633
        %v2672 = vpop.xlane.xlu0 %2671
        %2673 = vmax.xlane.f32.xlu0 %v2636
        %v2674 = vpop.xlane.xlu0 %2673
        %2675 = vmax.xlane.f32.xlu0 %v2641
        %v2676 = vpop.xlane.xlu0 %2675
        %2677 = vmax.xlane.f32.xlu0 %v2644
        %v2678 = vpop.xlane.xlu0 %2677
        %v2679 = vsub.f32 %v2585, %v2648
        %v2680 = vsub.f32 %v2588, %v2650
        %v2681 = vsub.f32 %v2593, %v2652
        %v2682 = vsub.f32 %v2596, %v2654
        %v2683 = vsub.f32 %v2601, %v2656
        %v2684 = vsub.f32 %v2604, %v2658
        %v2685 = vsub.f32 %v2609, %v2660
        %v2686 = vsub.f32 %v2612, %v2662
        %v2687 = vsub.f32 %v2617, %v2664
        %v2688 = vsub.f32 %v2620, %v2666
        %v2689 = vsub.f32 %v2625, %v2668
        %v2690 = vsub.f32 %v2628, %v2670
        %v2691 = vsub.f32 %v2633, %v2672
        %v2692 = vsub.f32 %v2636, %v2674
        %v2693 = vsub.f32 %v2641, %v2676
        %v2694 = vsub.f32 %v2644, %v2678
        %v2695 = vmul.f32 %v2679, 1.442695
        %v2696 = vpow.pop %v2695
        %v2697 = vmul.f32 %v2680, 1.442695
        %v2698 = vpow.pop %v2697
        %v2699 = vmul.f32 %v2681, 1.442695
        %v2700 = vpow.pop %v2699
        %v2701 = vmul.f32 %v2682, 1.442695
        %v2702 = vpow.pop %v2701
        %v2703 = vmul.f32 %v2683, 1.442695
        %v2704 = vpow.pop %v2703
        %v2705 = vmul.f32 %v2684, 1.442695
        %v2706 = vpow.pop %v2705
        %v2707 = vmul.f32 %v2685, 1.442695
        %v2708 = vpow.pop %v2707
        %v2709 = vmul.f32 %v2686, 1.442695
        %v2710 = vpow.pop %v2709
        %v2711 = vmul.f32 %v2687, 1.442695
        %v2712 = vpow.pop %v2711
        %v2713 = vmul.f32 %v2688, 1.442695
        %v2714 = vpow.pop %v2713
        %v2715 = vmul.f32 %v2689, 1.442695
        %v2716 = vpow.pop %v2715
        %v2717 = vmul.f32 %v2690, 1.442695
        %v2718 = vpow.pop %v2717
        %v2719 = vmul.f32 %v2691, 1.442695
        %v2720 = vpow.pop %v2719
        %v2721 = vmul.f32 %v2692, 1.442695
        %v2722 = vpow.pop %v2721
        %v2723 = vmul.f32 %v2693, 1.442695
        %v2724 = vpow.pop %v2723
        %v2725 = vmul.f32 %v2694, 1.442695
        %v2726 = vpow.pop %v2725
        %2727 = vadd.xlane.f32.xlu0 %v2696
        %v2728 = vpop.xlane.xlu0 %2727
        %2729 = vadd.xlane.f32.xlu0 %v2698
        %v2730 = vpop.xlane.xlu0 %2729
        %2731 = vadd.xlane.f32.xlu0 %v2700
        %v2732 = vpop.xlane.xlu0 %2731
        %2733 = vadd.xlane.f32.xlu0 %v2702
        %v2734 = vpop.xlane.xlu0 %2733
        %2735 = vadd.xlane.f32.xlu0 %v2704
        %v2736 = vpop.xlane.xlu0 %2735
        %2737 = vadd.xlane.f32.xlu0 %v2706
        %v2738 = vpop.xlane.xlu0 %2737
        %2739 = vadd.xlane.f32.xlu0 %v2708
        %v2740 = vpop.xlane.xlu0 %2739
        %2741 = vadd.xlane.f32.xlu0 %v2710
        %v2742 = vpop.xlane.xlu0 %2741
        %2743 = vadd.xlane.f32.xlu0 %v2712
        %v2744 = vpop.xlane.xlu0 %2743
        %2745 = vadd.xlane.f32.xlu0 %v2714
        %v2746 = vpop.xlane.xlu0 %2745
        %2747 = vadd.xlane.f32.xlu0 %v2716
        %v2748 = vpop.xlane.xlu0 %2747
        %2749 = vadd.xlane.f32.xlu0 %v2718
        %v2750 = vpop.xlane.xlu0 %2749
        %2751 = vadd.xlane.f32.xlu0 %v2720
        %v2752 = vpop.xlane.xlu0 %2751
        %2753 = vadd.xlane.f32.xlu0 %v2722
        %v2754 = vpop.xlane.xlu0 %2753
        %2755 = vadd.xlane.f32.xlu0 %v2724
        %v2756 = vpop.xlane.xlu0 %2755
        %2757 = vadd.xlane.f32.xlu0 %v2726
        %v2758 = vpop.xlane.xlu0 %2757
        %v2759 = vrcp.pop %v2728
        %v2760 = vrcp.pop %v2730
        %v2761 = vrcp.pop %v2732
        %v2762 = vrcp.pop %v2734
        %v2763 = vrcp.pop %v2736
        %v2764 = vrcp.pop %v2738
        %v2765 = vrcp.pop %v2740
        %v2766 = vrcp.pop %v2742
        %v2767 = vrcp.pop %v2744
        %v2768 = vrcp.pop %v2746
        %v2769 = vrcp.pop %v2748
        %v2770 = vrcp.pop %v2750
        %v2771 = vrcp.pop %v2752
        %v2772 = vrcp.pop %v2754
        %v2773 = vrcp.pop %v2756
        %v2774 = vrcp.pop %v2758
        %v2775 = vmul.f32 %v2696, %v2759
        %v2776 = vmul.f32 %v2698, %v2760
        %v2777 = vmul.f32 %v2700, %v2761
        %v2778 = vmul.f32 %v2702, %v2762
        %v2779 = vmul.f32 %v2704, %v2763
        %v2780 = vmul.f32 %v2706, %v2764
        %v2781 = vmul.f32 %v2708, %v2765
        %v2782 = vmul.f32 %v2710, %v2766
        %v2783 = vmul.f32 %v2712, %v2767
        %v2784 = vmul.f32 %v2714, %v2768
        %v2785 = vmul.f32 %v2716, %v2769
        %v2786 = vmul.f32 %v2718, %v2770
        %v2787 = vmul.f32 %v2720, %v2771
        %v2788 = vmul.f32 %v2722, %v2772
        %v2789 = vmul.f32 %v2724, %v2773
        %v2790 = vmul.f32 %v2726, %v2774
        %v2791 = vpack.c.bf16 %v2776, %v2775
        %v2792 = vpack.c.bf16 %v2778, %v2777
        %v2793 = vpack.c.bf16 %v2780, %v2779
        %v2794 = vpack.c.bf16 %v2782, %v2781
        %v2795 = vpack.c.bf16 %v2784, %v2783
        %v2796 = vpack.c.bf16 %v2786, %v2785
        %v2797 = vpack.c.bf16 %v2788, %v2787
        %v2798 = vpack.c.bf16 %v2790, %v2789
        %2799 = vrot.lane.b32.xlu0 %v2341, 64
        %v2800 = vpop.permute.xlu0 %2799
        %2801 = vrot.lane.b32.xlu0 %v2342, 64
        %v2802 = vpop.permute.xlu0 %2801
        %2803 = vrot.lane.b32.xlu0 %v2343, 64
        %v2804 = vpop.permute.xlu0 %2803
        %2805 = vrot.lane.b32.xlu0 %v2344, 64
        %v2806 = vpop.permute.xlu0 %2805
        %2807 = vrot.lane.b32.xlu0 %v2345, 64
        %v2808 = vpop.permute.xlu0 %2807
        %2809 = vrot.lane.b32.xlu0 %v2346, 64
        %v2810 = vpop.permute.xlu0 %2809
        %2811 = vrot.lane.b32.xlu0 %v2347, 64
        %v2812 = vpop.permute.xlu0 %2811
        %2813 = vrot.lane.b32.xlu0 %v2348, 64
        %v2814 = vpop.permute.xlu0 %2813
        %2823 = vmatprep.subr.bf16.mxu0 0
        %2824 = vmatpush1.bf16.msra.mxu0 %v2814
        %2825 = vmatprep.subr.bf16.mxu0 0
        %2826 = vmatpush1.bf16.msra.mxu0 %v2812
        %2827 = vmatprep.subr.bf16.mxu0 0
        %2828 = vmatpush1.bf16.msra.mxu0 %v2810
        %2829 = vmatprep.subr.bf16.mxu0 0
        %2830 = vmatpush1.bf16.msra.mxu0 %v2808
        %2831 = vmatprep.subr.bf16.mxu0 0
        %2832 = vmatpush1.bf16.msra.mxu0 %v2806
        %2833 = vmatprep.subr.bf16.mxu0 0
        %2834 = vmatpush1.bf16.msra.mxu0 %v2804
        %2835 = vmatprep.subr.bf16.mxu0 0
        %2836 = vmatpush1.bf16.msra.mxu0 %v2802
        %2837 = vmatprep.subr.bf16.mxu0 0
        %2838 = vmatpush1.bf16.msra.mxu0 %v2800
        %2839 = vmatprep.subr.bf16.mxu0 0
        %2840 = vmatpush2.bf16.msra.mxu0 0
        %2841 = vmatprep.subr.bf16.mxu0 0
        %2842 = vmatpush2.bf16.msra.mxu0 0
        %2843 = vmatprep.subr.bf16.mxu0 0
        %2844 = vmatpush2.bf16.msra.mxu0 0
        %2845 = vmatprep.subr.bf16.mxu0 0
        %2846 = vmatpush2.bf16.msra.mxu0 0
        %2847 = vmatprep.subr.bf16.mxu0 0
        %2848 = vmatpush2.bf16.msra.mxu0 0
        %2849 = vmatprep.subr.bf16.mxu0 0
        %2850 = vmatpush2.bf16.msra.mxu0 0
        %2851 = vmatprep.subr.bf16.mxu0 0
        %2852 = vmatpush2.bf16.msra.mxu0 0
        %2853 = vmatprep.subr.bf16.mxu0 0
        %2854 = vmatpush2.bf16.msra.mxu0 0
        %2855 = vmatprep.mubr.bf16.mxu0 0
        %2856 = vmatmul.mubr.bf16.gmra.mxu0 %v2791
        %v2857 = vpop.f32.mrf.mxu0
        %v2858 = vadd.f32 0.0, %v2857
        %v2859 = vpop.f32.mrf.mxu0
        %v2860 = vpop.f32.mrf.mxu0
        %v2861 = vadd.f32 0.0, %v2860
        %v2862 = vpop.f32.mrf.mxu0
        %2863 = vmatprep.mubr.bf16.mxu0 0
        %2864 = vmatmul.mubr.bf16.gmra.mxu0 %v2792
        %v2865 = vpop.f32.mrf.mxu0
        %v2866 = vadd.f32 0.0, %v2865
        %v2867 = vpop.f32.mrf.mxu0
        %v2868 = vpop.f32.mrf.mxu0
        %v2869 = vadd.f32 0.0, %v2868
        %v2870 = vpop.f32.mrf.mxu0
        %2871 = vmatprep.mubr.bf16.mxu0 0
        %2872 = vmatmul.mubr.bf16.gmra.mxu0 %v2793
        %v2873 = vpop.f32.mrf.mxu0
        %v2874 = vadd.f32 0.0, %v2873
        %v2875 = vpop.f32.mrf.mxu0
        %v2876 = vpop.f32.mrf.mxu0
        %v2877 = vadd.f32 0.0, %v2876
        %v2878 = vpop.f32.mrf.mxu0
        %2879 = vmatprep.mubr.bf16.mxu0 0
        %2880 = vmatmul.mubr.bf16.gmra.mxu0 %v2794
        %v2881 = vpop.f32.mrf.mxu0
        %v2882 = vadd.f32 0.0, %v2881
        %v2883 = vpop.f32.mrf.mxu0
        %v2884 = vpop.f32.mrf.mxu0
        %v2885 = vadd.f32 0.0, %v2884
        %v2886 = vpop.f32.mrf.mxu0
        %2887 = vmatprep.mubr.bf16.mxu0 0
        %2888 = vmatmul.mubr.bf16.gmra.mxu0 %v2795
        %v2889 = vpop.f32.mrf.mxu0
        %v2890 = vadd.f32 0.0, %v2889
        %v2891 = vpop.f32.mrf.mxu0
        %v2892 = vpop.f32.mrf.mxu0
        %v2893 = vadd.f32 0.0, %v2892
        %v2894 = vpop.f32.mrf.mxu0
        %2895 = vmatprep.mubr.bf16.mxu0 0
        %2896 = vmatmul.mubr.bf16.gmra.mxu0 %v2796
        %v2897 = vpop.f32.mrf.mxu0
        %v2898 = vadd.f32 0.0, %v2897
        %v2899 = vpop.f32.mrf.mxu0
        %v2900 = vpop.f32.mrf.mxu0
        %v2901 = vadd.f32 0.0, %v2900
        %v2902 = vpop.f32.mrf.mxu0
        %2903 = vmatprep.mubr.bf16.mxu0 0
        %2904 = vmatmul.mubr.bf16.gmra.mxu0 %v2797
        %v2905 = vpop.f32.mrf.mxu0
        %v2906 = vadd.f32 0.0, %v2905
        %v2907 = vpop.f32.mrf.mxu0
        %v2908 = vpop.f32.mrf.mxu0
        %v2909 = vadd.f32 0.0, %v2908
        %v2910 = vpop.f32.mrf.mxu0
        %2911 = vmatprep.mubr.bf16.mxu0 0
        %2912 = vmatmul.mubr.bf16.gmra.mxu0 %v2798
        %v2913 = vpop.f32.mrf.mxu0
        %v2914 = vadd.f32 0.0, %v2913
        %v2915 = vpop.f32.mrf.mxu0
        %v2916 = vpop.f32.mrf.mxu0
        %v2917 = vadd.f32 0.0, %v2916
        %v2918 = vpop.f32.mrf.mxu0
        %2919 = vdwg.mxu0
        %v2920 = vpack.c.bf16 %v2861, %v2858
        %v2921 = vpack.c.bf16 %v2869, %v2866
        %v2922 = vpack.c.bf16 %v2877, %v2874
        %v2923 = vpack.c.bf16 %v2885, %v2882
        %v2924 = vpack.c.bf16 %v2893, %v2890
        %v2925 = vpack.c.bf16 %v2901, %v2898
        %v2926 = vpack.c.bf16 %v2909, %v2906
        %v2927 = vpack.c.bf16 %v2917, %v2914
        %v2928 = vld [vmem:[#allocation10 + $0x40] sm:$0xff]
        %v2929 = vld [vmem:[#allocation10 + $0x48] sm:$0xff]
        %v2930 = vld [vmem:[#allocation10 + $0x50] sm:$0xff]
        %v2931 = vld [vmem:[#allocation10 + $0x58] sm:$0xff]
        %v2932 = vld [vmem:[#allocation10 + $0x60] sm:$0xff]
        %v2933 = vld [vmem:[#allocation10 + $0x68] sm:$0xff]
        %v2934 = vld [vmem:[#allocation10 + $0x70] sm:$0xff]
        %v2935 = vld [vmem:[#allocation10 + $0x78] sm:$0xff]
        %v2944 = vunpack.c.l.b16 %v2928
        %v2945 = vunpack.c.h.b16 %v2928
        %v2946 = vunpack.c.l.b16 %v2929
        %v2947 = vunpack.c.h.b16 %v2929
        %v2948 = vunpack.c.l.b16 %v2930
        %v2949 = vunpack.c.h.b16 %v2930
        %v2950 = vunpack.c.l.b16 %v2931
        %v2951 = vunpack.c.h.b16 %v2931
        %v2952 = vunpack.c.l.b16 %v2932
        %v2953 = vunpack.c.h.b16 %v2932
        %v2954 = vunpack.c.l.b16 %v2933
        %v2955 = vunpack.c.h.b16 %v2933
        %v2956 = vunpack.c.l.b16 %v2934
        %v2957 = vunpack.c.h.b16 %v2934
        %v2958 = vunpack.c.l.b16 %v2935
        %v2959 = vunpack.c.h.b16 %v2935
        %v2960 = vpack.c.b16 %v2946, %v2944
        %v2961 = vpack.c.b16 %v2947, %v2945
        %v2962 = vpack.c.b16 %v2950, %v2948
        %v2963 = vpack.c.b16 %v2951, %v2949
        %v2964 = vpack.c.b16 %v2954, %v2952
        %v2965 = vpack.c.b16 %v2955, %v2953
        %v2966 = vpack.c.b16 %v2958, %v2956
        %v2967 = vpack.c.b16 %v2959, %v2957
        %v2977 = vsel %vm2011, %v2920, 0
        %v2980 = vsel %vm2011, %v2921, 0
        %v2983 = vsel %vm2011, %v2922, 0
        %v2986 = vsel %vm2011, %v2923, 0
        %v2989 = vsel %vm2011, %v2924, 0
        %v2992 = vsel %vm2011, %v2925, 0
        %v2995 = vsel %vm2011, %v2926, 0
        %v2998 = vsel %vm2011, %v2927, 0
        %3000 = vmatprep.subr.bf16.mxu0 0
        %3001 = vmatpush1.bf16.msra.mxu0 0
        %3002 = vmatprep.subr.bf16.mxu0 0
        %3003 = vmatpush1.bf16.msra.mxu0 0
        %3004 = vmatprep.subr.bf16.mxu0 0
        %3005 = vmatpush1.bf16.msra.mxu0 0
        %3006 = vmatprep.subr.bf16.mxu0 0
        %3007 = vmatpush1.bf16.msra.mxu0 0
        %3008 = vmatprep.subr.bf16.mxu0 %v2967
        %3009 = vmatpush1.bf16.msra.mxu0 %v2966
        %3010 = vmatprep.subr.bf16.mxu0 %v2965
        %3011 = vmatpush1.bf16.msra.mxu0 %v2964
        %3012 = vmatprep.subr.bf16.mxu0 %v2963
        %3013 = vmatpush1.bf16.msra.mxu0 %v2962
        %3014 = vmatprep.subr.bf16.mxu0 %v2961
        %3015 = vmatpush1.bf16.msra.mxu0 %v2960
        %3016 = vmatprep.subr.bf16.mxu0 0
        %3017 = vmatpush2.bf16.msra.mxu0 0
        %3018 = vmatprep.subr.bf16.mxu0 0
        %3019 = vmatpush2.bf16.msra.mxu0 0
        %3020 = vmatprep.subr.bf16.mxu0 0
        %3021 = vmatpush2.bf16.msra.mxu0 0
        %3022 = vmatprep.subr.bf16.mxu0 0
        %3023 = vmatpush2.bf16.msra.mxu0 0
        %3024 = vmatprep.subr.bf16.mxu0 0
        %3025 = vmatpush2.bf16.msra.mxu0 0
        %3026 = vmatprep.subr.bf16.mxu0 0
        %3027 = vmatpush2.bf16.msra.mxu0 0
        %3028 = vmatprep.subr.bf16.mxu0 0
        %3029 = vmatpush2.bf16.msra.mxu0 0
        %3030 = vmatprep.subr.bf16.mxu0 0
        %3031 = vmatpush2.bf16.msra.mxu0 0
        %3032 = vmatprep.mubr.bf16.mxu0 0
        %3033 = vmatmul.mubr.bf16.gmra.mxu0 %v2977
        %v3034 = vpop.f32.mrf.mxu0
        %v3035 = vadd.f32 0.0, %v3034
        %v3036 = vpop.f32.mrf.mxu0
        %v3037 = vadd.f32 0.0, %v3036
        %v3038 = vpop.f32.mrf.mxu0
        %v3039 = vadd.f32 0.0, %v3038
        %v3040 = vpop.f32.mrf.mxu0
        %v3041 = vadd.f32 0.0, %v3040
        %3042 = vmatprep.mubr.bf16.mxu0 0
        %3043 = vmatmul.mubr.bf16.gmra.mxu0 %v2980
        %v3044 = vpop.f32.mrf.mxu0
        %v3045 = vadd.f32 0.0, %v3044
        %v3046 = vpop.f32.mrf.mxu0
        %v3047 = vadd.f32 0.0, %v3046
        %v3048 = vpop.f32.mrf.mxu0
        %v3049 = vadd.f32 0.0, %v3048
        %v3050 = vpop.f32.mrf.mxu0
        %v3051 = vadd.f32 0.0, %v3050
        %3052 = vmatprep.mubr.bf16.mxu0 0
        %3053 = vmatmul.mubr.bf16.gmra.mxu0 %v2983
        %v3054 = vpop.f32.mrf.mxu0
        %v3055 = vadd.f32 0.0, %v3054
        %v3056 = vpop.f32.mrf.mxu0
        %v3057 = vadd.f32 0.0, %v3056
        %v3058 = vpop.f32.mrf.mxu0
        %v3059 = vadd.f32 0.0, %v3058
        %v3060 = vpop.f32.mrf.mxu0
        %v3061 = vadd.f32 0.0, %v3060
        %3062 = vmatprep.mubr.bf16.mxu0 0
        %3063 = vmatmul.mubr.bf16.gmra.mxu0 %v2986
        %v3064 = vpop.f32.mrf.mxu0
        %v3065 = vadd.f32 0.0, %v3064
        %v3066 = vpop.f32.mrf.mxu0
        %v3067 = vadd.f32 0.0, %v3066
        %v3068 = vpop.f32.mrf.mxu0
        %v3069 = vadd.f32 0.0, %v3068
        %v3070 = vpop.f32.mrf.mxu0
        %v3071 = vadd.f32 0.0, %v3070
        %3072 = vmatprep.mubr.bf16.mxu0 0
        %3073 = vmatmul.mubr.bf16.gmra.mxu0 %v2989
        %v3074 = vpop.f32.mrf.mxu0
        %v3075 = vadd.f32 0.0, %v3074
        %v3076 = vpop.f32.mrf.mxu0
        %v3077 = vadd.f32 0.0, %v3076
        %v3078 = vpop.f32.mrf.mxu0
        %v3079 = vadd.f32 0.0, %v3078
        %v3080 = vpop.f32.mrf.mxu0
        %v3081 = vadd.f32 0.0, %v3080
        %3082 = vmatprep.mubr.bf16.mxu0 0
        %3083 = vmatmul.mubr.bf16.gmra.mxu0 %v2992
        %v3084 = vpop.f32.mrf.mxu0
        %v3085 = vadd.f32 0.0, %v3084
        %v3086 = vpop.f32.mrf.mxu0
        %v3087 = vadd.f32 0.0, %v3086
        %v3088 = vpop.f32.mrf.mxu0
        %v3089 = vadd.f32 0.0, %v3088
        %v3090 = vpop.f32.mrf.mxu0
        %v3091 = vadd.f32 0.0, %v3090
        %3092 = vmatprep.mubr.bf16.mxu0 0
        %3093 = vmatmul.mubr.bf16.gmra.mxu0 %v2995
        %v3094 = vpop.f32.mrf.mxu0
        %v3095 = vadd.f32 0.0, %v3094
        %v3096 = vpop.f32.mrf.mxu0
        %v3097 = vadd.f32 0.0, %v3096
        %v3098 = vpop.f32.mrf.mxu0
        %v3099 = vadd.f32 0.0, %v3098
        %v3100 = vpop.f32.mrf.mxu0
        %v3101 = vadd.f32 0.0, %v3100
        %3102 = vmatprep.mubr.bf16.mxu0 0
        %3103 = vmatmul.mubr.bf16.gmra.mxu0 %v2998
        %v3104 = vpop.f32.mrf.mxu0
        %v3105 = vadd.f32 0.0, %v3104
        %v3106 = vpop.f32.mrf.mxu0
        %v3107 = vadd.f32 0.0, %v3106
        %v3108 = vpop.f32.mrf.mxu0
        %v3109 = vadd.f32 0.0, %v3108
        %v3110 = vpop.f32.mrf.mxu0
        %v3111 = vadd.f32 0.0, %v3110
        %3112 = vdwg.mxu0
        %v3121 = vunpack.c.l.b16 %v2462
        %v3122 = vunpack.c.h.b16 %v2462
        %v3123 = vunpack.c.l.b16 %v2463
        %v3124 = vunpack.c.h.b16 %v2463
        %v3125 = vunpack.c.l.b16 %v2464
        %v3126 = vunpack.c.h.b16 %v2464
        %v3127 = vunpack.c.l.b16 %v2465
        %v3128 = vunpack.c.h.b16 %v2465
        %v3129 = vunpack.c.l.b16 %v2466
        %v3130 = vunpack.c.h.b16 %v2466
        %v3131 = vunpack.c.l.b16 %v2467
        %v3132 = vunpack.c.h.b16 %v2467
        %v3133 = vunpack.c.l.b16 %v2468
        %v3134 = vunpack.c.h.b16 %v2468
        %v3135 = vunpack.c.l.b16 %v2469
        %v3136 = vunpack.c.h.b16 %v2469
        %v3137 = vpack.c.b16 %v3123, %v3121
        %v3138 = vpack.c.b16 %v3124, %v3122
        %v3139 = vpack.c.b16 %v3127, %v3125
        %v3140 = vpack.c.b16 %v3128, %v3126
        %v3141 = vpack.c.b16 %v3131, %v3129
        %v3142 = vpack.c.b16 %v3132, %v3130
        %v3143 = vpack.c.b16 %v3135, %v3133
        %v3144 = vpack.c.b16 %v3136, %v3134
        %v3154 = vsel %vm2011, %v2454, 0
        %v3157 = vsel %vm2011, %v2455, 0
        %v3160 = vsel %vm2011, %v2456, 0
        %v3163 = vsel %vm2011, %v2457, 0
        %v3166 = vsel %vm2011, %v2458, 0
        %v3169 = vsel %vm2011, %v2459, 0
        %v3172 = vsel %vm2011, %v2460, 0
        %v3175 = vsel %vm2011, %v2461, 0
        %3177 = vmatprep.subr.bf16.mxu0 0
        %3178 = vmatpush1.bf16.msra.mxu0 0
        %3179 = vmatprep.subr.bf16.mxu0 0
        %3180 = vmatpush1.bf16.msra.mxu0 0
        %3181 = vmatprep.subr.bf16.mxu0 0
        %3182 = vmatpush1.bf16.msra.mxu0 0
        %3183 = vmatprep.subr.bf16.mxu0 0
        %3184 = vmatpush1.bf16.msra.mxu0 0
        %3185 = vmatprep.subr.bf16.mxu0 %v3144
        %3186 = vmatpush1.bf16.msra.mxu0 %v3143
        %3187 = vmatprep.subr.bf16.mxu0 %v3142
        %3188 = vmatpush1.bf16.msra.mxu0 %v3141
        %3189 = vmatprep.subr.bf16.mxu0 %v3140
        %3190 = vmatpush1.bf16.msra.mxu0 %v3139
        %3191 = vmatprep.subr.bf16.mxu0 %v3138
        %3192 = vmatpush1.bf16.msra.mxu0 %v3137
        %3193 = vmatprep.subr.bf16.mxu0 0
        %3194 = vmatpush2.bf16.msra.mxu0 0
        %3195 = vmatprep.subr.bf16.mxu0 0
        %3196 = vmatpush2.bf16.msra.mxu0 0
        %3197 = vmatprep.subr.bf16.mxu0 0
        %3198 = vmatpush2.bf16.msra.mxu0 0
        %3199 = vmatprep.subr.bf16.mxu0 0
        %3200 = vmatpush2.bf16.msra.mxu0 0
        %3201 = vmatprep.subr.bf16.mxu0 0
        %3202 = vmatpush2.bf16.msra.mxu0 0
        %3203 = vmatprep.subr.bf16.mxu0 0
        %3204 = vmatpush2.bf16.msra.mxu0 0
        %3205 = vmatprep.subr.bf16.mxu0 0
        %3206 = vmatpush2.bf16.msra.mxu0 0
        %3207 = vmatprep.subr.bf16.mxu0 0
        %3208 = vmatpush2.bf16.msra.mxu0 0
        %3209 = vmatprep.mubr.bf16.mxu0 0
        %3210 = vmatmul.mubr.bf16.gmra.mxu0 %v3154
        %v3211 = vpop.f32.mrf.mxu0
        %v3212 = vadd.f32 %v3035, %v3211
        %v3213 = vpop.f32.mrf.mxu0
        %v3214 = vadd.f32 %v3037, %v3213
        %v3215 = vpop.f32.mrf.mxu0
        %v3216 = vadd.f32 %v3039, %v3215
        %v3217 = vpop.f32.mrf.mxu0
        %v3218 = vadd.f32 %v3041, %v3217
        %3219 = vmatprep.mubr.bf16.mxu0 0
        %3220 = vmatmul.mubr.bf16.gmra.mxu0 %v3157
        %v3221 = vpop.f32.mrf.mxu0
        %v3222 = vadd.f32 %v3045, %v3221
        %v3223 = vpop.f32.mrf.mxu0
        %v3224 = vadd.f32 %v3047, %v3223
        %v3225 = vpop.f32.mrf.mxu0
        %v3226 = vadd.f32 %v3049, %v3225
        %v3227 = vpop.f32.mrf.mxu0
        %v3228 = vadd.f32 %v3051, %v3227
        %3229 = vmatprep.mubr.bf16.mxu0 0
        %3230 = vmatmul.mubr.bf16.gmra.mxu0 %v3160
        %v3231 = vpop.f32.mrf.mxu0
        %v3232 = vadd.f32 %v3055, %v3231
        %v3233 = vpop.f32.mrf.mxu0
        %v3234 = vadd.f32 %v3057, %v3233
        %v3235 = vpop.f32.mrf.mxu0
        %v3236 = vadd.f32 %v3059, %v3235
        %v3237 = vpop.f32.mrf.mxu0
        %v3238 = vadd.f32 %v3061, %v3237
        %3239 = vmatprep.mubr.bf16.mxu0 0
        %3240 = vmatmul.mubr.bf16.gmra.mxu0 %v3163
        %v3241 = vpop.f32.mrf.mxu0
        %v3242 = vadd.f32 %v3065, %v3241
        %v3243 = vpop.f32.mrf.mxu0
        %v3244 = vadd.f32 %v3067, %v3243
        %v3245 = vpop.f32.mrf.mxu0
        %v3246 = vadd.f32 %v3069, %v3245
        %v3247 = vpop.f32.mrf.mxu0
        %v3248 = vadd.f32 %v3071, %v3247
        %3249 = vmatprep.mubr.bf16.mxu0 0
        %3250 = vmatmul.mubr.bf16.gmra.mxu0 %v3166
        %v3251 = vpop.f32.mrf.mxu0
        %v3252 = vadd.f32 %v3075, %v3251
        %v3253 = vpop.f32.mrf.mxu0
        %v3254 = vadd.f32 %v3077, %v3253
        %v3255 = vpop.f32.mrf.mxu0
        %v3256 = vadd.f32 %v3079, %v3255
        %v3257 = vpop.f32.mrf.mxu0
        %v3258 = vadd.f32 %v3081, %v3257
        %3259 = vmatprep.mubr.bf16.mxu0 0
        %3260 = vmatmul.mubr.bf16.gmra.mxu0 %v3169
        %v3261 = vpop.f32.mrf.mxu0
        %v3262 = vadd.f32 %v3085, %v3261
        %v3263 = vpop.f32.mrf.mxu0
        %v3264 = vadd.f32 %v3087, %v3263
        %v3265 = vpop.f32.mrf.mxu0
        %v3266 = vadd.f32 %v3089, %v3265
        %v3267 = vpop.f32.mrf.mxu0
        %v3268 = vadd.f32 %v3091, %v3267
        %3269 = vmatprep.mubr.bf16.mxu0 0
        %3270 = vmatmul.mubr.bf16.gmra.mxu0 %v3172
        %v3271 = vpop.f32.mrf.mxu0
        %v3272 = vadd.f32 %v3095, %v3271
        %v3273 = vpop.f32.mrf.mxu0
        %v3274 = vadd.f32 %v3097, %v3273
        %v3275 = vpop.f32.mrf.mxu0
        %v3276 = vadd.f32 %v3099, %v3275
        %v3277 = vpop.f32.mrf.mxu0
        %v3278 = vadd.f32 %v3101, %v3277
        %3279 = vmatprep.mubr.bf16.mxu0 0
        %3280 = vmatmul.mubr.bf16.gmra.mxu0 %v3175
        %v3281 = vpop.f32.mrf.mxu0
        %v3282 = vadd.f32 %v3105, %v3281
        %v3283 = vpop.f32.mrf.mxu0
        %v3284 = vadd.f32 %v3107, %v3283
        %v3285 = vpop.f32.mrf.mxu0
        %v3286 = vadd.f32 %v3109, %v3285
        %v3287 = vpop.f32.mrf.mxu0
        %v3288 = vadd.f32 %v3111, %v3287
        %3289 = vdwg.mxu0
        %v3290 = vld [vmem:[#allocation2 + $0x4] sm:$0xf]
        %v3291 = vld [vmem:[#allocation2 + $0xc] sm:$0xf]
        %v3292 = vld [vmem:[#allocation2 + $0x14] sm:$0xf]
        %v3293 = vld [vmem:[#allocation2 + $0x1c] sm:$0xf]
        %v3294 = vld [vmem:[#allocation2 + $0x24] sm:$0xf]
        %v3295 = vld [vmem:[#allocation2 + $0x2c] sm:$0xf]
        %v3296 = vld [vmem:[#allocation2 + $0x34] sm:$0xf]
        %v3297 = vld [vmem:[#allocation2 + $0x3c] sm:$0xf]
        %v3298 = vld [vmem:[#allocation2 + $0x44] sm:$0xf]
        %v3299 = vld [vmem:[#allocation2 + $0x4c] sm:$0xf]
        %v3300 = vld [vmem:[#allocation2 + $0x54] sm:$0xf]
        %v3301 = vld [vmem:[#allocation2 + $0x5c] sm:$0xf]
        %v3302 = vld [vmem:[#allocation2 + $0x64] sm:$0xf]
        %v3303 = vld [vmem:[#allocation2 + $0x6c] sm:$0xf]
        %v3304 = vld [vmem:[#allocation2 + $0x74] sm:$0xf]
        %v3305 = vld [vmem:[#allocation2 + $0x7c] sm:$0xf]
        %v3306 = vld [vmem:[#allocation3 + $0x4] sm:$0xf]
        %v3307 = vld [vmem:[#allocation3 + $0x14] sm:$0xf]
        %v3308 = vld [vmem:[#allocation3 + $0x24] sm:$0xf]
        %v3309 = vld [vmem:[#allocation3 + $0x34] sm:$0xf]
        %v3310 = vld [vmem:[#allocation3 + $0x44] sm:$0xf]
        %v3311 = vld [vmem:[#allocation3 + $0x54] sm:$0xf]
        %v3312 = vld [vmem:[#allocation3 + $0x64] sm:$0xf]
        %v3313 = vld [vmem:[#allocation3 + $0x74] sm:$0xf]
        %v3314 = vld [vmem:[#allocation3 + $0x84] sm:$0xf]
        %v3315 = vld [vmem:[#allocation3 + $0x94] sm:$0xf]
        %v3316 = vld [vmem:[#allocation3 + $0xa4] sm:$0xf]
        %v3317 = vld [vmem:[#allocation3 + $0xb4] sm:$0xf]
        %v3318 = vld [vmem:[#allocation3 + $0xc4] sm:$0xf]
        %v3319 = vld [vmem:[#allocation3 + $0xd4] sm:$0xf]
        %v3320 = vld [vmem:[#allocation3 + $0xe4] sm:$0xf]
        %v3321 = vld [vmem:[#allocation3 + $0xf4] sm:$0xf]
        %v3322 = vld [vmem:[#allocation3 + $0xc] sm:$0xf]
        %v3323 = vld [vmem:[#allocation3 + $0x1c] sm:$0xf]
        %v3324 = vld [vmem:[#allocation3 + $0x2c] sm:$0xf]
        %v3325 = vld [vmem:[#allocation3 + $0x3c] sm:$0xf]
        %v3326 = vld [vmem:[#allocation3 + $0x4c] sm:$0xf]
        %v3327 = vld [vmem:[#allocation3 + $0x5c] sm:$0xf]
        %v3328 = vld [vmem:[#allocation3 + $0x6c] sm:$0xf]
        %v3329 = vld [vmem:[#allocation3 + $0x7c] sm:$0xf]
        %v3330 = vld [vmem:[#allocation3 + $0x8c] sm:$0xf]
        %v3331 = vld [vmem:[#allocation3 + $0x9c] sm:$0xf]
        %v3332 = vld [vmem:[#allocation3 + $0xac] sm:$0xf]
        %v3333 = vld [vmem:[#allocation3 + $0xbc] sm:$0xf]
        %v3334 = vld [vmem:[#allocation3 + $0xcc] sm:$0xf]
        %v3335 = vld [vmem:[#allocation3 + $0xdc] sm:$0xf]
        %v3336 = vld [vmem:[#allocation3 + $0xec] sm:$0xf]
        %v3337 = vld [vmem:[#allocation3 + $0xfc] sm:$0xf]
        %v3354 = vunpack.c.l.b16 %v3290
        %v3355 = vunpack.c.l.b16 %v3291
        %v3356 = vunpack.c.l.b16 %v3292
        %v3357 = vunpack.c.l.b16 %v3293
        %v3358 = vunpack.c.l.b16 %v3294
        %v3359 = vunpack.c.l.b16 %v3295
        %v3360 = vunpack.c.l.b16 %v3296
        %v3361 = vunpack.c.l.b16 %v3297
        %v3362 = vunpack.c.l.b16 %v3298
        %v3363 = vunpack.c.l.b16 %v3299
        %v3364 = vunpack.c.l.b16 %v3300
        %v3365 = vunpack.c.l.b16 %v3301
        %v3366 = vunpack.c.l.b16 %v3302
        %v3367 = vunpack.c.l.b16 %v3303
        %v3368 = vunpack.c.l.b16 %v3304
        %v3369 = vunpack.c.l.b16 %v3305
        %v3370 = vpack.c.b16 %v3355, %v3354
        %v3371 = vpack.c.b16 %v3357, %v3356
        %v3372 = vpack.c.b16 %v3359, %v3358
        %v3373 = vpack.c.b16 %v3361, %v3360
        %v3374 = vpack.c.b16 %v3363, %v3362
        %v3375 = vpack.c.b16 %v3365, %v3364
        %v3376 = vpack.c.b16 %v3367, %v3366
        %v3377 = vpack.c.b16 %v3369, %v3368
        %v3394 = vunpack.c.l.b16 %v3306
        %v3395 = vunpack.c.l.b16 %v3307
        %v3396 = vunpack.c.l.b16 %v3308
        %v3397 = vunpack.c.l.b16 %v3309
        %v3398 = vunpack.c.l.b16 %v3310
        %v3399 = vunpack.c.l.b16 %v3311
        %v3400 = vunpack.c.l.b16 %v3312
        %v3401 = vunpack.c.l.b16 %v3313
        %v3402 = vunpack.c.l.b16 %v3314
        %v3403 = vunpack.c.l.b16 %v3315
        %v3404 = vunpack.c.l.b16 %v3316
        %v3405 = vunpack.c.l.b16 %v3317
        %v3406 = vunpack.c.l.b16 %v3318
        %v3407 = vunpack.c.l.b16 %v3319
        %v3408 = vunpack.c.l.b16 %v3320
        %v3409 = vunpack.c.l.b16 %v3321
        %v3410 = vpack.c.b16 %v3395, %v3394
        %v3411 = vpack.c.b16 %v3397, %v3396
        %v3412 = vpack.c.b16 %v3399, %v3398
        %v3413 = vpack.c.b16 %v3401, %v3400
        %v3414 = vpack.c.b16 %v3403, %v3402
        %v3415 = vpack.c.b16 %v3405, %v3404
        %v3416 = vpack.c.b16 %v3407, %v3406
        %v3417 = vpack.c.b16 %v3409, %v3408
        %v3419 = vsel %vm2011, %v3370, 0
        %v3422 = vsel %vm2011, %v3371, 0
        %v3425 = vsel %vm2011, %v3372, 0
        %v3428 = vsel %vm2011, %v3373, 0
        %v3431 = vsel %vm2011, %v3374, 0
        %v3434 = vsel %vm2011, %v3375, 0
        %v3437 = vsel %vm2011, %v3376, 0
        %v3440 = vsel %vm2011, %v3377, 0
        %v3443 = vsel %vm2011, %v3410, 0
        %v3446 = vsel %vm2011, %v3411, 0
        %v3449 = vsel %vm2011, %v3412, 0
        %v3452 = vsel %vm2011, %v3413, 0
        %v3455 = vsel %vm2011, %v3414, 0
        %v3458 = vsel %vm2011, %v3415, 0
        %v3461 = vsel %vm2011, %v3416, 0
        %v3464 = vsel %vm2011, %v3417, 0
        %3466 = vmatprep.subr.bf16.mxu0 0
        %3467 = vmatpush1.bf16.xpose.msra.mxu0 %v3464
        %3468 = vmatprep.subr.bf16.mxu0 0
        %3469 = vmatpush1.bf16.xpose.msra.mxu0 %v3461
        %3470 = vmatprep.subr.bf16.mxu0 0
        %3471 = vmatpush1.bf16.xpose.msra.mxu0 %v3458
        %3472 = vmatprep.subr.bf16.mxu0 0
        %3473 = vmatpush1.bf16.xpose.msra.mxu0 %v3455
        %3474 = vmatprep.subr.bf16.mxu0 0
        %3475 = vmatpush1.bf16.xpose.msra.mxu0 %v3452
        %3476 = vmatprep.subr.bf16.mxu0 0
        %3477 = vmatpush1.bf16.xpose.msra.mxu0 %v3449
        %3478 = vmatprep.subr.bf16.mxu0 0
        %3479 = vmatpush1.bf16.xpose.msra.mxu0 %v3446
        %3480 = vmatprep.subr.bf16.mxu0 0
        %3481 = vmatpush1.bf16.xpose.msra.mxu0 %v3443
        %3482 = vmatprep.subr.bf16.mxu0 0
        %3483 = vmatpush2.bf16.xpose.msra.mxu0 0
        %3484 = vmatprep.subr.bf16.mxu0 0
        %3485 = vmatpush2.bf16.xpose.msra.mxu0 0
        %3486 = vmatprep.subr.bf16.mxu0 0
        %3487 = vmatpush2.bf16.xpose.msra.mxu0 0
        %3488 = vmatprep.subr.bf16.mxu0 0
        %3489 = vmatpush2.bf16.xpose.msra.mxu0 0
        %3490 = vmatprep.subr.bf16.mxu0 0
        %3491 = vmatpush2.bf16.xpose.msra.mxu0 0
        %3492 = vmatprep.subr.bf16.mxu0 0
        %3493 = vmatpush2.bf16.xpose.msra.mxu0 0
        %3494 = vmatprep.subr.bf16.mxu0 0
        %3495 = vmatpush2.bf16.xpose.msra.mxu0 0
        %3496 = vmatprep.subr.bf16.mxu0 0
        %3497 = vmatpush2.bf16.xpose.msra.mxu0 0
        %3498 = vmatprep.mubr.bf16.mxu0 0
        %3499 = vmatmul.mubr.bf16.gmra.mxu0 %v3419
        %v3500 = vpop.f32.mrf.mxu0
        %v3501 = vadd.f32 0.0, %v3500
        %v3502 = vpop.f32.mrf.mxu0
        %v3503 = vpop.f32.mrf.mxu0
        %v3504 = vadd.f32 0.0, %v3503
        %v3505 = vpop.f32.mrf.mxu0
        %3506 = vmatprep.mubr.bf16.mxu0 0
        %3507 = vmatmul.mubr.bf16.gmra.mxu0 %v3422
        %v3508 = vpop.f32.mrf.mxu0
        %v3509 = vadd.f32 0.0, %v3508
        %v3510 = vpop.f32.mrf.mxu0
        %v3511 = vpop.f32.mrf.mxu0
        %v3512 = vadd.f32 0.0, %v3511
        %v3513 = vpop.f32.mrf.mxu0
        %3514 = vmatprep.mubr.bf16.mxu0 0
        %3515 = vmatmul.mubr.bf16.gmra.mxu0 %v3425
        %v3516 = vpop.f32.mrf.mxu0
        %v3517 = vadd.f32 0.0, %v3516
        %v3518 = vpop.f32.mrf.mxu0
        %v3519 = vpop.f32.mrf.mxu0
        %v3520 = vadd.f32 0.0, %v3519
        %v3521 = vpop.f32.mrf.mxu0
        %3522 = vmatprep.mubr.bf16.mxu0 0
        %3523 = vmatmul.mubr.bf16.gmra.mxu0 %v3428
        %v3524 = vpop.f32.mrf.mxu0
        %v3525 = vadd.f32 0.0, %v3524
        %v3526 = vpop.f32.mrf.mxu0
        %v3527 = vpop.f32.mrf.mxu0
        %v3528 = vadd.f32 0.0, %v3527
        %v3529 = vpop.f32.mrf.mxu0
        %3530 = vmatprep.mubr.bf16.mxu0 0
        %3531 = vmatmul.mubr.bf16.gmra.mxu0 %v3431
        %v3532 = vpop.f32.mrf.mxu0
        %v3533 = vadd.f32 0.0, %v3532
        %v3534 = vpop.f32.mrf.mxu0
        %v3535 = vpop.f32.mrf.mxu0
        %v3536 = vadd.f32 0.0, %v3535
        %v3537 = vpop.f32.mrf.mxu0
        %3538 = vmatprep.mubr.bf16.mxu0 0
        %3539 = vmatmul.mubr.bf16.gmra.mxu0 %v3434
        %v3540 = vpop.f32.mrf.mxu0
        %v3541 = vadd.f32 0.0, %v3540
        %v3542 = vpop.f32.mrf.mxu0
        %v3543 = vpop.f32.mrf.mxu0
        %v3544 = vadd.f32 0.0, %v3543
        %v3545 = vpop.f32.mrf.mxu0
        %3546 = vmatprep.mubr.bf16.mxu0 0
        %3547 = vmatmul.mubr.bf16.gmra.mxu0 %v3437
        %v3548 = vpop.f32.mrf.mxu0
        %v3549 = vadd.f32 0.0, %v3548
        %v3550 = vpop.f32.mrf.mxu0
        %v3551 = vpop.f32.mrf.mxu0
        %v3552 = vadd.f32 0.0, %v3551
        %v3553 = vpop.f32.mrf.mxu0
        %3554 = vmatprep.mubr.bf16.mxu0 0
        %3555 = vmatmul.mubr.bf16.gmra.mxu0 %v3440
        %v3556 = vpop.f32.mrf.mxu0
        %v3557 = vadd.f32 0.0, %v3556
        %v3558 = vpop.f32.mrf.mxu0
        %v3559 = vpop.f32.mrf.mxu0
        %v3560 = vadd.f32 0.0, %v3559
        %v3561 = vpop.f32.mrf.mxu0
        %3562 = vdwg.mxu0
        %3563 = vmax.xlane.f32.xlu0 %v3501
        %v3564 = vpop.xlane.xlu0 %3563
        %3565 = vmax.xlane.f32.xlu0 %v3504
        %v3566 = vpop.xlane.xlu0 %3565
        %3567 = vmax.xlane.f32.xlu0 %v3509
        %v3568 = vpop.xlane.xlu0 %3567
        %3569 = vmax.xlane.f32.xlu0 %v3512
        %v3570 = vpop.xlane.xlu0 %3569
        %3571 = vmax.xlane.f32.xlu0 %v3517
        %v3572 = vpop.xlane.xlu0 %3571
        %3573 = vmax.xlane.f32.xlu0 %v3520
        %v3574 = vpop.xlane.xlu0 %3573
        %3575 = vmax.xlane.f32.xlu0 %v3525
        %v3576 = vpop.xlane.xlu0 %3575
        %3577 = vmax.xlane.f32.xlu0 %v3528
        %v3578 = vpop.xlane.xlu0 %3577
        %3579 = vmax.xlane.f32.xlu0 %v3533
        %v3580 = vpop.xlane.xlu0 %3579
        %3581 = vmax.xlane.f32.xlu0 %v3536
        %v3582 = vpop.xlane.xlu0 %3581
        %3583 = vmax.xlane.f32.xlu0 %v3541
        %v3584 = vpop.xlane.xlu0 %3583
        %3585 = vmax.xlane.f32.xlu0 %v3544
        %v3586 = vpop.xlane.xlu0 %3585
        %3587 = vmax.xlane.f32.xlu0 %v3549
        %v3588 = vpop.xlane.xlu0 %3587
        %3589 = vmax.xlane.f32.xlu0 %v3552
        %v3590 = vpop.xlane.xlu0 %3589
        %3591 = vmax.xlane.f32.xlu0 %v3557
        %v3592 = vpop.xlane.xlu0 %3591
        %3593 = vmax.xlane.f32.xlu0 %v3560
        %v3594 = vpop.xlane.xlu0 %3593
        %v3595 = vsub.f32 %v3501, %v3564
        %v3596 = vsub.f32 %v3504, %v3566
        %v3597 = vsub.f32 %v3509, %v3568
        %v3598 = vsub.f32 %v3512, %v3570
        %v3599 = vsub.f32 %v3517, %v3572
        %v3600 = vsub.f32 %v3520, %v3574
        %v3601 = vsub.f32 %v3525, %v3576
        %v3602 = vsub.f32 %v3528, %v3578
        %v3603 = vsub.f32 %v3533, %v3580
        %v3604 = vsub.f32 %v3536, %v3582
        %v3605 = vsub.f32 %v3541, %v3584
        %v3606 = vsub.f32 %v3544, %v3586
        %v3607 = vsub.f32 %v3549, %v3588
        %v3608 = vsub.f32 %v3552, %v3590
        %v3609 = vsub.f32 %v3557, %v3592
        %v3610 = vsub.f32 %v3560, %v3594
        %v3611 = vmul.f32 %v3595, 1.442695
        %v3612 = vpow.pop %v3611
        %v3613 = vmul.f32 %v3596, 1.442695
        %v3614 = vpow.pop %v3613
        %v3615 = vmul.f32 %v3597, 1.442695
        %v3616 = vpow.pop %v3615
        %v3617 = vmul.f32 %v3598, 1.442695
        %v3618 = vpow.pop %v3617
        %v3619 = vmul.f32 %v3599, 1.442695
        %v3620 = vpow.pop %v3619
        %v3621 = vmul.f32 %v3600, 1.442695
        %v3622 = vpow.pop %v3621
        %v3623 = vmul.f32 %v3601, 1.442695
        %v3624 = vpow.pop %v3623
        %v3625 = vmul.f32 %v3602, 1.442695
        %v3626 = vpow.pop %v3625
        %v3627 = vmul.f32 %v3603, 1.442695
        %v3628 = vpow.pop %v3627
        %v3629 = vmul.f32 %v3604, 1.442695
        %v3630 = vpow.pop %v3629
        %v3631 = vmul.f32 %v3605, 1.442695
        %v3632 = vpow.pop %v3631
        %v3633 = vmul.f32 %v3606, 1.442695
        %v3634 = vpow.pop %v3633
        %v3635 = vmul.f32 %v3607, 1.442695
        %v3636 = vpow.pop %v3635
        %v3637 = vmul.f32 %v3608, 1.442695
        %v3638 = vpow.pop %v3637
        %v3639 = vmul.f32 %v3609, 1.442695
        %v3640 = vpow.pop %v3639
        %v3641 = vmul.f32 %v3610, 1.442695
        %v3642 = vpow.pop %v3641
        %3643 = vadd.xlane.f32.xlu0 %v3612
        %v3644 = vpop.xlane.xlu0 %3643
        %3645 = vadd.xlane.f32.xlu0 %v3614
        %v3646 = vpop.xlane.xlu0 %3645
        %3647 = vadd.xlane.f32.xlu0 %v3616
        %v3648 = vpop.xlane.xlu0 %3647
        %3649 = vadd.xlane.f32.xlu0 %v3618
        %v3650 = vpop.xlane.xlu0 %3649
        %3651 = vadd.xlane.f32.xlu0 %v3620
        %v3652 = vpop.xlane.xlu0 %3651
        %3653 = vadd.xlane.f32.xlu0 %v3622
        %v3654 = vpop.xlane.xlu0 %3653
        %3655 = vadd.xlane.f32.xlu0 %v3624
        %v3656 = vpop.xlane.xlu0 %3655
        %3657 = vadd.xlane.f32.xlu0 %v3626
        %v3658 = vpop.xlane.xlu0 %3657
        %3659 = vadd.xlane.f32.xlu0 %v3628
        %v3660 = vpop.xlane.xlu0 %3659
        %3661 = vadd.xlane.f32.xlu0 %v3630
        %v3662 = vpop.xlane.xlu0 %3661
        %3663 = vadd.xlane.f32.xlu0 %v3632
        %v3664 = vpop.xlane.xlu0 %3663
        %3665 = vadd.xlane.f32.xlu0 %v3634
        %v3666 = vpop.xlane.xlu0 %3665
        %3667 = vadd.xlane.f32.xlu0 %v3636
        %v3668 = vpop.xlane.xlu0 %3667
        %3669 = vadd.xlane.f32.xlu0 %v3638
        %v3670 = vpop.xlane.xlu0 %3669
        %3671 = vadd.xlane.f32.xlu0 %v3640
        %v3672 = vpop.xlane.xlu0 %3671
        %3673 = vadd.xlane.f32.xlu0 %v3642
        %v3674 = vpop.xlane.xlu0 %3673
        %v3675 = vrcp.pop %v3644
        %v3676 = vrcp.pop %v3646
        %v3677 = vrcp.pop %v3648
        %v3678 = vrcp.pop %v3650
        %v3679 = vrcp.pop %v3652
        %v3680 = vrcp.pop %v3654
        %v3681 = vrcp.pop %v3656
        %v3682 = vrcp.pop %v3658
        %v3683 = vrcp.pop %v3660
        %v3684 = vrcp.pop %v3662
        %v3685 = vrcp.pop %v3664
        %v3686 = vrcp.pop %v3666
        %v3687 = vrcp.pop %v3668
        %v3688 = vrcp.pop %v3670
        %v3689 = vrcp.pop %v3672
        %v3690 = vrcp.pop %v3674
        %v3691 = vmul.f32 %v3612, %v3675
        %v3692 = vmul.f32 %v3614, %v3676
        %v3693 = vmul.f32 %v3616, %v3677
        %v3694 = vmul.f32 %v3618, %v3678
        %v3695 = vmul.f32 %v3620, %v3679
        %v3696 = vmul.f32 %v3622, %v3680
        %v3697 = vmul.f32 %v3624, %v3681
        %v3698 = vmul.f32 %v3626, %v3682
        %v3699 = vmul.f32 %v3628, %v3683
        %v3700 = vmul.f32 %v3630, %v3684
        %v3701 = vmul.f32 %v3632, %v3685
        %v3702 = vmul.f32 %v3634, %v3686
        %v3703 = vmul.f32 %v3636, %v3687
        %v3704 = vmul.f32 %v3638, %v3688
        %v3705 = vmul.f32 %v3640, %v3689
        %v3706 = vmul.f32 %v3642, %v3690
        %v3707 = vpack.c.bf16 %v3692, %v3691
        %v3708 = vpack.c.bf16 %v3694, %v3693
        %v3709 = vpack.c.bf16 %v3696, %v3695
        %v3710 = vpack.c.bf16 %v3698, %v3697
        %v3711 = vpack.c.bf16 %v3700, %v3699
        %v3712 = vpack.c.bf16 %v3702, %v3701
        %v3713 = vpack.c.bf16 %v3704, %v3703
        %v3714 = vpack.c.bf16 %v3706, %v3705
        %v3731 = vunpack.c.l.b16 %v3322
        %v3732 = vunpack.c.l.b16 %v3323
        %v3733 = vunpack.c.l.b16 %v3324
        %v3734 = vunpack.c.l.b16 %v3325
        %v3735 = vunpack.c.l.b16 %v3326
        %v3736 = vunpack.c.l.b16 %v3327
        %v3737 = vunpack.c.l.b16 %v3328
        %v3738 = vunpack.c.l.b16 %v3329
        %v3739 = vunpack.c.l.b16 %v3330
        %v3740 = vunpack.c.l.b16 %v3331
        %v3741 = vunpack.c.l.b16 %v3332
        %v3742 = vunpack.c.l.b16 %v3333
        %v3743 = vunpack.c.l.b16 %v3334
        %v3744 = vunpack.c.l.b16 %v3335
        %v3745 = vunpack.c.l.b16 %v3336
        %v3746 = vunpack.c.l.b16 %v3337
        %v3747 = vpack.c.b16 %v3732, %v3731
        %v3748 = vpack.c.b16 %v3734, %v3733
        %v3749 = vpack.c.b16 %v3736, %v3735
        %v3750 = vpack.c.b16 %v3738, %v3737
        %v3751 = vpack.c.b16 %v3740, %v3739
        %v3752 = vpack.c.b16 %v3742, %v3741
        %v3753 = vpack.c.b16 %v3744, %v3743
        %v3754 = vpack.c.b16 %v3746, %v3745
        %3763 = vmatprep.subr.bf16.mxu0 0
        %3764 = vmatpush1.bf16.msra.mxu0 %v3754
        %3765 = vmatprep.subr.bf16.mxu0 0
        %3766 = vmatpush1.bf16.msra.mxu0 %v3753
        %3767 = vmatprep.subr.bf16.mxu0 0
        %3768 = vmatpush1.bf16.msra.mxu0 %v3752
        %3769 = vmatprep.subr.bf16.mxu0 0
        %3770 = vmatpush1.bf16.msra.mxu0 %v3751
        %3771 = vmatprep.subr.bf16.mxu0 0
        %3772 = vmatpush1.bf16.msra.mxu0 %v3750
        %3773 = vmatprep.subr.bf16.mxu0 0
        %3774 = vmatpush1.bf16.msra.mxu0 %v3749
        %3775 = vmatprep.subr.bf16.mxu0 0
        %3776 = vmatpush1.bf16.msra.mxu0 %v3748
        %3777 = vmatprep.subr.bf16.mxu0 0
        %3778 = vmatpush1.bf16.msra.mxu0 %v3747
        %3779 = vmatprep.subr.bf16.mxu0 0
        %3780 = vmatpush2.bf16.msra.mxu0 0
        %3781 = vmatprep.subr.bf16.mxu0 0
        %3782 = vmatpush2.bf16.msra.mxu0 0
        %3783 = vmatprep.subr.bf16.mxu0 0
        %3784 = vmatpush2.bf16.msra.mxu0 0
        %3785 = vmatprep.subr.bf16.mxu0 0
        %3786 = vmatpush2.bf16.msra.mxu0 0
        %3787 = vmatprep.subr.bf16.mxu0 0
        %3788 = vmatpush2.bf16.msra.mxu0 0
        %3789 = vmatprep.subr.bf16.mxu0 0
        %3790 = vmatpush2.bf16.msra.mxu0 0
        %3791 = vmatprep.subr.bf16.mxu0 0
        %3792 = vmatpush2.bf16.msra.mxu0 0
        %3793 = vmatprep.subr.bf16.mxu0 0
        %3794 = vmatpush2.bf16.msra.mxu0 0
        %3795 = vmatprep.mubr.bf16.mxu0 0
        %3796 = vmatmul.mubr.bf16.gmra.mxu0 %v3707
        %v3797 = vpop.f32.mrf.mxu0
        %v3798 = vadd.f32 0.0, %v3797
        %v3799 = vpop.f32.mrf.mxu0
        %v3800 = vpop.f32.mrf.mxu0
        %v3801 = vadd.f32 0.0, %v3800
        %v3802 = vpop.f32.mrf.mxu0
        %3803 = vmatprep.mubr.bf16.mxu0 0
        %3804 = vmatmul.mubr.bf16.gmra.mxu0 %v3708
        %v3805 = vpop.f32.mrf.mxu0
        %v3806 = vadd.f32 0.0, %v3805
        %v3807 = vpop.f32.mrf.mxu0
        %v3808 = vpop.f32.mrf.mxu0
        %v3809 = vadd.f32 0.0, %v3808
        %v3810 = vpop.f32.mrf.mxu0
        %3811 = vmatprep.mubr.bf16.mxu0 0
        %3812 = vmatmul.mubr.bf16.gmra.mxu0 %v3709
        %v3813 = vpop.f32.mrf.mxu0
        %v3814 = vadd.f32 0.0, %v3813
        %v3815 = vpop.f32.mrf.mxu0
        %v3816 = vpop.f32.mrf.mxu0
        %v3817 = vadd.f32 0.0, %v3816
        %v3818 = vpop.f32.mrf.mxu0
        %3819 = vmatprep.mubr.bf16.mxu0 0
        %3820 = vmatmul.mubr.bf16.gmra.mxu0 %v3710
        %v3821 = vpop.f32.mrf.mxu0
        %v3822 = vadd.f32 0.0, %v3821
        %v3823 = vpop.f32.mrf.mxu0
        %v3824 = vpop.f32.mrf.mxu0
        %v3825 = vadd.f32 0.0, %v3824
        %v3826 = vpop.f32.mrf.mxu0
        %3827 = vmatprep.mubr.bf16.mxu0 0
        %3828 = vmatmul.mubr.bf16.gmra.mxu0 %v3711
        %v3829 = vpop.f32.mrf.mxu0
        %v3830 = vadd.f32 0.0, %v3829
        %v3831 = vpop.f32.mrf.mxu0
        %v3832 = vpop.f32.mrf.mxu0
        %v3833 = vadd.f32 0.0, %v3832
        %v3834 = vpop.f32.mrf.mxu0
        %3835 = vmatprep.mubr.bf16.mxu0 0
        %3836 = vmatmul.mubr.bf16.gmra.mxu0 %v3712
        %v3837 = vpop.f32.mrf.mxu0
        %v3838 = vadd.f32 0.0, %v3837
        %v3839 = vpop.f32.mrf.mxu0
        %v3840 = vpop.f32.mrf.mxu0
        %v3841 = vadd.f32 0.0, %v3840
        %v3842 = vpop.f32.mrf.mxu0
        %3843 = vmatprep.mubr.bf16.mxu0 0
        %3844 = vmatmul.mubr.bf16.gmra.mxu0 %v3713
        %v3845 = vpop.f32.mrf.mxu0
        %v3846 = vadd.f32 0.0, %v3845
        %v3847 = vpop.f32.mrf.mxu0
        %v3848 = vpop.f32.mrf.mxu0
        %v3849 = vadd.f32 0.0, %v3848
        %v3850 = vpop.f32.mrf.mxu0
        %3851 = vmatprep.mubr.bf16.mxu0 0
        %3852 = vmatmul.mubr.bf16.gmra.mxu0 %v3714
        %v3853 = vpop.f32.mrf.mxu0
        %v3854 = vadd.f32 0.0, %v3853
        %v3855 = vpop.f32.mrf.mxu0
        %v3856 = vpop.f32.mrf.mxu0
        %v3857 = vadd.f32 0.0, %v3856
        %v3858 = vpop.f32.mrf.mxu0
        %3859 = vdwg.mxu0
        %v3860 = vpack.c.bf16 %v3801, %v3798
        %v3861 = vpack.c.bf16 %v3809, %v3806
        %v3862 = vpack.c.bf16 %v3817, %v3814
        %v3863 = vpack.c.bf16 %v3825, %v3822
        %v3864 = vpack.c.bf16 %v3833, %v3830
        %v3865 = vpack.c.bf16 %v3841, %v3838
        %v3866 = vpack.c.bf16 %v3849, %v3846
        %v3867 = vpack.c.bf16 %v3857, %v3854
        %v3868 = vld [vmem:[#allocation10 + $0x80] sm:$0xff]
        %v3869 = vld [vmem:[#allocation10 + $0x88] sm:$0xff]
        %v3870 = vld [vmem:[#allocation10 + $0x90] sm:$0xff]
        %v3871 = vld [vmem:[#allocation10 + $0x98] sm:$0xff]
        %v3872 = vld [vmem:[#allocation10 + $0xa0] sm:$0xff]
        %v3873 = vld [vmem:[#allocation10 + $0xa8] sm:$0xff]
        %v3874 = vld [vmem:[#allocation10 + $0xb0] sm:$0xff]
        %v3875 = vld [vmem:[#allocation10 + $0xb8] sm:$0xff]
        %v3884 = vunpack.c.l.b16 %v3868
        %v3885 = vunpack.c.h.b16 %v3868
        %v3886 = vunpack.c.l.b16 %v3869
        %v3887 = vunpack.c.h.b16 %v3869
        %v3888 = vunpack.c.l.b16 %v3870
        %v3889 = vunpack.c.h.b16 %v3870
        %v3890 = vunpack.c.l.b16 %v3871
        %v3891 = vunpack.c.h.b16 %v3871
        %v3892 = vunpack.c.l.b16 %v3872
        %v3893 = vunpack.c.h.b16 %v3872
        %v3894 = vunpack.c.l.b16 %v3873
        %v3895 = vunpack.c.h.b16 %v3873
        %v3896 = vunpack.c.l.b16 %v3874
        %v3897 = vunpack.c.h.b16 %v3874
        %v3898 = vunpack.c.l.b16 %v3875
        %v3899 = vunpack.c.h.b16 %v3875
        %v3900 = vpack.c.b16 %v3886, %v3884
        %v3901 = vpack.c.b16 %v3887, %v3885
        %v3902 = vpack.c.b16 %v3890, %v3888
        %v3903 = vpack.c.b16 %v3891, %v3889
        %v3904 = vpack.c.b16 %v3894, %v3892
        %v3905 = vpack.c.b16 %v3895, %v3893
        %v3906 = vpack.c.b16 %v3898, %v3896
        %v3907 = vpack.c.b16 %v3899, %v3897
        %v3917 = vsel %vm2011, %v3860, 0
        %v3920 = vsel %vm2011, %v3861, 0
        %v3923 = vsel %vm2011, %v3862, 0
        %v3926 = vsel %vm2011, %v3863, 0
        %v3929 = vsel %vm2011, %v3864, 0
        %v3932 = vsel %vm2011, %v3865, 0
        %v3935 = vsel %vm2011, %v3866, 0
        %v3938 = vsel %vm2011, %v3867, 0
        %3940 = vmatprep.subr.bf16.mxu0 0
        %3941 = vmatpush1.bf16.msra.mxu0 0
        %3942 = vmatprep.subr.bf16.mxu0 0
        %3943 = vmatpush1.bf16.msra.mxu0 0
        %3944 = vmatprep.subr.bf16.mxu0 0
        %3945 = vmatpush1.bf16.msra.mxu0 0
        %3946 = vmatprep.subr.bf16.mxu0 0
        %3947 = vmatpush1.bf16.msra.mxu0 0
        %3948 = vmatprep.subr.bf16.mxu0 %v3907
        %3949 = vmatpush1.bf16.msra.mxu0 %v3906
        %3950 = vmatprep.subr.bf16.mxu0 %v3905
        %3951 = vmatpush1.bf16.msra.mxu0 %v3904
        %3952 = vmatprep.subr.bf16.mxu0 %v3903
        %3953 = vmatpush1.bf16.msra.mxu0 %v3902
        %3954 = vmatprep.subr.bf16.mxu0 %v3901
        %3955 = vmatpush1.bf16.msra.mxu0 %v3900
        %3956 = vmatprep.subr.bf16.mxu0 0
        %3957 = vmatpush2.bf16.msra.mxu0 0
        %3958 = vmatprep.subr.bf16.mxu0 0
        %3959 = vmatpush2.bf16.msra.mxu0 0
        %3960 = vmatprep.subr.bf16.mxu0 0
        %3961 = vmatpush2.bf16.msra.mxu0 0
        %3962 = vmatprep.subr.bf16.mxu0 0
        %3963 = vmatpush2.bf16.msra.mxu0 0
        %3964 = vmatprep.subr.bf16.mxu0 0
        %3965 = vmatpush2.bf16.msra.mxu0 0
        %3966 = vmatprep.subr.bf16.mxu0 0
        %3967 = vmatpush2.bf16.msra.mxu0 0
        %3968 = vmatprep.subr.bf16.mxu0 0
        %3969 = vmatpush2.bf16.msra.mxu0 0
        %3970 = vmatprep.subr.bf16.mxu0 0
        %3971 = vmatpush2.bf16.msra.mxu0 0
        %3972 = vmatprep.mubr.bf16.mxu0 0
        %3973 = vmatmul.mubr.bf16.gmra.mxu0 %v3917
        %v3974 = vpop.f32.mrf.mxu0
        %v3975 = vadd.f32 0.0, %v3974
        %v3976 = vpop.f32.mrf.mxu0
        %v3977 = vadd.f32 0.0, %v3976
        %v3978 = vpop.f32.mrf.mxu0
        %v3979 = vadd.f32 0.0, %v3978
        %v3980 = vpop.f32.mrf.mxu0
        %v3981 = vadd.f32 0.0, %v3980
        %3982 = vmatprep.mubr.bf16.mxu0 0
        %3983 = vmatmul.mubr.bf16.gmra.mxu0 %v3920
        %v3984 = vpop.f32.mrf.mxu0
        %v3985 = vadd.f32 0.0, %v3984
        %v3986 = vpop.f32.mrf.mxu0
        %v3987 = vadd.f32 0.0, %v3986
        %v3988 = vpop.f32.mrf.mxu0
        %v3989 = vadd.f32 0.0, %v3988
        %v3990 = vpop.f32.mrf.mxu0
        %v3991 = vadd.f32 0.0, %v3990
        %3992 = vmatprep.mubr.bf16.mxu0 0
        %3993 = vmatmul.mubr.bf16.gmra.mxu0 %v3923
        %v3994 = vpop.f32.mrf.mxu0
        %v3995 = vadd.f32 0.0, %v3994
        %v3996 = vpop.f32.mrf.mxu0
        %v3997 = vadd.f32 0.0, %v3996
        %v3998 = vpop.f32.mrf.mxu0
        %v3999 = vadd.f32 0.0, %v3998
        %v4000 = vpop.f32.mrf.mxu0
        %v4001 = vadd.f32 0.0, %v4000
        %4002 = vmatprep.mubr.bf16.mxu0 0
        %4003 = vmatmul.mubr.bf16.gmra.mxu0 %v3926
        %v4004 = vpop.f32.mrf.mxu0
        %v4005 = vadd.f32 0.0, %v4004
        %v4006 = vpop.f32.mrf.mxu0
        %v4007 = vadd.f32 0.0, %v4006
        %v4008 = vpop.f32.mrf.mxu0
        %v4009 = vadd.f32 0.0, %v4008
        %v4010 = vpop.f32.mrf.mxu0
        %v4011 = vadd.f32 0.0, %v4010
        %4012 = vmatprep.mubr.bf16.mxu0 0
        %4013 = vmatmul.mubr.bf16.gmra.mxu0 %v3929
        %v4014 = vpop.f32.mrf.mxu0
        %v4015 = vadd.f32 0.0, %v4014
        %v4016 = vpop.f32.mrf.mxu0
        %v4017 = vadd.f32 0.0, %v4016
        %v4018 = vpop.f32.mrf.mxu0
        %v4019 = vadd.f32 0.0, %v4018
        %v4020 = vpop.f32.mrf.mxu0
        %v4021 = vadd.f32 0.0, %v4020
        %4022 = vmatprep.mubr.bf16.mxu0 0
        %4023 = vmatmul.mubr.bf16.gmra.mxu0 %v3932
        %v4024 = vpop.f32.mrf.mxu0
        %v4025 = vadd.f32 0.0, %v4024
        %v4026 = vpop.f32.mrf.mxu0
        %v4027 = vadd.f32 0.0, %v4026
        %v4028 = vpop.f32.mrf.mxu0
        %v4029 = vadd.f32 0.0, %v4028
        %v4030 = vpop.f32.mrf.mxu0
        %v4031 = vadd.f32 0.0, %v4030
        %4032 = vmatprep.mubr.bf16.mxu0 0
        %4033 = vmatmul.mubr.bf16.gmra.mxu0 %v3935
        %v4034 = vpop.f32.mrf.mxu0
        %v4035 = vadd.f32 0.0, %v4034
        %v4036 = vpop.f32.mrf.mxu0
        %v4037 = vadd.f32 0.0, %v4036
        %v4038 = vpop.f32.mrf.mxu0
        %v4039 = vadd.f32 0.0, %v4038
        %v4040 = vpop.f32.mrf.mxu0
        %v4041 = vadd.f32 0.0, %v4040
        %4042 = vmatprep.mubr.bf16.mxu0 0
        %4043 = vmatmul.mubr.bf16.gmra.mxu0 %v3938
        %v4044 = vpop.f32.mrf.mxu0
        %v4045 = vadd.f32 0.0, %v4044
        %v4046 = vpop.f32.mrf.mxu0
        %v4047 = vadd.f32 0.0, %v4046
        %v4048 = vpop.f32.mrf.mxu0
        %v4049 = vadd.f32 0.0, %v4048
        %v4050 = vpop.f32.mrf.mxu0
        %v4051 = vadd.f32 0.0, %v4050
        %4052 = vdwg.mxu0
        %v4053 = vadd.f32 %v3212, %v3975
        %v4054 = vadd.f32 %v3214, %v3977
        %v4055 = vadd.f32 %v3216, %v3979
        %v4056 = vadd.f32 %v3218, %v3981
        %v4057 = vadd.f32 %v3222, %v3985
        %v4058 = vadd.f32 %v3224, %v3987
        %v4059 = vadd.f32 %v3226, %v3989
        %v4060 = vadd.f32 %v3228, %v3991
        %v4061 = vadd.f32 %v3232, %v3995
        %v4062 = vadd.f32 %v3234, %v3997
        %v4063 = vadd.f32 %v3236, %v3999
        %v4064 = vadd.f32 %v3238, %v4001
        %v4065 = vadd.f32 %v3242, %v4005
        %v4066 = vadd.f32 %v3244, %v4007
        %v4067 = vadd.f32 %v3246, %v4009
        %v4068 = vadd.f32 %v3248, %v4011
        %v4069 = vadd.f32 %v3252, %v4015
        %v4070 = vadd.f32 %v3254, %v4017
        %v4071 = vadd.f32 %v3256, %v4019
        %v4072 = vadd.f32 %v3258, %v4021
        %v4073 = vadd.f32 %v3262, %v4025
        %v4074 = vadd.f32 %v3264, %v4027
        %v4075 = vadd.f32 %v3266, %v4029
        %v4076 = vadd.f32 %v3268, %v4031
        %v4077 = vadd.f32 %v3272, %v4035
        %v4078 = vadd.f32 %v3274, %v4037
        %v4079 = vadd.f32 %v3276, %v4039
        %v4080 = vadd.f32 %v3278, %v4041
        %v4081 = vadd.f32 %v3282, %v4045
        %v4082 = vadd.f32 %v3284, %v4047
        %v4083 = vadd.f32 %v3286, %v4049
        %v4084 = vadd.f32 %v3288, %v4051
        %4085 = vrot.lane.b32.xlu0 %v3370, 64
        %v4086 = vpop.permute.xlu0 %4085
        %4087 = vrot.lane.b32.xlu0 %v3371, 64
        %v4088 = vpop.permute.xlu0 %4087
        %4089 = vrot.lane.b32.xlu0 %v3372, 64
        %v4090 = vpop.permute.xlu0 %4089
        %4091 = vrot.lane.b32.xlu0 %v3373, 64
        %v4092 = vpop.permute.xlu0 %4091
        %4093 = vrot.lane.b32.xlu0 %v3374, 64
        %v4094 = vpop.permute.xlu0 %4093
        %4095 = vrot.lane.b32.xlu0 %v3375, 64
        %v4096 = vpop.permute.xlu0 %4095
        %4097 = vrot.lane.b32.xlu0 %v3376, 64
        %v4098 = vpop.permute.xlu0 %4097
        %4099 = vrot.lane.b32.xlu0 %v3377, 64
        %v4100 = vpop.permute.xlu0 %4099
        %4101 = vrot.lane.b32.xlu0 %v3410, 64
        %v4102 = vpop.permute.xlu0 %4101
        %4103 = vrot.lane.b32.xlu0 %v3411, 64
        %v4104 = vpop.permute.xlu0 %4103
        %4105 = vrot.lane.b32.xlu0 %v3412, 64
        %v4106 = vpop.permute.xlu0 %4105
        %4107 = vrot.lane.b32.xlu0 %v3413, 64
        %v4108 = vpop.permute.xlu0 %4107
        %4109 = vrot.lane.b32.xlu0 %v3414, 64
        %v4110 = vpop.permute.xlu0 %4109
        %4111 = vrot.lane.b32.xlu0 %v3415, 64
        %v4112 = vpop.permute.xlu0 %4111
        %4113 = vrot.lane.b32.xlu0 %v3416, 64
        %v4114 = vpop.permute.xlu0 %4113
        %4115 = vrot.lane.b32.xlu0 %v3417, 64
        %v4116 = vpop.permute.xlu0 %4115
        %v4118 = vsel %vm2011, %v4086, 0
        %v4121 = vsel %vm2011, %v4088, 0
        %v4124 = vsel %vm2011, %v4090, 0
        %v4127 = vsel %vm2011, %v4092, 0
        %v4130 = vsel %vm2011, %v4094, 0
        %v4133 = vsel %vm2011, %v4096, 0
        %v4136 = vsel %vm2011, %v4098, 0
        %v4139 = vsel %vm2011, %v4100, 0
        %v4142 = vsel %vm2011, %v4102, 0
        %v4145 = vsel %vm2011, %v4104, 0
        %v4148 = vsel %vm2011, %v4106, 0
        %v4151 = vsel %vm2011, %v4108, 0
        %v4154 = vsel %vm2011, %v4110, 0
        %v4157 = vsel %vm2011, %v4112, 0
        %v4160 = vsel %vm2011, %v4114, 0
        %v4163 = vsel %vm2011, %v4116, 0
        %4165 = vmatprep.subr.bf16.mxu0 0
        %4166 = vmatpush1.bf16.xpose.msra.mxu0 %v4163
        %4167 = vmatprep.subr.bf16.mxu0 0
        %4168 = vmatpush1.bf16.xpose.msra.mxu0 %v4160
        %4169 = vmatprep.subr.bf16.mxu0 0
        %4170 = vmatpush1.bf16.xpose.msra.mxu0 %v4157
        %4171 = vmatprep.subr.bf16.mxu0 0
        %4172 = vmatpush1.bf16.xpose.msra.mxu0 %v4154
        %4173 = vmatprep.subr.bf16.mxu0 0
        %4174 = vmatpush1.bf16.xpose.msra.mxu0 %v4151
        %4175 = vmatprep.subr.bf16.mxu0 0
        %4176 = vmatpush1.bf16.xpose.msra.mxu0 %v4148
        %4177 = vmatprep.subr.bf16.mxu0 0
        %4178 = vmatpush1.bf16.xpose.msra.mxu0 %v4145
        %4179 = vmatprep.subr.bf16.mxu0 0
        %4180 = vmatpush1.bf16.xpose.msra.mxu0 %v4142
        %4181 = vmatprep.subr.bf16.mxu0 0
        %4182 = vmatpush2.bf16.xpose.msra.mxu0 0
        %4183 = vmatprep.subr.bf16.mxu0 0
        %4184 = vmatpush2.bf16.xpose.msra.mxu0 0
        %4185 = vmatprep.subr.bf16.mxu0 0
        %4186 = vmatpush2.bf16.xpose.msra.mxu0 0
        %4187 = vmatprep.subr.bf16.mxu0 0
        %4188 = vmatpush2.bf16.xpose.msra.mxu0 0
        %4189 = vmatprep.subr.bf16.mxu0 0
        %4190 = vmatpush2.bf16.xpose.msra.mxu0 0
        %4191 = vmatprep.subr.bf16.mxu0 0
        %4192 = vmatpush2.bf16.xpose.msra.mxu0 0
        %4193 = vmatprep.subr.bf16.mxu0 0
        %4194 = vmatpush2.bf16.xpose.msra.mxu0 0
        %4195 = vmatprep.subr.bf16.mxu0 0
        %4196 = vmatpush2.bf16.xpose.msra.mxu0 0
        %4197 = vmatprep.mubr.bf16.mxu0 0
        %4198 = vmatmul.mubr.bf16.gmra.mxu0 %v4118
        %v4199 = vpop.f32.mrf.mxu0
        %v4200 = vadd.f32 0.0, %v4199
        %v4201 = vpop.f32.mrf.mxu0
        %v4202 = vpop.f32.mrf.mxu0
        %v4203 = vadd.f32 0.0, %v4202
        %v4204 = vpop.f32.mrf.mxu0
        %4205 = vmatprep.mubr.bf16.mxu0 0
        %4206 = vmatmul.mubr.bf16.gmra.mxu0 %v4121
        %v4207 = vpop.f32.mrf.mxu0
        %v4208 = vadd.f32 0.0, %v4207
        %v4209 = vpop.f32.mrf.mxu0
        %v4210 = vpop.f32.mrf.mxu0
        %v4211 = vadd.f32 0.0, %v4210
        %v4212 = vpop.f32.mrf.mxu0
        %4213 = vmatprep.mubr.bf16.mxu0 0
        %4214 = vmatmul.mubr.bf16.gmra.mxu0 %v4124
        %v4215 = vpop.f32.mrf.mxu0
        %v4216 = vadd.f32 0.0, %v4215
        %v4217 = vpop.f32.mrf.mxu0
        %v4218 = vpop.f32.mrf.mxu0
        %v4219 = vadd.f32 0.0, %v4218
        %v4220 = vpop.f32.mrf.mxu0
        %4221 = vmatprep.mubr.bf16.mxu0 0
        %4222 = vmatmul.mubr.bf16.gmra.mxu0 %v4127
        %v4223 = vpop.f32.mrf.mxu0
        %v4224 = vadd.f32 0.0, %v4223
        %v4225 = vpop.f32.mrf.mxu0
        %v4226 = vpop.f32.mrf.mxu0
        %v4227 = vadd.f32 0.0, %v4226
        %v4228 = vpop.f32.mrf.mxu0
        %4229 = vmatprep.mubr.bf16.mxu0 0
        %4230 = vmatmul.mubr.bf16.gmra.mxu0 %v4130
        %v4231 = vpop.f32.mrf.mxu0
        %v4232 = vadd.f32 0.0, %v4231
        %v4233 = vpop.f32.mrf.mxu0
        %v4234 = vpop.f32.mrf.mxu0
        %v4235 = vadd.f32 0.0, %v4234
        %v4236 = vpop.f32.mrf.mxu0
        %4237 = vmatprep.mubr.bf16.mxu0 0
        %4238 = vmatmul.mubr.bf16.gmra.mxu0 %v4133
        %v4239 = vpop.f32.mrf.mxu0
        %v4240 = vadd.f32 0.0, %v4239
        %v4241 = vpop.f32.mrf.mxu0
        %v4242 = vpop.f32.mrf.mxu0
        %v4243 = vadd.f32 0.0, %v4242
        %v4244 = vpop.f32.mrf.mxu0
        %4245 = vmatprep.mubr.bf16.mxu0 0
        %4246 = vmatmul.mubr.bf16.gmra.mxu0 %v4136
        %v4247 = vpop.f32.mrf.mxu0
        %v4248 = vadd.f32 0.0, %v4247
        %v4249 = vpop.f32.mrf.mxu0
        %v4250 = vpop.f32.mrf.mxu0
        %v4251 = vadd.f32 0.0, %v4250
        %v4252 = vpop.f32.mrf.mxu0
        %4253 = vmatprep.mubr.bf16.mxu0 0
        %4254 = vmatmul.mubr.bf16.gmra.mxu0 %v4139
        %v4255 = vpop.f32.mrf.mxu0
        %v4256 = vadd.f32 0.0, %v4255
        %v4257 = vpop.f32.mrf.mxu0
        %v4258 = vpop.f32.mrf.mxu0
        %v4259 = vadd.f32 0.0, %v4258
        %v4260 = vpop.f32.mrf.mxu0
        %4261 = vdwg.mxu0
        %4262 = vmax.xlane.f32.xlu0 %v4200
        %v4263 = vpop.xlane.xlu0 %4262
        %4264 = vmax.xlane.f32.xlu0 %v4203
        %v4265 = vpop.xlane.xlu0 %4264
        %4266 = vmax.xlane.f32.xlu0 %v4208
        %v4267 = vpop.xlane.xlu0 %4266
        %4268 = vmax.xlane.f32.xlu0 %v4211
        %v4269 = vpop.xlane.xlu0 %4268
        %4270 = vmax.xlane.f32.xlu0 %v4216
        %v4271 = vpop.xlane.xlu0 %4270
        %4272 = vmax.xlane.f32.xlu0 %v4219
        %v4273 = vpop.xlane.xlu0 %4272
        %4274 = vmax.xlane.f32.xlu0 %v4224
        %v4275 = vpop.xlane.xlu0 %4274
        %4276 = vmax.xlane.f32.xlu0 %v4227
        %v4277 = vpop.xlane.xlu0 %4276
        %4278 = vmax.xlane.f32.xlu0 %v4232
        %v4279 = vpop.xlane.xlu0 %4278
        %4280 = vmax.xlane.f32.xlu0 %v4235
        %v4281 = vpop.xlane.xlu0 %4280
        %4282 = vmax.xlane.f32.xlu0 %v4240
        %v4283 = vpop.xlane.xlu0 %4282
        %4284 = vmax.xlane.f32.xlu0 %v4243
        %v4285 = vpop.xlane.xlu0 %4284
        %4286 = vmax.xlane.f32.xlu0 %v4248
        %v4287 = vpop.xlane.xlu0 %4286
        %4288 = vmax.xlane.f32.xlu0 %v4251
        %v4289 = vpop.xlane.xlu0 %4288
        %4290 = vmax.xlane.f32.xlu0 %v4256
        %v4291 = vpop.xlane.xlu0 %4290
        %4292 = vmax.xlane.f32.xlu0 %v4259
        %v4293 = vpop.xlane.xlu0 %4292
        %v4294 = vsub.f32 %v4200, %v4263
        %v4295 = vsub.f32 %v4203, %v4265
        %v4296 = vsub.f32 %v4208, %v4267
        %v4297 = vsub.f32 %v4211, %v4269
        %v4298 = vsub.f32 %v4216, %v4271
        %v4299 = vsub.f32 %v4219, %v4273
        %v4300 = vsub.f32 %v4224, %v4275
        %v4301 = vsub.f32 %v4227, %v4277
        %v4302 = vsub.f32 %v4232, %v4279
        %v4303 = vsub.f32 %v4235, %v4281
        %v4304 = vsub.f32 %v4240, %v4283
        %v4305 = vsub.f32 %v4243, %v4285
        %v4306 = vsub.f32 %v4248, %v4287
        %v4307 = vsub.f32 %v4251, %v4289
        %v4308 = vsub.f32 %v4256, %v4291
        %v4309 = vsub.f32 %v4259, %v4293
        %v4310 = vmul.f32 %v4294, 1.442695
        %v4311 = vpow.pop %v4310
        %v4312 = vmul.f32 %v4295, 1.442695
        %v4313 = vpow.pop %v4312
        %v4314 = vmul.f32 %v4296, 1.442695
        %v4315 = vpow.pop %v4314
        %v4316 = vmul.f32 %v4297, 1.442695
        %v4317 = vpow.pop %v4316
        %v4318 = vmul.f32 %v4298, 1.442695
        %v4319 = vpow.pop %v4318
        %v4320 = vmul.f32 %v4299, 1.442695
        %v4321 = vpow.pop %v4320
        %v4322 = vmul.f32 %v4300, 1.442695
        %v4323 = vpow.pop %v4322
        %v4324 = vmul.f32 %v4301, 1.442695
        %v4325 = vpow.pop %v4324
        %v4326 = vmul.f32 %v4302, 1.442695
        %v4327 = vpow.pop %v4326
        %v4328 = vmul.f32 %v4303, 1.442695
        %v4329 = vpow.pop %v4328
        %v4330 = vmul.f32 %v4304, 1.442695
        %v4331 = vpow.pop %v4330
        %v4332 = vmul.f32 %v4305, 1.442695
        %v4333 = vpow.pop %v4332
        %v4334 = vmul.f32 %v4306, 1.442695
        %v4335 = vpow.pop %v4334
        %v4336 = vmul.f32 %v4307, 1.442695
        %v4337 = vpow.pop %v4336
        %v4338 = vmul.f32 %v4308, 1.442695
        %v4339 = vpow.pop %v4338
        %v4340 = vmul.f32 %v4309, 1.442695
        %v4341 = vpow.pop %v4340
        %4342 = vadd.xlane.f32.xlu0 %v4311
        %v4343 = vpop.xlane.xlu0 %4342
        %4344 = vadd.xlane.f32.xlu0 %v4313
        %v4345 = vpop.xlane.xlu0 %4344
        %4346 = vadd.xlane.f32.xlu0 %v4315
        %v4347 = vpop.xlane.xlu0 %4346
        %4348 = vadd.xlane.f32.xlu0 %v4317
        %v4349 = vpop.xlane.xlu0 %4348
        %4350 = vadd.xlane.f32.xlu0 %v4319
        %v4351 = vpop.xlane.xlu0 %4350
        %4352 = vadd.xlane.f32.xlu0 %v4321
        %v4353 = vpop.xlane.xlu0 %4352
        %4354 = vadd.xlane.f32.xlu0 %v4323
        %v4355 = vpop.xlane.xlu0 %4354
        %4356 = vadd.xlane.f32.xlu0 %v4325
        %v4357 = vpop.xlane.xlu0 %4356
        %4358 = vadd.xlane.f32.xlu0 %v4327
        %v4359 = vpop.xlane.xlu0 %4358
        %4360 = vadd.xlane.f32.xlu0 %v4329
        %v4361 = vpop.xlane.xlu0 %4360
        %4362 = vadd.xlane.f32.xlu0 %v4331
        %v4363 = vpop.xlane.xlu0 %4362
        %4364 = vadd.xlane.f32.xlu0 %v4333
        %v4365 = vpop.xlane.xlu0 %4364
        %4366 = vadd.xlane.f32.xlu0 %v4335
        %v4367 = vpop.xlane.xlu0 %4366
        %4368 = vadd.xlane.f32.xlu0 %v4337
        %v4369 = vpop.xlane.xlu0 %4368
        %4370 = vadd.xlane.f32.xlu0 %v4339
        %v4371 = vpop.xlane.xlu0 %4370
        %4372 = vadd.xlane.f32.xlu0 %v4341
        %v4373 = vpop.xlane.xlu0 %4372
        %v4374 = vrcp.pop %v4343
        %v4375 = vrcp.pop %v4345
        %v4376 = vrcp.pop %v4347
        %v4377 = vrcp.pop %v4349
        %v4378 = vrcp.pop %v4351
        %v4379 = vrcp.pop %v4353
        %v4380 = vrcp.pop %v4355
        %v4381 = vrcp.pop %v4357
        %v4382 = vrcp.pop %v4359
        %v4383 = vrcp.pop %v4361
        %v4384 = vrcp.pop %v4363
        %v4385 = vrcp.pop %v4365
        %v4386 = vrcp.pop %v4367
        %v4387 = vrcp.pop %v4369
        %v4388 = vrcp.pop %v4371
        %v4389 = vrcp.pop %v4373
        %v4390 = vmul.f32 %v4311, %v4374
        %v4391 = vmul.f32 %v4313, %v4375
        %v4392 = vmul.f32 %v4315, %v4376
        %v4393 = vmul.f32 %v4317, %v4377
        %v4394 = vmul.f32 %v4319, %v4378
        %v4395 = vmul.f32 %v4321, %v4379
        %v4396 = vmul.f32 %v4323, %v4380
        %v4397 = vmul.f32 %v4325, %v4381
        %v4398 = vmul.f32 %v4327, %v4382
        %v4399 = vmul.f32 %v4329, %v4383
        %v4400 = vmul.f32 %v4331, %v4384
        %v4401 = vmul.f32 %v4333, %v4385
        %v4402 = vmul.f32 %v4335, %v4386
        %v4403 = vmul.f32 %v4337, %v4387
        %v4404 = vmul.f32 %v4339, %v4388
        %v4405 = vmul.f32 %v4341, %v4389
        %v4406 = vpack.c.bf16 %v4391, %v4390
        %v4407 = vpack.c.bf16 %v4393, %v4392
        %v4408 = vpack.c.bf16 %v4395, %v4394
        %v4409 = vpack.c.bf16 %v4397, %v4396
        %v4410 = vpack.c.bf16 %v4399, %v4398
        %v4411 = vpack.c.bf16 %v4401, %v4400
        %v4412 = vpack.c.bf16 %v4403, %v4402
        %v4413 = vpack.c.bf16 %v4405, %v4404
        %4414 = vrot.lane.b32.xlu0 %v3747, 64
        %v4415 = vpop.permute.xlu0 %4414
        %4416 = vrot.lane.b32.xlu0 %v3748, 64
        %v4417 = vpop.permute.xlu0 %4416
        %4418 = vrot.lane.b32.xlu0 %v3749, 64
        %v4419 = vpop.permute.xlu0 %4418
        %4420 = vrot.lane.b32.xlu0 %v3750, 64
        %v4421 = vpop.permute.xlu0 %4420
        %4422 = vrot.lane.b32.xlu0 %v3751, 64
        %v4423 = vpop.permute.xlu0 %4422
        %4424 = vrot.lane.b32.xlu0 %v3752, 64
        %v4425 = vpop.permute.xlu0 %4424
        %4426 = vrot.lane.b32.xlu0 %v3753, 64
        %v4427 = vpop.permute.xlu0 %4426
        %4428 = vrot.lane.b32.xlu0 %v3754, 64
        %v4429 = vpop.permute.xlu0 %4428
        %4438 = vmatprep.subr.bf16.mxu0 0
        %4439 = vmatpush1.bf16.msra.mxu0 %v4429
        %4440 = vmatprep.subr.bf16.mxu0 0
        %4441 = vmatpush1.bf16.msra.mxu0 %v4427
        %4442 = vmatprep.subr.bf16.mxu0 0
        %4443 = vmatpush1.bf16.msra.mxu0 %v4425
        %4444 = vmatprep.subr.bf16.mxu0 0
        %4445 = vmatpush1.bf16.msra.mxu0 %v4423
        %4446 = vmatprep.subr.bf16.mxu0 0
        %4447 = vmatpush1.bf16.msra.mxu0 %v4421
        %4448 = vmatprep.subr.bf16.mxu0 0
        %4449 = vmatpush1.bf16.msra.mxu0 %v4419
        %4450 = vmatprep.subr.bf16.mxu0 0
        %4451 = vmatpush1.bf16.msra.mxu0 %v4417
        %4452 = vmatprep.subr.bf16.mxu0 0
        %4453 = vmatpush1.bf16.msra.mxu0 %v4415
        %4454 = vmatprep.subr.bf16.mxu0 0
        %4455 = vmatpush2.bf16.msra.mxu0 0
        %4456 = vmatprep.subr.bf16.mxu0 0
        %4457 = vmatpush2.bf16.msra.mxu0 0
        %4458 = vmatprep.subr.bf16.mxu0 0
        %4459 = vmatpush2.bf16.msra.mxu0 0
        %4460 = vmatprep.subr.bf16.mxu0 0
        %4461 = vmatpush2.bf16.msra.mxu0 0
        %4462 = vmatprep.subr.bf16.mxu0 0
        %4463 = vmatpush2.bf16.msra.mxu0 0
        %4464 = vmatprep.subr.bf16.mxu0 0
        %4465 = vmatpush2.bf16.msra.mxu0 0
        %4466 = vmatprep.subr.bf16.mxu0 0
        %4467 = vmatpush2.bf16.msra.mxu0 0
        %4468 = vmatprep.subr.bf16.mxu0 0
        %4469 = vmatpush2.bf16.msra.mxu0 0
        %4470 = vmatprep.mubr.bf16.mxu0 0
        %4471 = vmatmul.mubr.bf16.gmra.mxu0 %v4406
        %v4472 = vpop.f32.mrf.mxu0
        %v4473 = vadd.f32 0.0, %v4472
        %v4474 = vpop.f32.mrf.mxu0
        %v4475 = vpop.f32.mrf.mxu0
        %v4476 = vadd.f32 0.0, %v4475
        %v4477 = vpop.f32.mrf.mxu0
        %4478 = vmatprep.mubr.bf16.mxu0 0
        %4479 = vmatmul.mubr.bf16.gmra.mxu0 %v4407
        %v4480 = vpop.f32.mrf.mxu0
        %v4481 = vadd.f32 0.0, %v4480
        %v4482 = vpop.f32.mrf.mxu0
        %v4483 = vpop.f32.mrf.mxu0
        %v4484 = vadd.f32 0.0, %v4483
        %v4485 = vpop.f32.mrf.mxu0
        %4486 = vmatprep.mubr.bf16.mxu0 0
        %4487 = vmatmul.mubr.bf16.gmra.mxu0 %v4408
        %v4488 = vpop.f32.mrf.mxu0
        %v4489 = vadd.f32 0.0, %v4488
        %v4490 = vpop.f32.mrf.mxu0
        %v4491 = vpop.f32.mrf.mxu0
        %v4492 = vadd.f32 0.0, %v4491
        %v4493 = vpop.f32.mrf.mxu0
        %4494 = vmatprep.mubr.bf16.mxu0 0
        %4495 = vmatmul.mubr.bf16.gmra.mxu0 %v4409
        %v4496 = vpop.f32.mrf.mxu0
        %v4497 = vadd.f32 0.0, %v4496
        %v4498 = vpop.f32.mrf.mxu0
        %v4499 = vpop.f32.mrf.mxu0
        %v4500 = vadd.f32 0.0, %v4499
        %v4501 = vpop.f32.mrf.mxu0
        %4502 = vmatprep.mubr.bf16.mxu0 0
        %4503 = vmatmul.mubr.bf16.gmra.mxu0 %v4410
        %v4504 = vpop.f32.mrf.mxu0
        %v4505 = vadd.f32 0.0, %v4504
        %v4506 = vpop.f32.mrf.mxu0
        %v4507 = vpop.f32.mrf.mxu0
        %v4508 = vadd.f32 0.0, %v4507
        %v4509 = vpop.f32.mrf.mxu0
        %4510 = vmatprep.mubr.bf16.mxu0 0
        %4511 = vmatmul.mubr.bf16.gmra.mxu0 %v4411
        %v4512 = vpop.f32.mrf.mxu0
        %v4513 = vadd.f32 0.0, %v4512
        %v4514 = vpop.f32.mrf.mxu0
        %v4515 = vpop.f32.mrf.mxu0
        %v4516 = vadd.f32 0.0, %v4515
        %v4517 = vpop.f32.mrf.mxu0
        %4518 = vmatprep.mubr.bf16.mxu0 0
        %4519 = vmatmul.mubr.bf16.gmra.mxu0 %v4412
        %v4520 = vpop.f32.mrf.mxu0
        %v4521 = vadd.f32 0.0, %v4520
        %v4522 = vpop.f32.mrf.mxu0
        %v4523 = vpop.f32.mrf.mxu0
        %v4524 = vadd.f32 0.0, %v4523
        %v4525 = vpop.f32.mrf.mxu0
        %4526 = vmatprep.mubr.bf16.mxu0 0
        %4527 = vmatmul.mubr.bf16.gmra.mxu0 %v4413
        %v4528 = vpop.f32.mrf.mxu0
        %v4529 = vadd.f32 0.0, %v4528
        %v4530 = vpop.f32.mrf.mxu0
        %v4531 = vpop.f32.mrf.mxu0
        %v4532 = vadd.f32 0.0, %v4531
        %v4533 = vpop.f32.mrf.mxu0
        %4534 = vdwg.mxu0
        %v4535 = vpack.c.bf16 %v4476, %v4473
        %v4536 = vpack.c.bf16 %v4484, %v4481
        %v4537 = vpack.c.bf16 %v4492, %v4489
        %v4538 = vpack.c.bf16 %v4500, %v4497
        %v4539 = vpack.c.bf16 %v4508, %v4505
        %v4540 = vpack.c.bf16 %v4516, %v4513
        %v4541 = vpack.c.bf16 %v4524, %v4521
        %v4542 = vpack.c.bf16 %v4532, %v4529
        %v4543 = vld [vmem:[#allocation10 + $0xc0] sm:$0xff]
        %v4544 = vld [vmem:[#allocation10 + $0xc8] sm:$0xff]
        %v4545 = vld [vmem:[#allocation10 + $0xd0] sm:$0xff]
        %v4546 = vld [vmem:[#allocation10 + $0xd8] sm:$0xff]
        %v4547 = vld [vmem:[#allocation10 + $0xe0] sm:$0xff]
        %v4548 = vld [vmem:[#allocation10 + $0xe8] sm:$0xff]
        %v4549 = vld [vmem:[#allocation10 + $0xf0] sm:$0xff]
        %v4550 = vld [vmem:[#allocation10 + $0xf8] sm:$0xff]
        %v4559 = vunpack.c.l.b16 %v4543
        %v4560 = vunpack.c.h.b16 %v4543
        %v4561 = vunpack.c.l.b16 %v4544
        %v4562 = vunpack.c.h.b16 %v4544
        %v4563 = vunpack.c.l.b16 %v4545
        %v4564 = vunpack.c.h.b16 %v4545
        %v4565 = vunpack.c.l.b16 %v4546
        %v4566 = vunpack.c.h.b16 %v4546
        %v4567 = vunpack.c.l.b16 %v4547
        %v4568 = vunpack.c.h.b16 %v4547
        %v4569 = vunpack.c.l.b16 %v4548
        %v4570 = vunpack.c.h.b16 %v4548
        %v4571 = vunpack.c.l.b16 %v4549
        %v4572 = vunpack.c.h.b16 %v4549
        %v4573 = vunpack.c.l.b16 %v4550
        %v4574 = vunpack.c.h.b16 %v4550
        %v4575 = vpack.c.b16 %v4561, %v4559
        %v4576 = vpack.c.b16 %v4562, %v4560
        %v4577 = vpack.c.b16 %v4565, %v4563
        %v4578 = vpack.c.b16 %v4566, %v4564
        %v4579 = vpack.c.b16 %v4569, %v4567
        %v4580 = vpack.c.b16 %v4570, %v4568
        %v4581 = vpack.c.b16 %v4573, %v4571
        %v4582 = vpack.c.b16 %v4574, %v4572
        %v4592 = vsel %vm2011, %v4535, 0
        %v4595 = vsel %vm2011, %v4536, 0
        %v4598 = vsel %vm2011, %v4537, 0
        %v4601 = vsel %vm2011, %v4538, 0
        %v4604 = vsel %vm2011, %v4539, 0
        %v4607 = vsel %vm2011, %v4540, 0
        %v4610 = vsel %vm2011, %v4541, 0
        %v4613 = vsel %vm2011, %v4542, 0
        %4615 = vmatprep.subr.bf16.mxu0 0
        %4616 = vmatpush1.bf16.msra.mxu0 0
        %4617 = vmatprep.subr.bf16.mxu0 0
        %4618 = vmatpush1.bf16.msra.mxu0 0
        %4619 = vmatprep.subr.bf16.mxu0 0
        %4620 = vmatpush1.bf16.msra.mxu0 0
        %4621 = vmatprep.subr.bf16.mxu0 0
        %4622 = vmatpush1.bf16.msra.mxu0 0
        %4623 = vmatprep.subr.bf16.mxu0 %v4582
        %4624 = vmatpush1.bf16.msra.mxu0 %v4581
        %4625 = vmatprep.subr.bf16.mxu0 %v4580
        %4626 = vmatpush1.bf16.msra.mxu0 %v4579
        %4627 = vmatprep.subr.bf16.mxu0 %v4578
        %4628 = vmatpush1.bf16.msra.mxu0 %v4577
        %4629 = vmatprep.subr.bf16.mxu0 %v4576
        %4630 = vmatpush1.bf16.msra.mxu0 %v4575
        %4631 = vmatprep.subr.bf16.mxu0 0
        %4632 = vmatpush2.bf16.msra.mxu0 0
        %4633 = vmatprep.subr.bf16.mxu0 0
        %4634 = vmatpush2.bf16.msra.mxu0 0
        %4635 = vmatprep.subr.bf16.mxu0 0
        %4636 = vmatpush2.bf16.msra.mxu0 0
        %4637 = vmatprep.subr.bf16.mxu0 0
        %4638 = vmatpush2.bf16.msra.mxu0 0
        %4639 = vmatprep.subr.bf16.mxu0 0
        %4640 = vmatpush2.bf16.msra.mxu0 0
        %4641 = vmatprep.subr.bf16.mxu0 0
        %4642 = vmatpush2.bf16.msra.mxu0 0
        %4643 = vmatprep.subr.bf16.mxu0 0
        %4644 = vmatpush2.bf16.msra.mxu0 0
        %4645 = vmatprep.subr.bf16.mxu0 0
        %4646 = vmatpush2.bf16.msra.mxu0 0
        %4647 = vmatprep.mubr.bf16.mxu0 0
        %4648 = vmatmul.mubr.bf16.gmra.mxu0 %v4592
        %v4649 = vpop.f32.mrf.mxu0
        %v4650 = vadd.f32 0.0, %v4649
        %v4651 = vpop.f32.mrf.mxu0
        %v4652 = vadd.f32 0.0, %v4651
        %v4653 = vpop.f32.mrf.mxu0
        %v4654 = vadd.f32 0.0, %v4653
        %v4655 = vpop.f32.mrf.mxu0
        %v4656 = vadd.f32 0.0, %v4655
        %4657 = vmatprep.mubr.bf16.mxu0 0
        %4658 = vmatmul.mubr.bf16.gmra.mxu0 %v4595
        %v4659 = vpop.f32.mrf.mxu0
        %v4660 = vadd.f32 0.0, %v4659
        %v4661 = vpop.f32.mrf.mxu0
        %v4662 = vadd.f32 0.0, %v4661
        %v4663 = vpop.f32.mrf.mxu0
        %v4664 = vadd.f32 0.0, %v4663
        %v4665 = vpop.f32.mrf.mxu0
        %v4666 = vadd.f32 0.0, %v4665
        %4667 = vmatprep.mubr.bf16.mxu0 0
        %4668 = vmatmul.mubr.bf16.gmra.mxu0 %v4598
        %v4669 = vpop.f32.mrf.mxu0
        %v4670 = vadd.f32 0.0, %v4669
        %v4671 = vpop.f32.mrf.mxu0
        %v4672 = vadd.f32 0.0, %v4671
        %v4673 = vpop.f32.mrf.mxu0
        %v4674 = vadd.f32 0.0, %v4673
        %v4675 = vpop.f32.mrf.mxu0
        %v4676 = vadd.f32 0.0, %v4675
        %4677 = vmatprep.mubr.bf16.mxu0 0
        %4678 = vmatmul.mubr.bf16.gmra.mxu0 %v4601
        %v4679 = vpop.f32.mrf.mxu0
        %v4680 = vadd.f32 0.0, %v4679
        %v4681 = vpop.f32.mrf.mxu0
        %v4682 = vadd.f32 0.0, %v4681
        %v4683 = vpop.f32.mrf.mxu0
        %v4684 = vadd.f32 0.0, %v4683
        %v4685 = vpop.f32.mrf.mxu0
        %v4686 = vadd.f32 0.0, %v4685
        %4687 = vmatprep.mubr.bf16.mxu0 0
        %4688 = vmatmul.mubr.bf16.gmra.mxu0 %v4604
        %v4689 = vpop.f32.mrf.mxu0
        %v4690 = vadd.f32 0.0, %v4689
        %v4691 = vpop.f32.mrf.mxu0
        %v4692 = vadd.f32 0.0, %v4691
        %v4693 = vpop.f32.mrf.mxu0
        %v4694 = vadd.f32 0.0, %v4693
        %v4695 = vpop.f32.mrf.mxu0
        %v4696 = vadd.f32 0.0, %v4695
        %4697 = vmatprep.mubr.bf16.mxu0 0
        %4698 = vmatmul.mubr.bf16.gmra.mxu0 %v4607
        %v4699 = vpop.f32.mrf.mxu0
        %v4700 = vadd.f32 0.0, %v4699
        %v4701 = vpop.f32.mrf.mxu0
        %v4702 = vadd.f32 0.0, %v4701
        %v4703 = vpop.f32.mrf.mxu0
        %v4704 = vadd.f32 0.0, %v4703
        %v4705 = vpop.f32.mrf.mxu0
        %v4706 = vadd.f32 0.0, %v4705
        %4707 = vmatprep.mubr.bf16.mxu0 0
        %4708 = vmatmul.mubr.bf16.gmra.mxu0 %v4610
        %v4709 = vpop.f32.mrf.mxu0
        %v4710 = vadd.f32 0.0, %v4709
        %v4711 = vpop.f32.mrf.mxu0
        %v4712 = vadd.f32 0.0, %v4711
        %v4713 = vpop.f32.mrf.mxu0
        %v4714 = vadd.f32 0.0, %v4713
        %v4715 = vpop.f32.mrf.mxu0
        %v4716 = vadd.f32 0.0, %v4715
        %4717 = vmatprep.mubr.bf16.mxu0 0
        %4718 = vmatmul.mubr.bf16.gmra.mxu0 %v4613
        %v4719 = vpop.f32.mrf.mxu0
        %v4720 = vadd.f32 0.0, %v4719
        %v4721 = vpop.f32.mrf.mxu0
        %v4722 = vadd.f32 0.0, %v4721
        %v4723 = vpop.f32.mrf.mxu0
        %v4724 = vadd.f32 0.0, %v4723
        %v4725 = vpop.f32.mrf.mxu0
        %v4726 = vadd.f32 0.0, %v4725
        %4727 = vdwg.mxu0
        %v4728 = vadd.f32 %v4053, %v4650
        %v4729 = vadd.f32 %v4054, %v4652
        %v4730 = vadd.f32 %v4055, %v4654
        %v4731 = vadd.f32 %v4056, %v4656
        %v4732 = vadd.f32 %v4057, %v4660
        %v4733 = vadd.f32 %v4058, %v4662
        %v4734 = vadd.f32 %v4059, %v4664
        %v4735 = vadd.f32 %v4060, %v4666
        %v4736 = vadd.f32 %v4061, %v4670
        %v4737 = vadd.f32 %v4062, %v4672
        %v4738 = vadd.f32 %v4063, %v4674
        %v4739 = vadd.f32 %v4064, %v4676
        %v4740 = vadd.f32 %v4065, %v4680
        %v4741 = vadd.f32 %v4066, %v4682
        %v4742 = vadd.f32 %v4067, %v4684
        %v4743 = vadd.f32 %v4068, %v4686
        %v4744 = vadd.f32 %v4069, %v4690
        %v4745 = vadd.f32 %v4070, %v4692
        %v4746 = vadd.f32 %v4071, %v4694
        %v4747 = vadd.f32 %v4072, %v4696
        %v4748 = vadd.f32 %v4073, %v4700
        %v4749 = vadd.f32 %v4074, %v4702
        %v4750 = vadd.f32 %v4075, %v4704
        %v4751 = vadd.f32 %v4076, %v4706
        %v4752 = vadd.f32 %v4077, %v4710
        %v4753 = vadd.f32 %v4078, %v4712
        %v4754 = vadd.f32 %v4079, %v4714
        %v4755 = vadd.f32 %v4080, %v4716
        %v4756 = vadd.f32 %v4081, %v4720
        %v4757 = vadd.f32 %v4082, %v4722
        %v4758 = vadd.f32 %v4083, %v4724
        %v4759 = vadd.f32 %v4084, %v4726
        %v4760 = vld [vmem:[%s4] sm:$0x3]
        %v4762 = vlaneseq
        %v4763 = vshrl.u32 %v4762, 7
        %v4764 = vsub.s32 0, %v4763
        %v4765 = vrot.slane %v4760, %v4764
        %v4766 = vlaneseq
        %v4767 = vshrl.u32 %v4766, 7
        %v4768 = vsub.s32 1, %v4767
        %v4769 = vrot.slane %v4760, %v4768
        %v4772 = vadd.f32 %v4728, %v4765
        %v4773 = vadd.f32 %v4729, %v4769
        %v4774 = vadd.f32 %v4730, %v4765
        %v4775 = vadd.f32 %v4731, %v4769
        %v4776 = vadd.f32 %v4732, %v4765
        %v4777 = vadd.f32 %v4733, %v4769
        %v4778 = vadd.f32 %v4734, %v4765
        %v4779 = vadd.f32 %v4735, %v4769
        %v4780 = vadd.f32 %v4736, %v4765
        %v4781 = vadd.f32 %v4737, %v4769
        %v4782 = vadd.f32 %v4738, %v4765
        %v4783 = vadd.f32 %v4739, %v4769
        %v4784 = vadd.f32 %v4740, %v4765
        %v4785 = vadd.f32 %v4741, %v4769
        %v4786 = vadd.f32 %v4742, %v4765
        %v4787 = vadd.f32 %v4743, %v4769
        %v4788 = vadd.f32 %v4744, %v4765
        %v4789 = vadd.f32 %v4745, %v4769
        %v4790 = vadd.f32 %v4746, %v4765
        %v4791 = vadd.f32 %v4747, %v4769
        %v4792 = vadd.f32 %v4748, %v4765
        %v4793 = vadd.f32 %v4749, %v4769
        %v4794 = vadd.f32 %v4750, %v4765
        %v4795 = vadd.f32 %v4751, %v4769
        %v4796 = vadd.f32 %v4752, %v4765
        %v4797 = vadd.f32 %v4753, %v4769
        %v4798 = vadd.f32 %v4754, %v4765
        %v4799 = vadd.f32 %v4755, %v4769
        %v4800 = vadd.f32 %v4756, %v4765
        %v4801 = vadd.f32 %v4757, %v4769
        %v4802 = vadd.f32 %v4758, %v4765
        %v4803 = vadd.f32 %v4759, %v4769
        %v4804 = vadd.f32 %v552, %v4772
        %v4805 = vadd.f32 %v553, %v4773
        %v4806 = vadd.f32 %v554, %v4774
        %v4807 = vadd.f32 %v555, %v4775
        %v4808 = vadd.f32 %v556, %v4776
        %v4809 = vadd.f32 %v557, %v4777
        %v4810 = vadd.f32 %v558, %v4778
        %v4811 = vadd.f32 %v559, %v4779
        %v4812 = vadd.f32 %v560, %v4780
        %v4813 = vadd.f32 %v561, %v4781
        %v4814 = vadd.f32 %v562, %v4782
        %v4815 = vadd.f32 %v563, %v4783
        %v4816 = vadd.f32 %v564, %v4784
        %v4817 = vadd.f32 %v565, %v4785
        %v4818 = vadd.f32 %v566, %v4786
        %v4819 = vadd.f32 %v567, %v4787
        %v4820 = vadd.f32 %v568, %v4788
        %v4821 = vadd.f32 %v569, %v4789
        %v4822 = vadd.f32 %v570, %v4790
        %v4823 = vadd.f32 %v571, %v4791
        %v4824 = vadd.f32 %v572, %v4792
        %v4825 = vadd.f32 %v573, %v4793
        %v4826 = vadd.f32 %v574, %v4794
        %v4827 = vadd.f32 %v575, %v4795
        %v4828 = vadd.f32 %v576, %v4796
        %v4829 = vadd.f32 %v577, %v4797
        %v4830 = vadd.f32 %v578, %v4798
        %v4831 = vadd.f32 %v579, %v4799
        %v4832 = vadd.f32 %v580, %v4800
        %v4833 = vadd.f32 %v581, %v4801
        %v4834 = vadd.f32 %v582, %v4802
        %v4835 = vadd.f32 %v583, %v4803
        %v4836 = vld [vmem:[%s5] sm:$0x3]
        %v4837 = vld [vmem:[%s6] sm:$0x3]
        %v4838 = vadd.f32 %v4804, %v4805
        %4839 = vadd.xlane.f32.xlu0 %v4838
        %v4840 = vpop.xlane.xlu0 %4839
        %v4841 = vadd.f32 %v4806, %v4807
        %4842 = vadd.xlane.f32.xlu0 %v4841
        %v4843 = vpop.xlane.xlu0 %4842
        %v4844 = vadd.f32 %v4808, %v4809
        %4845 = vadd.xlane.f32.xlu0 %v4844
        %v4846 = vpop.xlane.xlu0 %4845
        %v4847 = vadd.f32 %v4810, %v4811
        %4848 = vadd.xlane.f32.xlu0 %v4847
        %v4849 = vpop.xlane.xlu0 %4848
        %v4850 = vadd.f32 %v4812, %v4813
        %4851 = vadd.xlane.f32.xlu0 %v4850
        %v4852 = vpop.xlane.xlu0 %4851
        %v4853 = vadd.f32 %v4814, %v4815
        %4854 = vadd.xlane.f32.xlu0 %v4853
        %v4855 = vpop.xlane.xlu0 %4854
        %v4856 = vadd.f32 %v4816, %v4817
        %4857 = vadd.xlane.f32.xlu0 %v4856
        %v4858 = vpop.xlane.xlu0 %4857
        %v4859 = vadd.f32 %v4818, %v4819
        %4860 = vadd.xlane.f32.xlu0 %v4859
        %v4861 = vpop.xlane.xlu0 %4860
        %v4862 = vadd.f32 %v4820, %v4821
        %4863 = vadd.xlane.f32.xlu0 %v4862
        %v4864 = vpop.xlane.xlu0 %4863
        %v4865 = vadd.f32 %v4822, %v4823
        %4866 = vadd.xlane.f32.xlu0 %v4865
        %v4867 = vpop.xlane.xlu0 %4866
        %v4868 = vadd.f32 %v4824, %v4825
        %4869 = vadd.xlane.f32.xlu0 %v4868
        %v4870 = vpop.xlane.xlu0 %4869
        %v4871 = vadd.f32 %v4826, %v4827
        %4872 = vadd.xlane.f32.xlu0 %v4871
        %v4873 = vpop.xlane.xlu0 %4872
        %v4874 = vadd.f32 %v4828, %v4829
        %4875 = vadd.xlane.f32.xlu0 %v4874
        %v4876 = vpop.xlane.xlu0 %4875
        %v4877 = vadd.f32 %v4830, %v4831
        %4878 = vadd.xlane.f32.xlu0 %v4877
        %v4879 = vpop.xlane.xlu0 %4878
        %v4880 = vadd.f32 %v4832, %v4833
        %4881 = vadd.xlane.f32.xlu0 %v4880
        %v4882 = vpop.xlane.xlu0 %4881
        %v4883 = vadd.f32 %v4834, %v4835
        %4884 = vadd.xlane.f32.xlu0 %v4883
        %v4885 = vpop.xlane.xlu0 %4884
        %v4886 = vrcp.pop 256.0
        %v4887 = vmul.f32 %v4840, %v4886
        %v4888 = vmul.f32 %v4843, %v4886
        %v4889 = vmul.f32 %v4846, %v4886
        %v4890 = vmul.f32 %v4849, %v4886
        %v4891 = vmul.f32 %v4852, %v4886
        %v4892 = vmul.f32 %v4855, %v4886
        %v4893 = vmul.f32 %v4858, %v4886
        %v4894 = vmul.f32 %v4861, %v4886
        %v4895 = vmul.f32 %v4864, %v4886
        %v4896 = vmul.f32 %v4867, %v4886
        %v4897 = vmul.f32 %v4870, %v4886
        %v4898 = vmul.f32 %v4873, %v4886
        %v4899 = vmul.f32 %v4876, %v4886
        %v4900 = vmul.f32 %v4879, %v4886
        %v4901 = vmul.f32 %v4882, %v4886
        %v4902 = vmul.f32 %v4885, %v4886
        %v4903 = vsub.f32 %v4804, %v4887
        %v4904 = vsub.f32 %v4805, %v4887
        %v4905 = vsub.f32 %v4806, %v4888
        %v4906 = vsub.f32 %v4807, %v4888
        %v4907 = vsub.f32 %v4808, %v4889
        %v4908 = vsub.f32 %v4809, %v4889
        %v4909 = vsub.f32 %v4810, %v4890
        %v4910 = vsub.f32 %v4811, %v4890
        %v4911 = vsub.f32 %v4812, %v4891
        %v4912 = vsub.f32 %v4813, %v4891
        %v4913 = vsub.f32 %v4814, %v4892
        %v4914 = vsub.f32 %v4815, %v4892
        %v4915 = vsub.f32 %v4816, %v4893
        %v4916 = vsub.f32 %v4817, %v4893
        %v4917 = vsub.f32 %v4818, %v4894
        %v4918 = vsub.f32 %v4819, %v4894
        %v4919 = vsub.f32 %v4820, %v4895
        %v4920 = vsub.f32 %v4821, %v4895
        %v4921 = vsub.f32 %v4822, %v4896
        %v4922 = vsub.f32 %v4823, %v4896
        %v4923 = vsub.f32 %v4824, %v4897
        %v4924 = vsub.f32 %v4825, %v4897
        %v4925 = vsub.f32 %v4826, %v4898
        %v4926 = vsub.f32 %v4827, %v4898
        %v4927 = vsub.f32 %v4828, %v4899
        %v4928 = vsub.f32 %v4829, %v4899
        %v4929 = vsub.f32 %v4830, %v4900
        %v4930 = vsub.f32 %v4831, %v4900
        %v4931 = vsub.f32 %v4832, %v4901
        %v4932 = vsub.f32 %v4833, %v4901
        %v4933 = vsub.f32 %v4834, %v4902
        %v4934 = vsub.f32 %v4835, %v4902
        %v4935 = vmul.f32 %v4903, %v4903
        %v4936 = vmul.f32 %v4904, %v4904
        %v4937 = vmul.f32 %v4905, %v4905
        %v4938 = vmul.f32 %v4906, %v4906
        %v4939 = vmul.f32 %v4907, %v4907
        %v4940 = vmul.f32 %v4908, %v4908
        %v4941 = vmul.f32 %v4909, %v4909
        %v4942 = vmul.f32 %v4910, %v4910
        %v4943 = vmul.f32 %v4911, %v4911
        %v4944 = vmul.f32 %v4912, %v4912
        %v4945 = vmul.f32 %v4913, %v4913
        %v4946 = vmul.f32 %v4914, %v4914
        %v4947 = vmul.f32 %v4915, %v4915
        %v4948 = vmul.f32 %v4916, %v4916
        %v4949 = vmul.f32 %v4917, %v4917
        %v4950 = vmul.f32 %v4918, %v4918
        %v4951 = vmul.f32 %v4919, %v4919
        %v4952 = vmul.f32 %v4920, %v4920
        %v4953 = vmul.f32 %v4921, %v4921
        %v4954 = vmul.f32 %v4922, %v4922
        %v4955 = vmul.f32 %v4923, %v4923
        %v4956 = vmul.f32 %v4924, %v4924
        %v4957 = vmul.f32 %v4925, %v4925
        %v4958 = vmul.f32 %v4926, %v4926
        %v4959 = vmul.f32 %v4927, %v4927
        %v4960 = vmul.f32 %v4928, %v4928
        %v4961 = vmul.f32 %v4929, %v4929
        %v4962 = vmul.f32 %v4930, %v4930
        %v4963 = vmul.f32 %v4931, %v4931
        %v4964 = vmul.f32 %v4932, %v4932
        %v4965 = vmul.f32 %v4933, %v4933
        %v4966 = vmul.f32 %v4934, %v4934
        %v4967 = vadd.f32 %v4935, %v4936
        %4968 = vadd.xlane.f32.xlu0 %v4967
        %v4969 = vpop.xlane.xlu0 %4968
        %v4970 = vadd.f32 %v4937, %v4938
        %4971 = vadd.xlane.f32.xlu0 %v4970
        %v4972 = vpop.xlane.xlu0 %4971
        %v4973 = vadd.f32 %v4939, %v4940
        %4974 = vadd.xlane.f32.xlu0 %v4973
        %v4975 = vpop.xlane.xlu0 %4974
        %v4976 = vadd.f32 %v4941, %v4942
        %4977 = vadd.xlane.f32.xlu0 %v4976
        %v4978 = vpop.xlane.xlu0 %4977
        %v4979 = vadd.f32 %v4943, %v4944
        %4980 = vadd.xlane.f32.xlu0 %v4979
        %v4981 = vpop.xlane.xlu0 %4980
        %v4982 = vadd.f32 %v4945, %v4946
        %4983 = vadd.xlane.f32.xlu0 %v4982
        %v4984 = vpop.xlane.xlu0 %4983
        %v4985 = vadd.f32 %v4947, %v4948
        %4986 = vadd.xlane.f32.xlu0 %v4985
        %v4987 = vpop.xlane.xlu0 %4986
        %v4988 = vadd.f32 %v4949, %v4950
        %4989 = vadd.xlane.f32.xlu0 %v4988
        %v4990 = vpop.xlane.xlu0 %4989
        %v4991 = vadd.f32 %v4951, %v4952
        %4992 = vadd.xlane.f32.xlu0 %v4991
        %v4993 = vpop.xlane.xlu0 %4992
        %v4994 = vadd.f32 %v4953, %v4954
        %4995 = vadd.xlane.f32.xlu0 %v4994
        %v4996 = vpop.xlane.xlu0 %4995
        %v4997 = vadd.f32 %v4955, %v4956
        %4998 = vadd.xlane.f32.xlu0 %v4997
        %v4999 = vpop.xlane.xlu0 %4998
        %v5000 = vadd.f32 %v4957, %v4958
        %5001 = vadd.xlane.f32.xlu0 %v5000
        %v5002 = vpop.xlane.xlu0 %5001
        %v5003 = vadd.f32 %v4959, %v4960
        %5004 = vadd.xlane.f32.xlu0 %v5003
        %v5005 = vpop.xlane.xlu0 %5004
        %v5006 = vadd.f32 %v4961, %v4962
        %5007 = vadd.xlane.f32.xlu0 %v5006
        %v5008 = vpop.xlane.xlu0 %5007
        %v5009 = vadd.f32 %v4963, %v4964
        %5010 = vadd.xlane.f32.xlu0 %v5009
        %v5011 = vpop.xlane.xlu0 %5010
        %v5012 = vadd.f32 %v4965, %v4966
        %5013 = vadd.xlane.f32.xlu0 %v5012
        %v5014 = vpop.xlane.xlu0 %5013
        %v5015 = vmul.f32 %v4969, %v4886
        %v5016 = vmul.f32 %v4972, %v4886
        %v5017 = vmul.f32 %v4975, %v4886
        %v5018 = vmul.f32 %v4978, %v4886
        %v5019 = vmul.f32 %v4981, %v4886
        %v5020 = vmul.f32 %v4984, %v4886
        %v5021 = vmul.f32 %v4987, %v4886
        %v5022 = vmul.f32 %v4990, %v4886
        %v5023 = vmul.f32 %v4993, %v4886
        %v5024 = vmul.f32 %v4996, %v4886
        %v5025 = vmul.f32 %v4999, %v4886
        %v5026 = vmul.f32 %v5002, %v4886
        %v5027 = vmul.f32 %v5005, %v4886
        %v5028 = vmul.f32 %v5008, %v4886
        %v5029 = vmul.f32 %v5011, %v4886
        %v5030 = vmul.f32 %v5014, %v4886
        %v5031 = vadd.f32 %v5015, 1e-05
        %v5032 = vadd.f32 %v5016, 1e-05
        %v5033 = vadd.f32 %v5017, 1e-05
        %v5034 = vadd.f32 %v5018, 1e-05
        %v5035 = vadd.f32 %v5019, 1e-05
        %v5036 = vadd.f32 %v5020, 1e-05
        %v5037 = vadd.f32 %v5021, 1e-05
        %v5038 = vadd.f32 %v5022, 1e-05
        %v5039 = vadd.f32 %v5023, 1e-05
        %v5040 = vadd.f32 %v5024, 1e-05
        %v5041 = vadd.f32 %v5025, 1e-05
        %v5042 = vadd.f32 %v5026, 1e-05
        %v5043 = vadd.f32 %v5027, 1e-05
        %v5044 = vadd.f32 %v5028, 1e-05
        %v5045 = vadd.f32 %v5029, 1e-05
        %v5046 = vadd.f32 %v5030, 1e-05
        %v5047 = vrsqrt.pop %v5031
        %v5048 = vrsqrt.pop %v5032
        %v5049 = vrsqrt.pop %v5033
        %v5050 = vrsqrt.pop %v5034
        %v5051 = vrsqrt.pop %v5035
        %v5052 = vrsqrt.pop %v5036
        %v5053 = vrsqrt.pop %v5037
        %v5054 = vrsqrt.pop %v5038
        %v5055 = vrsqrt.pop %v5039
        %v5056 = vrsqrt.pop %v5040
        %v5057 = vrsqrt.pop %v5041
        %v5058 = vrsqrt.pop %v5042
        %v5059 = vrsqrt.pop %v5043
        %v5060 = vrsqrt.pop %v5044
        %v5061 = vrsqrt.pop %v5045
        %v5062 = vrsqrt.pop %v5046
        %v5063 = vmul.f32 %v4903, %v5047
        %v5064 = vmul.f32 %v4904, %v5047
        %v5065 = vmul.f32 %v4905, %v5048
        %v5066 = vmul.f32 %v4906, %v5048
        %v5067 = vmul.f32 %v4907, %v5049
        %v5068 = vmul.f32 %v4908, %v5049
        %v5069 = vmul.f32 %v4909, %v5050
        %v5070 = vmul.f32 %v4910, %v5050
        %v5071 = vmul.f32 %v4911, %v5051
        %v5072 = vmul.f32 %v4912, %v5051
        %v5073 = vmul.f32 %v4913, %v5052
        %v5074 = vmul.f32 %v4914, %v5052
        %v5075 = vmul.f32 %v4915, %v5053
        %v5076 = vmul.f32 %v4916, %v5053
        %v5077 = vmul.f32 %v4917, %v5054
        %v5078 = vmul.f32 %v4918, %v5054
        %v5079 = vmul.f32 %v4919, %v5055
        %v5080 = vmul.f32 %v4920, %v5055
        %v5081 = vmul.f32 %v4921, %v5056
        %v5082 = vmul.f32 %v4922, %v5056
        %v5083 = vmul.f32 %v4923, %v5057
        %v5084 = vmul.f32 %v4924, %v5057
        %v5085 = vmul.f32 %v4925, %v5058
        %v5086 = vmul.f32 %v4926, %v5058
        %v5087 = vmul.f32 %v4927, %v5059
        %v5088 = vmul.f32 %v4928, %v5059
        %v5089 = vmul.f32 %v4929, %v5060
        %v5090 = vmul.f32 %v4930, %v5060
        %v5091 = vmul.f32 %v4931, %v5061
        %v5092 = vmul.f32 %v4932, %v5061
        %v5093 = vmul.f32 %v4933, %v5062
        %v5094 = vmul.f32 %v4934, %v5062
        %v5096 = vlaneseq
        %v5097 = vshrl.u32 %v5096, 7
        %v5098 = vsub.s32 0, %v5097
        %v5099 = vrot.slane %v4836, %v5098
        %v5100 = vlaneseq
        %v5101 = vshrl.u32 %v5100, 7
        %v5102 = vsub.s32 1, %v5101
        %v5103 = vrot.slane %v4836, %v5102
        %v5106 = vmul.f32 %v5063, %v5099
        %v5107 = vmul.f32 %v5064, %v5103
        %v5108 = vmul.f32 %v5065, %v5099
        %v5109 = vmul.f32 %v5066, %v5103
        %v5110 = vmul.f32 %v5067, %v5099
        %v5111 = vmul.f32 %v5068, %v5103
        %v5112 = vmul.f32 %v5069, %v5099
        %v5113 = vmul.f32 %v5070, %v5103
        %v5114 = vmul.f32 %v5071, %v5099
        %v5115 = vmul.f32 %v5072, %v5103
        %v5116 = vmul.f32 %v5073, %v5099
        %v5117 = vmul.f32 %v5074, %v5103
        %v5118 = vmul.f32 %v5075, %v5099
        %v5119 = vmul.f32 %v5076, %v5103
        %v5120 = vmul.f32 %v5077, %v5099
        %v5121 = vmul.f32 %v5078, %v5103
        %v5122 = vmul.f32 %v5079, %v5099
        %v5123 = vmul.f32 %v5080, %v5103
        %v5124 = vmul.f32 %v5081, %v5099
        %v5125 = vmul.f32 %v5082, %v5103
        %v5126 = vmul.f32 %v5083, %v5099
        %v5127 = vmul.f32 %v5084, %v5103
        %v5128 = vmul.f32 %v5085, %v5099
        %v5129 = vmul.f32 %v5086, %v5103
        %v5130 = vmul.f32 %v5087, %v5099
        %v5131 = vmul.f32 %v5088, %v5103
        %v5132 = vmul.f32 %v5089, %v5099
        %v5133 = vmul.f32 %v5090, %v5103
        %v5134 = vmul.f32 %v5091, %v5099
        %v5135 = vmul.f32 %v5092, %v5103
        %v5136 = vmul.f32 %v5093, %v5099
        %v5137 = vmul.f32 %v5094, %v5103
        %v5139 = vlaneseq
        %v5140 = vshrl.u32 %v5139, 7
        %v5141 = vsub.s32 0, %v5140
        %v5142 = vrot.slane %v4837, %v5141
        %v5143 = vlaneseq
        %v5144 = vshrl.u32 %v5143, 7
        %v5145 = vsub.s32 1, %v5144
        %v5146 = vrot.slane %v4837, %v5145
        %v5149 = vadd.f32 %v5106, %v5142
        %v5150 = vadd.f32 %v5107, %v5146
        %v5151 = vadd.f32 %v5108, %v5142
        %v5152 = vadd.f32 %v5109, %v5146
        %v5153 = vadd.f32 %v5110, %v5142
        %v5154 = vadd.f32 %v5111, %v5146
        %v5155 = vadd.f32 %v5112, %v5142
        %v5156 = vadd.f32 %v5113, %v5146
        %v5157 = vadd.f32 %v5114, %v5142
        %v5158 = vadd.f32 %v5115, %v5146
        %v5159 = vadd.f32 %v5116, %v5142
        %v5160 = vadd.f32 %v5117, %v5146
        %v5161 = vadd.f32 %v5118, %v5142
        %v5162 = vadd.f32 %v5119, %v5146
        %v5163 = vadd.f32 %v5120, %v5142
        %v5164 = vadd.f32 %v5121, %v5146
        %v5165 = vadd.f32 %v5122, %v5142
        %v5166 = vadd.f32 %v5123, %v5146
        %v5167 = vadd.f32 %v5124, %v5142
        %v5168 = vadd.f32 %v5125, %v5146
        %v5169 = vadd.f32 %v5126, %v5142
        %v5170 = vadd.f32 %v5127, %v5146
        %v5171 = vadd.f32 %v5128, %v5142
        %v5172 = vadd.f32 %v5129, %v5146
        %v5173 = vadd.f32 %v5130, %v5142
        %v5174 = vadd.f32 %v5131, %v5146
        %v5175 = vadd.f32 %v5132, %v5142
        %v5176 = vadd.f32 %v5133, %v5146
        %v5177 = vadd.f32 %v5134, %v5142
        %v5178 = vadd.f32 %v5135, %v5146
        %v5179 = vadd.f32 %v5136, %v5142
        %v5180 = vadd.f32 %v5137, %v5146
        %v5181 = vpack.c.bf16 %v5151, %v5149
        %v5182 = vpack.c.bf16 %v5152, %v5150
        %v5183 = vpack.c.bf16 %v5155, %v5153
        %v5184 = vpack.c.bf16 %v5156, %v5154
        %v5185 = vpack.c.bf16 %v5159, %v5157
        %v5186 = vpack.c.bf16 %v5160, %v5158
        %v5187 = vpack.c.bf16 %v5163, %v5161
        %v5188 = vpack.c.bf16 %v5164, %v5162
        %v5189 = vpack.c.bf16 %v5167, %v5165
        %v5190 = vpack.c.bf16 %v5168, %v5166
        %v5191 = vpack.c.bf16 %v5171, %v5169
        %v5192 = vpack.c.bf16 %v5172, %v5170
        %v5193 = vpack.c.bf16 %v5175, %v5173
        %v5194 = vpack.c.bf16 %v5176, %v5174
        %v5195 = vpack.c.bf16 %v5179, %v5177
        %v5196 = vpack.c.bf16 %v5180, %v5178
        %v5197 = vld [vmem:[#allocation12] sm:$0xff]
        %v5198 = vld [vmem:[#allocation12 + $0x8] sm:$0xff]
        %v5199 = vld [vmem:[#allocation12 + $0x20] sm:$0xff]
        %v5200 = vld [vmem:[#allocation12 + $0x28] sm:$0xff]
        %v5201 = vld [vmem:[#allocation12 + $0x40] sm:$0xff]
        %v5202 = vld [vmem:[#allocation12 + $0x48] sm:$0xff]
        %v5203 = vld [vmem:[#allocation12 + $0x60] sm:$0xff]
        %v5204 = vld [vmem:[#allocation12 + $0x68] sm:$0xff]
        %v5205 = vld [vmem:[#allocation12 + $0x80] sm:$0xff]
        %v5206 = vld [vmem:[#allocation12 + $0x88] sm:$0xff]
        %v5207 = vld [vmem:[#allocation12 + $0xa0] sm:$0xff]
        %v5208 = vld [vmem:[#allocation12 + $0xa8] sm:$0xff]
        %v5209 = vld [vmem:[#allocation12 + $0xc0] sm:$0xff]
        %v5210 = vld [vmem:[#allocation12 + $0xc8] sm:$0xff]
        %v5211 = vld [vmem:[#allocation12 + $0xe0] sm:$0xff]
        %v5212 = vld [vmem:[#allocation12 + $0xe8] sm:$0xff]
        %v5213 = vld [vmem:[#allocation12 + $0x100] sm:$0xff]
        %v5214 = vld [vmem:[#allocation12 + $0x108] sm:$0xff]
        %v5215 = vld [vmem:[#allocation12 + $0x120] sm:$0xff]
        %v5216 = vld [vmem:[#allocation12 + $0x128] sm:$0xff]
        %v5217 = vld [vmem:[#allocation12 + $0x140] sm:$0xff]
        %v5218 = vld [vmem:[#allocation12 + $0x148] sm:$0xff]
        %v5219 = vld [vmem:[#allocation12 + $0x160] sm:$0xff]
        %v5220 = vld [vmem:[#allocation12 + $0x168] sm:$0xff]
        %v5221 = vld [vmem:[#allocation12 + $0x180] sm:$0xff]
        %v5222 = vld [vmem:[#allocation12 + $0x188] sm:$0xff]
        %v5223 = vld [vmem:[#allocation12 + $0x1a0] sm:$0xff]
        %v5224 = vld [vmem:[#allocation12 + $0x1a8] sm:$0xff]
        %v5225 = vld [vmem:[#allocation12 + $0x1c0] sm:$0xff]
        %v5226 = vld [vmem:[#allocation12 + $0x1c8] sm:$0xff]
        %v5227 = vld [vmem:[#allocation12 + $0x1e0] sm:$0xff]
        %v5228 = vld [vmem:[#allocation12 + $0x1e8] sm:$0xff]
        %v5229 = vld [vmem:[#allocation12 + $0x200] sm:$0xff]
        %v5230 = vld [vmem:[#allocation12 + $0x208] sm:$0xff]
        %v5231 = vld [vmem:[#allocation12 + $0x220] sm:$0xff]
        %v5232 = vld [vmem:[#allocation12 + $0x228] sm:$0xff]
        %v5233 = vld [vmem:[#allocation12 + $0x240] sm:$0xff]
        %v5234 = vld [vmem:[#allocation12 + $0x248] sm:$0xff]
        %v5235 = vld [vmem:[#allocation12 + $0x260] sm:$0xff]
        %v5236 = vld [vmem:[#allocation12 + $0x268] sm:$0xff]
        %v5237 = vld [vmem:[#allocation12 + $0x280] sm:$0xff]
        %v5238 = vld [vmem:[#allocation12 + $0x288] sm:$0xff]
        %v5239 = vld [vmem:[#allocation12 + $0x2a0] sm:$0xff]
        %v5240 = vld [vmem:[#allocation12 + $0x2a8] sm:$0xff]
        %v5241 = vld [vmem:[#allocation12 + $0x2c0] sm:$0xff]
        %v5242 = vld [vmem:[#allocation12 + $0x2c8] sm:$0xff]
        %v5243 = vld [vmem:[#allocation12 + $0x2e0] sm:$0xff]
        %v5244 = vld [vmem:[#allocation12 + $0x2e8] sm:$0xff]
        %v5245 = vld [vmem:[#allocation12 + $0x300] sm:$0xff]
        %v5246 = vld [vmem:[#allocation12 + $0x308] sm:$0xff]
        %v5247 = vld [vmem:[#allocation12 + $0x320] sm:$0xff]
        %v5248 = vld [vmem:[#allocation12 + $0x328] sm:$0xff]
        %v5249 = vld [vmem:[#allocation12 + $0x340] sm:$0xff]
        %v5250 = vld [vmem:[#allocation12 + $0x348] sm:$0xff]
        %v5251 = vld [vmem:[#allocation12 + $0x360] sm:$0xff]
        %v5252 = vld [vmem:[#allocation12 + $0x368] sm:$0xff]
        %v5253 = vld [vmem:[#allocation12 + $0x380] sm:$0xff]
        %v5254 = vld [vmem:[#allocation12 + $0x388] sm:$0xff]
        %v5255 = vld [vmem:[#allocation12 + $0x3a0] sm:$0xff]
        %v5256 = vld [vmem:[#allocation12 + $0x3a8] sm:$0xff]
        %v5257 = vld [vmem:[#allocation12 + $0x3c0] sm:$0xff]
        %v5258 = vld [vmem:[#allocation12 + $0x3c8] sm:$0xff]
        %v5259 = vld [vmem:[#allocation12 + $0x3e0] sm:$0xff]
        %v5260 = vld [vmem:[#allocation12 + $0x3e8] sm:$0xff]
        %v5261 = vld [vmem:[%s8] sm:$0xf]
        %v5263 = vlaneseq
        %v5264 = vshrl.u32 %v5263, 7
        %v5265 = vsub.s32 0, %v5264
        %v5266 = vrot.slane %v5261, %v5265
        %v5267 = vlaneseq
        %v5268 = vshrl.u32 %v5267, 7
        %v5269 = vsub.s32 1, %v5268
        %v5270 = vrot.slane %v5261, %v5269
        %v5271 = vlaneseq
        %v5272 = vshrl.u32 %v5271, 7
        %v5273 = vsub.s32 2, %v5272
        %v5274 = vrot.slane %v5261, %v5273
        %v5275 = vlaneseq
        %v5276 = vshrl.u32 %v5275, 7
        %v5277 = vsub.s32 3, %v5276
        %v5278 = vrot.slane %v5261, %v5277
        %v5347 = vunpack.c.l.b16 %v5197
        %v5348 = vunpack.c.h.b16 %v5197
        %v5349 = vunpack.c.l.b16 %v5198
        %v5350 = vunpack.c.h.b16 %v5198
        %v5351 = vunpack.c.l.b16 %v5199
        %v5352 = vunpack.c.h.b16 %v5199
        %v5353 = vunpack.c.l.b16 %v5200
        %v5354 = vunpack.c.h.b16 %v5200
        %v5355 = vunpack.c.l.b16 %v5201
        %v5356 = vunpack.c.h.b16 %v5201
        %v5357 = vunpack.c.l.b16 %v5202
        %v5358 = vunpack.c.h.b16 %v5202
        %v5359 = vunpack.c.l.b16 %v5203
        %v5360 = vunpack.c.h.b16 %v5203
        %v5361 = vunpack.c.l.b16 %v5204
        %v5362 = vunpack.c.h.b16 %v5204
        %v5363 = vunpack.c.l.b16 %v5205
        %v5364 = vunpack.c.h.b16 %v5205
        %v5365 = vunpack.c.l.b16 %v5206
        %v5366 = vunpack.c.h.b16 %v5206
        %v5367 = vunpack.c.l.b16 %v5207
        %v5368 = vunpack.c.h.b16 %v5207
        %v5369 = vunpack.c.l.b16 %v5208
        %v5370 = vunpack.c.h.b16 %v5208
        %v5371 = vunpack.c.l.b16 %v5209
        %v5372 = vunpack.c.h.b16 %v5209
        %v5373 = vunpack.c.l.b16 %v5210
        %v5374 = vunpack.c.h.b16 %v5210
        %v5375 = vunpack.c.l.b16 %v5211
        %v5376 = vunpack.c.h.b16 %v5211
        %v5377 = vunpack.c.l.b16 %v5212
        %v5378 = vunpack.c.h.b16 %v5212
        %v5379 = vunpack.c.l.b16 %v5213
        %v5380 = vunpack.c.h.b16 %v5213
        %v5381 = vunpack.c.l.b16 %v5214
        %v5382 = vunpack.c.h.b16 %v5214
        %v5383 = vunpack.c.l.b16 %v5215
        %v5384 = vunpack.c.h.b16 %v5215
        %v5385 = vunpack.c.l.b16 %v5216
        %v5386 = vunpack.c.h.b16 %v5216
        %v5387 = vunpack.c.l.b16 %v5217
        %v5388 = vunpack.c.h.b16 %v5217
        %v5389 = vunpack.c.l.b16 %v5218
        %v5390 = vunpack.c.h.b16 %v5218
        %v5391 = vunpack.c.l.b16 %v5219
        %v5392 = vunpack.c.h.b16 %v5219
        %v5393 = vunpack.c.l.b16 %v5220
        %v5394 = vunpack.c.h.b16 %v5220
        %v5395 = vunpack.c.l.b16 %v5221
        %v5396 = vunpack.c.h.b16 %v5221
        %v5397 = vunpack.c.l.b16 %v5222
        %v5398 = vunpack.c.h.b16 %v5222
        %v5399 = vunpack.c.l.b16 %v5223
        %v5400 = vunpack.c.h.b16 %v5223
        %v5401 = vunpack.c.l.b16 %v5224
        %v5402 = vunpack.c.h.b16 %v5224
        %v5403 = vunpack.c.l.b16 %v5225
        %v5404 = vunpack.c.h.b16 %v5225
        %v5405 = vunpack.c.l.b16 %v5226
        %v5406 = vunpack.c.h.b16 %v5226
        %v5407 = vunpack.c.l.b16 %v5227
        %v5408 = vunpack.c.h.b16 %v5227
        %v5409 = vunpack.c.l.b16 %v5228
        %v5410 = vunpack.c.h.b16 %v5228
        %v5411 = vunpack.c.l.b16 %v5229
        %v5412 = vunpack.c.h.b16 %v5229
        %v5413 = vunpack.c.l.b16 %v5230
        %v5414 = vunpack.c.h.b16 %v5230
        %v5415 = vunpack.c.l.b16 %v5231
        %v5416 = vunpack.c.h.b16 %v5231
        %v5417 = vunpack.c.l.b16 %v5232
        %v5418 = vunpack.c.h.b16 %v5232
        %v5419 = vunpack.c.l.b16 %v5233
        %v5420 = vunpack.c.h.b16 %v5233
        %v5421 = vunpack.c.l.b16 %v5234
        %v5422 = vunpack.c.h.b16 %v5234
        %v5423 = vunpack.c.l.b16 %v5235
        %v5424 = vunpack.c.h.b16 %v5235
        %v5425 = vunpack.c.l.b16 %v5236
        %v5426 = vunpack.c.h.b16 %v5236
        %v5427 = vunpack.c.l.b16 %v5237
        %v5428 = vunpack.c.h.b16 %v5237
        %v5429 = vunpack.c.l.b16 %v5238
        %v5430 = vunpack.c.h.b16 %v5238
        %v5431 = vunpack.c.l.b16 %v5239
        %v5432 = vunpack.c.h.b16 %v5239
        %v5433 = vunpack.c.l.b16 %v5240
        %v5434 = vunpack.c.h.b16 %v5240
        %v5435 = vunpack.c.l.b16 %v5241
        %v5436 = vunpack.c.h.b16 %v5241
        %v5437 = vunpack.c.l.b16 %v5242
        %v5438 = vunpack.c.h.b16 %v5242
        %v5439 = vunpack.c.l.b16 %v5243
        %v5440 = vunpack.c.h.b16 %v5243
        %v5441 = vunpack.c.l.b16 %v5244
        %v5442 = vunpack.c.h.b16 %v5244
        %v5443 = vunpack.c.l.b16 %v5245
        %v5444 = vunpack.c.h.b16 %v5245
        %v5445 = vunpack.c.l.b16 %v5246
        %v5446 = vunpack.c.h.b16 %v5246
        %v5447 = vunpack.c.l.b16 %v5247
        %v5448 = vunpack.c.h.b16 %v5247
        %v5449 = vunpack.c.l.b16 %v5248
        %v5450 = vunpack.c.h.b16 %v5248
        %v5451 = vunpack.c.l.b16 %v5249
        %v5452 = vunpack.c.h.b16 %v5249
        %v5453 = vunpack.c.l.b16 %v5250
        %v5454 = vunpack.c.h.b16 %v5250
        %v5455 = vunpack.c.l.b16 %v5251
        %v5456 = vunpack.c.h.b16 %v5251
        %v5457 = vunpack.c.l.b16 %v5252
        %v5458 = vunpack.c.h.b16 %v5252
        %v5459 = vunpack.c.l.b16 %v5253
        %v5460 = vunpack.c.h.b16 %v5253
        %v5461 = vunpack.c.l.b16 %v5254
        %v5462 = vunpack.c.h.b16 %v5254
        %v5463 = vunpack.c.l.b16 %v5255
        %v5464 = vunpack.c.h.b16 %v5255
        %v5465 = vunpack.c.l.b16 %v5256
        %v5466 = vunpack.c.h.b16 %v5256
        %v5467 = vunpack.c.l.b16 %v5257
        %v5468 = vunpack.c.h.b16 %v5257
        %v5469 = vunpack.c.l.b16 %v5258
        %v5470 = vunpack.c.h.b16 %v5258
        %v5471 = vunpack.c.l.b16 %v5259
        %v5472 = vunpack.c.h.b16 %v5259
        %v5473 = vunpack.c.l.b16 %v5260
        %v5474 = vunpack.c.h.b16 %v5260
        %v5475 = vpack.c.b16 %v5351, %v5347
        %v5476 = vpack.c.b16 %v5352, %v5348
        %v5477 = vpack.c.b16 %v5353, %v5349
        %v5478 = vpack.c.b16 %v5354, %v5350
        %v5479 = vpack.c.b16 %v5359, %v5355
        %v5480 = vpack.c.b16 %v5360, %v5356
        %v5481 = vpack.c.b16 %v5361, %v5357
        %v5482 = vpack.c.b16 %v5362, %v5358
        %v5483 = vpack.c.b16 %v5367, %v5363
        %v5484 = vpack.c.b16 %v5368, %v5364
        %v5485 = vpack.c.b16 %v5369, %v5365
        %v5486 = vpack.c.b16 %v5370, %v5366
        %v5487 = vpack.c.b16 %v5375, %v5371
        %v5488 = vpack.c.b16 %v5376, %v5372
        %v5489 = vpack.c.b16 %v5377, %v5373
        %v5490 = vpack.c.b16 %v5378, %v5374
        %v5491 = vpack.c.b16 %v5383, %v5379
        %v5492 = vpack.c.b16 %v5384, %v5380
        %v5493 = vpack.c.b16 %v5385, %v5381
        %v5494 = vpack.c.b16 %v5386, %v5382
        %v5495 = vpack.c.b16 %v5391, %v5387
        %v5496 = vpack.c.b16 %v5392, %v5388
        %v5497 = vpack.c.b16 %v5393, %v5389
        %v5498 = vpack.c.b16 %v5394, %v5390
        %v5499 = vpack.c.b16 %v5399, %v5395
        %v5500 = vpack.c.b16 %v5400, %v5396
        %v5501 = vpack.c.b16 %v5401, %v5397
        %v5502 = vpack.c.b16 %v5402, %v5398
        %v5503 = vpack.c.b16 %v5407, %v5403
        %v5504 = vpack.c.b16 %v5408, %v5404
        %v5505 = vpack.c.b16 %v5409, %v5405
        %v5506 = vpack.c.b16 %v5410, %v5406
        %v5507 = vpack.c.b16 %v5415, %v5411
        %v5508 = vpack.c.b16 %v5416, %v5412
        %v5509 = vpack.c.b16 %v5417, %v5413
        %v5510 = vpack.c.b16 %v5418, %v5414
        %v5511 = vpack.c.b16 %v5423, %v5419
        %v5512 = vpack.c.b16 %v5424, %v5420
        %v5513 = vpack.c.b16 %v5425, %v5421
        %v5514 = vpack.c.b16 %v5426, %v5422
        %v5515 = vpack.c.b16 %v5431, %v5427
        %v5516 = vpack.c.b16 %v5432, %v5428
        %v5517 = vpack.c.b16 %v5433, %v5429
        %v5518 = vpack.c.b16 %v5434, %v5430
        %v5519 = vpack.c.b16 %v5439, %v5435
        %v5520 = vpack.c.b16 %v5440, %v5436
        %v5521 = vpack.c.b16 %v5441, %v5437
        %v5522 = vpack.c.b16 %v5442, %v5438
        %v5523 = vpack.c.b16 %v5447, %v5443
        %v5524 = vpack.c.b16 %v5448, %v5444
        %v5525 = vpack.c.b16 %v5449, %v5445
        %v5526 = vpack.c.b16 %v5450, %v5446
        %v5527 = vpack.c.b16 %v5455, %v5451
        %v5528 = vpack.c.b16 %v5456, %v5452
        %v5529 = vpack.c.b16 %v5457, %v5453
        %v5530 = vpack.c.b16 %v5458, %v5454
        %v5531 = vpack.c.b16 %v5463, %v5459
        %v5532 = vpack.c.b16 %v5464, %v5460
        %v5533 = vpack.c.b16 %v5465, %v5461
        %v5534 = vpack.c.b16 %v5466, %v5462
        %v5535 = vpack.c.b16 %v5471, %v5467
        %v5536 = vpack.c.b16 %v5472, %v5468
        %v5537 = vpack.c.b16 %v5473, %v5469
        %v5538 = vpack.c.b16 %v5474, %v5470
        %5603 = vmatprep.subr.bf16.mxu0 %v5504
        %5604 = vmatpush1.bf16.msra.mxu0 %v5503
        %5605 = vmatprep.subr.bf16.mxu0 %v5500
        %5606 = vmatpush1.bf16.msra.mxu0 %v5499
        %5607 = vmatprep.subr.bf16.mxu0 %v5496
        %5608 = vmatpush1.bf16.msra.mxu0 %v5495
        %5609 = vmatprep.subr.bf16.mxu0 %v5492
        %5610 = vmatpush1.bf16.msra.mxu0 %v5491
        %5611 = vmatprep.subr.bf16.mxu0 %v5488
        %5612 = vmatpush1.bf16.msra.mxu0 %v5487
        %5613 = vmatprep.subr.bf16.mxu0 %v5484
        %5614 = vmatpush1.bf16.msra.mxu0 %v5483
        %5615 = vmatprep.subr.bf16.mxu0 %v5480
        %5616 = vmatpush1.bf16.msra.mxu0 %v5479
        %5617 = vmatprep.subr.bf16.mxu0 %v5476
        %5618 = vmatpush1.bf16.msra.mxu0 %v5475
        %5619 = vmatprep.subr.bf16.mxu0 %v5536
        %5620 = vmatpush2.bf16.msra.mxu0 %v5535
        %5621 = vmatprep.subr.bf16.mxu0 %v5532
        %5622 = vmatpush2.bf16.msra.mxu0 %v5531
        %5623 = vmatprep.subr.bf16.mxu0 %v5528
        %5624 = vmatpush2.bf16.msra.mxu0 %v5527
        %5625 = vmatprep.subr.bf16.mxu0 %v5524
        %5626 = vmatpush2.bf16.msra.mxu0 %v5523
        %5627 = vmatprep.subr.bf16.mxu0 %v5520
        %5628 = vmatpush2.bf16.msra.mxu0 %v5519
        %5629 = vmatprep.subr.bf16.mxu0 %v5516
        %5630 = vmatpush2.bf16.msra.mxu0 %v5515
        %5631 = vmatprep.subr.bf16.mxu0 %v5512
        %5632 = vmatpush2.bf16.msra.mxu0 %v5511
        %5633 = vmatprep.subr.bf16.mxu0 %v5508
        %5634 = vmatpush2.bf16.msra.mxu0 %v5507
        %5635 = vmatprep.mubr.bf16.mxu0 %v5182
        %5636 = vmatmul.mubr.bf16.gmra.mxu0 %v5181
        %v5637 = vpop.f32.mrf.mxu0
        %v5638 = vadd.f32 %v5266, %v5637
        %v5639 = vpop.f32.mrf.mxu0
        %v5640 = vadd.f32 %v5270, %v5639
        %v5641 = vpop.f32.mrf.mxu0
        %v5642 = vadd.f32 %v5266, %v5641
        %v5643 = vpop.f32.mrf.mxu0
        %v5644 = vadd.f32 %v5270, %v5643
        %5645 = vmatprep.mubr.bf16.mxu0 %v5184
        %5646 = vmatmul.mubr.bf16.gmra.mxu0 %v5183
        %v5647 = vpop.f32.mrf.mxu0
        %v5648 = vadd.f32 %v5266, %v5647
        %v5649 = vpop.f32.mrf.mxu0
        %v5650 = vadd.f32 %v5270, %v5649
        %v5651 = vpop.f32.mrf.mxu0
        %v5652 = vadd.f32 %v5266, %v5651
        %v5653 = vpop.f32.mrf.mxu0
        %v5654 = vadd.f32 %v5270, %v5653
        %5655 = vmatprep.mubr.bf16.mxu0 %v5186
        %5656 = vmatmul.mubr.bf16.gmra.mxu0 %v5185
        %v5657 = vpop.f32.mrf.mxu0
        %v5658 = vadd.f32 %v5266, %v5657
        %v5659 = vpop.f32.mrf.mxu0
        %v5660 = vadd.f32 %v5270, %v5659
        %v5661 = vpop.f32.mrf.mxu0
        %v5662 = vadd.f32 %v5266, %v5661
        %v5663 = vpop.f32.mrf.mxu0
        %v5664 = vadd.f32 %v5270, %v5663
        %5665 = vmatprep.mubr.bf16.mxu0 %v5188
        %5666 = vmatmul.mubr.bf16.gmra.mxu0 %v5187
        %v5667 = vpop.f32.mrf.mxu0
        %v5668 = vadd.f32 %v5266, %v5667
        %v5669 = vpop.f32.mrf.mxu0
        %v5670 = vadd.f32 %v5270, %v5669
        %v5671 = vpop.f32.mrf.mxu0
        %v5672 = vadd.f32 %v5266, %v5671
        %v5673 = vpop.f32.mrf.mxu0
        %v5674 = vadd.f32 %v5270, %v5673
        %5675 = vmatprep.mubr.bf16.mxu0 %v5190
        %5676 = vmatmul.mubr.bf16.gmra.mxu0 %v5189
        %v5677 = vpop.f32.mrf.mxu0
        %v5678 = vadd.f32 %v5266, %v5677
        %v5679 = vpop.f32.mrf.mxu0
        %v5680 = vadd.f32 %v5270, %v5679
        %v5681 = vpop.f32.mrf.mxu0
        %v5682 = vadd.f32 %v5266, %v5681
        %v5683 = vpop.f32.mrf.mxu0
        %v5684 = vadd.f32 %v5270, %v5683
        %5685 = vmatprep.mubr.bf16.mxu0 %v5192
        %5686 = vmatmul.mubr.bf16.gmra.mxu0 %v5191
        %v5687 = vpop.f32.mrf.mxu0
        %v5688 = vadd.f32 %v5266, %v5687
        %v5689 = vpop.f32.mrf.mxu0
        %v5690 = vadd.f32 %v5270, %v5689
        %v5691 = vpop.f32.mrf.mxu0
        %v5692 = vadd.f32 %v5266, %v5691
        %v5693 = vpop.f32.mrf.mxu0
        %v5694 = vadd.f32 %v5270, %v5693
        %5695 = vmatprep.mubr.bf16.mxu0 %v5194
        %5696 = vmatmul.mubr.bf16.gmra.mxu0 %v5193
        %v5697 = vpop.f32.mrf.mxu0
        %v5698 = vadd.f32 %v5266, %v5697
        %v5699 = vpop.f32.mrf.mxu0
        %v5700 = vadd.f32 %v5270, %v5699
        %v5701 = vpop.f32.mrf.mxu0
        %v5702 = vadd.f32 %v5266, %v5701
        %v5703 = vpop.f32.mrf.mxu0
        %v5704 = vadd.f32 %v5270, %v5703
        %5705 = vmatprep.mubr.bf16.mxu0 %v5196
        %5706 = vmatmul.mubr.bf16.gmra.mxu0 %v5195
        %v5707 = vpop.f32.mrf.mxu0
        %v5708 = vadd.f32 %v5266, %v5707
        %v5709 = vpop.f32.mrf.mxu0
        %v5710 = vadd.f32 %v5270, %v5709
        %v5711 = vpop.f32.mrf.mxu0
        %v5712 = vadd.f32 %v5266, %v5711
        %v5713 = vpop.f32.mrf.mxu0
        %v5714 = vadd.f32 %v5270, %v5713
        %5715 = vdwg.mxu0
        %5716 = vmatprep.subr.bf16.mxu0 %v5506
        %5717 = vmatpush1.bf16.msra.mxu0 %v5505
        %5718 = vmatprep.subr.bf16.mxu0 %v5502
        %5719 = vmatpush1.bf16.msra.mxu0 %v5501
        %5720 = vmatprep.subr.bf16.mxu0 %v5498
        %5721 = vmatpush1.bf16.msra.mxu0 %v5497
        %5722 = vmatprep.subr.bf16.mxu0 %v5494
        %5723 = vmatpush1.bf16.msra.mxu0 %v5493
        %5724 = vmatprep.subr.bf16.mxu0 %v5490
        %5725 = vmatpush1.bf16.msra.mxu0 %v5489
        %5726 = vmatprep.subr.bf16.mxu0 %v5486
        %5727 = vmatpush1.bf16.msra.mxu0 %v5485
        %5728 = vmatprep.subr.bf16.mxu0 %v5482
        %5729 = vmatpush1.bf16.msra.mxu0 %v5481
        %5730 = vmatprep.subr.bf16.mxu0 %v5478
        %5731 = vmatpush1.bf16.msra.mxu0 %v5477
        %5732 = vmatprep.subr.bf16.mxu0 %v5538
        %5733 = vmatpush2.bf16.msra.mxu0 %v5537
        %5734 = vmatprep.subr.bf16.mxu0 %v5534
        %5735 = vmatpush2.bf16.msra.mxu0 %v5533
        %5736 = vmatprep.subr.bf16.mxu0 %v5530
        %5737 = vmatpush2.bf16.msra.mxu0 %v5529
        %5738 = vmatprep.subr.bf16.mxu0 %v5526
        %5739 = vmatpush2.bf16.msra.mxu0 %v5525
        %5740 = vmatprep.subr.bf16.mxu0 %v5522
        %5741 = vmatpush2.bf16.msra.mxu0 %v5521
        %5742 = vmatprep.subr.bf16.mxu0 %v5518
        %5743 = vmatpush2.bf16.msra.mxu0 %v5517
        %5744 = vmatprep.subr.bf16.mxu0 %v5514
        %5745 = vmatpush2.bf16.msra.mxu0 %v5513
        %5746 = vmatprep.subr.bf16.mxu0 %v5510
        %5747 = vmatpush2.bf16.msra.mxu0 %v5509
        %5748 = vmatprep.mubr.bf16.mxu0 %v5182
        %5749 = vmatmul.mubr.bf16.gmra.mxu0 %v5181
        %v5750 = vpop.f32.mrf.mxu0
        %v5751 = vadd.f32 %v5274, %v5750
        %v5752 = vpop.f32.mrf.mxu0
        %v5753 = vadd.f32 %v5278, %v5752
        %v5754 = vpop.f32.mrf.mxu0
        %v5755 = vadd.f32 %v5274, %v5754
        %v5756 = vpop.f32.mrf.mxu0
        %v5757 = vadd.f32 %v5278, %v5756
        %5758 = vmatprep.mubr.bf16.mxu0 %v5184
        %5759 = vmatmul.mubr.bf16.gmra.mxu0 %v5183
        %v5760 = vpop.f32.mrf.mxu0
        %v5761 = vadd.f32 %v5274, %v5760
        %v5762 = vpop.f32.mrf.mxu0
        %v5763 = vadd.f32 %v5278, %v5762
        %v5764 = vpop.f32.mrf.mxu0
        %v5765 = vadd.f32 %v5274, %v5764
        %v5766 = vpop.f32.mrf.mxu0
        %v5767 = vadd.f32 %v5278, %v5766
        %5768 = vmatprep.mubr.bf16.mxu0 %v5186
        %5769 = vmatmul.mubr.bf16.gmra.mxu0 %v5185
        %v5770 = vpop.f32.mrf.mxu0
        %v5771 = vadd.f32 %v5274, %v5770
        %v5772 = vpop.f32.mrf.mxu0
        %v5773 = vadd.f32 %v5278, %v5772
        %v5774 = vpop.f32.mrf.mxu0
        %v5775 = vadd.f32 %v5274, %v5774
        %v5776 = vpop.f32.mrf.mxu0
        %v5777 = vadd.f32 %v5278, %v5776
        %5778 = vmatprep.mubr.bf16.mxu0 %v5188
        %5779 = vmatmul.mubr.bf16.gmra.mxu0 %v5187
        %v5780 = vpop.f32.mrf.mxu0
        %v5781 = vadd.f32 %v5274, %v5780
        %v5782 = vpop.f32.mrf.mxu0
        %v5783 = vadd.f32 %v5278, %v5782
        %v5784 = vpop.f32.mrf.mxu0
        %v5785 = vadd.f32 %v5274, %v5784
        %v5786 = vpop.f32.mrf.mxu0
        %v5787 = vadd.f32 %v5278, %v5786
        %5788 = vmatprep.mubr.bf16.mxu0 %v5190
        %5789 = vmatmul.mubr.bf16.gmra.mxu0 %v5189
        %v5790 = vpop.f32.mrf.mxu0
        %v5791 = vadd.f32 %v5274, %v5790
        %v5792 = vpop.f32.mrf.mxu0
        %v5793 = vadd.f32 %v5278, %v5792
        %v5794 = vpop.f32.mrf.mxu0
        %v5795 = vadd.f32 %v5274, %v5794
        %v5796 = vpop.f32.mrf.mxu0
        %v5797 = vadd.f32 %v5278, %v5796
        %5798 = vmatprep.mubr.bf16.mxu0 %v5192
        %5799 = vmatmul.mubr.bf16.gmra.mxu0 %v5191
        %v5800 = vpop.f32.mrf.mxu0
        %v5801 = vadd.f32 %v5274, %v5800
        %v5802 = vpop.f32.mrf.mxu0
        %v5803 = vadd.f32 %v5278, %v5802
        %v5804 = vpop.f32.mrf.mxu0
        %v5805 = vadd.f32 %v5274, %v5804
        %v5806 = vpop.f32.mrf.mxu0
        %v5807 = vadd.f32 %v5278, %v5806
        %5808 = vmatprep.mubr.bf16.mxu0 %v5194
        %5809 = vmatmul.mubr.bf16.gmra.mxu0 %v5193
        %v5810 = vpop.f32.mrf.mxu0
        %v5811 = vadd.f32 %v5274, %v5810
        %v5812 = vpop.f32.mrf.mxu0
        %v5813 = vadd.f32 %v5278, %v5812
        %v5814 = vpop.f32.mrf.mxu0
        %v5815 = vadd.f32 %v5274, %v5814
        %v5816 = vpop.f32.mrf.mxu0
        %v5817 = vadd.f32 %v5278, %v5816
        %5818 = vmatprep.mubr.bf16.mxu0 %v5196
        %5819 = vmatmul.mubr.bf16.gmra.mxu0 %v5195
        %v5820 = vpop.f32.mrf.mxu0
        %v5821 = vadd.f32 %v5274, %v5820
        %v5822 = vpop.f32.mrf.mxu0
        %v5823 = vadd.f32 %v5278, %v5822
        %v5824 = vpop.f32.mrf.mxu0
        %v5825 = vadd.f32 %v5274, %v5824
        %v5826 = vpop.f32.mrf.mxu0
        %v5827 = vadd.f32 %v5278, %v5826
        %5828 = vdwg.mxu0
        %v5829 = vmax.f32 %v5638, 0.0
        %v5830 = vmax.f32 %v5640, 0.0
        %v5831 = vmax.f32 %v5751, 0.0
        %v5832 = vmax.f32 %v5753, 0.0
        %v5833 = vmax.f32 %v5642, 0.0
        %v5834 = vmax.f32 %v5644, 0.0
        %v5835 = vmax.f32 %v5755, 0.0
        %v5836 = vmax.f32 %v5757, 0.0
        %v5837 = vmax.f32 %v5648, 0.0
        %v5838 = vmax.f32 %v5650, 0.0
        %v5839 = vmax.f32 %v5761, 0.0
        %v5840 = vmax.f32 %v5763, 0.0
        %v5841 = vmax.f32 %v5652, 0.0
        %v5842 = vmax.f32 %v5654, 0.0
        %v5843 = vmax.f32 %v5765, 0.0
        %v5844 = vmax.f32 %v5767, 0.0
        %v5845 = vmax.f32 %v5658, 0.0
        %v5846 = vmax.f32 %v5660, 0.0
        %v5847 = vmax.f32 %v5771, 0.0
        %v5848 = vmax.f32 %v5773, 0.0
        %v5849 = vmax.f32 %v5662, 0.0
        %v5850 = vmax.f32 %v5664, 0.0
        %v5851 = vmax.f32 %v5775, 0.0
        %v5852 = vmax.f32 %v5777, 0.0
        %v5853 = vmax.f32 %v5668, 0.0
        %v5854 = vmax.f32 %v5670, 0.0
        %v5855 = vmax.f32 %v5781, 0.0
        %v5856 = vmax.f32 %v5783, 0.0
        %v5857 = vmax.f32 %v5672, 0.0
        %v5858 = vmax.f32 %v5674, 0.0
        %v5859 = vmax.f32 %v5785, 0.0
        %v5860 = vmax.f32 %v5787, 0.0
        %v5861 = vmax.f32 %v5678, 0.0
        %v5862 = vmax.f32 %v5680, 0.0
        %v5863 = vmax.f32 %v5791, 0.0
        %v5864 = vmax.f32 %v5793, 0.0
        %v5865 = vmax.f32 %v5682, 0.0
        %v5866 = vmax.f32 %v5684, 0.0
        %v5867 = vmax.f32 %v5795, 0.0
        %v5868 = vmax.f32 %v5797, 0.0
        %v5869 = vmax.f32 %v5688, 0.0
        %v5870 = vmax.f32 %v5690, 0.0
        %v5871 = vmax.f32 %v5801, 0.0
        %v5872 = vmax.f32 %v5803, 0.0
        %v5873 = vmax.f32 %v5692, 0.0
        %v5874 = vmax.f32 %v5694, 0.0
        %v5875 = vmax.f32 %v5805, 0.0
        %v5876 = vmax.f32 %v5807, 0.0
        %v5877 = vmax.f32 %v5698, 0.0
        %v5878 = vmax.f32 %v5700, 0.0
        %v5879 = vmax.f32 %v5811, 0.0
        %v5880 = vmax.f32 %v5813, 0.0
        %v5881 = vmax.f32 %v5702, 0.0
        %v5882 = vmax.f32 %v5704, 0.0
        %v5883 = vmax.f32 %v5815, 0.0
        %v5884 = vmax.f32 %v5817, 0.0
        %v5885 = vmax.f32 %v5708, 0.0
        %v5886 = vmax.f32 %v5710, 0.0
        %v5887 = vmax.f32 %v5821, 0.0
        %v5888 = vmax.f32 %v5823, 0.0
        %v5889 = vmax.f32 %v5712, 0.0
        %v5890 = vmax.f32 %v5714, 0.0
        %v5891 = vmax.f32 %v5825, 0.0
        %v5892 = vmax.f32 %v5827, 0.0
        %v5893 = vpack.c.bf16 %v5833, %v5829
        %v5894 = vpack.c.bf16 %v5834, %v5830
        %v5895 = vpack.c.bf16 %v5835, %v5831
        %v5896 = vpack.c.bf16 %v5836, %v5832
        %v5897 = vpack.c.bf16 %v5841, %v5837
        %v5898 = vpack.c.bf16 %v5842, %v5838
        %v5899 = vpack.c.bf16 %v5843, %v5839
        %v5900 = vpack.c.bf16 %v5844, %v5840
        %v5901 = vpack.c.bf16 %v5849, %v5845
        %v5902 = vpack.c.bf16 %v5850, %v5846
        %v5903 = vpack.c.bf16 %v5851, %v5847
        %v5904 = vpack.c.bf16 %v5852, %v5848
        %v5905 = vpack.c.bf16 %v5857, %v5853
        %v5906 = vpack.c.bf16 %v5858, %v5854
        %v5907 = vpack.c.bf16 %v5859, %v5855
        %v5908 = vpack.c.bf16 %v5860, %v5856
        %v5909 = vpack.c.bf16 %v5865, %v5861
        %v5910 = vpack.c.bf16 %v5866, %v5862
        %v5911 = vpack.c.bf16 %v5867, %v5863
        %v5912 = vpack.c.bf16 %v5868, %v5864
        %v5913 = vpack.c.bf16 %v5873, %v5869
        %v5914 = vpack.c.bf16 %v5874, %v5870
        %v5915 = vpack.c.bf16 %v5875, %v5871
        %v5916 = vpack.c.bf16 %v5876, %v5872
        %v5917 = vpack.c.bf16 %v5881, %v5877
        %v5918 = vpack.c.bf16 %v5882, %v5878
        %v5919 = vpack.c.bf16 %v5883, %v5879
        %v5920 = vpack.c.bf16 %v5884, %v5880
        %v5921 = vpack.c.bf16 %v5889, %v5885
        %v5922 = vpack.c.bf16 %v5890, %v5886
        %v5923 = vpack.c.bf16 %v5891, %v5887
        %v5924 = vpack.c.bf16 %v5892, %v5888
        %v5925 = vld [vmem:[#allocation13] sm:$0xff]
        %v5926 = vld [vmem:[#allocation13 + $0x8] sm:$0xff]
        %v5927 = vld [vmem:[#allocation13 + $0x10] sm:$0xff]
        %v5928 = vld [vmem:[#allocation13 + $0x18] sm:$0xff]
        %v5929 = vld [vmem:[#allocation13 + $0x20] sm:$0xff]
        %v5930 = vld [vmem:[#allocation13 + $0x28] sm:$0xff]
        %v5931 = vld [vmem:[#allocation13 + $0x30] sm:$0xff]
        %v5932 = vld [vmem:[#allocation13 + $0x38] sm:$0xff]
        %v5933 = vld [vmem:[#allocation13 + $0x40] sm:$0xff]
        %v5934 = vld [vmem:[#allocation13 + $0x48] sm:$0xff]
        %v5935 = vld [vmem:[#allocation13 + $0x50] sm:$0xff]
        %v5936 = vld [vmem:[#allocation13 + $0x58] sm:$0xff]
        %v5937 = vld [vmem:[#allocation13 + $0x60] sm:$0xff]
        %v5938 = vld [vmem:[#allocation13 + $0x68] sm:$0xff]
        %v5939 = vld [vmem:[#allocation13 + $0x70] sm:$0xff]
        %v5940 = vld [vmem:[#allocation13 + $0x78] sm:$0xff]
        %v5941 = vld [vmem:[#allocation13 + $0x80] sm:$0xff]
        %v5942 = vld [vmem:[#allocation13 + $0x88] sm:$0xff]
        %v5943 = vld [vmem:[#allocation13 + $0x90] sm:$0xff]
        %v5944 = vld [vmem:[#allocation13 + $0x98] sm:$0xff]
        %v5945 = vld [vmem:[#allocation13 + $0xa0] sm:$0xff]
        %v5946 = vld [vmem:[#allocation13 + $0xa8] sm:$0xff]
        %v5947 = vld [vmem:[#allocation13 + $0xb0] sm:$0xff]
        %v5948 = vld [vmem:[#allocation13 + $0xb8] sm:$0xff]
        %v5949 = vld [vmem:[#allocation13 + $0xc0] sm:$0xff]
        %v5950 = vld [vmem:[#allocation13 + $0xc8] sm:$0xff]
        %v5951 = vld [vmem:[#allocation13 + $0xd0] sm:$0xff]
        %v5952 = vld [vmem:[#allocation13 + $0xd8] sm:$0xff]
        %v5953 = vld [vmem:[#allocation13 + $0xe0] sm:$0xff]
        %v5954 = vld [vmem:[#allocation13 + $0xe8] sm:$0xff]
        %v5955 = vld [vmem:[#allocation13 + $0xf0] sm:$0xff]
        %v5956 = vld [vmem:[#allocation13 + $0xf8] sm:$0xff]
        %v5957 = vld [vmem:[#allocation13 + $0x100] sm:$0xff]
        %v5958 = vld [vmem:[#allocation13 + $0x108] sm:$0xff]
        %v5959 = vld [vmem:[#allocation13 + $0x110] sm:$0xff]
        %v5960 = vld [vmem:[#allocation13 + $0x118] sm:$0xff]
        %v5961 = vld [vmem:[#allocation13 + $0x120] sm:$0xff]
        %v5962 = vld [vmem:[#allocation13 + $0x128] sm:$0xff]
        %v5963 = vld [vmem:[#allocation13 + $0x130] sm:$0xff]
        %v5964 = vld [vmem:[#allocation13 + $0x138] sm:$0xff]
        %v5965 = vld [vmem:[#allocation13 + $0x140] sm:$0xff]
        %v5966 = vld [vmem:[#allocation13 + $0x148] sm:$0xff]
        %v5967 = vld [vmem:[#allocation13 + $0x150] sm:$0xff]
        %v5968 = vld [vmem:[#allocation13 + $0x158] sm:$0xff]
        %v5969 = vld [vmem:[#allocation13 + $0x160] sm:$0xff]
        %v5970 = vld [vmem:[#allocation13 + $0x168] sm:$0xff]
        %v5971 = vld [vmem:[#allocation13 + $0x170] sm:$0xff]
        %v5972 = vld [vmem:[#allocation13 + $0x178] sm:$0xff]
        %v5973 = vld [vmem:[#allocation13 + $0x180] sm:$0xff]
        %v5974 = vld [vmem:[#allocation13 + $0x188] sm:$0xff]
        %v5975 = vld [vmem:[#allocation13 + $0x190] sm:$0xff]
        %v5976 = vld [vmem:[#allocation13 + $0x198] sm:$0xff]
        %v5977 = vld [vmem:[#allocation13 + $0x1a0] sm:$0xff]
        %v5978 = vld [vmem:[#allocation13 + $0x1a8] sm:$0xff]
        %v5979 = vld [vmem:[#allocation13 + $0x1b0] sm:$0xff]
        %v5980 = vld [vmem:[#allocation13 + $0x1b8] sm:$0xff]
        %v5981 = vld [vmem:[#allocation13 + $0x1c0] sm:$0xff]
        %v5982 = vld [vmem:[#allocation13 + $0x1c8] sm:$0xff]
        %v5983 = vld [vmem:[#allocation13 + $0x1d0] sm:$0xff]
        %v5984 = vld [vmem:[#allocation13 + $0x1d8] sm:$0xff]
        %v5985 = vld [vmem:[#allocation13 + $0x1e0] sm:$0xff]
        %v5986 = vld [vmem:[#allocation13 + $0x1e8] sm:$0xff]
        %v5987 = vld [vmem:[#allocation13 + $0x1f0] sm:$0xff]
        %v5988 = vld [vmem:[#allocation13 + $0x1f8] sm:$0xff]
        %v5989 = vld [vmem:[#allocation12 + $0x10] sm:$0xff]
        %v5990 = vld [vmem:[#allocation12 + $0x18] sm:$0xff]
        %v5991 = vld [vmem:[#allocation12 + $0x30] sm:$0xff]
        %v5992 = vld [vmem:[#allocation12 + $0x38] sm:$0xff]
        %v5993 = vld [vmem:[#allocation12 + $0x50] sm:$0xff]
        %v5994 = vld [vmem:[#allocation12 + $0x58] sm:$0xff]
        %v5995 = vld [vmem:[#allocation12 + $0x70] sm:$0xff]
        %v5996 = vld [vmem:[#allocation12 + $0x78] sm:$0xff]
        %v5997 = vld [vmem:[#allocation12 + $0x90] sm:$0xff]
        %v5998 = vld [vmem:[#allocation12 + $0x98] sm:$0xff]
        %v5999 = vld [vmem:[#allocation12 + $0xb0] sm:$0xff]
        %v6000 = vld [vmem:[#allocation12 + $0xb8] sm:$0xff]
        %v6001 = vld [vmem:[#allocation12 + $0xd0] sm:$0xff]
        %v6002 = vld [vmem:[#allocation12 + $0xd8] sm:$0xff]
        %v6003 = vld [vmem:[#allocation12 + $0xf0] sm:$0xff]
        %v6004 = vld [vmem:[#allocation12 + $0xf8] sm:$0xff]
        %v6005 = vld [vmem:[#allocation12 + $0x110] sm:$0xff]
        %v6006 = vld [vmem:[#allocation12 + $0x118] sm:$0xff]
        %v6007 = vld [vmem:[#allocation12 + $0x130] sm:$0xff]
        %v6008 = vld [vmem:[#allocation12 + $0x138] sm:$0xff]
        %v6009 = vld [vmem:[#allocation12 + $0x150] sm:$0xff]
        %v6010 = vld [vmem:[#allocation12 + $0x158] sm:$0xff]
        %v6011 = vld [vmem:[#allocation12 + $0x170] sm:$0xff]
        %v6012 = vld [vmem:[#allocation12 + $0x178] sm:$0xff]
        %v6013 = vld [vmem:[#allocation12 + $0x190] sm:$0xff]
        %v6014 = vld [vmem:[#allocation12 + $0x198] sm:$0xff]
        %v6015 = vld [vmem:[#allocation12 + $0x1b0] sm:$0xff]
        %v6016 = vld [vmem:[#allocation12 + $0x1b8] sm:$0xff]
        %v6017 = vld [vmem:[#allocation12 + $0x1d0] sm:$0xff]
        %v6018 = vld [vmem:[#allocation12 + $0x1d8] sm:$0xff]
        %v6019 = vld [vmem:[#allocation12 + $0x1f0] sm:$0xff]
        %v6020 = vld [vmem:[#allocation12 + $0x1f8] sm:$0xff]
        %v6021 = vld [vmem:[#allocation12 + $0x210] sm:$0xff]
        %v6022 = vld [vmem:[#allocation12 + $0x218] sm:$0xff]
        %v6023 = vld [vmem:[#allocation12 + $0x230] sm:$0xff]
        %v6024 = vld [vmem:[#allocation12 + $0x238] sm:$0xff]
        %v6025 = vld [vmem:[#allocation12 + $0x250] sm:$0xff]
        %v6026 = vld [vmem:[#allocation12 + $0x258] sm:$0xff]
        %v6027 = vld [vmem:[#allocation12 + $0x270] sm:$0xff]
        %v6028 = vld [vmem:[#allocation12 + $0x278] sm:$0xff]
        %v6029 = vld [vmem:[#allocation12 + $0x290] sm:$0xff]
        %v6030 = vld [vmem:[#allocation12 + $0x298] sm:$0xff]
        %v6031 = vld [vmem:[#allocation12 + $0x2b0] sm:$0xff]
        %v6032 = vld [vmem:[#allocation12 + $0x2b8] sm:$0xff]
        %v6033 = vld [vmem:[#allocation12 + $0x2d0] sm:$0xff]
        %v6034 = vld [vmem:[#allocation12 + $0x2d8] sm:$0xff]
        %v6035 = vld [vmem:[#allocation12 + $0x2f0] sm:$0xff]
        %v6036 = vld [vmem:[#allocation12 + $0x2f8] sm:$0xff]
        %v6037 = vld [vmem:[#allocation12 + $0x310] sm:$0xff]
        %v6038 = vld [vmem:[#allocation12 + $0x318] sm:$0xff]
        %v6039 = vld [vmem:[#allocation12 + $0x330] sm:$0xff]
        %v6040 = vld [vmem:[#allocation12 + $0x338] sm:$0xff]
        %v6041 = vld [vmem:[#allocation12 + $0x350] sm:$0xff]
        %v6042 = vld [vmem:[#allocation12 + $0x358] sm:$0xff]
        %v6043 = vld [vmem:[#allocation12 + $0x370] sm:$0xff]
        %v6044 = vld [vmem:[#allocation12 + $0x378] sm:$0xff]
        %v6045 = vld [vmem:[#allocation12 + $0x390] sm:$0xff]
        %v6046 = vld [vmem:[#allocation12 + $0x398] sm:$0xff]
        %v6047 = vld [vmem:[#allocation12 + $0x3b0] sm:$0xff]
        %v6048 = vld [vmem:[#allocation12 + $0x3b8] sm:$0xff]
        %v6049 = vld [vmem:[#allocation12 + $0x3d0] sm:$0xff]
        %v6050 = vld [vmem:[#allocation12 + $0x3d8] sm:$0xff]
        %v6051 = vld [vmem:[#allocation12 + $0x3f0] sm:$0xff]
        %v6052 = vld [vmem:[#allocation12 + $0x3f8] sm:$0xff]
        %v6053 = vld [vmem:[%s8 + $0x4] sm:$0xf]
        %v6055 = vlaneseq
        %v6056 = vshrl.u32 %v6055, 7
        %v6057 = vsub.s32 0, %v6056
        %v6058 = vrot.slane %v6053, %v6057
        %v6059 = vlaneseq
        %v6060 = vshrl.u32 %v6059, 7
        %v6061 = vsub.s32 1, %v6060
        %v6062 = vrot.slane %v6053, %v6061
        %v6063 = vlaneseq
        %v6064 = vshrl.u32 %v6063, 7
        %v6065 = vsub.s32 2, %v6064
        %v6066 = vrot.slane %v6053, %v6065
        %v6067 = vlaneseq
        %v6068 = vshrl.u32 %v6067, 7
        %v6069 = vsub.s32 3, %v6068
        %v6070 = vrot.slane %v6053, %v6069
        %v6139 = vunpack.c.l.b16 %v5989
        %v6140 = vunpack.c.h.b16 %v5989
        %v6141 = vunpack.c.l.b16 %v5990
        %v6142 = vunpack.c.h.b16 %v5990
        %v6143 = vunpack.c.l.b16 %v5991
        %v6144 = vunpack.c.h.b16 %v5991
        %v6145 = vunpack.c.l.b16 %v5992
        %v6146 = vunpack.c.h.b16 %v5992
        %v6147 = vunpack.c.l.b16 %v5993
        %v6148 = vunpack.c.h.b16 %v5993
        %v6149 = vunpack.c.l.b16 %v5994
        %v6150 = vunpack.c.h.b16 %v5994
        %v6151 = vunpack.c.l.b16 %v5995
        %v6152 = vunpack.c.h.b16 %v5995
        %v6153 = vunpack.c.l.b16 %v5996
        %v6154 = vunpack.c.h.b16 %v5996
        %v6155 = vunpack.c.l.b16 %v5997
        %v6156 = vunpack.c.h.b16 %v5997
        %v6157 = vunpack.c.l.b16 %v5998
        %v6158 = vunpack.c.h.b16 %v5998
        %v6159 = vunpack.c.l.b16 %v5999
        %v6160 = vunpack.c.h.b16 %v5999
        %v6161 = vunpack.c.l.b16 %v6000
        %v6162 = vunpack.c.h.b16 %v6000
        %v6163 = vunpack.c.l.b16 %v6001
        %v6164 = vunpack.c.h.b16 %v6001
        %v6165 = vunpack.c.l.b16 %v6002
        %v6166 = vunpack.c.h.b16 %v6002
        %v6167 = vunpack.c.l.b16 %v6003
        %v6168 = vunpack.c.h.b16 %v6003
        %v6169 = vunpack.c.l.b16 %v6004
        %v6170 = vunpack.c.h.b16 %v6004
        %v6171 = vunpack.c.l.b16 %v6005
        %v6172 = vunpack.c.h.b16 %v6005
        %v6173 = vunpack.c.l.b16 %v6006
        %v6174 = vunpack.c.h.b16 %v6006
        %v6175 = vunpack.c.l.b16 %v6007
        %v6176 = vunpack.c.h.b16 %v6007
        %v6177 = vunpack.c.l.b16 %v6008
        %v6178 = vunpack.c.h.b16 %v6008
        %v6179 = vunpack.c.l.b16 %v6009
        %v6180 = vunpack.c.h.b16 %v6009
        %v6181 = vunpack.c.l.b16 %v6010
        %v6182 = vunpack.c.h.b16 %v6010
        %v6183 = vunpack.c.l.b16 %v6011
        %v6184 = vunpack.c.h.b16 %v6011
        %v6185 = vunpack.c.l.b16 %v6012
        %v6186 = vunpack.c.h.b16 %v6012
        %v6187 = vunpack.c.l.b16 %v6013
        %v6188 = vunpack.c.h.b16 %v6013
        %v6189 = vunpack.c.l.b16 %v6014
        %v6190 = vunpack.c.h.b16 %v6014
        %v6191 = vunpack.c.l.b16 %v6015
        %v6192 = vunpack.c.h.b16 %v6015
        %v6193 = vunpack.c.l.b16 %v6016
        %v6194 = vunpack.c.h.b16 %v6016
        %v6195 = vunpack.c.l.b16 %v6017
        %v6196 = vunpack.c.h.b16 %v6017
        %v6197 = vunpack.c.l.b16 %v6018
        %v6198 = vunpack.c.h.b16 %v6018
        %v6199 = vunpack.c.l.b16 %v6019
        %v6200 = vunpack.c.h.b16 %v6019
        %v6201 = vunpack.c.l.b16 %v6020
        %v6202 = vunpack.c.h.b16 %v6020
        %v6203 = vunpack.c.l.b16 %v6021
        %v6204 = vunpack.c.h.b16 %v6021
        %v6205 = vunpack.c.l.b16 %v6022
        %v6206 = vunpack.c.h.b16 %v6022
        %v6207 = vunpack.c.l.b16 %v6023
        %v6208 = vunpack.c.h.b16 %v6023
        %v6209 = vunpack.c.l.b16 %v6024
        %v6210 = vunpack.c.h.b16 %v6024
        %v6211 = vunpack.c.l.b16 %v6025
        %v6212 = vunpack.c.h.b16 %v6025
        %v6213 = vunpack.c.l.b16 %v6026
        %v6214 = vunpack.c.h.b16 %v6026
        %v6215 = vunpack.c.l.b16 %v6027
        %v6216 = vunpack.c.h.b16 %v6027
        %v6217 = vunpack.c.l.b16 %v6028
        %v6218 = vunpack.c.h.b16 %v6028
        %v6219 = vunpack.c.l.b16 %v6029
        %v6220 = vunpack.c.h.b16 %v6029
        %v6221 = vunpack.c.l.b16 %v6030
        %v6222 = vunpack.c.h.b16 %v6030
        %v6223 = vunpack.c.l.b16 %v6031
        %v6224 = vunpack.c.h.b16 %v6031
        %v6225 = vunpack.c.l.b16 %v6032
        %v6226 = vunpack.c.h.b16 %v6032
        %v6227 = vunpack.c.l.b16 %v6033
        %v6228 = vunpack.c.h.b16 %v6033
        %v6229 = vunpack.c.l.b16 %v6034
        %v6230 = vunpack.c.h.b16 %v6034
        %v6231 = vunpack.c.l.b16 %v6035
        %v6232 = vunpack.c.h.b16 %v6035
        %v6233 = vunpack.c.l.b16 %v6036
        %v6234 = vunpack.c.h.b16 %v6036
        %v6235 = vunpack.c.l.b16 %v6037
        %v6236 = vunpack.c.h.b16 %v6037
        %v6237 = vunpack.c.l.b16 %v6038
        %v6238 = vunpack.c.h.b16 %v6038
        %v6239 = vunpack.c.l.b16 %v6039
        %v6240 = vunpack.c.h.b16 %v6039
        %v6241 = vunpack.c.l.b16 %v6040
        %v6242 = vunpack.c.h.b16 %v6040
        %v6243 = vunpack.c.l.b16 %v6041
        %v6244 = vunpack.c.h.b16 %v6041
        %v6245 = vunpack.c.l.b16 %v6042
        %v6246 = vunpack.c.h.b16 %v6042
        %v6247 = vunpack.c.l.b16 %v6043
        %v6248 = vunpack.c.h.b16 %v6043
        %v6249 = vunpack.c.l.b16 %v6044
        %v6250 = vunpack.c.h.b16 %v6044
        %v6251 = vunpack.c.l.b16 %v6045
        %v6252 = vunpack.c.h.b16 %v6045
        %v6253 = vunpack.c.l.b16 %v6046
        %v6254 = vunpack.c.h.b16 %v6046
        %v6255 = vunpack.c.l.b16 %v6047
        %v6256 = vunpack.c.h.b16 %v6047
        %v6257 = vunpack.c.l.b16 %v6048
        %v6258 = vunpack.c.h.b16 %v6048
        %v6259 = vunpack.c.l.b16 %v6049
        %v6260 = vunpack.c.h.b16 %v6049
        %v6261 = vunpack.c.l.b16 %v6050
        %v6262 = vunpack.c.h.b16 %v6050
        %v6263 = vunpack.c.l.b16 %v6051
        %v6264 = vunpack.c.h.b16 %v6051
        %v6265 = vunpack.c.l.b16 %v6052
        %v6266 = vunpack.c.h.b16 %v6052
        %v6267 = vpack.c.b16 %v6143, %v6139
        %v6268 = vpack.c.b16 %v6144, %v6140
        %v6269 = vpack.c.b16 %v6145, %v6141
        %v6270 = vpack.c.b16 %v6146, %v6142
        %v6271 = vpack.c.b16 %v6151, %v6147
        %v6272 = vpack.c.b16 %v6152, %v6148
        %v6273 = vpack.c.b16 %v6153, %v6149
        %v6274 = vpack.c.b16 %v6154, %v6150
        %v6275 = vpack.c.b16 %v6159, %v6155
        %v6276 = vpack.c.b16 %v6160, %v6156
        %v6277 = vpack.c.b16 %v6161, %v6157
        %v6278 = vpack.c.b16 %v6162, %v6158
        %v6279 = vpack.c.b16 %v6167, %v6163
        %v6280 = vpack.c.b16 %v6168, %v6164
        %v6281 = vpack.c.b16 %v6169, %v6165
        %v6282 = vpack.c.b16 %v6170, %v6166
        %v6283 = vpack.c.b16 %v6175, %v6171
        %v6284 = vpack.c.b16 %v6176, %v6172
        %v6285 = vpack.c.b16 %v6177, %v6173
        %v6286 = vpack.c.b16 %v6178, %v6174
        %v6287 = vpack.c.b16 %v6183, %v6179
        %v6288 = vpack.c.b16 %v6184, %v6180
        %v6289 = vpack.c.b16 %v6185, %v6181
        %v6290 = vpack.c.b16 %v6186, %v6182
        %v6291 = vpack.c.b16 %v6191, %v6187
        %v6292 = vpack.c.b16 %v6192, %v6188
        %v6293 = vpack.c.b16 %v6193, %v6189
        %v6294 = vpack.c.b16 %v6194, %v6190
        %v6295 = vpack.c.b16 %v6199, %v6195
        %v6296 = vpack.c.b16 %v6200, %v6196
        %v6297 = vpack.c.b16 %v6201, %v6197
        %v6298 = vpack.c.b16 %v6202, %v6198
        %v6299 = vpack.c.b16 %v6207, %v6203
        %v6300 = vpack.c.b16 %v6208, %v6204
        %v6301 = vpack.c.b16 %v6209, %v6205
        %v6302 = vpack.c.b16 %v6210, %v6206
        %v6303 = vpack.c.b16 %v6215, %v6211
        %v6304 = vpack.c.b16 %v6216, %v6212
        %v6305 = vpack.c.b16 %v6217, %v6213
        %v6306 = vpack.c.b16 %v6218, %v6214
        %v6307 = vpack.c.b16 %v6223, %v6219
        %v6308 = vpack.c.b16 %v6224, %v6220
        %v6309 = vpack.c.b16 %v6225, %v6221
        %v6310 = vpack.c.b16 %v6226, %v6222
        %v6311 = vpack.c.b16 %v6231, %v6227
        %v6312 = vpack.c.b16 %v6232, %v6228
        %v6313 = vpack.c.b16 %v6233, %v6229
        %v6314 = vpack.c.b16 %v6234, %v6230
        %v6315 = vpack.c.b16 %v6239, %v6235
        %v6316 = vpack.c.b16 %v6240, %v6236
        %v6317 = vpack.c.b16 %v6241, %v6237
        %v6318 = vpack.c.b16 %v6242, %v6238
        %v6319 = vpack.c.b16 %v6247, %v6243
        %v6320 = vpack.c.b16 %v6248, %v6244
        %v6321 = vpack.c.b16 %v6249, %v6245
        %v6322 = vpack.c.b16 %v6250, %v6246
        %v6323 = vpack.c.b16 %v6255, %v6251
        %v6324 = vpack.c.b16 %v6256, %v6252
        %v6325 = vpack.c.b16 %v6257, %v6253
        %v6326 = vpack.c.b16 %v6258, %v6254
        %v6327 = vpack.c.b16 %v6263, %v6259
        %v6328 = vpack.c.b16 %v6264, %v6260
        %v6329 = vpack.c.b16 %v6265, %v6261
        %v6330 = vpack.c.b16 %v6266, %v6262
        %6395 = vmatprep.subr.bf16.mxu0 %v6296
        %6396 = vmatpush1.bf16.msra.mxu0 %v6295
        %6397 = vmatprep.subr.bf16.mxu0 %v6292
        %6398 = vmatpush1.bf16.msra.mxu0 %v6291
        %6399 = vmatprep.subr.bf16.mxu0 %v6288
        %6400 = vmatpush1.bf16.msra.mxu0 %v6287
        %6401 = vmatprep.subr.bf16.mxu0 %v6284
        %6402 = vmatpush1.bf16.msra.mxu0 %v6283
        %6403 = vmatprep.subr.bf16.mxu0 %v6280
        %6404 = vmatpush1.bf16.msra.mxu0 %v6279
        %6405 = vmatprep.subr.bf16.mxu0 %v6276
        %6406 = vmatpush1.bf16.msra.mxu0 %v6275
        %6407 = vmatprep.subr.bf16.mxu0 %v6272
        %6408 = vmatpush1.bf16.msra.mxu0 %v6271
        %6409 = vmatprep.subr.bf16.mxu0 %v6268
        %6410 = vmatpush1.bf16.msra.mxu0 %v6267
        %6411 = vmatprep.subr.bf16.mxu0 %v6328
        %6412 = vmatpush2.bf16.msra.mxu0 %v6327
        %6413 = vmatprep.subr.bf16.mxu0 %v6324
        %6414 = vmatpush2.bf16.msra.mxu0 %v6323
        %6415 = vmatprep.subr.bf16.mxu0 %v6320
        %6416 = vmatpush2.bf16.msra.mxu0 %v6319
        %6417 = vmatprep.subr.bf16.mxu0 %v6316
        %6418 = vmatpush2.bf16.msra.mxu0 %v6315
        %6419 = vmatprep.subr.bf16.mxu0 %v6312
        %6420 = vmatpush2.bf16.msra.mxu0 %v6311
        %6421 = vmatprep.subr.bf16.mxu0 %v6308
        %6422 = vmatpush2.bf16.msra.mxu0 %v6307
        %6423 = vmatprep.subr.bf16.mxu0 %v6304
        %6424 = vmatpush2.bf16.msra.mxu0 %v6303
        %6425 = vmatprep.subr.bf16.mxu0 %v6300
        %6426 = vmatpush2.bf16.msra.mxu0 %v6299
        %6427 = vmatprep.mubr.bf16.mxu0 %v5182
        %6428 = vmatmul.mubr.bf16.gmra.mxu0 %v5181
        %v6429 = vpop.f32.mrf.mxu0
        %v6430 = vadd.f32 %v6058, %v6429
        %v6431 = vpop.f32.mrf.mxu0
        %v6432 = vadd.f32 %v6062, %v6431
        %v6433 = vpop.f32.mrf.mxu0
        %v6434 = vadd.f32 %v6058, %v6433
        %v6435 = vpop.f32.mrf.mxu0
        %v6436 = vadd.f32 %v6062, %v6435
        %6437 = vmatprep.mubr.bf16.mxu0 %v5184
        %6438 = vmatmul.mubr.bf16.gmra.mxu0 %v5183
        %v6439 = vpop.f32.mrf.mxu0
        %v6440 = vadd.f32 %v6058, %v6439
        %v6441 = vpop.f32.mrf.mxu0
        %v6442 = vadd.f32 %v6062, %v6441
        %v6443 = vpop.f32.mrf.mxu0
        %v6444 = vadd.f32 %v6058, %v6443
        %v6445 = vpop.f32.mrf.mxu0
        %v6446 = vadd.f32 %v6062, %v6445
        %6447 = vmatprep.mubr.bf16.mxu0 %v5186
        %6448 = vmatmul.mubr.bf16.gmra.mxu0 %v5185
        %v6449 = vpop.f32.mrf.mxu0
        %v6450 = vadd.f32 %v6058, %v6449
        %v6451 = vpop.f32.mrf.mxu0
        %v6452 = vadd.f32 %v6062, %v6451
        %v6453 = vpop.f32.mrf.mxu0
        %v6454 = vadd.f32 %v6058, %v6453
        %v6455 = vpop.f32.mrf.mxu0
        %v6456 = vadd.f32 %v6062, %v6455
        %6457 = vmatprep.mubr.bf16.mxu0 %v5188
        %6458 = vmatmul.mubr.bf16.gmra.mxu0 %v5187
        %v6459 = vpop.f32.mrf.mxu0
        %v6460 = vadd.f32 %v6058, %v6459
        %v6461 = vpop.f32.mrf.mxu0
        %v6462 = vadd.f32 %v6062, %v6461
        %v6463 = vpop.f32.mrf.mxu0
        %v6464 = vadd.f32 %v6058, %v6463
        %v6465 = vpop.f32.mrf.mxu0
        %v6466 = vadd.f32 %v6062, %v6465
        %6467 = vmatprep.mubr.bf16.mxu0 %v5190
        %6468 = vmatmul.mubr.bf16.gmra.mxu0 %v5189
        %v6469 = vpop.f32.mrf.mxu0
        %v6470 = vadd.f32 %v6058, %v6469
        %v6471 = vpop.f32.mrf.mxu0
        %v6472 = vadd.f32 %v6062, %v6471
        %v6473 = vpop.f32.mrf.mxu0
        %v6474 = vadd.f32 %v6058, %v6473
        %v6475 = vpop.f32.mrf.mxu0
        %v6476 = vadd.f32 %v6062, %v6475
        %6477 = vmatprep.mubr.bf16.mxu0 %v5192
        %6478 = vmatmul.mubr.bf16.gmra.mxu0 %v5191
        %v6479 = vpop.f32.mrf.mxu0
        %v6480 = vadd.f32 %v6058, %v6479
        %v6481 = vpop.f32.mrf.mxu0
        %v6482 = vadd.f32 %v6062, %v6481
        %v6483 = vpop.f32.mrf.mxu0
        %v6484 = vadd.f32 %v6058, %v6483
        %v6485 = vpop.f32.mrf.mxu0
        %v6486 = vadd.f32 %v6062, %v6485
        %6487 = vmatprep.mubr.bf16.mxu0 %v5194
        %6488 = vmatmul.mubr.bf16.gmra.mxu0 %v5193
        %v6489 = vpop.f32.mrf.mxu0
        %v6490 = vadd.f32 %v6058, %v6489
        %v6491 = vpop.f32.mrf.mxu0
        %v6492 = vadd.f32 %v6062, %v6491
        %v6493 = vpop.f32.mrf.mxu0
        %v6494 = vadd.f32 %v6058, %v6493
        %v6495 = vpop.f32.mrf.mxu0
        %v6496 = vadd.f32 %v6062, %v6495
        %6497 = vmatprep.mubr.bf16.mxu0 %v5196
        %6498 = vmatmul.mubr.bf16.gmra.mxu0 %v5195
        %v6499 = vpop.f32.mrf.mxu0
        %v6500 = vadd.f32 %v6058, %v6499
        %v6501 = vpop.f32.mrf.mxu0
        %v6502 = vadd.f32 %v6062, %v6501
        %v6503 = vpop.f32.mrf.mxu0
        %v6504 = vadd.f32 %v6058, %v6503
        %v6505 = vpop.f32.mrf.mxu0
        %v6506 = vadd.f32 %v6062, %v6505
        %6507 = vdwg.mxu0
        %6508 = vmatprep.subr.bf16.mxu0 %v6298
        %6509 = vmatpush1.bf16.msra.mxu0 %v6297
        %6510 = vmatprep.subr.bf16.mxu0 %v6294
        %6511 = vmatpush1.bf16.msra.mxu0 %v6293
        %6512 = vmatprep.subr.bf16.mxu0 %v6290
        %6513 = vmatpush1.bf16.msra.mxu0 %v6289
        %6514 = vmatprep.subr.bf16.mxu0 %v6286
        %6515 = vmatpush1.bf16.msra.mxu0 %v6285
        %6516 = vmatprep.subr.bf16.mxu0 %v6282
        %6517 = vmatpush1.bf16.msra.mxu0 %v6281
        %6518 = vmatprep.subr.bf16.mxu0 %v6278
        %6519 = vmatpush1.bf16.msra.mxu0 %v6277
        %6520 = vmatprep.subr.bf16.mxu0 %v6274
        %6521 = vmatpush1.bf16.msra.mxu0 %v6273
        %6522 = vmatprep.subr.bf16.mxu0 %v6270
        %6523 = vmatpush1.bf16.msra.mxu0 %v6269
        %6524 = vmatprep.subr.bf16.mxu0 %v6330
        %6525 = vmatpush2.bf16.msra.mxu0 %v6329
        %6526 = vmatprep.subr.bf16.mxu0 %v6326
        %6527 = vmatpush2.bf16.msra.mxu0 %v6325
        %6528 = vmatprep.subr.bf16.mxu0 %v6322
        %6529 = vmatpush2.bf16.msra.mxu0 %v6321
        %6530 = vmatprep.subr.bf16.mxu0 %v6318
        %6531 = vmatpush2.bf16.msra.mxu0 %v6317
        %6532 = vmatprep.subr.bf16.mxu0 %v6314
        %6533 = vmatpush2.bf16.msra.mxu0 %v6313
        %6534 = vmatprep.subr.bf16.mxu0 %v6310
        %6535 = vmatpush2.bf16.msra.mxu0 %v6309
        %6536 = vmatprep.subr.bf16.mxu0 %v6306
        %6537 = vmatpush2.bf16.msra.mxu0 %v6305
        %6538 = vmatprep.subr.bf16.mxu0 %v6302
        %6539 = vmatpush2.bf16.msra.mxu0 %v6301
        %6540 = vmatprep.mubr.bf16.mxu0 %v5182
        %6541 = vmatmul.mubr.bf16.gmra.mxu0 %v5181
        %v6542 = vpop.f32.mrf.mxu0
        %v6543 = vadd.f32 %v6066, %v6542
        %v6544 = vpop.f32.mrf.mxu0
        %v6545 = vadd.f32 %v6070, %v6544
        %v6546 = vpop.f32.mrf.mxu0
        %v6547 = vadd.f32 %v6066, %v6546
        %v6548 = vpop.f32.mrf.mxu0
        %v6549 = vadd.f32 %v6070, %v6548
        %6550 = vmatprep.mubr.bf16.mxu0 %v5184
        %6551 = vmatmul.mubr.bf16.gmra.mxu0 %v5183
        %v6552 = vpop.f32.mrf.mxu0
        %v6553 = vadd.f32 %v6066, %v6552
        %v6554 = vpop.f32.mrf.mxu0
        %v6555 = vadd.f32 %v6070, %v6554
        %v6556 = vpop.f32.mrf.mxu0
        %v6557 = vadd.f32 %v6066, %v6556
        %v6558 = vpop.f32.mrf.mxu0
        %v6559 = vadd.f32 %v6070, %v6558
        %6560 = vmatprep.mubr.bf16.mxu0 %v5186
        %6561 = vmatmul.mubr.bf16.gmra.mxu0 %v5185
        %v6562 = vpop.f32.mrf.mxu0
        %v6563 = vadd.f32 %v6066, %v6562
        %v6564 = vpop.f32.mrf.mxu0
        %v6565 = vadd.f32 %v6070, %v6564
        %v6566 = vpop.f32.mrf.mxu0
        %v6567 = vadd.f32 %v6066, %v6566
        %v6568 = vpop.f32.mrf.mxu0
        %v6569 = vadd.f32 %v6070, %v6568
        %6570 = vmatprep.mubr.bf16.mxu0 %v5188
        %6571 = vmatmul.mubr.bf16.gmra.mxu0 %v5187
        %v6572 = vpop.f32.mrf.mxu0
        %v6573 = vadd.f32 %v6066, %v6572
        %v6574 = vpop.f32.mrf.mxu0
        %v6575 = vadd.f32 %v6070, %v6574
        %v6576 = vpop.f32.mrf.mxu0
        %v6577 = vadd.f32 %v6066, %v6576
        %v6578 = vpop.f32.mrf.mxu0
        %v6579 = vadd.f32 %v6070, %v6578
        %6580 = vmatprep.mubr.bf16.mxu0 %v5190
        %6581 = vmatmul.mubr.bf16.gmra.mxu0 %v5189
        %v6582 = vpop.f32.mrf.mxu0
        %v6583 = vadd.f32 %v6066, %v6582
        %v6584 = vpop.f32.mrf.mxu0
        %v6585 = vadd.f32 %v6070, %v6584
        %v6586 = vpop.f32.mrf.mxu0
        %v6587 = vadd.f32 %v6066, %v6586
        %v6588 = vpop.f32.mrf.mxu0
        %v6589 = vadd.f32 %v6070, %v6588
        %6590 = vmatprep.mubr.bf16.mxu0 %v5192
        %6591 = vmatmul.mubr.bf16.gmra.mxu0 %v5191
        %v6592 = vpop.f32.mrf.mxu0
        %v6593 = vadd.f32 %v6066, %v6592
        %v6594 = vpop.f32.mrf.mxu0
        %v6595 = vadd.f32 %v6070, %v6594
        %v6596 = vpop.f32.mrf.mxu0
        %v6597 = vadd.f32 %v6066, %v6596
        %v6598 = vpop.f32.mrf.mxu0
        %v6599 = vadd.f32 %v6070, %v6598
        %6600 = vmatprep.mubr.bf16.mxu0 %v5194
        %6601 = vmatmul.mubr.bf16.gmra.mxu0 %v5193
        %v6602 = vpop.f32.mrf.mxu0
        %v6603 = vadd.f32 %v6066, %v6602
        %v6604 = vpop.f32.mrf.mxu0
        %v6605 = vadd.f32 %v6070, %v6604
        %v6606 = vpop.f32.mrf.mxu0
        %v6607 = vadd.f32 %v6066, %v6606
        %v6608 = vpop.f32.mrf.mxu0
        %v6609 = vadd.f32 %v6070, %v6608
        %6610 = vmatprep.mubr.bf16.mxu0 %v5196
        %6611 = vmatmul.mubr.bf16.gmra.mxu0 %v5195
        %v6612 = vpop.f32.mrf.mxu0
        %v6613 = vadd.f32 %v6066, %v6612
        %v6614 = vpop.f32.mrf.mxu0
        %v6615 = vadd.f32 %v6070, %v6614
        %v6616 = vpop.f32.mrf.mxu0
        %v6617 = vadd.f32 %v6066, %v6616
        %v6618 = vpop.f32.mrf.mxu0
        %v6619 = vadd.f32 %v6070, %v6618
        %6620 = vdwg.mxu0
        %v6621 = vmax.f32 %v6430, 0.0
        %v6622 = vmax.f32 %v6432, 0.0
        %v6623 = vmax.f32 %v6543, 0.0
        %v6624 = vmax.f32 %v6545, 0.0
        %v6625 = vmax.f32 %v6434, 0.0
        %v6626 = vmax.f32 %v6436, 0.0
        %v6627 = vmax.f32 %v6547, 0.0
        %v6628 = vmax.f32 %v6549, 0.0
        %v6629 = vmax.f32 %v6440, 0.0
        %v6630 = vmax.f32 %v6442, 0.0
        %v6631 = vmax.f32 %v6553, 0.0
        %v6632 = vmax.f32 %v6555, 0.0
        %v6633 = vmax.f32 %v6444, 0.0
        %v6634 = vmax.f32 %v6446, 0.0
        %v6635 = vmax.f32 %v6557, 0.0
        %v6636 = vmax.f32 %v6559, 0.0
        %v6637 = vmax.f32 %v6450, 0.0
        %v6638 = vmax.f32 %v6452, 0.0
        %v6639 = vmax.f32 %v6563, 0.0
        %v6640 = vmax.f32 %v6565, 0.0
        %v6641 = vmax.f32 %v6454, 0.0
        %v6642 = vmax.f32 %v6456, 0.0
        %v6643 = vmax.f32 %v6567, 0.0
        %v6644 = vmax.f32 %v6569, 0.0
        %v6645 = vmax.f32 %v6460, 0.0
        %v6646 = vmax.f32 %v6462, 0.0
        %v6647 = vmax.f32 %v6573, 0.0
        %v6648 = vmax.f32 %v6575, 0.0
        %v6649 = vmax.f32 %v6464, 0.0
        %v6650 = vmax.f32 %v6466, 0.0
        %v6651 = vmax.f32 %v6577, 0.0
        %v6652 = vmax.f32 %v6579, 0.0
        %v6653 = vmax.f32 %v6470, 0.0
        %v6654 = vmax.f32 %v6472, 0.0
        %v6655 = vmax.f32 %v6583, 0.0
        %v6656 = vmax.f32 %v6585, 0.0
        %v6657 = vmax.f32 %v6474, 0.0
        %v6658 = vmax.f32 %v6476, 0.0
        %v6659 = vmax.f32 %v6587, 0.0
        %v6660 = vmax.f32 %v6589, 0.0
        %v6661 = vmax.f32 %v6480, 0.0
        %v6662 = vmax.f32 %v6482, 0.0
        %v6663 = vmax.f32 %v6593, 0.0
        %v6664 = vmax.f32 %v6595, 0.0
        %v6665 = vmax.f32 %v6484, 0.0
        %v6666 = vmax.f32 %v6486, 0.0
        %v6667 = vmax.f32 %v6597, 0.0
        %v6668 = vmax.f32 %v6599, 0.0
        %v6669 = vmax.f32 %v6490, 0.0
        %v6670 = vmax.f32 %v6492, 0.0
        %v6671 = vmax.f32 %v6603, 0.0
        %v6672 = vmax.f32 %v6605, 0.0
        %v6673 = vmax.f32 %v6494, 0.0
        %v6674 = vmax.f32 %v6496, 0.0
        %v6675 = vmax.f32 %v6607, 0.0
        %v6676 = vmax.f32 %v6609, 0.0
        %v6677 = vmax.f32 %v6500, 0.0
        %v6678 = vmax.f32 %v6502, 0.0
        %v6679 = vmax.f32 %v6613, 0.0
        %v6680 = vmax.f32 %v6615, 0.0
        %v6681 = vmax.f32 %v6504, 0.0
        %v6682 = vmax.f32 %v6506, 0.0
        %v6683 = vmax.f32 %v6617, 0.0
        %v6684 = vmax.f32 %v6619, 0.0
        %v6685 = vpack.c.bf16 %v6625, %v6621
        %v6686 = vpack.c.bf16 %v6626, %v6622
        %v6687 = vpack.c.bf16 %v6627, %v6623
        %v6688 = vpack.c.bf16 %v6628, %v6624
        %v6689 = vpack.c.bf16 %v6633, %v6629
        %v6690 = vpack.c.bf16 %v6634, %v6630
        %v6691 = vpack.c.bf16 %v6635, %v6631
        %v6692 = vpack.c.bf16 %v6636, %v6632
        %v6693 = vpack.c.bf16 %v6641, %v6637
        %v6694 = vpack.c.bf16 %v6642, %v6638
        %v6695 = vpack.c.bf16 %v6643, %v6639
        %v6696 = vpack.c.bf16 %v6644, %v6640
        %v6697 = vpack.c.bf16 %v6649, %v6645
        %v6698 = vpack.c.bf16 %v6650, %v6646
        %v6699 = vpack.c.bf16 %v6651, %v6647
        %v6700 = vpack.c.bf16 %v6652, %v6648
        %v6701 = vpack.c.bf16 %v6657, %v6653
        %v6702 = vpack.c.bf16 %v6658, %v6654
        %v6703 = vpack.c.bf16 %v6659, %v6655
        %v6704 = vpack.c.bf16 %v6660, %v6656
        %v6705 = vpack.c.bf16 %v6665, %v6661
        %v6706 = vpack.c.bf16 %v6666, %v6662
        %v6707 = vpack.c.bf16 %v6667, %v6663
        %v6708 = vpack.c.bf16 %v6668, %v6664
        %v6709 = vpack.c.bf16 %v6673, %v6669
        %v6710 = vpack.c.bf16 %v6674, %v6670
        %v6711 = vpack.c.bf16 %v6675, %v6671
        %v6712 = vpack.c.bf16 %v6676, %v6672
        %v6713 = vpack.c.bf16 %v6681, %v6677
        %v6714 = vpack.c.bf16 %v6682, %v6678
        %v6715 = vpack.c.bf16 %v6683, %v6679
        %v6716 = vpack.c.bf16 %v6684, %v6680
        %v6717 = vld [vmem:[#allocation13 + $0x200] sm:$0xff]
        %v6718 = vld [vmem:[#allocation13 + $0x208] sm:$0xff]
        %v6719 = vld [vmem:[#allocation13 + $0x210] sm:$0xff]
        %v6720 = vld [vmem:[#allocation13 + $0x218] sm:$0xff]
        %v6721 = vld [vmem:[#allocation13 + $0x220] sm:$0xff]
        %v6722 = vld [vmem:[#allocation13 + $0x228] sm:$0xff]
        %v6723 = vld [vmem:[#allocation13 + $0x230] sm:$0xff]
        %v6724 = vld [vmem:[#allocation13 + $0x238] sm:$0xff]
        %v6725 = vld [vmem:[#allocation13 + $0x240] sm:$0xff]
        %v6726 = vld [vmem:[#allocation13 + $0x248] sm:$0xff]
        %v6727 = vld [vmem:[#allocation13 + $0x250] sm:$0xff]
        %v6728 = vld [vmem:[#allocation13 + $0x258] sm:$0xff]
        %v6729 = vld [vmem:[#allocation13 + $0x260] sm:$0xff]
        %v6730 = vld [vmem:[#allocation13 + $0x268] sm:$0xff]
        %v6731 = vld [vmem:[#allocation13 + $0x270] sm:$0xff]
        %v6732 = vld [vmem:[#allocation13 + $0x278] sm:$0xff]
        %v6733 = vld [vmem:[#allocation13 + $0x280] sm:$0xff]
        %v6734 = vld [vmem:[#allocation13 + $0x288] sm:$0xff]
        %v6735 = vld [vmem:[#allocation13 + $0x290] sm:$0xff]
        %v6736 = vld [vmem:[#allocation13 + $0x298] sm:$0xff]
        %v6737 = vld [vmem:[#allocation13 + $0x2a0] sm:$0xff]
        %v6738 = vld [vmem:[#allocation13 + $0x2a8] sm:$0xff]
        %v6739 = vld [vmem:[#allocation13 + $0x2b0] sm:$0xff]
        %v6740 = vld [vmem:[#allocation13 + $0x2b8] sm:$0xff]
        %v6741 = vld [vmem:[#allocation13 + $0x2c0] sm:$0xff]
        %v6742 = vld [vmem:[#allocation13 + $0x2c8] sm:$0xff]
        %v6743 = vld [vmem:[#allocation13 + $0x2d0] sm:$0xff]
        %v6744 = vld [vmem:[#allocation13 + $0x2d8] sm:$0xff]
        %v6745 = vld [vmem:[#allocation13 + $0x2e0] sm:$0xff]
        %v6746 = vld [vmem:[#allocation13 + $0x2e8] sm:$0xff]
        %v6747 = vld [vmem:[#allocation13 + $0x2f0] sm:$0xff]
        %v6748 = vld [vmem:[#allocation13 + $0x2f8] sm:$0xff]
        %v6749 = vld [vmem:[#allocation13 + $0x300] sm:$0xff]
        %v6750 = vld [vmem:[#allocation13 + $0x308] sm:$0xff]
        %v6751 = vld [vmem:[#allocation13 + $0x310] sm:$0xff]
        %v6752 = vld [vmem:[#allocation13 + $0x318] sm:$0xff]
        %v6753 = vld [vmem:[#allocation13 + $0x320] sm:$0xff]
        %v6754 = vld [vmem:[#allocation13 + $0x328] sm:$0xff]
        %v6755 = vld [vmem:[#allocation13 + $0x330] sm:$0xff]
        %v6756 = vld [vmem:[#allocation13 + $0x338] sm:$0xff]
        %v6757 = vld [vmem:[#allocation13 + $0x340] sm:$0xff]
        %v6758 = vld [vmem:[#allocation13 + $0x348] sm:$0xff]
        %v6759 = vld [vmem:[#allocation13 + $0x350] sm:$0xff]
        %v6760 = vld [vmem:[#allocation13 + $0x358] sm:$0xff]
        %v6761 = vld [vmem:[#allocation13 + $0x360] sm:$0xff]
        %v6762 = vld [vmem:[#allocation13 + $0x368] sm:$0xff]
        %v6763 = vld [vmem:[#allocation13 + $0x370] sm:$0xff]
        %v6764 = vld [vmem:[#allocation13 + $0x378] sm:$0xff]
        %v6765 = vld [vmem:[#allocation13 + $0x380] sm:$0xff]
        %v6766 = vld [vmem:[#allocation13 + $0x388] sm:$0xff]
        %v6767 = vld [vmem:[#allocation13 + $0x390] sm:$0xff]
        %v6768 = vld [vmem:[#allocation13 + $0x398] sm:$0xff]
        %v6769 = vld [vmem:[#allocation13 + $0x3a0] sm:$0xff]
        %v6770 = vld [vmem:[#allocation13 + $0x3a8] sm:$0xff]
        %v6771 = vld [vmem:[#allocation13 + $0x3b0] sm:$0xff]
        %v6772 = vld [vmem:[#allocation13 + $0x3b8] sm:$0xff]
        %v6773 = vld [vmem:[#allocation13 + $0x3c0] sm:$0xff]
        %v6774 = vld [vmem:[#allocation13 + $0x3c8] sm:$0xff]
        %v6775 = vld [vmem:[#allocation13 + $0x3d0] sm:$0xff]
        %v6776 = vld [vmem:[#allocation13 + $0x3d8] sm:$0xff]
        %v6777 = vld [vmem:[#allocation13 + $0x3e0] sm:$0xff]
        %v6778 = vld [vmem:[#allocation13 + $0x3e8] sm:$0xff]
        %v6779 = vld [vmem:[#allocation13 + $0x3f0] sm:$0xff]
        %v6780 = vld [vmem:[#allocation13 + $0x3f8] sm:$0xff]
        %v6845 = vunpack.c.l.b16 %v6717
        %v6846 = vunpack.c.h.b16 %v6717
        %v6847 = vunpack.c.l.b16 %v6718
        %v6848 = vunpack.c.h.b16 %v6718
        %v6849 = vunpack.c.l.b16 %v6719
        %v6850 = vunpack.c.h.b16 %v6719
        %v6851 = vunpack.c.l.b16 %v6720
        %v6852 = vunpack.c.h.b16 %v6720
        %v6853 = vunpack.c.l.b16 %v6721
        %v6854 = vunpack.c.h.b16 %v6721
        %v6855 = vunpack.c.l.b16 %v6722
        %v6856 = vunpack.c.h.b16 %v6722
        %v6857 = vunpack.c.l.b16 %v6723
        %v6858 = vunpack.c.h.b16 %v6723
        %v6859 = vunpack.c.l.b16 %v6724
        %v6860 = vunpack.c.h.b16 %v6724
        %v6861 = vunpack.c.l.b16 %v6725
        %v6862 = vunpack.c.h.b16 %v6725
        %v6863 = vunpack.c.l.b16 %v6726
        %v6864 = vunpack.c.h.b16 %v6726
        %v6865 = vunpack.c.l.b16 %v6727
        %v6866 = vunpack.c.h.b16 %v6727
        %v6867 = vunpack.c.l.b16 %v6728
        %v6868 = vunpack.c.h.b16 %v6728
        %v6869 = vunpack.c.l.b16 %v6729
        %v6870 = vunpack.c.h.b16 %v6729
        %v6871 = vunpack.c.l.b16 %v6730
        %v6872 = vunpack.c.h.b16 %v6730
        %v6873 = vunpack.c.l.b16 %v6731
        %v6874 = vunpack.c.h.b16 %v6731
        %v6875 = vunpack.c.l.b16 %v6732
        %v6876 = vunpack.c.h.b16 %v6732
        %v6877 = vunpack.c.l.b16 %v6733
        %v6878 = vunpack.c.h.b16 %v6733
        %v6879 = vunpack.c.l.b16 %v6734
        %v6880 = vunpack.c.h.b16 %v6734
        %v6881 = vunpack.c.l.b16 %v6735
        %v6882 = vunpack.c.h.b16 %v6735
        %v6883 = vunpack.c.l.b16 %v6736
        %v6884 = vunpack.c.h.b16 %v6736
        %v6885 = vunpack.c.l.b16 %v6737
        %v6886 = vunpack.c.h.b16 %v6737
        %v6887 = vunpack.c.l.b16 %v6738
        %v6888 = vunpack.c.h.b16 %v6738
        %v6889 = vunpack.c.l.b16 %v6739
        %v6890 = vunpack.c.h.b16 %v6739
        %v6891 = vunpack.c.l.b16 %v6740
        %v6892 = vunpack.c.h.b16 %v6740
        %v6893 = vunpack.c.l.b16 %v6741
        %v6894 = vunpack.c.h.b16 %v6741
        %v6895 = vunpack.c.l.b16 %v6742
        %v6896 = vunpack.c.h.b16 %v6742
        %v6897 = vunpack.c.l.b16 %v6743
        %v6898 = vunpack.c.h.b16 %v6743
        %v6899 = vunpack.c.l.b16 %v6744
        %v6900 = vunpack.c.h.b16 %v6744
        %v6901 = vunpack.c.l.b16 %v6745
        %v6902 = vunpack.c.h.b16 %v6745
        %v6903 = vunpack.c.l.b16 %v6746
        %v6904 = vunpack.c.h.b16 %v6746
        %v6905 = vunpack.c.l.b16 %v6747
        %v6906 = vunpack.c.h.b16 %v6747
        %v6907 = vunpack.c.l.b16 %v6748
        %v6908 = vunpack.c.h.b16 %v6748
        %v6909 = vunpack.c.l.b16 %v6749
        %v6910 = vunpack.c.h.b16 %v6749
        %v6911 = vunpack.c.l.b16 %v6750
        %v6912 = vunpack.c.h.b16 %v6750
        %v6913 = vunpack.c.l.b16 %v6751
        %v6914 = vunpack.c.h.b16 %v6751
        %v6915 = vunpack.c.l.b16 %v6752
        %v6916 = vunpack.c.h.b16 %v6752
        %v6917 = vunpack.c.l.b16 %v6753
        %v6918 = vunpack.c.h.b16 %v6753
        %v6919 = vunpack.c.l.b16 %v6754
        %v6920 = vunpack.c.h.b16 %v6754
        %v6921 = vunpack.c.l.b16 %v6755
        %v6922 = vunpack.c.h.b16 %v6755
        %v6923 = vunpack.c.l.b16 %v6756
        %v6924 = vunpack.c.h.b16 %v6756
        %v6925 = vunpack.c.l.b16 %v6757
        %v6926 = vunpack.c.h.b16 %v6757
        %v6927 = vunpack.c.l.b16 %v6758
        %v6928 = vunpack.c.h.b16 %v6758
        %v6929 = vunpack.c.l.b16 %v6759
        %v6930 = vunpack.c.h.b16 %v6759
        %v6931 = vunpack.c.l.b16 %v6760
        %v6932 = vunpack.c.h.b16 %v6760
        %v6933 = vunpack.c.l.b16 %v6761
        %v6934 = vunpack.c.h.b16 %v6761
        %v6935 = vunpack.c.l.b16 %v6762
        %v6936 = vunpack.c.h.b16 %v6762
        %v6937 = vunpack.c.l.b16 %v6763
        %v6938 = vunpack.c.h.b16 %v6763
        %v6939 = vunpack.c.l.b16 %v6764
        %v6940 = vunpack.c.h.b16 %v6764
        %v6941 = vunpack.c.l.b16 %v6765
        %v6942 = vunpack.c.h.b16 %v6765
        %v6943 = vunpack.c.l.b16 %v6766
        %v6944 = vunpack.c.h.b16 %v6766
        %v6945 = vunpack.c.l.b16 %v6767
        %v6946 = vunpack.c.h.b16 %v6767
        %v6947 = vunpack.c.l.b16 %v6768
        %v6948 = vunpack.c.h.b16 %v6768
        %v6949 = vunpack.c.l.b16 %v6769
        %v6950 = vunpack.c.h.b16 %v6769
        %v6951 = vunpack.c.l.b16 %v6770
        %v6952 = vunpack.c.h.b16 %v6770
        %v6953 = vunpack.c.l.b16 %v6771
        %v6954 = vunpack.c.h.b16 %v6771
        %v6955 = vunpack.c.l.b16 %v6772
        %v6956 = vunpack.c.h.b16 %v6772
        %v6957 = vunpack.c.l.b16 %v6773
        %v6958 = vunpack.c.h.b16 %v6773
        %v6959 = vunpack.c.l.b16 %v6774
        %v6960 = vunpack.c.h.b16 %v6774
        %v6961 = vunpack.c.l.b16 %v6775
        %v6962 = vunpack.c.h.b16 %v6775
        %v6963 = vunpack.c.l.b16 %v6776
        %v6964 = vunpack.c.h.b16 %v6776
        %v6965 = vunpack.c.l.b16 %v6777
        %v6966 = vunpack.c.h.b16 %v6777
        %v6967 = vunpack.c.l.b16 %v6778
        %v6968 = vunpack.c.h.b16 %v6778
        %v6969 = vunpack.c.l.b16 %v6779
        %v6970 = vunpack.c.h.b16 %v6779
        %v6971 = vunpack.c.l.b16 %v6780
        %v6972 = vunpack.c.h.b16 %v6780
        %v6973 = vpack.c.b16 %v6847, %v6845
        %v6974 = vpack.c.b16 %v6848, %v6846
        %v6975 = vpack.c.b16 %v6851, %v6849
        %v6976 = vpack.c.b16 %v6852, %v6850
        %v6977 = vpack.c.b16 %v6855, %v6853
        %v6978 = vpack.c.b16 %v6856, %v6854
        %v6979 = vpack.c.b16 %v6859, %v6857
        %v6980 = vpack.c.b16 %v6860, %v6858
        %v6981 = vpack.c.b16 %v6863, %v6861
        %v6982 = vpack.c.b16 %v6864, %v6862
        %v6983 = vpack.c.b16 %v6867, %v6865
        %v6984 = vpack.c.b16 %v6868, %v6866
        %v6985 = vpack.c.b16 %v6871, %v6869
        %v6986 = vpack.c.b16 %v6872, %v6870
        %v6987 = vpack.c.b16 %v6875, %v6873
        %v6988 = vpack.c.b16 %v6876, %v6874
        %v6989 = vpack.c.b16 %v6879, %v6877
        %v6990 = vpack.c.b16 %v6880, %v6878
        %v6991 = vpack.c.b16 %v6883, %v6881
        %v6992 = vpack.c.b16 %v6884, %v6882
        %v6993 = vpack.c.b16 %v6887, %v6885
        %v6994 = vpack.c.b16 %v6888, %v6886
        %v6995 = vpack.c.b16 %v6891, %v6889
        %v6996 = vpack.c.b16 %v6892, %v6890
        %v6997 = vpack.c.b16 %v6895, %v6893
        %v6998 = vpack.c.b16 %v6896, %v6894
        %v6999 = vpack.c.b16 %v6899, %v6897
        %v7000 = vpack.c.b16 %v6900, %v6898
        %v7001 = vpack.c.b16 %v6903, %v6901
        %v7002 = vpack.c.b16 %v6904, %v6902
        %v7003 = vpack.c.b16 %v6907, %v6905
        %v7004 = vpack.c.b16 %v6908, %v6906
        %v7005 = vpack.c.b16 %v6911, %v6909
        %v7006 = vpack.c.b16 %v6912, %v6910
        %v7007 = vpack.c.b16 %v6915, %v6913
        %v7008 = vpack.c.b16 %v6916, %v6914
        %v7009 = vpack.c.b16 %v6919, %v6917
        %v7010 = vpack.c.b16 %v6920, %v6918
        %v7011 = vpack.c.b16 %v6923, %v6921
        %v7012 = vpack.c.b16 %v6924, %v6922
        %v7013 = vpack.c.b16 %v6927, %v6925
        %v7014 = vpack.c.b16 %v6928, %v6926
        %v7015 = vpack.c.b16 %v6931, %v6929
        %v7016 = vpack.c.b16 %v6932, %v6930
        %v7017 = vpack.c.b16 %v6935, %v6933
        %v7018 = vpack.c.b16 %v6936, %v6934
        %v7019 = vpack.c.b16 %v6939, %v6937
        %v7020 = vpack.c.b16 %v6940, %v6938
        %v7021 = vpack.c.b16 %v6943, %v6941
        %v7022 = vpack.c.b16 %v6944, %v6942
        %v7023 = vpack.c.b16 %v6947, %v6945
        %v7024 = vpack.c.b16 %v6948, %v6946
        %v7025 = vpack.c.b16 %v6951, %v6949
        %v7026 = vpack.c.b16 %v6952, %v6950
        %v7027 = vpack.c.b16 %v6955, %v6953
        %v7028 = vpack.c.b16 %v6956, %v6954
        %v7029 = vpack.c.b16 %v6959, %v6957
        %v7030 = vpack.c.b16 %v6960, %v6958
        %v7031 = vpack.c.b16 %v6963, %v6961
        %v7032 = vpack.c.b16 %v6964, %v6962
        %v7033 = vpack.c.b16 %v6967, %v6965
        %v7034 = vpack.c.b16 %v6968, %v6966
        %v7035 = vpack.c.b16 %v6971, %v6969
        %v7036 = vpack.c.b16 %v6972, %v6970
        %7101 = vmatprep.subr.bf16.mxu0 %v6988
        %7102 = vmatpush1.bf16.msra.mxu0 %v6987
        %7103 = vmatprep.subr.bf16.mxu0 %v6986
        %7104 = vmatpush1.bf16.msra.mxu0 %v6985
        %7105 = vmatprep.subr.bf16.mxu0 %v6984
        %7106 = vmatpush1.bf16.msra.mxu0 %v6983
        %7107 = vmatprep.subr.bf16.mxu0 %v6982
        %7108 = vmatpush1.bf16.msra.mxu0 %v6981
        %7109 = vmatprep.subr.bf16.mxu0 %v6980
        %7110 = vmatpush1.bf16.msra.mxu0 %v6979
        %7111 = vmatprep.subr.bf16.mxu0 %v6978
        %7112 = vmatpush1.bf16.msra.mxu0 %v6977
        %7113 = vmatprep.subr.bf16.mxu0 %v6976
        %7114 = vmatpush1.bf16.msra.mxu0 %v6975
        %7115 = vmatprep.subr.bf16.mxu0 %v6974
        %7116 = vmatpush1.bf16.msra.mxu0 %v6973
        %7117 = vmatprep.subr.bf16.mxu0 %v7004
        %7118 = vmatpush2.bf16.msra.mxu0 %v7003
        %7119 = vmatprep.subr.bf16.mxu0 %v7002
        %7120 = vmatpush2.bf16.msra.mxu0 %v7001
        %7121 = vmatprep.subr.bf16.mxu0 %v7000
        %7122 = vmatpush2.bf16.msra.mxu0 %v6999
        %7123 = vmatprep.subr.bf16.mxu0 %v6998
        %7124 = vmatpush2.bf16.msra.mxu0 %v6997
        %7125 = vmatprep.subr.bf16.mxu0 %v6996
        %7126 = vmatpush2.bf16.msra.mxu0 %v6995
        %7127 = vmatprep.subr.bf16.mxu0 %v6994
        %7128 = vmatpush2.bf16.msra.mxu0 %v6993
        %7129 = vmatprep.subr.bf16.mxu0 %v6992
        %7130 = vmatpush2.bf16.msra.mxu0 %v6991
        %7131 = vmatprep.subr.bf16.mxu0 %v6990
        %7132 = vmatpush2.bf16.msra.mxu0 %v6989
        %7133 = vmatprep.mubr.bf16.mxu0 %v6686
        %7134 = vmatmul.mubr.bf16.gmra.mxu0 %v6685
        %v7135 = vpop.f32.mrf.mxu0
        %v7136 = vadd.f32 0.0, %v7135
        %v7137 = vpop.f32.mrf.mxu0
        %v7138 = vadd.f32 0.0, %v7137
        %v7139 = vpop.f32.mrf.mxu0
        %v7140 = vadd.f32 0.0, %v7139
        %v7141 = vpop.f32.mrf.mxu0
        %v7142 = vadd.f32 0.0, %v7141
        %7143 = vmatprep.mubr.bf16.mxu0 %v6690
        %7144 = vmatmul.mubr.bf16.gmra.mxu0 %v6689
        %v7145 = vpop.f32.mrf.mxu0
        %v7146 = vadd.f32 0.0, %v7145
        %v7147 = vpop.f32.mrf.mxu0
        %v7148 = vadd.f32 0.0, %v7147
        %v7149 = vpop.f32.mrf.mxu0
        %v7150 = vadd.f32 0.0, %v7149
        %v7151 = vpop.f32.mrf.mxu0
        %v7152 = vadd.f32 0.0, %v7151
        %7153 = vmatprep.mubr.bf16.mxu0 %v6694
        %7154 = vmatmul.mubr.bf16.gmra.mxu0 %v6693
        %v7155 = vpop.f32.mrf.mxu0
        %v7156 = vadd.f32 0.0, %v7155
        %v7157 = vpop.f32.mrf.mxu0
        %v7158 = vadd.f32 0.0, %v7157
        %v7159 = vpop.f32.mrf.mxu0
        %v7160 = vadd.f32 0.0, %v7159
        %v7161 = vpop.f32.mrf.mxu0
        %v7162 = vadd.f32 0.0, %v7161
        %7163 = vmatprep.mubr.bf16.mxu0 %v6698
        %7164 = vmatmul.mubr.bf16.gmra.mxu0 %v6697
        %v7165 = vpop.f32.mrf.mxu0
        %v7166 = vadd.f32 0.0, %v7165
        %v7167 = vpop.f32.mrf.mxu0
        %v7168 = vadd.f32 0.0, %v7167
        %v7169 = vpop.f32.mrf.mxu0
        %v7170 = vadd.f32 0.0, %v7169
        %v7171 = vpop.f32.mrf.mxu0
        %v7172 = vadd.f32 0.0, %v7171
        %7173 = vmatprep.mubr.bf16.mxu0 %v6702
        %7174 = vmatmul.mubr.bf16.gmra.mxu0 %v6701
        %v7175 = vpop.f32.mrf.mxu0
        %v7176 = vadd.f32 0.0, %v7175
        %v7177 = vpop.f32.mrf.mxu0
        %v7178 = vadd.f32 0.0, %v7177
        %v7179 = vpop.f32.mrf.mxu0
        %v7180 = vadd.f32 0.0, %v7179
        %v7181 = vpop.f32.mrf.mxu0
        %v7182 = vadd.f32 0.0, %v7181
        %7183 = vmatprep.mubr.bf16.mxu0 %v6706
        %7184 = vmatmul.mubr.bf16.gmra.mxu0 %v6705
        %v7185 = vpop.f32.mrf.mxu0
        %v7186 = vadd.f32 0.0, %v7185
        %v7187 = vpop.f32.mrf.mxu0
        %v7188 = vadd.f32 0.0, %v7187
        %v7189 = vpop.f32.mrf.mxu0
        %v7190 = vadd.f32 0.0, %v7189
        %v7191 = vpop.f32.mrf.mxu0
        %v7192 = vadd.f32 0.0, %v7191
        %7193 = vmatprep.mubr.bf16.mxu0 %v6710
        %7194 = vmatmul.mubr.bf16.gmra.mxu0 %v6709
        %v7195 = vpop.f32.mrf.mxu0
        %v7196 = vadd.f32 0.0, %v7195
        %v7197 = vpop.f32.mrf.mxu0
        %v7198 = vadd.f32 0.0, %v7197
        %v7199 = vpop.f32.mrf.mxu0
        %v7200 = vadd.f32 0.0, %v7199
        %v7201 = vpop.f32.mrf.mxu0
        %v7202 = vadd.f32 0.0, %v7201
        %7203 = vmatprep.mubr.bf16.mxu0 %v6714
        %7204 = vmatmul.mubr.bf16.gmra.mxu0 %v6713
        %v7205 = vpop.f32.mrf.mxu0
        %v7206 = vadd.f32 0.0, %v7205
        %v7207 = vpop.f32.mrf.mxu0
        %v7208 = vadd.f32 0.0, %v7207
        %v7209 = vpop.f32.mrf.mxu0
        %v7210 = vadd.f32 0.0, %v7209
        %v7211 = vpop.f32.mrf.mxu0
        %v7212 = vadd.f32 0.0, %v7211
        %7213 = vdwg.mxu0
        %7214 = vmatprep.subr.bf16.mxu0 %v7020
        %7215 = vmatpush1.bf16.msra.mxu0 %v7019
        %7216 = vmatprep.subr.bf16.mxu0 %v7018
        %7217 = vmatpush1.bf16.msra.mxu0 %v7017
        %7218 = vmatprep.subr.bf16.mxu0 %v7016
        %7219 = vmatpush1.bf16.msra.mxu0 %v7015
        %7220 = vmatprep.subr.bf16.mxu0 %v7014
        %7221 = vmatpush1.bf16.msra.mxu0 %v7013
        %7222 = vmatprep.subr.bf16.mxu0 %v7012
        %7223 = vmatpush1.bf16.msra.mxu0 %v7011
        %7224 = vmatprep.subr.bf16.mxu0 %v7010
        %7225 = vmatpush1.bf16.msra.mxu0 %v7009
        %7226 = vmatprep.subr.bf16.mxu0 %v7008
        %7227 = vmatpush1.bf16.msra.mxu0 %v7007
        %7228 = vmatprep.subr.bf16.mxu0 %v7006
        %7229 = vmatpush1.bf16.msra.mxu0 %v7005
        %7230 = vmatprep.subr.bf16.mxu0 %v7036
        %7231 = vmatpush2.bf16.msra.mxu0 %v7035
        %7232 = vmatprep.subr.bf16.mxu0 %v7034
        %7233 = vmatpush2.bf16.msra.mxu0 %v7033
        %7234 = vmatprep.subr.bf16.mxu0 %v7032
        %7235 = vmatpush2.bf16.msra.mxu0 %v7031
        %7236 = vmatprep.subr.bf16.mxu0 %v7030
        %7237 = vmatpush2.bf16.msra.mxu0 %v7029
        %7238 = vmatprep.subr.bf16.mxu0 %v7028
        %7239 = vmatpush2.bf16.msra.mxu0 %v7027
        %7240 = vmatprep.subr.bf16.mxu0 %v7026
        %7241 = vmatpush2.bf16.msra.mxu0 %v7025
        %7242 = vmatprep.subr.bf16.mxu0 %v7024
        %7243 = vmatpush2.bf16.msra.mxu0 %v7023
        %7244 = vmatprep.subr.bf16.mxu0 %v7022
        %7245 = vmatpush2.bf16.msra.mxu0 %v7021
        %7246 = vmatprep.mubr.bf16.mxu0 %v6688
        %7247 = vmatmul.mubr.bf16.gmra.mxu0 %v6687
        %v7248 = vpop.f32.mrf.mxu0
        %v7249 = vadd.f32 %v7136, %v7248
        %v7250 = vpop.f32.mrf.mxu0
        %v7251 = vadd.f32 %v7138, %v7250
        %v7252 = vpop.f32.mrf.mxu0
        %v7253 = vadd.f32 %v7140, %v7252
        %v7254 = vpop.f32.mrf.mxu0
        %v7255 = vadd.f32 %v7142, %v7254
        %7256 = vmatprep.mubr.bf16.mxu0 %v6692
        %7257 = vmatmul.mubr.bf16.gmra.mxu0 %v6691
        %v7258 = vpop.f32.mrf.mxu0
        %v7259 = vadd.f32 %v7146, %v7258
        %v7260 = vpop.f32.mrf.mxu0
        %v7261 = vadd.f32 %v7148, %v7260
        %v7262 = vpop.f32.mrf.mxu0
        %v7263 = vadd.f32 %v7150, %v7262
        %v7264 = vpop.f32.mrf.mxu0
        %v7265 = vadd.f32 %v7152, %v7264
        %7266 = vmatprep.mubr.bf16.mxu0 %v6696
        %7267 = vmatmul.mubr.bf16.gmra.mxu0 %v6695
        %v7268 = vpop.f32.mrf.mxu0
        %v7269 = vadd.f32 %v7156, %v7268
        %v7270 = vpop.f32.mrf.mxu0
        %v7271 = vadd.f32 %v7158, %v7270
        %v7272 = vpop.f32.mrf.mxu0
        %v7273 = vadd.f32 %v7160, %v7272
        %v7274 = vpop.f32.mrf.mxu0
        %v7275 = vadd.f32 %v7162, %v7274
        %7276 = vmatprep.mubr.bf16.mxu0 %v6700
        %7277 = vmatmul.mubr.bf16.gmra.mxu0 %v6699
        %v7278 = vpop.f32.mrf.mxu0
        %v7279 = vadd.f32 %v7166, %v7278
        %v7280 = vpop.f32.mrf.mxu0
        %v7281 = vadd.f32 %v7168, %v7280
        %v7282 = vpop.f32.mrf.mxu0
        %v7283 = vadd.f32 %v7170, %v7282
        %v7284 = vpop.f32.mrf.mxu0
        %v7285 = vadd.f32 %v7172, %v7284
        %7286 = vmatprep.mubr.bf16.mxu0 %v6704
        %7287 = vmatmul.mubr.bf16.gmra.mxu0 %v6703
        %v7288 = vpop.f32.mrf.mxu0
        %v7289 = vadd.f32 %v7176, %v7288
        %v7290 = vpop.f32.mrf.mxu0
        %v7291 = vadd.f32 %v7178, %v7290
        %v7292 = vpop.f32.mrf.mxu0
        %v7293 = vadd.f32 %v7180, %v7292
        %v7294 = vpop.f32.mrf.mxu0
        %v7295 = vadd.f32 %v7182, %v7294
        %7296 = vmatprep.mubr.bf16.mxu0 %v6708
        %7297 = vmatmul.mubr.bf16.gmra.mxu0 %v6707
        %v7298 = vpop.f32.mrf.mxu0
        %v7299 = vadd.f32 %v7186, %v7298
        %v7300 = vpop.f32.mrf.mxu0
        %v7301 = vadd.f32 %v7188, %v7300
        %v7302 = vpop.f32.mrf.mxu0
        %v7303 = vadd.f32 %v7190, %v7302
        %v7304 = vpop.f32.mrf.mxu0
        %v7305 = vadd.f32 %v7192, %v7304
        %7306 = vmatprep.mubr.bf16.mxu0 %v6712
        %7307 = vmatmul.mubr.bf16.gmra.mxu0 %v6711
        %v7308 = vpop.f32.mrf.mxu0
        %v7309 = vadd.f32 %v7196, %v7308
        %v7310 = vpop.f32.mrf.mxu0
        %v7311 = vadd.f32 %v7198, %v7310
        %v7312 = vpop.f32.mrf.mxu0
        %v7313 = vadd.f32 %v7200, %v7312
        %v7314 = vpop.f32.mrf.mxu0
        %v7315 = vadd.f32 %v7202, %v7314
        %7316 = vmatprep.mubr.bf16.mxu0 %v6716
        %7317 = vmatmul.mubr.bf16.gmra.mxu0 %v6715
        %v7318 = vpop.f32.mrf.mxu0
        %v7319 = vadd.f32 %v7206, %v7318
        %v7320 = vpop.f32.mrf.mxu0
        %v7321 = vadd.f32 %v7208, %v7320
        %v7322 = vpop.f32.mrf.mxu0
        %v7323 = vadd.f32 %v7210, %v7322
        %v7324 = vpop.f32.mrf.mxu0
        %v7325 = vadd.f32 %v7212, %v7324
        %7326 = vdwg.mxu0
        %v7391 = vunpack.c.l.b16 %v5925
        %v7392 = vunpack.c.h.b16 %v5925
        %v7393 = vunpack.c.l.b16 %v5926
        %v7394 = vunpack.c.h.b16 %v5926
        %v7395 = vunpack.c.l.b16 %v5927
        %v7396 = vunpack.c.h.b16 %v5927
        %v7397 = vunpack.c.l.b16 %v5928
        %v7398 = vunpack.c.h.b16 %v5928
        %v7399 = vunpack.c.l.b16 %v5929
        %v7400 = vunpack.c.h.b16 %v5929
        %v7401 = vunpack.c.l.b16 %v5930
        %v7402 = vunpack.c.h.b16 %v5930
        %v7403 = vunpack.c.l.b16 %v5931
        %v7404 = vunpack.c.h.b16 %v5931
        %v7405 = vunpack.c.l.b16 %v5932
        %v7406 = vunpack.c.h.b16 %v5932
        %v7407 = vunpack.c.l.b16 %v5933
        %v7408 = vunpack.c.h.b16 %v5933
        %v7409 = vunpack.c.l.b16 %v5934
        %v7410 = vunpack.c.h.b16 %v5934
        %v7411 = vunpack.c.l.b16 %v5935
        %v7412 = vunpack.c.h.b16 %v5935
        %v7413 = vunpack.c.l.b16 %v5936
        %v7414 = vunpack.c.h.b16 %v5936
        %v7415 = vunpack.c.l.b16 %v5937
        %v7416 = vunpack.c.h.b16 %v5937
        %v7417 = vunpack.c.l.b16 %v5938
        %v7418 = vunpack.c.h.b16 %v5938
        %v7419 = vunpack.c.l.b16 %v5939
        %v7420 = vunpack.c.h.b16 %v5939
        %v7421 = vunpack.c.l.b16 %v5940
        %v7422 = vunpack.c.h.b16 %v5940
        %v7423 = vunpack.c.l.b16 %v5941
        %v7424 = vunpack.c.h.b16 %v5941
        %v7425 = vunpack.c.l.b16 %v5942
        %v7426 = vunpack.c.h.b16 %v5942
        %v7427 = vunpack.c.l.b16 %v5943
        %v7428 = vunpack.c.h.b16 %v5943
        %v7429 = vunpack.c.l.b16 %v5944
        %v7430 = vunpack.c.h.b16 %v5944
        %v7431 = vunpack.c.l.b16 %v5945
        %v7432 = vunpack.c.h.b16 %v5945
        %v7433 = vunpack.c.l.b16 %v5946
        %v7434 = vunpack.c.h.b16 %v5946
        %v7435 = vunpack.c.l.b16 %v5947
        %v7436 = vunpack.c.h.b16 %v5947
        %v7437 = vunpack.c.l.b16 %v5948
        %v7438 = vunpack.c.h.b16 %v5948
        %v7439 = vunpack.c.l.b16 %v5949
        %v7440 = vunpack.c.h.b16 %v5949
        %v7441 = vunpack.c.l.b16 %v5950
        %v7442 = vunpack.c.h.b16 %v5950
        %v7443 = vunpack.c.l.b16 %v5951
        %v7444 = vunpack.c.h.b16 %v5951
        %v7445 = vunpack.c.l.b16 %v5952
        %v7446 = vunpack.c.h.b16 %v5952
        %v7447 = vunpack.c.l.b16 %v5953
        %v7448 = vunpack.c.h.b16 %v5953
        %v7449 = vunpack.c.l.b16 %v5954
        %v7450 = vunpack.c.h.b16 %v5954
        %v7451 = vunpack.c.l.b16 %v5955
        %v7452 = vunpack.c.h.b16 %v5955
        %v7453 = vunpack.c.l.b16 %v5956
        %v7454 = vunpack.c.h.b16 %v5956
        %v7455 = vunpack.c.l.b16 %v5957
        %v7456 = vunpack.c.h.b16 %v5957
        %v7457 = vunpack.c.l.b16 %v5958
        %v7458 = vunpack.c.h.b16 %v5958
        %v7459 = vunpack.c.l.b16 %v5959
        %v7460 = vunpack.c.h.b16 %v5959
        %v7461 = vunpack.c.l.b16 %v5960
        %v7462 = vunpack.c.h.b16 %v5960
        %v7463 = vunpack.c.l.b16 %v5961
        %v7464 = vunpack.c.h.b16 %v5961
        %v7465 = vunpack.c.l.b16 %v5962
        %v7466 = vunpack.c.h.b16 %v5962
        %v7467 = vunpack.c.l.b16 %v5963
        %v7468 = vunpack.c.h.b16 %v5963
        %v7469 = vunpack.c.l.b16 %v5964
        %v7470 = vunpack.c.h.b16 %v5964
        %v7471 = vunpack.c.l.b16 %v5965
        %v7472 = vunpack.c.h.b16 %v5965
        %v7473 = vunpack.c.l.b16 %v5966
        %v7474 = vunpack.c.h.b16 %v5966
        %v7475 = vunpack.c.l.b16 %v5967
        %v7476 = vunpack.c.h.b16 %v5967
        %v7477 = vunpack.c.l.b16 %v5968
        %v7478 = vunpack.c.h.b16 %v5968
        %v7479 = vunpack.c.l.b16 %v5969
        %v7480 = vunpack.c.h.b16 %v5969
        %v7481 = vunpack.c.l.b16 %v5970
        %v7482 = vunpack.c.h.b16 %v5970
        %v7483 = vunpack.c.l.b16 %v5971
        %v7484 = vunpack.c.h.b16 %v5971
        %v7485 = vunpack.c.l.b16 %v5972
        %v7486 = vunpack.c.h.b16 %v5972
        %v7487 = vunpack.c.l.b16 %v5973
        %v7488 = vunpack.c.h.b16 %v5973
        %v7489 = vunpack.c.l.b16 %v5974
        %v7490 = vunpack.c.h.b16 %v5974
        %v7491 = vunpack.c.l.b16 %v5975
        %v7492 = vunpack.c.h.b16 %v5975
        %v7493 = vunpack.c.l.b16 %v5976
        %v7494 = vunpack.c.h.b16 %v5976
        %v7495 = vunpack.c.l.b16 %v5977
        %v7496 = vunpack.c.h.b16 %v5977
        %v7497 = vunpack.c.l.b16 %v5978
        %v7498 = vunpack.c.h.b16 %v5978
        %v7499 = vunpack.c.l.b16 %v5979
        %v7500 = vunpack.c.h.b16 %v5979
        %v7501 = vunpack.c.l.b16 %v5980
        %v7502 = vunpack.c.h.b16 %v5980
        %v7503 = vunpack.c.l.b16 %v5981
        %v7504 = vunpack.c.h.b16 %v5981
        %v7505 = vunpack.c.l.b16 %v5982
        %v7506 = vunpack.c.h.b16 %v5982
        %v7507 = vunpack.c.l.b16 %v5983
        %v7508 = vunpack.c.h.b16 %v5983
        %v7509 = vunpack.c.l.b16 %v5984
        %v7510 = vunpack.c.h.b16 %v5984
        %v7511 = vunpack.c.l.b16 %v5985
        %v7512 = vunpack.c.h.b16 %v5985
        %v7513 = vunpack.c.l.b16 %v5986
        %v7514 = vunpack.c.h.b16 %v5986
        %v7515 = vunpack.c.l.b16 %v5987
        %v7516 = vunpack.c.h.b16 %v5987
        %v7517 = vunpack.c.l.b16 %v5988
        %v7518 = vunpack.c.h.b16 %v5988
        %v7519 = vpack.c.b16 %v7393, %v7391
        %v7520 = vpack.c.b16 %v7394, %v7392
        %v7521 = vpack.c.b16 %v7397, %v7395
        %v7522 = vpack.c.b16 %v7398, %v7396
        %v7523 = vpack.c.b16 %v7401, %v7399
        %v7524 = vpack.c.b16 %v7402, %v7400
        %v7525 = vpack.c.b16 %v7405, %v7403
        %v7526 = vpack.c.b16 %v7406, %v7404
        %v7527 = vpack.c.b16 %v7409, %v7407
        %v7528 = vpack.c.b16 %v7410, %v7408
        %v7529 = vpack.c.b16 %v7413, %v7411
        %v7530 = vpack.c.b16 %v7414, %v7412
        %v7531 = vpack.c.b16 %v7417, %v7415
        %v7532 = vpack.c.b16 %v7418, %v7416
        %v7533 = vpack.c.b16 %v7421, %v7419
        %v7534 = vpack.c.b16 %v7422, %v7420
        %v7535 = vpack.c.b16 %v7425, %v7423
        %v7536 = vpack.c.b16 %v7426, %v7424
        %v7537 = vpack.c.b16 %v7429, %v7427
        %v7538 = vpack.c.b16 %v7430, %v7428
        %v7539 = vpack.c.b16 %v7433, %v7431
        %v7540 = vpack.c.b16 %v7434, %v7432
        %v7541 = vpack.c.b16 %v7437, %v7435
        %v7542 = vpack.c.b16 %v7438, %v7436
        %v7543 = vpack.c.b16 %v7441, %v7439
        %v7544 = vpack.c.b16 %v7442, %v7440
        %v7545 = vpack.c.b16 %v7445, %v7443
        %v7546 = vpack.c.b16 %v7446, %v7444
        %v7547 = vpack.c.b16 %v7449, %v7447
        %v7548 = vpack.c.b16 %v7450, %v7448
        %v7549 = vpack.c.b16 %v7453, %v7451
        %v7550 = vpack.c.b16 %v7454, %v7452
        %v7551 = vpack.c.b16 %v7457, %v7455
        %v7552 = vpack.c.b16 %v7458, %v7456
        %v7553 = vpack.c.b16 %v7461, %v7459
        %v7554 = vpack.c.b16 %v7462, %v7460
        %v7555 = vpack.c.b16 %v7465, %v7463
        %v7556 = vpack.c.b16 %v7466, %v7464
        %v7557 = vpack.c.b16 %v7469, %v7467
        %v7558 = vpack.c.b16 %v7470, %v7468
        %v7559 = vpack.c.b16 %v7473, %v7471
        %v7560 = vpack.c.b16 %v7474, %v7472
        %v7561 = vpack.c.b16 %v7477, %v7475
        %v7562 = vpack.c.b16 %v7478, %v7476
        %v7563 = vpack.c.b16 %v7481, %v7479
        %v7564 = vpack.c.b16 %v7482, %v7480
        %v7565 = vpack.c.b16 %v7485, %v7483
        %v7566 = vpack.c.b16 %v7486, %v7484
        %v7567 = vpack.c.b16 %v7489, %v7487
        %v7568 = vpack.c.b16 %v7490, %v7488
        %v7569 = vpack.c.b16 %v7493, %v7491
        %v7570 = vpack.c.b16 %v7494, %v7492
        %v7571 = vpack.c.b16 %v7497, %v7495
        %v7572 = vpack.c.b16 %v7498, %v7496
        %v7573 = vpack.c.b16 %v7501, %v7499
        %v7574 = vpack.c.b16 %v7502, %v7500
        %v7575 = vpack.c.b16 %v7505, %v7503
        %v7576 = vpack.c.b16 %v7506, %v7504
        %v7577 = vpack.c.b16 %v7509, %v7507
        %v7578 = vpack.c.b16 %v7510, %v7508
        %v7579 = vpack.c.b16 %v7513, %v7511
        %v7580 = vpack.c.b16 %v7514, %v7512
        %v7581 = vpack.c.b16 %v7517, %v7515
        %v7582 = vpack.c.b16 %v7518, %v7516
        %7647 = vmatprep.subr.bf16.mxu0 %v7534
        %7648 = vmatpush1.bf16.msra.mxu0 %v7533
        %7649 = vmatprep.subr.bf16.mxu0 %v7532
        %7650 = vmatpush1.bf16.msra.mxu0 %v7531
        %7651 = vmatprep.subr.bf16.mxu0 %v7530
        %7652 = vmatpush1.bf16.msra.mxu0 %v7529
        %7653 = vmatprep.subr.bf16.mxu0 %v7528
        %7654 = vmatpush1.bf16.msra.mxu0 %v7527
        %7655 = vmatprep.subr.bf16.mxu0 %v7526
        %7656 = vmatpush1.bf16.msra.mxu0 %v7525
        %7657 = vmatprep.subr.bf16.mxu0 %v7524
        %7658 = vmatpush1.bf16.msra.mxu0 %v7523
        %7659 = vmatprep.subr.bf16.mxu0 %v7522
        %7660 = vmatpush1.bf16.msra.mxu0 %v7521
        %7661 = vmatprep.subr.bf16.mxu0 %v7520
        %7662 = vmatpush1.bf16.msra.mxu0 %v7519
        %7663 = vmatprep.subr.bf16.mxu0 %v7550
        %7664 = vmatpush2.bf16.msra.mxu0 %v7549
        %7665 = vmatprep.subr.bf16.mxu0 %v7548
        %7666 = vmatpush2.bf16.msra.mxu0 %v7547
        %7667 = vmatprep.subr.bf16.mxu0 %v7546
        %7668 = vmatpush2.bf16.msra.mxu0 %v7545
        %7669 = vmatprep.subr.bf16.mxu0 %v7544
        %7670 = vmatpush2.bf16.msra.mxu0 %v7543
        %7671 = vmatprep.subr.bf16.mxu0 %v7542
        %7672 = vmatpush2.bf16.msra.mxu0 %v7541
        %7673 = vmatprep.subr.bf16.mxu0 %v7540
        %7674 = vmatpush2.bf16.msra.mxu0 %v7539
        %7675 = vmatprep.subr.bf16.mxu0 %v7538
        %7676 = vmatpush2.bf16.msra.mxu0 %v7537
        %7677 = vmatprep.subr.bf16.mxu0 %v7536
        %7678 = vmatpush2.bf16.msra.mxu0 %v7535
        %7679 = vmatprep.mubr.bf16.mxu0 %v5894
        %7680 = vmatmul.mubr.bf16.gmra.mxu0 %v5893
        %v7681 = vpop.f32.mrf.mxu0
        %v7682 = vadd.f32 %v7249, %v7681
        %v7683 = vpop.f32.mrf.mxu0
        %v7684 = vadd.f32 %v7251, %v7683
        %v7685 = vpop.f32.mrf.mxu0
        %v7686 = vadd.f32 %v7253, %v7685
        %v7687 = vpop.f32.mrf.mxu0
        %v7688 = vadd.f32 %v7255, %v7687
        %7689 = vmatprep.mubr.bf16.mxu0 %v5898
        %7690 = vmatmul.mubr.bf16.gmra.mxu0 %v5897
        %v7691 = vpop.f32.mrf.mxu0
        %v7692 = vadd.f32 %v7259, %v7691
        %v7693 = vpop.f32.mrf.mxu0
        %v7694 = vadd.f32 %v7261, %v7693
        %v7695 = vpop.f32.mrf.mxu0
        %v7696 = vadd.f32 %v7263, %v7695
        %v7697 = vpop.f32.mrf.mxu0
        %v7698 = vadd.f32 %v7265, %v7697
        %7699 = vmatprep.mubr.bf16.mxu0 %v5902
        %7700 = vmatmul.mubr.bf16.gmra.mxu0 %v5901
        %v7701 = vpop.f32.mrf.mxu0
        %v7702 = vadd.f32 %v7269, %v7701
        %v7703 = vpop.f32.mrf.mxu0
        %v7704 = vadd.f32 %v7271, %v7703
        %v7705 = vpop.f32.mrf.mxu0
        %v7706 = vadd.f32 %v7273, %v7705
        %v7707 = vpop.f32.mrf.mxu0
        %v7708 = vadd.f32 %v7275, %v7707
        %7709 = vmatprep.mubr.bf16.mxu0 %v5906
        %7710 = vmatmul.mubr.bf16.gmra.mxu0 %v5905
        %v7711 = vpop.f32.mrf.mxu0
        %v7712 = vadd.f32 %v7279, %v7711
        %v7713 = vpop.f32.mrf.mxu0
        %v7714 = vadd.f32 %v7281, %v7713
        %v7715 = vpop.f32.mrf.mxu0
        %v7716 = vadd.f32 %v7283, %v7715
        %v7717 = vpop.f32.mrf.mxu0
        %v7718 = vadd.f32 %v7285, %v7717
        %7719 = vmatprep.mubr.bf16.mxu0 %v5910
        %7720 = vmatmul.mubr.bf16.gmra.mxu0 %v5909
        %v7721 = vpop.f32.mrf.mxu0
        %v7722 = vadd.f32 %v7289, %v7721
        %v7723 = vpop.f32.mrf.mxu0
        %v7724 = vadd.f32 %v7291, %v7723
        %v7725 = vpop.f32.mrf.mxu0
        %v7726 = vadd.f32 %v7293, %v7725
        %v7727 = vpop.f32.mrf.mxu0
        %v7728 = vadd.f32 %v7295, %v7727
        %7729 = vmatprep.mubr.bf16.mxu0 %v5914
        %7730 = vmatmul.mubr.bf16.gmra.mxu0 %v5913
        %v7731 = vpop.f32.mrf.mxu0
        %v7732 = vadd.f32 %v7299, %v7731
        %v7733 = vpop.f32.mrf.mxu0
        %v7734 = vadd.f32 %v7301, %v7733
        %v7735 = vpop.f32.mrf.mxu0
        %v7736 = vadd.f32 %v7303, %v7735
        %v7737 = vpop.f32.mrf.mxu0
        %v7738 = vadd.f32 %v7305, %v7737
        %7739 = vmatprep.mubr.bf16.mxu0 %v5918
        %7740 = vmatmul.mubr.bf16.gmra.mxu0 %v5917
        %v7741 = vpop.f32.mrf.mxu0
        %v7742 = vadd.f32 %v7309, %v7741
        %v7743 = vpop.f32.mrf.mxu0
        %v7744 = vadd.f32 %v7311, %v7743
        %v7745 = vpop.f32.mrf.mxu0
        %v7746 = vadd.f32 %v7313, %v7745
        %v7747 = vpop.f32.mrf.mxu0
        %v7748 = vadd.f32 %v7315, %v7747
        %7749 = vmatprep.mubr.bf16.mxu0 %v5922
        %7750 = vmatmul.mubr.bf16.gmra.mxu0 %v5921
        %v7751 = vpop.f32.mrf.mxu0
        %v7752 = vadd.f32 %v7319, %v7751
        %v7753 = vpop.f32.mrf.mxu0
        %v7754 = vadd.f32 %v7321, %v7753
        %v7755 = vpop.f32.mrf.mxu0
        %v7756 = vadd.f32 %v7323, %v7755
        %v7757 = vpop.f32.mrf.mxu0
        %v7758 = vadd.f32 %v7325, %v7757
        %7759 = vdwg.mxu0
        %7760 = vmatprep.subr.bf16.mxu0 %v7566
        %7761 = vmatpush1.bf16.msra.mxu0 %v7565
        %7762 = vmatprep.subr.bf16.mxu0 %v7564
        %7763 = vmatpush1.bf16.msra.mxu0 %v7563
        %7764 = vmatprep.subr.bf16.mxu0 %v7562
        %7765 = vmatpush1.bf16.msra.mxu0 %v7561
        %7766 = vmatprep.subr.bf16.mxu0 %v7560
        %7767 = vmatpush1.bf16.msra.mxu0 %v7559
        %7768 = vmatprep.subr.bf16.mxu0 %v7558
        %7769 = vmatpush1.bf16.msra.mxu0 %v7557
        %7770 = vmatprep.subr.bf16.mxu0 %v7556
        %7771 = vmatpush1.bf16.msra.mxu0 %v7555
        %7772 = vmatprep.subr.bf16.mxu0 %v7554
        %7773 = vmatpush1.bf16.msra.mxu0 %v7553
        %7774 = vmatprep.subr.bf16.mxu0 %v7552
        %7775 = vmatpush1.bf16.msra.mxu0 %v7551
        %7776 = vmatprep.subr.bf16.mxu0 %v7582
        %7777 = vmatpush2.bf16.msra.mxu0 %v7581
        %7778 = vmatprep.subr.bf16.mxu0 %v7580
        %7779 = vmatpush2.bf16.msra.mxu0 %v7579
        %7780 = vmatprep.subr.bf16.mxu0 %v7578
        %7781 = vmatpush2.bf16.msra.mxu0 %v7577
        %7782 = vmatprep.subr.bf16.mxu0 %v7576
        %7783 = vmatpush2.bf16.msra.mxu0 %v7575
        %7784 = vmatprep.subr.bf16.mxu0 %v7574
        %7785 = vmatpush2.bf16.msra.mxu0 %v7573
        %7786 = vmatprep.subr.bf16.mxu0 %v7572
        %7787 = vmatpush2.bf16.msra.mxu0 %v7571
        %7788 = vmatprep.subr.bf16.mxu0 %v7570
        %7789 = vmatpush2.bf16.msra.mxu0 %v7569
        %7790 = vmatprep.subr.bf16.mxu0 %v7568
        %7791 = vmatpush2.bf16.msra.mxu0 %v7567
        %7792 = vmatprep.mubr.bf16.mxu0 %v5896
        %7793 = vmatmul.mubr.bf16.gmra.mxu0 %v5895
        %v7794 = vpop.f32.mrf.mxu0
        %v7795 = vadd.f32 %v7682, %v7794
        %v7796 = vpop.f32.mrf.mxu0
        %v7797 = vadd.f32 %v7684, %v7796
        %v7798 = vpop.f32.mrf.mxu0
        %v7799 = vadd.f32 %v7686, %v7798
        %v7800 = vpop.f32.mrf.mxu0
        %v7801 = vadd.f32 %v7688, %v7800
        %7802 = vmatprep.mubr.bf16.mxu0 %v5900
        %7803 = vmatmul.mubr.bf16.gmra.mxu0 %v5899
        %v7804 = vpop.f32.mrf.mxu0
        %v7805 = vadd.f32 %v7692, %v7804
        %v7806 = vpop.f32.mrf.mxu0
        %v7807 = vadd.f32 %v7694, %v7806
        %v7808 = vpop.f32.mrf.mxu0
        %v7809 = vadd.f32 %v7696, %v7808
        %v7810 = vpop.f32.mrf.mxu0
        %v7811 = vadd.f32 %v7698, %v7810
        %7812 = vmatprep.mubr.bf16.mxu0 %v5904
        %7813 = vmatmul.mubr.bf16.gmra.mxu0 %v5903
        %v7814 = vpop.f32.mrf.mxu0
        %v7815 = vadd.f32 %v7702, %v7814
        %v7816 = vpop.f32.mrf.mxu0
        %v7817 = vadd.f32 %v7704, %v7816
        %v7818 = vpop.f32.mrf.mxu0
        %v7819 = vadd.f32 %v7706, %v7818
        %v7820 = vpop.f32.mrf.mxu0
        %v7821 = vadd.f32 %v7708, %v7820
        %7822 = vmatprep.mubr.bf16.mxu0 %v5908
        %7823 = vmatmul.mubr.bf16.gmra.mxu0 %v5907
        %v7824 = vpop.f32.mrf.mxu0
        %v7825 = vadd.f32 %v7712, %v7824
        %v7826 = vpop.f32.mrf.mxu0
        %v7827 = vadd.f32 %v7714, %v7826
        %v7828 = vpop.f32.mrf.mxu0
        %v7829 = vadd.f32 %v7716, %v7828
        %v7830 = vpop.f32.mrf.mxu0
        %v7831 = vadd.f32 %v7718, %v7830
        %7832 = vmatprep.mubr.bf16.mxu0 %v5912
        %7833 = vmatmul.mubr.bf16.gmra.mxu0 %v5911
        %v7834 = vpop.f32.mrf.mxu0
        %v7835 = vadd.f32 %v7722, %v7834
        %v7836 = vpop.f32.mrf.mxu0
        %v7837 = vadd.f32 %v7724, %v7836
        %v7838 = vpop.f32.mrf.mxu0
        %v7839 = vadd.f32 %v7726, %v7838
        %v7840 = vpop.f32.mrf.mxu0
        %v7841 = vadd.f32 %v7728, %v7840
        %7842 = vmatprep.mubr.bf16.mxu0 %v5916
        %7843 = vmatmul.mubr.bf16.gmra.mxu0 %v5915
        %v7844 = vpop.f32.mrf.mxu0
        %v7845 = vadd.f32 %v7732, %v7844
        %v7846 = vpop.f32.mrf.mxu0
        %v7847 = vadd.f32 %v7734, %v7846
        %v7848 = vpop.f32.mrf.mxu0
        %v7849 = vadd.f32 %v7736, %v7848
        %v7850 = vpop.f32.mrf.mxu0
        %v7851 = vadd.f32 %v7738, %v7850
        %7852 = vmatprep.mubr.bf16.mxu0 %v5920
        %7853 = vmatmul.mubr.bf16.gmra.mxu0 %v5919
        %v7854 = vpop.f32.mrf.mxu0
        %v7855 = vadd.f32 %v7742, %v7854
        %v7856 = vpop.f32.mrf.mxu0
        %v7857 = vadd.f32 %v7744, %v7856
        %v7858 = vpop.f32.mrf.mxu0
        %v7859 = vadd.f32 %v7746, %v7858
        %v7860 = vpop.f32.mrf.mxu0
        %v7861 = vadd.f32 %v7748, %v7860
        %7862 = vmatprep.mubr.bf16.mxu0 %v5924
        %7863 = vmatmul.mubr.bf16.gmra.mxu0 %v5923
        %v7864 = vpop.f32.mrf.mxu0
        %v7865 = vadd.f32 %v7752, %v7864
        %v7866 = vpop.f32.mrf.mxu0
        %v7867 = vadd.f32 %v7754, %v7866
        %v7868 = vpop.f32.mrf.mxu0
        %v7869 = vadd.f32 %v7756, %v7868
        %v7870 = vpop.f32.mrf.mxu0
        %v7871 = vadd.f32 %v7758, %v7870
        %7872 = vdwg.mxu0
        %v7873 = vld [vmem:[%s10] sm:$0x3]
        %v7875 = vlaneseq
        %v7876 = vshrl.u32 %v7875, 7
        %v7877 = vsub.s32 0, %v7876
        %v7878 = vrot.slane %v7873, %v7877
        %v7879 = vlaneseq
        %v7880 = vshrl.u32 %v7879, 7
        %v7881 = vsub.s32 1, %v7880
        %v7882 = vrot.slane %v7873, %v7881
        %v7885 = vadd.f32 %v7795, %v7878
        %v7886 = vadd.f32 %v7797, %v7882
        %v7887 = vadd.f32 %v7799, %v7878
        %v7888 = vadd.f32 %v7801, %v7882
        %v7889 = vadd.f32 %v7805, %v7878
        %v7890 = vadd.f32 %v7807, %v7882
        %v7891 = vadd.f32 %v7809, %v7878
        %v7892 = vadd.f32 %v7811, %v7882
        %v7893 = vadd.f32 %v7815, %v7878
        %v7894 = vadd.f32 %v7817, %v7882
        %v7895 = vadd.f32 %v7819, %v7878
        %v7896 = vadd.f32 %v7821, %v7882
        %v7897 = vadd.f32 %v7825, %v7878
        %v7898 = vadd.f32 %v7827, %v7882
        %v7899 = vadd.f32 %v7829, %v7878
        %v7900 = vadd.f32 %v7831, %v7882
        %v7901 = vadd.f32 %v7835, %v7878
        %v7902 = vadd.f32 %v7837, %v7882
        %v7903 = vadd.f32 %v7839, %v7878
        %v7904 = vadd.f32 %v7841, %v7882
        %v7905 = vadd.f32 %v7845, %v7878
        %v7906 = vadd.f32 %v7847, %v7882
        %v7907 = vadd.f32 %v7849, %v7878
        %v7908 = vadd.f32 %v7851, %v7882
        %v7909 = vadd.f32 %v7855, %v7878
        %v7910 = vadd.f32 %v7857, %v7882
        %v7911 = vadd.f32 %v7859, %v7878
        %v7912 = vadd.f32 %v7861, %v7882
        %v7913 = vadd.f32 %v7865, %v7878
        %v7914 = vadd.f32 %v7867, %v7882
        %v7915 = vadd.f32 %v7869, %v7878
        %v7916 = vadd.f32 %v7871, %v7882
        %v7917 = vadd.f32 %v5149, %v7885
        %v7918 = vadd.f32 %v5150, %v7886
        %v7919 = vadd.f32 %v5151, %v7887
        %v7920 = vadd.f32 %v5152, %v7888
        %v7921 = vadd.f32 %v5153, %v7889
        %v7922 = vadd.f32 %v5154, %v7890
        %v7923 = vadd.f32 %v5155, %v7891
        %v7924 = vadd.f32 %v5156, %v7892
        %v7925 = vadd.f32 %v5157, %v7893
        %v7926 = vadd.f32 %v5158, %v7894
        %v7927 = vadd.f32 %v5159, %v7895
        %v7928 = vadd.f32 %v5160, %v7896
        %v7929 = vadd.f32 %v5161, %v7897
        %v7930 = vadd.f32 %v5162, %v7898
        %v7931 = vadd.f32 %v5163, %v7899
        %v7932 = vadd.f32 %v5164, %v7900
        %v7933 = vadd.f32 %v5165, %v7901
        %v7934 = vadd.f32 %v5166, %v7902
        %v7935 = vadd.f32 %v5167, %v7903
        %v7936 = vadd.f32 %v5168, %v7904
        %v7937 = vadd.f32 %v5169, %v7905
        %v7938 = vadd.f32 %v5170, %v7906
        %v7939 = vadd.f32 %v5171, %v7907
        %v7940 = vadd.f32 %v5172, %v7908
        %v7941 = vadd.f32 %v5173, %v7909
        %v7942 = vadd.f32 %v5174, %v7910
        %v7943 = vadd.f32 %v5175, %v7911
        %v7944 = vadd.f32 %v5176, %v7912
        %v7945 = vadd.f32 %v5177, %v7913
        %v7946 = vadd.f32 %v5178, %v7914
        %v7947 = vadd.f32 %v5179, %v7915
        %v7948 = vadd.f32 %v5180, %v7916
        %v7949 = vld [vmem:[%s11] sm:$0x3]
        %v7950 = vld [vmem:[%s12] sm:$0x3]
        %v7951 = vadd.f32 %v7917, %v7918
        %7952 = vadd.xlane.f32.xlu0 %v7951
        %v7953 = vpop.xlane.xlu0 %7952
        %v7954 = vadd.f32 %v7919, %v7920
        %7955 = vadd.xlane.f32.xlu0 %v7954
        %v7956 = vpop.xlane.xlu0 %7955
        %v7957 = vadd.f32 %v7921, %v7922
        %7958 = vadd.xlane.f32.xlu0 %v7957
        %v7959 = vpop.xlane.xlu0 %7958
        %v7960 = vadd.f32 %v7923, %v7924
        %7961 = vadd.xlane.f32.xlu0 %v7960
        %v7962 = vpop.xlane.xlu0 %7961
        %v7963 = vadd.f32 %v7925, %v7926
        %7964 = vadd.xlane.f32.xlu0 %v7963
        %v7965 = vpop.xlane.xlu0 %7964
        %v7966 = vadd.f32 %v7927, %v7928
        %7967 = vadd.xlane.f32.xlu0 %v7966
        %v7968 = vpop.xlane.xlu0 %7967
        %v7969 = vadd.f32 %v7929, %v7930
        %7970 = vadd.xlane.f32.xlu0 %v7969
        %v7971 = vpop.xlane.xlu0 %7970
        %v7972 = vadd.f32 %v7931, %v7932
        %7973 = vadd.xlane.f32.xlu0 %v7972
        %v7974 = vpop.xlane.xlu0 %7973
        %v7975 = vadd.f32 %v7933, %v7934
        %7976 = vadd.xlane.f32.xlu0 %v7975
        %v7977 = vpop.xlane.xlu0 %7976
        %v7978 = vadd.f32 %v7935, %v7936
        %7979 = vadd.xlane.f32.xlu0 %v7978
        %v7980 = vpop.xlane.xlu0 %7979
        %v7981 = vadd.f32 %v7937, %v7938
        %7982 = vadd.xlane.f32.xlu0 %v7981
        %v7983 = vpop.xlane.xlu0 %7982
        %v7984 = vadd.f32 %v7939, %v7940
        %7985 = vadd.xlane.f32.xlu0 %v7984
        %v7986 = vpop.xlane.xlu0 %7985
        %v7987 = vadd.f32 %v7941, %v7942
        %7988 = vadd.xlane.f32.xlu0 %v7987
        %v7989 = vpop.xlane.xlu0 %7988
        %v7990 = vadd.f32 %v7943, %v7944
        %7991 = vadd.xlane.f32.xlu0 %v7990
        %v7992 = vpop.xlane.xlu0 %7991
        %v7993 = vadd.f32 %v7945, %v7946
        %7994 = vadd.xlane.f32.xlu0 %v7993
        %v7995 = vpop.xlane.xlu0 %7994
        %v7996 = vadd.f32 %v7947, %v7948
        %7997 = vadd.xlane.f32.xlu0 %v7996
        %v7998 = vpop.xlane.xlu0 %7997
        %v7999 = vmul.f32 %v7953, %v4886
        %v8000 = vmul.f32 %v7956, %v4886
        %v8001 = vmul.f32 %v7959, %v4886
        %v8002 = vmul.f32 %v7962, %v4886
        %v8003 = vmul.f32 %v7965, %v4886
        %v8004 = vmul.f32 %v7968, %v4886
        %v8005 = vmul.f32 %v7971, %v4886
        %v8006 = vmul.f32 %v7974, %v4886
        %v8007 = vmul.f32 %v7977, %v4886
        %v8008 = vmul.f32 %v7980, %v4886
        %v8009 = vmul.f32 %v7983, %v4886
        %v8010 = vmul.f32 %v7986, %v4886
        %v8011 = vmul.f32 %v7989, %v4886
        %v8012 = vmul.f32 %v7992, %v4886
        %v8013 = vmul.f32 %v7995, %v4886
        %v8014 = vmul.f32 %v7998, %v4886
        %v8015 = vsub.f32 %v7917, %v7999
        %v8016 = vsub.f32 %v7918, %v7999
        %v8017 = vsub.f32 %v7919, %v8000
        %v8018 = vsub.f32 %v7920, %v8000
        %v8019 = vsub.f32 %v7921, %v8001
        %v8020 = vsub.f32 %v7922, %v8001
        %v8021 = vsub.f32 %v7923, %v8002
        %v8022 = vsub.f32 %v7924, %v8002
        %v8023 = vsub.f32 %v7925, %v8003
        %v8024 = vsub.f32 %v7926, %v8003
        %v8025 = vsub.f32 %v7927, %v8004
        %v8026 = vsub.f32 %v7928, %v8004
        %v8027 = vsub.f32 %v7929, %v8005
        %v8028 = vsub.f32 %v7930, %v8005
        %v8029 = vsub.f32 %v7931, %v8006
        %v8030 = vsub.f32 %v7932, %v8006
        %v8031 = vsub.f32 %v7933, %v8007
        %v8032 = vsub.f32 %v7934, %v8007
        %v8033 = vsub.f32 %v7935, %v8008
        %v8034 = vsub.f32 %v7936, %v8008
        %v8035 = vsub.f32 %v7937, %v8009
        %v8036 = vsub.f32 %v7938, %v8009
        %v8037 = vsub.f32 %v7939, %v8010
        %v8038 = vsub.f32 %v7940, %v8010
        %v8039 = vsub.f32 %v7941, %v8011
        %v8040 = vsub.f32 %v7942, %v8011
        %v8041 = vsub.f32 %v7943, %v8012
        %v8042 = vsub.f32 %v7944, %v8012
        %v8043 = vsub.f32 %v7945, %v8013
        %v8044 = vsub.f32 %v7946, %v8013
        %v8045 = vsub.f32 %v7947, %v8014
        %v8046 = vsub.f32 %v7948, %v8014
        %v8047 = vmul.f32 %v8015, %v8015
        %v8048 = vmul.f32 %v8016, %v8016
        %v8049 = vmul.f32 %v8017, %v8017
        %v8050 = vmul.f32 %v8018, %v8018
        %v8051 = vmul.f32 %v8019, %v8019
        %v8052 = vmul.f32 %v8020, %v8020
        %v8053 = vmul.f32 %v8021, %v8021
        %v8054 = vmul.f32 %v8022, %v8022
        %v8055 = vmul.f32 %v8023, %v8023
        %v8056 = vmul.f32 %v8024, %v8024
        %v8057 = vmul.f32 %v8025, %v8025
        %v8058 = vmul.f32 %v8026, %v8026
        %v8059 = vmul.f32 %v8027, %v8027
        %v8060 = vmul.f32 %v8028, %v8028
        %v8061 = vmul.f32 %v8029, %v8029
        %v8062 = vmul.f32 %v8030, %v8030
        %v8063 = vmul.f32 %v8031, %v8031
        %v8064 = vmul.f32 %v8032, %v8032
        %v8065 = vmul.f32 %v8033, %v8033
        %v8066 = vmul.f32 %v8034, %v8034
        %v8067 = vmul.f32 %v8035, %v8035
        %v8068 = vmul.f32 %v8036, %v8036
        %v8069 = vmul.f32 %v8037, %v8037
        %v8070 = vmul.f32 %v8038, %v8038
        %v8071 = vmul.f32 %v8039, %v8039
        %v8072 = vmul.f32 %v8040, %v8040
        %v8073 = vmul.f32 %v8041, %v8041
        %v8074 = vmul.f32 %v8042, %v8042
        %v8075 = vmul.f32 %v8043, %v8043
        %v8076 = vmul.f32 %v8044, %v8044
        %v8077 = vmul.f32 %v8045, %v8045
        %v8078 = vmul.f32 %v8046, %v8046
        %v8079 = vadd.f32 %v8047, %v8048
        %8080 = vadd.xlane.f32.xlu0 %v8079
        %v8081 = vpop.xlane.xlu0 %8080
        %v8082 = vadd.f32 %v8049, %v8050
        %8083 = vadd.xlane.f32.xlu0 %v8082
        %v8084 = vpop.xlane.xlu0 %8083
        %v8085 = vadd.f32 %v8051, %v8052
        %8086 = vadd.xlane.f32.xlu0 %v8085
        %v8087 = vpop.xlane.xlu0 %8086
        %v8088 = vadd.f32 %v8053, %v8054
        %8089 = vadd.xlane.f32.xlu0 %v8088
        %v8090 = vpop.xlane.xlu0 %8089
        %v8091 = vadd.f32 %v8055, %v8056
        %8092 = vadd.xlane.f32.xlu0 %v8091
        %v8093 = vpop.xlane.xlu0 %8092
        %v8094 = vadd.f32 %v8057, %v8058
        %8095 = vadd.xlane.f32.xlu0 %v8094
        %v8096 = vpop.xlane.xlu0 %8095
        %v8097 = vadd.f32 %v8059, %v8060
        %8098 = vadd.xlane.f32.xlu0 %v8097
        %v8099 = vpop.xlane.xlu0 %8098
        %v8100 = vadd.f32 %v8061, %v8062
        %8101 = vadd.xlane.f32.xlu0 %v8100
        %v8102 = vpop.xlane.xlu0 %8101
        %v8103 = vadd.f32 %v8063, %v8064
        %8104 = vadd.xlane.f32.xlu0 %v8103
        %v8105 = vpop.xlane.xlu0 %8104
        %v8106 = vadd.f32 %v8065, %v8066
        %8107 = vadd.xlane.f32.xlu0 %v8106
        %v8108 = vpop.xlane.xlu0 %8107
        %v8109 = vadd.f32 %v8067, %v8068
        %8110 = vadd.xlane.f32.xlu0 %v8109
        %v8111 = vpop.xlane.xlu0 %8110
        %v8112 = vadd.f32 %v8069, %v8070
        %8113 = vadd.xlane.f32.xlu0 %v8112
        %v8114 = vpop.xlane.xlu0 %8113
        %v8115 = vadd.f32 %v8071, %v8072
        %8116 = vadd.xlane.f32.xlu0 %v8115
        %v8117 = vpop.xlane.xlu0 %8116
        %v8118 = vadd.f32 %v8073, %v8074
        %8119 = vadd.xlane.f32.xlu0 %v8118
        %v8120 = vpop.xlane.xlu0 %8119
        %v8121 = vadd.f32 %v8075, %v8076
        %8122 = vadd.xlane.f32.xlu0 %v8121
        %v8123 = vpop.xlane.xlu0 %8122
        %v8124 = vadd.f32 %v8077, %v8078
        %8125 = vadd.xlane.f32.xlu0 %v8124
        %v8126 = vpop.xlane.xlu0 %8125
        %v8127 = vmul.f32 %v8081, %v4886
        %v8128 = vmul.f32 %v8084, %v4886
        %v8129 = vmul.f32 %v8087, %v4886
        %v8130 = vmul.f32 %v8090, %v4886
        %v8131 = vmul.f32 %v8093, %v4886
        %v8132 = vmul.f32 %v8096, %v4886
        %v8133 = vmul.f32 %v8099, %v4886
        %v8134 = vmul.f32 %v8102, %v4886
        %v8135 = vmul.f32 %v8105, %v4886
        %v8136 = vmul.f32 %v8108, %v4886
        %v8137 = vmul.f32 %v8111, %v4886
        %v8138 = vmul.f32 %v8114, %v4886
        %v8139 = vmul.f32 %v8117, %v4886
        %v8140 = vmul.f32 %v8120, %v4886
        %v8141 = vmul.f32 %v8123, %v4886
        %v8142 = vmul.f32 %v8126, %v4886
        %v8143 = vadd.f32 %v8127, 1e-05
        %v8144 = vadd.f32 %v8128, 1e-05
        %v8145 = vadd.f32 %v8129, 1e-05
        %v8146 = vadd.f32 %v8130, 1e-05
        %v8147 = vadd.f32 %v8131, 1e-05
        %v8148 = vadd.f32 %v8132, 1e-05
        %v8149 = vadd.f32 %v8133, 1e-05
        %v8150 = vadd.f32 %v8134, 1e-05
        %v8151 = vadd.f32 %v8135, 1e-05
        %v8152 = vadd.f32 %v8136, 1e-05
        %v8153 = vadd.f32 %v8137, 1e-05
        %v8154 = vadd.f32 %v8138, 1e-05
        %v8155 = vadd.f32 %v8139, 1e-05
        %v8156 = vadd.f32 %v8140, 1e-05
        %v8157 = vadd.f32 %v8141, 1e-05
        %v8158 = vadd.f32 %v8142, 1e-05
        %v8159 = vrsqrt.pop %v8143
        %v8160 = vrsqrt.pop %v8144
        %v8161 = vrsqrt.pop %v8145
        %v8162 = vrsqrt.pop %v8146
        %v8163 = vrsqrt.pop %v8147
        %v8164 = vrsqrt.pop %v8148
        %v8165 = vrsqrt.pop %v8149
        %v8166 = vrsqrt.pop %v8150
        %v8167 = vrsqrt.pop %v8151
        %v8168 = vrsqrt.pop %v8152
        %v8169 = vrsqrt.pop %v8153
        %v8170 = vrsqrt.pop %v8154
        %v8171 = vrsqrt.pop %v8155
        %v8172 = vrsqrt.pop %v8156
        %v8173 = vrsqrt.pop %v8157
        %v8174 = vrsqrt.pop %v8158
        %v8175 = vmul.f32 %v8015, %v8159
        %v8176 = vmul.f32 %v8016, %v8159
        %v8177 = vmul.f32 %v8017, %v8160
        %v8178 = vmul.f32 %v8018, %v8160
        %v8179 = vmul.f32 %v8019, %v8161
        %v8180 = vmul.f32 %v8020, %v8161
        %v8181 = vmul.f32 %v8021, %v8162
        %v8182 = vmul.f32 %v8022, %v8162
        %v8183 = vmul.f32 %v8023, %v8163
        %v8184 = vmul.f32 %v8024, %v8163
        %v8185 = vmul.f32 %v8025, %v8164
        %v8186 = vmul.f32 %v8026, %v8164
        %v8187 = vmul.f32 %v8027, %v8165
        %v8188 = vmul.f32 %v8028, %v8165
        %v8189 = vmul.f32 %v8029, %v8166
        %v8190 = vmul.f32 %v8030, %v8166
        %v8191 = vmul.f32 %v8031, %v8167
        %v8192 = vmul.f32 %v8032, %v8167
        %v8193 = vmul.f32 %v8033, %v8168
        %v8194 = vmul.f32 %v8034, %v8168
        %v8195 = vmul.f32 %v8035, %v8169
        %v8196 = vmul.f32 %v8036, %v8169
        %v8197 = vmul.f32 %v8037, %v8170
        %v8198 = vmul.f32 %v8038, %v8170
        %v8199 = vmul.f32 %v8039, %v8171
        %v8200 = vmul.f32 %v8040, %v8171
        %v8201 = vmul.f32 %v8041, %v8172
        %v8202 = vmul.f32 %v8042, %v8172
        %v8203 = vmul.f32 %v8043, %v8173
        %v8204 = vmul.f32 %v8044, %v8173
        %v8205 = vmul.f32 %v8045, %v8174
        %v8206 = vmul.f32 %v8046, %v8174
        %v8208 = vlaneseq
        %v8209 = vshrl.u32 %v8208, 7
        %v8210 = vsub.s32 0, %v8209
        %v8211 = vrot.slane %v7949, %v8210
        %v8212 = vlaneseq
        %v8213 = vshrl.u32 %v8212, 7
        %v8214 = vsub.s32 1, %v8213
        %v8215 = vrot.slane %v7949, %v8214
        %v8218 = vmul.f32 %v8175, %v8211
        %v8219 = vmul.f32 %v8176, %v8215
        %v8220 = vmul.f32 %v8177, %v8211
        %v8221 = vmul.f32 %v8178, %v8215
        %v8222 = vmul.f32 %v8179, %v8211
        %v8223 = vmul.f32 %v8180, %v8215
        %v8224 = vmul.f32 %v8181, %v8211
        %v8225 = vmul.f32 %v8182, %v8215
        %v8226 = vmul.f32 %v8183, %v8211
        %v8227 = vmul.f32 %v8184, %v8215
        %v8228 = vmul.f32 %v8185, %v8211
        %v8229 = vmul.f32 %v8186, %v8215
        %v8230 = vmul.f32 %v8187, %v8211
        %v8231 = vmul.f32 %v8188, %v8215
        %v8232 = vmul.f32 %v8189, %v8211
        %v8233 = vmul.f32 %v8190, %v8215
        %v8234 = vmul.f32 %v8191, %v8211
        %v8235 = vmul.f32 %v8192, %v8215
        %v8236 = vmul.f32 %v8193, %v8211
        %v8237 = vmul.f32 %v8194, %v8215
        %v8238 = vmul.f32 %v8195, %v8211
        %v8239 = vmul.f32 %v8196, %v8215
        %v8240 = vmul.f32 %v8197, %v8211
        %v8241 = vmul.f32 %v8198, %v8215
        %v8242 = vmul.f32 %v8199, %v8211
        %v8243 = vmul.f32 %v8200, %v8215
        %v8244 = vmul.f32 %v8201, %v8211
        %v8245 = vmul.f32 %v8202, %v8215
        %v8246 = vmul.f32 %v8203, %v8211
        %v8247 = vmul.f32 %v8204, %v8215
        %v8248 = vmul.f32 %v8205, %v8211
        %v8249 = vmul.f32 %v8206, %v8215
        %v8251 = vlaneseq
        %v8252 = vshrl.u32 %v8251, 7
        %v8253 = vsub.s32 0, %v8252
        %v8254 = vrot.slane %v7950, %v8253
        %v8255 = vlaneseq
        %v8256 = vshrl.u32 %v8255, 7
        %v8257 = vsub.s32 1, %v8256
        %v8258 = vrot.slane %v7950, %v8257
        %v8261 = vadd.f32 %v8218, %v8254
        %v8262 = vadd.f32 %v8219, %v8258
        %v8263 = vadd.f32 %v8220, %v8254
        %v8264 = vadd.f32 %v8221, %v8258
        %v8265 = vadd.f32 %v8222, %v8254
        %v8266 = vadd.f32 %v8223, %v8258
        %v8267 = vadd.f32 %v8224, %v8254
        %v8268 = vadd.f32 %v8225, %v8258
        %v8269 = vadd.f32 %v8226, %v8254
        %v8270 = vadd.f32 %v8227, %v8258
        %v8271 = vadd.f32 %v8228, %v8254
        %v8272 = vadd.f32 %v8229, %v8258
        %v8273 = vadd.f32 %v8230, %v8254
        %v8274 = vadd.f32 %v8231, %v8258
        %v8275 = vadd.f32 %v8232, %v8254
        %v8276 = vadd.f32 %v8233, %v8258
        %v8277 = vadd.f32 %v8234, %v8254
        %v8278 = vadd.f32 %v8235, %v8258
        %v8279 = vadd.f32 %v8236, %v8254
        %v8280 = vadd.f32 %v8237, %v8258
        %v8281 = vadd.f32 %v8238, %v8254
        %v8282 = vadd.f32 %v8239, %v8258
        %v8283 = vadd.f32 %v8240, %v8254
        %v8284 = vadd.f32 %v8241, %v8258
        %v8285 = vadd.f32 %v8242, %v8254
        %v8286 = vadd.f32 %v8243, %v8258
        %v8287 = vadd.f32 %v8244, %v8254
        %v8288 = vadd.f32 %v8245, %v8258
        %v8289 = vadd.f32 %v8246, %v8254
        %v8290 = vadd.f32 %v8247, %v8258
        %v8291 = vadd.f32 %v8248, %v8254
        %v8292 = vadd.f32 %v8249, %v8258
        %8293 = vst [vmem:[%s548] sm:$0xff] %v8261
        %8294 = vst [vmem:[%s548 + $0x8] sm:$0xff] %v8262
        %8295 = vst [vmem:[%s548 + $0x10] sm:$0xff] %v8263
        %8296 = vst [vmem:[%s548 + $0x18] sm:$0xff] %v8264
        %8297 = vst [vmem:[%s548 + $0x20] sm:$0xff] %v8265
        %8298 = vst [vmem:[%s548 + $0x28] sm:$0xff] %v8266
        %8299 = vst [vmem:[%s548 + $0x30] sm:$0xff] %v8267
        %8300 = vst [vmem:[%s548 + $0x38] sm:$0xff] %v8268
        %8301 = vst [vmem:[%s548 + $0x40] sm:$0xff] %v8269
        %8302 = vst [vmem:[%s548 + $0x48] sm:$0xff] %v8270
        %8303 = vst [vmem:[%s548 + $0x50] sm:$0xff] %v8271
        %8304 = vst [vmem:[%s548 + $0x58] sm:$0xff] %v8272
        %8305 = vst [vmem:[%s548 + $0x60] sm:$0xff] %v8273
        %8306 = vst [vmem:[%s548 + $0x68] sm:$0xff] %v8274
        %8307 = vst [vmem:[%s548 + $0x70] sm:$0xff] %v8275
        %8308 = vst [vmem:[%s548 + $0x78] sm:$0xff] %v8276
        %8309 = vst [vmem:[%s548 + $0x80] sm:$0xff] %v8277
        %8310 = vst [vmem:[%s548 + $0x88] sm:$0xff] %v8278
        %8311 = vst [vmem:[%s548 + $0x90] sm:$0xff] %v8279
        %8312 = vst [vmem:[%s548 + $0x98] sm:$0xff] %v8280
        %8313 = vst [vmem:[%s548 + $0xa0] sm:$0xff] %v8281
        %8314 = vst [vmem:[%s548 + $0xa8] sm:$0xff] %v8282
        %8315 = vst [vmem:[%s548 + $0xb0] sm:$0xff] %v8283
        %8316 = vst [vmem:[%s548 + $0xb8] sm:$0xff] %v8284
        %8317 = vst [vmem:[%s548 + $0xc0] sm:$0xff] %v8285
        %8318 = vst [vmem:[%s548 + $0xc8] sm:$0xff] %v8286
        %8319 = vst [vmem:[%s548 + $0xd0] sm:$0xff] %v8287
        %8320 = vst [vmem:[%s548 + $0xd8] sm:$0xff] %v8288
        %8321 = vst [vmem:[%s548 + $0xe0] sm:$0xff] %v8289
        %8322 = vst [vmem:[%s548 + $0xe8] sm:$0xff] %v8290
        %8323 = vst [vmem:[%s548 + $0xf0] sm:$0xff] %v8291
        %8324 = vst [vmem:[%s548 + $0xf8] sm:$0xff] %v8292
        %s8325 = sand.u32 %s335, 1
        %s8326 = scalar_lea.sflag [#allocation6], %s8325
        %s8327 = sand.u32 %s335, 1
        %s8328 = smul.addr %s8327, 256
        %s8329 = scalar_lea.vmem [#allocation15], %s8328
        // Predicated region
        $region97: #{tpu_custom_call.1} parent=71 // pred_check
          %p8330 = pneg %p345
        $region98: #{tpu_custom_call.1} parent=71 // pred_check_branch
          %8332 = sbr.rel (%p8330) target = $region100
        $region99: #{tpu_custom_call.1} parent=71 // pred_region
          %s8333 = smul.u32 16, %s38
          %s8335 = ssub.s32 4096, 4096
          %8336 = vsyncadd %s8326, %s8335
          %s8337 = smul.addr %s8333, 2
          %s8338 = smul.addr %s37, 32
          %s8339 = sadd.s32 %s8337, %s8338
          %s8340 = smul.addr %s8339, 128
          %s8341 = scalar_lea.hbm %s13, %s8340
          %s8342 = sshll.u32 %s8329, 4
          %s8343 = int_to_ptr.vmem [resolvable:$true] %s8342
          %8348 = dma.vmem_to_hbm [thread:$0]  %s8343, 4096, %s8341, %s8326, 256, 256, 16
        $region100: #{tpu_custom_call.1} parent=71 // pred_fallthru
          _
      $region72: #{tpu_custom_call.1} parent=5 // pred_fallthru
        _
      %p8349 = scmp.le.s32.totalorder 2, %s28
      // Predicated region
      $region101: #{tpu_custom_call.1} parent=5 // pred_check
        %p8350 = pneg %p8349
      $region102: #{tpu_custom_call.1} parent=5 // pred_check_branch
        %8352 = sbr.rel (%p8350) target = $region104
      $region103: #{tpu_custom_call.1} parent=5 // pred_region
        %s8353 = ssub.s32 %s28, 2
        // Predicated region
        $region105: #{tpu_custom_call.1} parent=103 // pred_check
          %p8354 = pneg %p351
        $region106: #{tpu_custom_call.1} parent=103 // pred_check_branch
          %8356 = sbr.rel (%p8354) target = $region108
        $region107: #{tpu_custom_call.1} parent=103 // pred_region
          %s8357 = sand.u32 %s336, 1
          %s8358 = scalar_lea.sflag [#allocation6], %s8357
          %s8359 = sand.u32 %s336, 1
          %s8360 = smul.addr %s8359, 256
          %s8361 = scalar_lea.vmem [#allocation15], %s8360
          %8362 = dma.done %s8358, 4096
        $region108: #{tpu_custom_call.1} parent=103 // pred_fallthru
          _
      $region104: #{tpu_custom_call.1} parent=5 // pred_fallthru
        _
    $region6: #{tpu_custom_call.1} parent=1 // loop_footer
      %s32 = sadd.s32 1, %s28
    $region7: #{tpu_custom_call.1} parent=1 // loop_footer_branch
      %27 = sbr.rel target = $region3
    $region8: #{tpu_custom_call.1} parent=1 // loop_exit
      _
    %8363 = vsyncpa [#allocation5], 1
    %s8364 = scalar_lea.sflag [#allocation5], 1
    %8365 = vsyncpa %s8364, 1
    %8366 = vsyncpa [#allocation8], 1
    %8367 = vsyncpa [#allocation11], 1
    %8368 = vsyncpa [#allocation14], 1
    %8369 = vsyncpa [#allocation6], 1
    %s8370 = scalar_lea.sflag [#allocation6], 1
    %8371 = vsyncpa %s8370, 1

</llo_original>
